<compile_context>
chip_gen: v7x
topology: tpu7x:2x2x1
jax: 0.10.0
libtpu: 0.0.40
codegen_flags: <defaults>
</compile_context>

<pallas_src>
import jax
import jax.numpy as jnp
from jax import lax
from jax.experimental import pallas as pl
from jax.experimental.pallas import tpu as pltpu

# ---------------- small synthetic configuration ----------------
B = 8          # batch size
S = 16         # source length
H = 32         # tgt hidden size == char embedding dim (tied projection)
DS = 32        # src hidden size (src_outputs feature dim)
V = 32         # vocab size (num chars / "unit")
NL = 2         # LSTM layers
L = 8          # max decode length
SOT_ID = 1
NC_RATIO = 0.2       # norms_or_ratios = (1.0, 0.2), control_mode = 'relative'
MASK_FILL = -9999.9  # fill value used for masked attention scores


def lstm_decoder_forward(params, src_emb, src_outputs, mask_src, max_length=L):
    """Greedy LstmDecoder.forward. Returns (log_probs [L,B,V], almt_distrs [L,B,S])."""
    (emb_tbl, w_ih, w_hh, b_ih, b_hh, wa, w_hid, b_hid) = params

    # ---------- wrapper-side parameter folding (plain JAX glue) ----------
    # LSTM: fuse W_ih / W_hh into one [V+H,4H] / [2H,4H] weight per layer; fold the
    # embedding table into the layer-0 input weight (emb = onehot @ E feeds only the cell).
    w0 = jnp.concatenate([emb_tbl @ w_ih[0].T, w_hh[0].T], axis=0)   # [V+H, 4H]
    w1 = jnp.concatenate([w_ih[1].T, w_hh[1].T], axis=0)             # [2H,  4H]
    b0 = (b_ih[0] + b_hh[0])[None, :]                                # [1, 4H]
    b1 = (b_ih[1] + b_hh[1])[None, :]                                # [1, 4H]

    # Attention: flatten sources over (src_pos, batch) -> lane axis K = S*B = 128.
    src_out_flat = src_outputs.reshape(S * B, DS)                    # row k = s*B + b
    src_emb_flat = src_emb.reshape(S * B, H)
    m_scores = (src_out_flat @ wa).T                                 # [H, S*B]  cached Wh_s^T
    # hidden Linear split: the ctx part is folded through the sources so ctx itself is
    # never materialized (ctx @ Whid_c == almt_full @ (src_out_flat @ Whid_c)).
    whid_h = w_hid[:, :H].T                                          # [H, H]
    p_ctx = src_out_flat @ w_hid[:, H:].T                            # [S*B, H]
    bhid = b_hid[None, :]                                            # [1, H]

    # Mask over the flattened lane axis: valid iff same batch row AND unpadded src pos.
    mask_f = (mask_src.T.astype(jnp.float32)[:, :, None]
              * jnp.eye(B, dtype=jnp.float32)[:, None, :]).reshape(B, S * B)
    mask_bias = (1.0 - mask_f) * MASK_FILL                           # additive score mask

    # Selection matrix compressing almt_full [B, S*B] back to almt [B, S].
    sel = (jnp.arange(S * B)[:, None] // B
           == jnp.arange(S)[None, :]).astype(jnp.float32)            # [S*B, S]

    emb_t = emb_tbl.T                                                # [H, V] tied projection

    def kernel(w0_ref, b0_ref, w1_ref, b1_ref, msc_ref, pctx_ref, whid_ref, bhid_ref,
               semb_ref, sel_ref, mbias_ref, mmul_ref, embt_ref,
               logp_ref, almt_ref, xh_ref):
        # ---- hoist loop invariants: read every weight/mask exactly once ----
        w0v, b0v = w0_ref[...], b0_ref[...]
        w1v, b1v = w1_ref[...], b1_ref[...]
        m_sc = msc_ref[...]
        p_ctxv = pctx_ref[...]
        whid = whid_ref[...]
        bhidv = bhid_ref[...]
        semb = semb_ref[...]
        selv = sel_ref[...]
        mbias = mbias_ref[...]
        mmul = mmul_ref[...]
        embt = embt_ref[...]
        iota_v = lax.broadcasted_iota(jnp.int32, (B, V), 1)

        # LstmStatesByLayers.zero_state + SOT one-hot first input.
        onehot = (iota_v == SOT_ID).astype(jnp.float32)
        h0 = jnp.zeros((B, H), jnp.float32)
        c0 = jnp.zeros((B, H), jnp.float32)
        h1 = jnp.zeros((B, H), jnp.float32)
        c1 = jnp.zeros((B, H), jnp.float32)

        for l in range(max_length):
            # ---- MultiLayerLSTMCell (dropout = 0): fused gate matmul per layer ----
            # layer 0: input = [onehot | h0] assembled in VMEM scratch (embedding folded).
            xh_ref[:, 0:V] = onehot
            xh_ref[:, V:V + H] = h0
            g0 = jnp.dot(xh_ref[...], w0v,
                         preferred_element_type=jnp.float32) + b0v   # [B, 4H]
            sg0 = jax.nn.sigmoid(g0)                                  # full-row EUP
            tg0 = jnp.tanh(g0)
            c0 = sg0[:, H:2 * H] * c0 + sg0[:, 0:H] * tg0[:, 2 * H:3 * H]
            h0 = sg0[:, 3 * H:4 * H] * jnp.tanh(c0)

            # layer 1: input = [h0_new | h1_prev]
            xh_ref[:, 0:H] = h0
            xh_ref[:, H:2 * H] = h1
            g1 = jnp.dot(xh_ref[:, 0:2 * H], w1v,
                         preferred_element_type=jnp.float32) + b1v
            sg1 = jax.nn.sigmoid(g1)
            tg1 = jnp.tanh(g1)
            c1 = sg1[:, H:2 * H] * c1 + sg1[:, 0:H] * tg1[:, 2 * H:3 * H]
            h1 = sg1[:, 3 * H:4 * H] * jnp.tanh(c1)
            hid_rnn = h1                                              # [B, H]

            # ---- GlobalAttention: masked softmax over the flattened S*B lane axis ----
            scores = jnp.dot(hid_rnn, m_sc,
                             preferred_element_type=jnp.float32) + mbias   # [B, S*B]
            m = jnp.max(scores, axis=-1, keepdims=True)
            p = jnp.exp(scores - m) * mmul        # masked lanes exactly zero
            denom = jnp.sum(p, axis=-1, keepdims=True)
            almt_full = p * (1.0 / denom)                              # [B, S*B]

            # ---- hidden Linear on concat([hid_rnn, ctx]) (ctx path pre-folded) ----
            hid_cat = (jnp.dot(hid_rnn, whid, preferred_element_type=jnp.float32)
                       + jnp.dot(almt_full, p_ctxv, preferred_element_type=jnp.float32)
                       + bhidv)                                        # [B, H]

            # ---- ctx_emb + NormControlledResidual ('relative', ratios (1.0, 0.2)) ----
            # TODO(synk): 'relative' mode and the (1.0, 0.2) ratios mirror the sound_law
            #             NormControlledResidual implementation (source not in the spec).
            ctx_emb = jnp.dot(almt_full, semb, preferred_element_type=jnp.float32)
            norm_base = jnp.sqrt(jnp.sum(ctx_emb * ctx_emb, axis=-1, keepdims=True))
            norm_hid = jnp.sqrt(jnp.sum(hid_cat * hid_cat, axis=-1, keepdims=True))
            adj_norm = jnp.minimum(norm_hid, norm_base * NC_RATIO)
            hid_res = ctx_emb + hid_cat / jnp.maximum(norm_hid, 1e-12) * adj_norm

            # ---- tied projection + log_softmax ----
            logit = jnp.dot(hid_res, embt, preferred_element_type=jnp.float32)  # [B, V]
            lm = jnp.max(logit, axis=-1, keepdims=True)
            z = logit - lm
            log_prob = z - jnp.log(jnp.sum(jnp.exp(z), axis=-1, keepdims=True))

            # ---- greedy next token (first-occurrence argmax, kept as one-hot) ----
            is_max = log_prob == jnp.max(log_prob, axis=-1, keepdims=True)
            idx = jnp.min(jnp.where(is_max, iota_v, V), axis=-1, keepdims=True)
            onehot = (iota_v == idx).astype(jnp.float32)

            # ---- write this step's rows (outputs stay in VMEM; single HBM writeback) ----
            logp_ref[l] = log_prob                                     # [B, V]
            almt_ref[l] = jnp.dot(almt_full, selv,
                                  preferred_element_type=jnp.float32)  # [B, S]

    inputs = (w0, b0, w1, b1, m_scores, p_ctx, whid_h, bhid,
              src_emb_flat, sel, mask_bias, mask_f, emb_t)

    def full_spec(shape):
        nd = len(shape)
        return pl.BlockSpec(shape, lambda i, nd=nd: (0,) * nd)

    grid_spec = pltpu.PrefetchScalarGridSpec(
        num_scalar_prefetch=0,
        grid=(1,),                                  # decode loop lives inside the kernel
        in_specs=[full_spec(x.shape) for x in inputs],
        out_specs=[
            pl.BlockSpec((max_length, B, V), lambda i: (0, 0, 0)),
            pl.BlockSpec((max_length, B, S), lambda i: (0, 0, 0)),
        ],
        scratch_shapes=[
            pltpu.VMEM((B, V + H), jnp.float32),    # LSTM-input assembly buffer
        ],
    )

    out_shapes = (
        jax.ShapeDtypeStruct((max_length, B, V), jnp.float32),
        jax.ShapeDtypeStruct((max_length, B, S), jnp.float32),
    )

    return pl.pallas_call(
        kernel,
        grid_spec=grid_spec,
        out_shape=out_shapes,
        compiler_params=pltpu.CompilerParams(
            dimension_semantics=("arbitrary",)),    # single sequential invocation
    )(*inputs)


if __name__ == "__main__":
    key = jax.random.PRNGKey(0)
    ks = jax.random.split(key, 10)
    scale = 0.1

    # Deterministic synthetic parameters (shapes follow the module's __init__):
    emb_tbl = scale * jax.random.normal(ks[0], (V, H), jnp.float32)          # CharEmbedding (tied)
    w_ih = scale * jax.random.normal(ks[1], (NL, 4 * H, H), jnp.float32)     # LSTMCell W_ih per layer
    w_hh = scale * jax.random.normal(ks[2], (NL, 4 * H, H), jnp.float32)     # LSTMCell W_hh per layer
    b_ih = scale * jax.random.normal(ks[3], (NL, 4 * H), jnp.float32)
    b_hh = scale * jax.random.normal(ks[4], (NL, 4 * H), jnp.float32)
    wa = scale * jax.random.normal(ks[5], (DS, H), jnp.float32)              # GlobalAttention.Wa
    w_hid = scale * jax.random.normal(ks[6], (H, H + DS), jnp.float32)       # nn.Linear(src+tgt -> tgt)
    b_hid = scale * jax.random.normal(ks[7], (H,), jnp.float32)

    # Inputs to forward().
    src_emb = jax.random.normal(ks[8], (S, B, H), jnp.float32)
    src_outputs = jax.random.normal(ks[9], (S, B, DS), jnp.float32)
    lengths = jnp.array([16, 12, 10, 16, 8, 16, 14, 16], jnp.int32)
    mask_src = jnp.arange(S)[:, None] < lengths[None, :]   # [S, B] bool, True = valid

    params = (emb_tbl, w_ih, w_hh, b_ih, b_hh, wa, w_hid, b_hid)
    log_probs, almt_distrs = lstm_decoder_forward(params, src_emb, src_outputs,
                                                  mask_src, max_length=L)
    jax.block_until_ready((log_probs, almt_distrs))

    assert log_probs.shape == (L, B, V)
    assert almt_distrs.shape == (L, B, S)
    assert bool(jnp.all(jnp.isfinite(log_probs)))
    # log_probs must be valid log-distributions over the vocab
    assert bool(jnp.allclose(jnp.sum(jnp.exp(log_probs), axis=-1), 1.0, atol=1e-4))
    # alignment distributions must sum to 1 over src positions
    assert bool(jnp.allclose(jnp.sum(almt_distrs, axis=-1), 1.0, atol=1e-4))

    print("KERNEL_OK")
</pallas_src>

<mosaic_0001>
module attributes {stable_mosaic.version = 11 : i64} {
  func.func @kernel(%arg0: i32, %arg1: memref<64x128xf32, #tpu.memory_space<vmem>>, %arg2: memref<1x128xf32, #tpu.memory_space<vmem>>, %arg3: memref<64x128xf32, #tpu.memory_space<vmem>>, %arg4: memref<1x128xf32, #tpu.memory_space<vmem>>, %arg5: memref<32x128xf32, #tpu.memory_space<vmem>>, %arg6: memref<128x32xf32, #tpu.memory_space<vmem>>, %arg7: memref<32x32xf32, #tpu.memory_space<vmem>>, %arg8: memref<1x32xf32, #tpu.memory_space<vmem>>, %arg9: memref<128x32xf32, #tpu.memory_space<vmem>>, %arg10: memref<128x16xf32, #tpu.memory_space<vmem>>, %arg11: memref<8x128xf32, #tpu.memory_space<vmem>>, %arg12: memref<8x128xf32, #tpu.memory_space<vmem>>, %arg13: memref<32x32xf32, #tpu.memory_space<vmem>>, %arg14: memref<8x8x32xf32, #tpu.memory_space<vmem>>, %arg15: memref<8x8x16xf32, #tpu.memory_space<vmem>>, %arg16: memref<8x64xf32, #tpu.memory_space<vmem>>) attributes {dimension_semantics = [#tpu.dimension_semantics<arbitrary>], iteration_bounds = array<i64: 1>, scalar_prefetch = 0 : i64, scratch_operands = 1 : i64, tpu.core_type = #tpu.core_type<tc>, window_params = [{pipeline_mode = #tpu.pipeline_mode<synchronous>, transform_indices = @transform_0, window_bounds = array<i64: 64, 128>}, {pipeline_mode = #tpu.pipeline_mode<synchronous>, transform_indices = @transform_1, window_bounds = array<i64: 1, 128>}, {pipeline_mode = #tpu.pipeline_mode<synchronous>, transform_indices = @transform_2, window_bounds = array<i64: 64, 128>}, {pipeline_mode = #tpu.pipeline_mode<synchronous>, transform_indices = @transform_3, window_bounds = array<i64: 1, 128>}, {pipeline_mode = #tpu.pipeline_mode<synchronous>, transform_indices = @transform_4, window_bounds = array<i64: 32, 128>}, {pipeline_mode = #tpu.pipeline_mode<synchronous>, transform_indices = @transform_5, window_bounds = array<i64: 128, 32>}, {pipeline_mode = #tpu.pipeline_mode<synchronous>, transform_indices = @transform_6, window_bounds = array<i64: 32, 32>}, {pipeline_mode = #tpu.pipeline_mode<synchronous>, transform_indices = @transform_7, window_bounds = array<i64: 1, 32>}, {pipeline_mode = #tpu.pipeline_mode<synchronous>, transform_indices = @transform_8, window_bounds = array<i64: 128, 32>}, {pipeline_mode = #tpu.pipeline_mode<synchronous>, transform_indices = @transform_9, window_bounds = array<i64: 128, 16>}, {pipeline_mode = #tpu.pipeline_mode<synchronous>, transform_indices = @transform_10, window_bounds = array<i64: 8, 128>}, {pipeline_mode = #tpu.pipeline_mode<synchronous>, transform_indices = @transform_11, window_bounds = array<i64: 8, 128>}, {pipeline_mode = #tpu.pipeline_mode<synchronous>, transform_indices = @transform_12, window_bounds = array<i64: 32, 32>}, {pipeline_mode = #tpu.pipeline_mode<synchronous>, transform_indices = @transform_13, window_bounds = array<i64: 8, 8, 32>}, {pipeline_mode = #tpu.pipeline_mode<synchronous>, transform_indices = @transform_14, window_bounds = array<i64: 8, 8, 16>}]} {
    %c0 = arith.constant 0 : index
    %c0_0 = arith.constant 0 : index
    %0 = vector.load %arg1[%c0, %c0_0] : memref<64x128xf32, #tpu.memory_space<vmem>>, vector<64x128xf32>
    %c0_1 = arith.constant 0 : index
    %c0_2 = arith.constant 0 : index
    %1 = vector.load %arg2[%c0_1, %c0_2] : memref<1x128xf32, #tpu.memory_space<vmem>>, vector<1x128xf32>
    %c0_3 = arith.constant 0 : index
    %c0_4 = arith.constant 0 : index
    %2 = vector.load %arg3[%c0_3, %c0_4] : memref<64x128xf32, #tpu.memory_space<vmem>>, vector<64x128xf32>
    %c0_5 = arith.constant 0 : index
    %c0_6 = arith.constant 0 : index
    %3 = vector.load %arg4[%c0_5, %c0_6] : memref<1x128xf32, #tpu.memory_space<vmem>>, vector<1x128xf32>
    %c0_7 = arith.constant 0 : index
    %c0_8 = arith.constant 0 : index
    %4 = vector.load %arg5[%c0_7, %c0_8] : memref<32x128xf32, #tpu.memory_space<vmem>>, vector<32x128xf32>
    %c0_9 = arith.constant 0 : index
    %c0_10 = arith.constant 0 : index
    %5 = vector.load %arg6[%c0_9, %c0_10] : memref<128x32xf32, #tpu.memory_space<vmem>>, vector<128x32xf32>
    %c0_11 = arith.constant 0 : index
    %c0_12 = arith.constant 0 : index
    %6 = vector.load %arg7[%c0_11, %c0_12] : memref<32x32xf32, #tpu.memory_space<vmem>>, vector<32x32xf32>
    %c0_13 = arith.constant 0 : index
    %c0_14 = arith.constant 0 : index
    %7 = vector.load %arg8[%c0_13, %c0_14] : memref<1x32xf32, #tpu.memory_space<vmem>>, vector<1x32xf32>
    %c0_15 = arith.constant 0 : index
    %c0_16 = arith.constant 0 : index
    %8 = vector.load %arg9[%c0_15, %c0_16] : memref<128x32xf32, #tpu.memory_space<vmem>>, vector<128x32xf32>
    %c0_17 = arith.constant 0 : index
    %c0_18 = arith.constant 0 : index
    %9 = vector.load %arg10[%c0_17, %c0_18] : memref<128x16xf32, #tpu.memory_space<vmem>>, vector<128x16xf32>
    %c0_19 = arith.constant 0 : index
    %c0_20 = arith.constant 0 : index
    %10 = vector.load %arg11[%c0_19, %c0_20] : memref<8x128xf32, #tpu.memory_space<vmem>>, vector<8x128xf32>
    %c0_21 = arith.constant 0 : index
    %c0_22 = arith.constant 0 : index
    %11 = vector.load %arg12[%c0_21, %c0_22] : memref<8x128xf32, #tpu.memory_space<vmem>>, vector<8x128xf32>
    %c0_23 = arith.constant 0 : index
    %c0_24 = arith.constant 0 : index
    %12 = vector.load %arg13[%c0_23, %c0_24] : memref<32x32xf32, #tpu.memory_space<vmem>>, vector<32x32xf32>
    %13 = tpu.iota {dimensions = array<i32: 1>} : vector<8x32xi32>
    %c1_i32 = arith.constant 1 : i32
    %14 = vector.broadcast %c1_i32 : i32 to vector<8x32xi32>
    %15 = arith.cmpi eq, %13, %14 : vector<8x32xi32>
    %16 = arith.extui %15 : vector<8x32xi1> to vector<8x32xi32>
    %17 = arith.sitofp %16 : vector<8x32xi32> to vector<8x32xf32>
    %cst = arith.constant 0.000000e+00 : f32
    %18 = vector.broadcast %cst : f32 to vector<8x32xf32>
    %cst_25 = arith.constant 0.000000e+00 : f32
    %19 = vector.broadcast %cst_25 : f32 to vector<8x32xf32>
    %cst_26 = arith.constant 0.000000e+00 : f32
    %20 = vector.broadcast %cst_26 : f32 to vector<8x32xf32>
    %cst_27 = arith.constant 0.000000e+00 : f32
    %21 = vector.broadcast %cst_27 : f32 to vector<8x32xf32>
    %c0_28 = arith.constant 0 : index
    %c0_29 = arith.constant 0 : index
    %22 = vector.load %arg16[%c0_28, %c0_29] : memref<8x64xf32, #tpu.memory_space<vmem>>, vector<8x32xf32>
    tpu.vector_store %arg16[%c0_28, %c0_29], %17 {strides = array<i32>} : memref<8x64xf32, #tpu.memory_space<vmem>>, vector<8x32xf32>,
    %c0_30 = arith.constant 0 : index
    %c32 = arith.constant 32 : index
    %23 = vector.load %arg16[%c0_30, %c32] : memref<8x64xf32, #tpu.memory_space<vmem>>, vector<8x32xf32>
    tpu.vector_store %arg16[%c0_30, %c32], %18 {strides = array<i32>} : memref<8x64xf32, #tpu.memory_space<vmem>>, vector<8x32xf32>,
    %c0_31 = arith.constant 0 : index
    %c0_32 = arith.constant 0 : index
    %24 = vector.load %arg16[%c0_31, %c0_32] : memref<8x64xf32, #tpu.memory_space<vmem>>, vector<8x64xf32>
    %cst_33 = arith.constant dense<0.000000e+00> : vector<8x128xf32>
    %25 = tpu.matmul %24, %0, %cst_33 {dimension_numbers = #tpu.dot_dimension_numbers<[1], [0], [0], [1], [0, 0, 1, 1], [], []>} : vector<8x64xf32>, vector<64x128xf32>, vector<8x128xf32> -> vector<8x128xf32>
    %26 = vector.broadcast %1 : vector<1x128xf32> to vector<8x128xf32>
    %27 = arith.addf %25, %26 : vector<8x128xf32>
    %28 = arith.negf %27 : vector<8x128xf32>
    %29 = math.exp %28 : vector<8x128xf32>
    %cst_34 = arith.constant 1.000000e+00 : f32
    %30 = vector.broadcast %cst_34 : f32 to vector<8x128xf32>
    %31 = arith.addf %30, %29 : vector<8x128xf32>
    %32 = arith.divf %30, %31 : vector<8x128xf32>
    %33 = math.tanh %27 : vector<8x128xf32>
    %34 = vector.extract_strided_slice %32 {offsets = [0, 32], sizes = [8, 32], strides = [1, 1]} : vector<8x128xf32> to vector<8x32xf32>
    %35 = arith.mulf %34, %19 : vector<8x32xf32>
    %36 = vector.extract_strided_slice %32 {offsets = [0, 0], sizes = [8, 32], strides = [1, 1]} : vector<8x128xf32> to vector<8x32xf32>
    %37 = vector.extract_strided_slice %33 {offsets = [0, 64], sizes = [8, 32], strides = [1, 1]} : vector<8x128xf32> to vector<8x32xf32>
    %38 = arith.mulf %36, %37 : vector<8x32xf32>
    %39 = arith.addf %35, %38 : vector<8x32xf32>
    %40 = vector.extract_strided_slice %32 {offsets = [0, 96], sizes = [8, 32], strides = [1, 1]} : vector<8x128xf32> to vector<8x32xf32>
    %41 = math.tanh %39 : vector<8x32xf32>
    %42 = arith.mulf %40, %41 : vector<8x32xf32>
    %c0_35 = arith.constant 0 : index
    %c0_36 = arith.constant 0 : index
    %43 = vector.load %arg16[%c0_35, %c0_36] : memref<8x64xf32, #tpu.memory_space<vmem>>, vector<8x32xf32>
    tpu.vector_store %arg16[%c0_35, %c0_36], %42 {strides = array<i32>} : memref<8x64xf32, #tpu.memory_space<vmem>>, vector<8x32xf32>,
    %c0_37 = arith.constant 0 : index
    %c32_38 = arith.constant 32 : index
    %44 = vector.load %arg16[%c0_37, %c32_38] : memref<8x64xf32, #tpu.memory_space<vmem>>, vector<8x32xf32>
    tpu.vector_store %arg16[%c0_37, %c32_38], %20 {strides = array<i32>} : memref<8x64xf32, #tpu.memory_space<vmem>>, vector<8x32xf32>,
    %c0_39 = arith.constant 0 : index
    %c0_40 = arith.constant 0 : index
    %45 = vector.load %arg16[%c0_39, %c0_40] : memref<8x64xf32, #tpu.memory_space<vmem>>, vector<8x64xf32>
    %cst_41 = arith.constant dense<0.000000e+00> : vector<8x128xf32>
    %46 = tpu.matmul %45, %2, %cst_41 {dimension_numbers = #tpu.dot_dimension_numbers<[1], [0], [0], [1], [0, 0, 1, 1], [], []>} : vector<8x64xf32>, vector<64x128xf32>, vector<8x128xf32> -> vector<8x128xf32>
    %47 = vector.broadcast %3 : vector<1x128xf32> to vector<8x128xf32>
    %48 = arith.addf %46, %47 : vector<8x128xf32>
    %49 = arith.negf %48 : vector<8x128xf32>
    %50 = math.exp %49 : vector<8x128xf32>
    %cst_42 = arith.constant 1.000000e+00 : f32
    %51 = vector.broadcast %cst_42 : f32 to vector<8x128xf32>
    %52 = arith.addf %51, %50 : vector<8x128xf32>
    %53 = arith.divf %51, %52 : vector<8x128xf32>
    %54 = math.tanh %48 : vector<8x128xf32>
    %55 = vector.extract_strided_slice %53 {offsets = [0, 32], sizes = [8, 32], strides = [1, 1]} : vector<8x128xf32> to vector<8x32xf32>
    %56 = arith.mulf %55, %21 : vector<8x32xf32>
    %57 = vector.extract_strided_slice %53 {offsets = [0, 0], sizes = [8, 32], strides = [1, 1]} : vector<8x128xf32> to vector<8x32xf32>
    %58 = vector.extract_strided_slice %54 {offsets = [0, 64], sizes = [8, 32], strides = [1, 1]} : vector<8x128xf32> to vector<8x32xf32>
    %59 = arith.mulf %57, %58 : vector<8x32xf32>
    %60 = arith.addf %56, %59 : vector<8x32xf32>
    %61 = vector.extract_strided_slice %53 {offsets = [0, 96], sizes = [8, 32], strides = [1, 1]} : vector<8x128xf32> to vector<8x32xf32>
    %62 = math.tanh %60 : vector<8x32xf32>
    %63 = arith.mulf %61, %62 : vector<8x32xf32>
    %cst_43 = arith.constant dense<0.000000e+00> : vector<8x128xf32>
    %64 = tpu.matmul %63, %4, %cst_43 {dimension_numbers = #tpu.dot_dimension_numbers<[1], [0], [0], [1], [0, 0, 1, 1], [], []>} : vector<8x32xf32>, vector<32x128xf32>, vector<8x128xf32> -> vector<8x128xf32>
    %65 = arith.addf %64, %10 : vector<8x128xf32>
    %cst_44 = arith.constant dense<0xFF800000> : vector<8xf32>
    %66 = vector.multi_reduction <maximumf>, %65, %cst_44 [1] : vector<8x128xf32> to vector<8xf32>
    %67 = vector.shape_cast %66 : vector<8xf32> to vector<8x1xf32>
    %68 = vector.broadcast %67 : vector<8x1xf32> to vector<8x128xf32>
    %69 = arith.subf %65, %68 : vector<8x128xf32>
    %70 = math.exp %69 : vector<8x128xf32>
    %71 = arith.mulf %70, %11 : vector<8x128xf32>
    %cst_45 = arith.constant dense<0.000000e+00> : vector<8xf32>
    %72 = vector.multi_reduction <add>, %71, %cst_45 [1] : vector<8x128xf32> to vector<8xf32>
    %73 = vector.shape_cast %72 : vector<8xf32> to vector<8x1xf32>
    %cst_46 = arith.constant 1.000000e+00 : f32
    %74 = vector.broadcast %cst_46 : f32 to vector<8x1xf32>
    %75 = arith.divf %74, %73 : vector<8x1xf32>
    %76 = vector.broadcast %75 : vector<8x1xf32> to vector<8x128xf32>
    %77 = arith.mulf %71, %76 : vector<8x128xf32>
    %cst_47 = arith.constant dense<0.000000e+00> : vector<8x32xf32>
    %78 = tpu.matmul %63, %6, %cst_47 {dimension_numbers = #tpu.dot_dimension_numbers<[1], [0], [0], [1], [0, 0, 1, 1], [], []>} : vector<8x32xf32>, vector<32x32xf32>, vector<8x32xf32> -> vector<8x32xf32>
    %cst_48 = arith.constant dense<0.000000e+00> : vector<8x32xf32>
    %79 = tpu.matmul %77, %5, %cst_48 {dimension_numbers = #tpu.dot_dimension_numbers<[1], [0], [0], [1], [0, 0, 1, 1], [], []>} : vector<8x128xf32>, vector<128x32xf32>, vector<8x32xf32> -> vector<8x32xf32>
    %80 = arith.addf %78, %79 : vector<8x32xf32>
    %81 = vector.broadcast %7 : vector<1x32xf32> to vector<8x32xf32>
    %82 = arith.addf %80, %81 : vector<8x32xf32>
    %cst_49 = arith.constant dense<0.000000e+00> : vector<8x32xf32>
    %83 = tpu.matmul %77, %8, %cst_49 {dimension_numbers = #tpu.dot_dimension_numbers<[1], [0], [0], [1], [0, 0, 1, 1], [], []>} : vector<8x128xf32>, vector<128x32xf32>, vector<8x32xf32> -> vector<8x32xf32>
    %84 = arith.mulf %83, %83 : vector<8x32xf32>
    %cst_50 = arith.constant dense<0.000000e+00> : vector<8xf32>
    %85 = vector.multi_reduction <add>, %84, %cst_50 [1] : vector<8x32xf32> to vector<8xf32>
    %86 = vector.shape_cast %85 : vector<8xf32> to vector<8x1xf32>
    %87 = math.sqrt %86 : vector<8x1xf32>
    %88 = arith.mulf %82, %82 : vector<8x32xf32>
    %cst_51 = arith.constant dense<0.000000e+00> : vector<8xf32>
    %89 = vector.multi_reduction <add>, %88, %cst_51 [1] : vector<8x32xf32> to vector<8xf32>
    %90 = vector.shape_cast %89 : vector<8xf32> to vector<8x1xf32>
    %91 = math.sqrt %90 : vector<8x1xf32>
    %cst_52 = arith.constant 2.000000e-01 : f32
    %92 = vector.broadcast %cst_52 : f32 to vector<8x1xf32>
    %93 = arith.mulf %87, %92 : vector<8x1xf32>
    %94 = arith.minimumf %91, %93 : vector<8x1xf32>
    %cst_53 = arith.constant 9.99999996E-13 : f32
    %95 = vector.broadcast %cst_53 : f32 to vector<8x1xf32>
    %96 = arith.maximumf %91, %95 : vector<8x1xf32>
    %97 = vector.broadcast %96 : vector<8x1xf32> to vector<8x32xf32>
    %98 = arith.divf %82, %97 : vector<8x32xf32>
    %99 = vector.broadcast %94 : vector<8x1xf32> to vector<8x32xf32>
    %100 = arith.mulf %98, %99 : vector<8x32xf32>
    %101 = arith.addf %83, %100 : vector<8x32xf32>
    %cst_54 = arith.constant dense<0.000000e+00> : vector<8x32xf32>
    %102 = tpu.matmul %101, %12, %cst_54 {dimension_numbers = #tpu.dot_dimension_numbers<[1], [0], [0], [1], [0, 0, 1, 1], [], []>} : vector<8x32xf32>, vector<32x32xf32>, vector<8x32xf32> -> vector<8x32xf32>
    %cst_55 = arith.constant dense<0xFF800000> : vector<8xf32>
    %103 = vector.multi_reduction <maximumf>, %102, %cst_55 [1] : vector<8x32xf32> to vector<8xf32>
    %104 = vector.shape_cast %103 : vector<8xf32> to vector<8x1xf32>
    %105 = vector.broadcast %104 : vector<8x1xf32> to vector<8x32xf32>
    %106 = arith.subf %102, %105 : vector<8x32xf32>
    %107 = math.exp %106 : vector<8x32xf32>
    %cst_56 = arith.constant dense<0.000000e+00> : vector<8xf32>
    %108 = vector.multi_reduction <add>, %107, %cst_56 [1] : vector<8x32xf32> to vector<8xf32>
    %109 = vector.shape_cast %108 : vector<8xf32> to vector<8x1xf32>
    %110 = math.log %109 : vector<8x1xf32>
    %111 = vector.broadcast %110 : vector<8x1xf32> to vector<8x32xf32>
    %112 = arith.subf %106, %111 : vector<8x32xf32>
    %cst_57 = arith.constant dense<0xFF800000> : vector<8xf32>
    %113 = vector.multi_reduction <maximumf>, %112, %cst_57 [1] : vector<8x32xf32> to vector<8xf32>
    %114 = vector.shape_cast %113 : vector<8xf32> to vector<8x1xf32>
    %115 = vector.broadcast %114 : vector<8x1xf32> to vector<8x32xf32>
    %116 = arith.cmpf oeq, %112, %115 : vector<8x32xf32>
    %c32_i32 = arith.constant 32 : i32
    %117 = vector.broadcast %c32_i32 : i32 to vector<8x32xi32>
    %118 = arith.select %116, %13, %117 : vector<8x32xi1>, vector<8x32xi32>
    %cst_58 = arith.constant dense<2147483647> : vector<8xi32>
    %119 = vector.multi_reduction <minsi>, %118, %cst_58 [1] : vector<8x32xi32> to vector<8xi32>
    %120 = vector.shape_cast %119 : vector<8xi32> to vector<8x1xi32>
    %121 = vector.broadcast %120 : vector<8x1xi32> to vector<8x32xi32>
    %122 = arith.cmpi eq, %13, %121 : vector<8x32xi32>
    %123 = arith.extui %122 : vector<8x32xi1> to vector<8x32xi32>
    %124 = arith.sitofp %123 : vector<8x32xi32> to vector<8x32xf32>
    %c0_59 = arith.constant 0 : index
    %c0_60 = arith.constant 0 : index
    %c0_61 = arith.constant 0 : index
    %125 = vector.load %arg14[%c0_59, %c0_60, %c0_61] : memref<8x8x32xf32, #tpu.memory_space<vmem>>, vector<1x8x32xf32>
    %126 = vector.shape_cast %125 : vector<1x8x32xf32> to vector<8x32xf32>
    %127 = vector.shape_cast %112 : vector<8x32xf32> to vector<1x8x32xf32>
    tpu.vector_store %arg14[%c0_59, %c0_60, %c0_61], %127 {strides = array<i32>} : memref<8x8x32xf32, #tpu.memory_space<vmem>>, vector<1x8x32xf32>,
    %cst_62 = arith.constant dense<0.000000e+00> : vector<8x16xf32>
    %128 = tpu.matmul %77, %9, %cst_62 {dimension_numbers = #tpu.dot_dimension_numbers<[1], [0], [0], [1], [0, 0, 1, 1], [], []>} : vector<8x128xf32>, vector<128x16xf32>, vector<8x16xf32> -> vector<8x16xf32>
    %c0_63 = arith.constant 0 : index
    %c0_64 = arith.constant 0 : index
    %c0_65 = arith.constant 0 : index
    %129 = vector.load %arg15[%c0_63, %c0_64, %c0_65] : memref<8x8x16xf32, #tpu.memory_space<vmem>>, vector<1x8x16xf32>
    %130 = vector.shape_cast %129 : vector<1x8x16xf32> to vector<8x16xf32>
    %131 = vector.shape_cast %128 : vector<8x16xf32> to vector<1x8x16xf32>
    tpu.vector_store %arg15[%c0_63, %c0_64, %c0_65], %131 {strides = array<i32>} : memref<8x8x16xf32, #tpu.memory_space<vmem>>, vector<1x8x16xf32>,
    %c0_66 = arith.constant 0 : index
    %c0_67 = arith.constant 0 : index
    %132 = vector.load %arg16[%c0_66, %c0_67] : memref<8x64xf32, #tpu.memory_space<vmem>>, vector<8x32xf32>
    tpu.vector_store %arg16[%c0_66, %c0_67], %124 {strides = array<i32>} : memref<8x64xf32, #tpu.memory_space<vmem>>, vector<8x32xf32>,
    %c0_68 = arith.constant 0 : index
    %c32_69 = arith.constant 32 : index
    %133 = vector.load %arg16[%c0_68, %c32_69] : memref<8x64xf32, #tpu.memory_space<vmem>>, vector<8x32xf32>
    tpu.vector_store %arg16[%c0_68, %c32_69], %42 {strides = array<i32>} : memref<8x64xf32, #tpu.memory_space<vmem>>, vector<8x32xf32>,
    %c0_70 = arith.constant 0 : index
    %c0_71 = arith.constant 0 : index
    %134 = vector.load %arg16[%c0_70, %c0_71] : memref<8x64xf32, #tpu.memory_space<vmem>>, vector<8x64xf32>
    %cst_72 = arith.constant dense<0.000000e+00> : vector<8x128xf32>
    %135 = tpu.matmul %134, %0, %cst_72 {dimension_numbers = #tpu.dot_dimension_numbers<[1], [0], [0], [1], [0, 0, 1, 1], [], []>} : vector<8x64xf32>, vector<64x128xf32>, vector<8x128xf32> -> vector<8x128xf32>
    %136 = vector.broadcast %1 : vector<1x128xf32> to vector<8x128xf32>
    %137 = arith.addf %135, %136 : vector<8x128xf32>
    %138 = arith.negf %137 : vector<8x128xf32>
    %139 = math.exp %138 : vector<8x128xf32>
    %cst_73 = arith.constant 1.000000e+00 : f32
    %140 = vector.broadcast %cst_73 : f32 to vector<8x128xf32>
    %141 = arith.addf %140, %139 : vector<8x128xf32>
    %142 = arith.divf %140, %141 : vector<8x128xf32>
    %143 = math.tanh %137 : vector<8x128xf32>
    %144 = vector.extract_strided_slice %142 {offsets = [0, 32], sizes = [8, 32], strides = [1, 1]} : vector<8x128xf32> to vector<8x32xf32>
    %145 = arith.mulf %144, %39 : vector<8x32xf32>
    %146 = vector.extract_strided_slice %142 {offsets = [0, 0], sizes = [8, 32], strides = [1, 1]} : vector<8x128xf32> to vector<8x32xf32>
    %147 = vector.extract_strided_slice %143 {offsets = [0, 64], sizes = [8, 32], strides = [1, 1]} : vector<8x128xf32> to vector<8x32xf32>
    %148 = arith.mulf %146, %147 : vector<8x32xf32>
    %149 = arith.addf %145, %148 : vector<8x32xf32>
    %150 = vector.extract_strided_slice %142 {offsets = [0, 96], sizes = [8, 32], strides = [1, 1]} : vector<8x128xf32> to vector<8x32xf32>
    %151 = math.tanh %149 : vector<8x32xf32>
    %152 = arith.mulf %150, %151 : vector<8x32xf32>
    %c0_74 = arith.constant 0 : index
    %c0_75 = arith.constant 0 : index
    %153 = vector.load %arg16[%c0_74, %c0_75] : memref<8x64xf32, #tpu.memory_space<vmem>>, vector<8x32xf32>
    tpu.vector_store %arg16[%c0_74, %c0_75], %152 {strides = array<i32>} : memref<8x64xf32, #tpu.memory_space<vmem>>, vector<8x32xf32>,
    %c0_76 = arith.constant 0 : index
    %c32_77 = arith.constant 32 : index
    %154 = vector.load %arg16[%c0_76, %c32_77] : memref<8x64xf32, #tpu.memory_space<vmem>>, vector<8x32xf32>
    tpu.vector_store %arg16[%c0_76, %c32_77], %63 {strides = array<i32>} : memref<8x64xf32, #tpu.memory_space<vmem>>, vector<8x32xf32>,
    %c0_78 = arith.constant 0 : index
    %c0_79 = arith.constant 0 : index
    %155 = vector.load %arg16[%c0_78, %c0_79] : memref<8x64xf32, #tpu.memory_space<vmem>>, vector<8x64xf32>
    %cst_80 = arith.constant dense<0.000000e+00> : vector<8x128xf32>
    %156 = tpu.matmul %155, %2, %cst_80 {dimension_numbers = #tpu.dot_dimension_numbers<[1], [0], [0], [1], [0, 0, 1, 1], [], []>} : vector<8x64xf32>, vector<64x128xf32>, vector<8x128xf32> -> vector<8x128xf32>
    %157 = vector.broadcast %3 : vector<1x128xf32> to vector<8x128xf32>
    %158 = arith.addf %156, %157 : vector<8x128xf32>
    %159 = arith.negf %158 : vector<8x128xf32>
    %160 = math.exp %159 : vector<8x128xf32>
    %cst_81 = arith.constant 1.000000e+00 : f32
    %161 = vector.broadcast %cst_81 : f32 to vector<8x128xf32>
    %162 = arith.addf %161, %160 : vector<8x128xf32>
    %163 = arith.divf %161, %162 : vector<8x128xf32>
    %164 = math.tanh %158 : vector<8x128xf32>
    %165 = vector.extract_strided_slice %163 {offsets = [0, 32], sizes = [8, 32], strides = [1, 1]} : vector<8x128xf32> to vector<8x32xf32>
    %166 = arith.mulf %165, %60 : vector<8x32xf32>
    %167 = vector.extract_strided_slice %163 {offsets = [0, 0], sizes = [8, 32], strides = [1, 1]} : vector<8x128xf32> to vector<8x32xf32>
    %168 = vector.extract_strided_slice %164 {offsets = [0, 64], sizes = [8, 32], strides = [1, 1]} : vector<8x128xf32> to vector<8x32xf32>
    %169 = arith.mulf %167, %168 : vector<8x32xf32>
    %170 = arith.addf %166, %169 : vector<8x32xf32>
    %171 = vector.extract_strided_slice %163 {offsets = [0, 96], sizes = [8, 32], strides = [1, 1]} : vector<8x128xf32> to vector<8x32xf32>
    %172 = math.tanh %170 : vector<8x32xf32>
    %173 = arith.mulf %171, %172 : vector<8x32xf32>
    %cst_82 = arith.constant dense<0.000000e+00> : vector<8x128xf32>
    %174 = tpu.matmul %173, %4, %cst_82 {dimension_numbers = #tpu.dot_dimension_numbers<[1], [0], [0], [1], [0, 0, 1, 1], [], []>} : vector<8x32xf32>, vector<32x128xf32>, vector<8x128xf32> -> vector<8x128xf32>
    %175 = arith.addf %174, %10 : vector<8x128xf32>
    %cst_83 = arith.constant dense<0xFF800000> : vector<8xf32>
    %176 = vector.multi_reduction <maximumf>, %175, %cst_83 [1] : vector<8x128xf32> to vector<8xf32>
    %177 = vector.shape_cast %176 : vector<8xf32> to vector<8x1xf32>
    %178 = vector.broadcast %177 : vector<8x1xf32> to vector<8x128xf32>
    %179 = arith.subf %175, %178 : vector<8x128xf32>
    %180 = math.exp %179 : vector<8x128xf32>
    %181 = arith.mulf %180, %11 : vector<8x128xf32>
    %cst_84 = arith.constant dense<0.000000e+00> : vector<8xf32>
    %182 = vector.multi_reduction <add>, %181, %cst_84 [1] : vector<8x128xf32> to vector<8xf32>
    %183 = vector.shape_cast %182 : vector<8xf32> to vector<8x1xf32>
    %cst_85 = arith.constant 1.000000e+00 : f32
    %184 = vector.broadcast %cst_85 : f32 to vector<8x1xf32>
    %185 = arith.divf %184, %183 : vector<8x1xf32>
    %186 = vector.broadcast %185 : vector<8x1xf32> to vector<8x128xf32>
    %187 = arith.mulf %181, %186 : vector<8x128xf32>
    %cst_86 = arith.constant dense<0.000000e+00> : vector<8x32xf32>
    %188 = tpu.matmul %173, %6, %cst_86 {dimension_numbers = #tpu.dot_dimension_numbers<[1], [0], [0], [1], [0, 0, 1, 1], [], []>} : vector<8x32xf32>, vector<32x32xf32>, vector<8x32xf32> -> vector<8x32xf32>
    %cst_87 = arith.constant dense<0.000000e+00> : vector<8x32xf32>
    %189 = tpu.matmul %187, %5, %cst_87 {dimension_numbers = #tpu.dot_dimension_numbers<[1], [0], [0], [1], [0, 0, 1, 1], [], []>} : vector<8x128xf32>, vector<128x32xf32>, vector<8x32xf32> -> vector<8x32xf32>
    %190 = arith.addf %188, %189 : vector<8x32xf32>
    %191 = vector.broadcast %7 : vector<1x32xf32> to vector<8x32xf32>
    %192 = arith.addf %190, %191 : vector<8x32xf32>
    %cst_88 = arith.constant dense<0.000000e+00> : vector<8x32xf32>
    %193 = tpu.matmul %187, %8, %cst_88 {dimension_numbers = #tpu.dot_dimension_numbers<[1], [0], [0], [1], [0, 0, 1, 1], [], []>} : vector<8x128xf32>, vector<128x32xf32>, vector<8x32xf32> -> vector<8x32xf32>
    %194 = arith.mulf %193, %193 : vector<8x32xf32>
    %cst_89 = arith.constant dense<0.000000e+00> : vector<8xf32>
    %195 = vector.multi_reduction <add>, %194, %cst_89 [1] : vector<8x32xf32> to vector<8xf32>
    %196 = vector.shape_cast %195 : vector<8xf32> to vector<8x1xf32>
    %197 = math.sqrt %196 : vector<8x1xf32>
    %198 = arith.mulf %192, %192 : vector<8x32xf32>
    %cst_90 = arith.constant dense<0.000000e+00> : vector<8xf32>
    %199 = vector.multi_reduction <add>, %198, %cst_90 [1] : vector<8x32xf32> to vector<8xf32>
    %200 = vector.shape_cast %199 : vector<8xf32> to vector<8x1xf32>
    %201 = math.sqrt %200 : vector<8x1xf32>
    %cst_91 = arith.constant 2.000000e-01 : f32
    %202 = vector.broadcast %cst_91 : f32 to vector<8x1xf32>
    %203 = arith.mulf %197, %202 : vector<8x1xf32>
    %204 = arith.minimumf %201, %203 : vector<8x1xf32>
    %cst_92 = arith.constant 9.99999996E-13 : f32
    %205 = vector.broadcast %cst_92 : f32 to vector<8x1xf32>
    %206 = arith.maximumf %201, %205 : vector<8x1xf32>
    %207 = vector.broadcast %206 : vector<8x1xf32> to vector<8x32xf32>
    %208 = arith.divf %192, %207 : vector<8x32xf32>
    %209 = vector.broadcast %204 : vector<8x1xf32> to vector<8x32xf32>
    %210 = arith.mulf %208, %209 : vector<8x32xf32>
    %211 = arith.addf %193, %210 : vector<8x32xf32>
    %cst_93 = arith.constant dense<0.000000e+00> : vector<8x32xf32>
    %212 = tpu.matmul %211, %12, %cst_93 {dimension_numbers = #tpu.dot_dimension_numbers<[1], [0], [0], [1], [0, 0, 1, 1], [], []>} : vector<8x32xf32>, vector<32x32xf32>, vector<8x32xf32> -> vector<8x32xf32>
    %cst_94 = arith.constant dense<0xFF800000> : vector<8xf32>
    %213 = vector.multi_reduction <maximumf>, %212, %cst_94 [1] : vector<8x32xf32> to vector<8xf32>
    %214 = vector.shape_cast %213 : vector<8xf32> to vector<8x1xf32>
    %215 = vector.broadcast %214 : vector<8x1xf32> to vector<8x32xf32>
    %216 = arith.subf %212, %215 : vector<8x32xf32>
    %217 = math.exp %216 : vector<8x32xf32>
    %cst_95 = arith.constant dense<0.000000e+00> : vector<8xf32>
    %218 = vector.multi_reduction <add>, %217, %cst_95 [1] : vector<8x32xf32> to vector<8xf32>
    %219 = vector.shape_cast %218 : vector<8xf32> to vector<8x1xf32>
    %220 = math.log %219 : vector<8x1xf32>
    %221 = vector.broadcast %220 : vector<8x1xf32> to vector<8x32xf32>
    %222 = arith.subf %216, %221 : vector<8x32xf32>
    %cst_96 = arith.constant dense<0xFF800000> : vector<8xf32>
    %223 = vector.multi_reduction <maximumf>, %222, %cst_96 [1] : vector<8x32xf32> to vector<8xf32>
    %224 = vector.shape_cast %223 : vector<8xf32> to vector<8x1xf32>
    %225 = vector.broadcast %224 : vector<8x1xf32> to vector<8x32xf32>
    %226 = arith.cmpf oeq, %222, %225 : vector<8x32xf32>
    %c32_i32_97 = arith.constant 32 : i32
    %227 = vector.broadcast %c32_i32_97 : i32 to vector<8x32xi32>
    %228 = arith.select %226, %13, %227 : vector<8x32xi1>, vector<8x32xi32>
    %cst_98 = arith.constant dense<2147483647> : vector<8xi32>
    %229 = vector.multi_reduction <minsi>, %228, %cst_98 [1] : vector<8x32xi32> to vector<8xi32>
    %230 = vector.shape_cast %229 : vector<8xi32> to vector<8x1xi32>
    %231 = vector.broadcast %230 : vector<8x1xi32> to vector<8x32xi32>
    %232 = arith.cmpi eq, %13, %231 : vector<8x32xi32>
    %233 = arith.extui %232 : vector<8x32xi1> to vector<8x32xi32>
    %234 = arith.sitofp %233 : vector<8x32xi32> to vector<8x32xf32>
    %c1 = arith.constant 1 : index
    %c0_99 = arith.constant 0 : index
    %c0_100 = arith.constant 0 : index
    %235 = vector.load %arg14[%c1, %c0_99, %c0_100] : memref<8x8x32xf32, #tpu.memory_space<vmem>>, vector<1x8x32xf32>
    %236 = vector.shape_cast %235 : vector<1x8x32xf32> to vector<8x32xf32>
    %237 = vector.shape_cast %222 : vector<8x32xf32> to vector<1x8x32xf32>
    tpu.vector_store %arg14[%c1, %c0_99, %c0_100], %237 {strides = array<i32>} : memref<8x8x32xf32, #tpu.memory_space<vmem>>, vector<1x8x32xf32>,
    %cst_101 = arith.constant dense<0.000000e+00> : vector<8x16xf32>
    %238 = tpu.matmul %187, %9, %cst_101 {dimension_numbers = #tpu.dot_dimension_numbers<[1], [0], [0], [1], [0, 0, 1, 1], [], []>} : vector<8x128xf32>, vector<128x16xf32>, vector<8x16xf32> -> vector<8x16xf32>
    %c1_102 = arith.constant 1 : index
    %c0_103 = arith.constant 0 : index
    %c0_104 = arith.constant 0 : index
    %239 = vector.load %arg15[%c1_102, %c0_103, %c0_104] : memref<8x8x16xf32, #tpu.memory_space<vmem>>, vector<1x8x16xf32>
    %240 = vector.shape_cast %239 : vector<1x8x16xf32> to vector<8x16xf32>
    %241 = vector.shape_cast %238 : vector<8x16xf32> to vector<1x8x16xf32>
    tpu.vector_store %arg15[%c1_102, %c0_103, %c0_104], %241 {strides = array<i32>} : memref<8x8x16xf32, #tpu.memory_space<vmem>>, vector<1x8x16xf32>,
    %c0_105 = arith.constant 0 : index
    %c0_106 = arith.constant 0 : index
    %242 = vector.load %arg16[%c0_105, %c0_106] : memref<8x64xf32, #tpu.memory_space<vmem>>, vector<8x32xf32>
    tpu.vector_store %arg16[%c0_105, %c0_106], %234 {strides = array<i32>} : memref<8x64xf32, #tpu.memory_space<vmem>>, vector<8x32xf32>,
    %c0_107 = arith.constant 0 : index
    %c32_108 = arith.constant 32 : index
    %243 = vector.load %arg16[%c0_107, %c32_108] : memref<8x64xf32, #tpu.memory_space<vmem>>, vector<8x32xf32>
    tpu.vector_store %arg16[%c0_107, %c32_108], %152 {strides = array<i32>} : memref<8x64xf32, #tpu.memory_space<vmem>>, vector<8x32xf32>,
    %c0_109 = arith.constant 0 : index
    %c0_110 = arith.constant 0 : index
    %244 = vector.load %arg16[%c0_109, %c0_110] : memref<8x64xf32, #tpu.memory_space<vmem>>, vector<8x64xf32>
    %cst_111 = arith.constant dense<0.000000e+00> : vector<8x128xf32>
    %245 = tpu.matmul %244, %0, %cst_111 {dimension_numbers = #tpu.dot_dimension_numbers<[1], [0], [0], [1], [0, 0, 1, 1], [], []>} : vector<8x64xf32>, vector<64x128xf32>, vector<8x128xf32> -> vector<8x128xf32>
    %246 = vector.broadcast %1 : vector<1x128xf32> to vector<8x128xf32>
    %247 = arith.addf %245, %246 : vector<8x128xf32>
    %248 = arith.negf %247 : vector<8x128xf32>
    %249 = math.exp %248 : vector<8x128xf32>
    %cst_112 = arith.constant 1.000000e+00 : f32
    %250 = vector.broadcast %cst_112 : f32 to vector<8x128xf32>
    %251 = arith.addf %250, %249 : vector<8x128xf32>
    %252 = arith.divf %250, %251 : vector<8x128xf32>
    %253 = math.tanh %247 : vector<8x128xf32>
    %254 = vector.extract_strided_slice %252 {offsets = [0, 32], sizes = [8, 32], strides = [1, 1]} : vector<8x128xf32> to vector<8x32xf32>
    %255 = arith.mulf %254, %149 : vector<8x32xf32>
    %256 = vector.extract_strided_slice %252 {offsets = [0, 0], sizes = [8, 32], strides = [1, 1]} : vector<8x128xf32> to vector<8x32xf32>
    %257 = vector.extract_strided_slice %253 {offsets = [0, 64], sizes = [8, 32], strides = [1, 1]} : vector<8x128xf32> to vector<8x32xf32>
    %258 = arith.mulf %256, %257 : vector<8x32xf32>
    %259 = arith.addf %255, %258 : vector<8x32xf32>
    %260 = vector.extract_strided_slice %252 {offsets = [0, 96], sizes = [8, 32], strides = [1, 1]} : vector<8x128xf32> to vector<8x32xf32>
    %261 = math.tanh %259 : vector<8x32xf32>
    %262 = arith.mulf %260, %261 : vector<8x32xf32>
    %c0_113 = arith.constant 0 : index
    %c0_114 = arith.constant 0 : index
    %263 = vector.load %arg16[%c0_113, %c0_114] : memref<8x64xf32, #tpu.memory_space<vmem>>, vector<8x32xf32>
    tpu.vector_store %arg16[%c0_113, %c0_114], %262 {strides = array<i32>} : memref<8x64xf32, #tpu.memory_space<vmem>>, vector<8x32xf32>,
    %c0_115 = arith.constant 0 : index
    %c32_116 = arith.constant 32 : index
    %264 = vector.load %arg16[%c0_115, %c32_116] : memref<8x64xf32, #tpu.memory_space<vmem>>, vector<8x32xf32>
    tpu.vector_store %arg16[%c0_115, %c32_116], %173 {strides = array<i32>} : memref<8x64xf32, #tpu.memory_space<vmem>>, vector<8x32xf32>,
    %c0_117 = arith.constant 0 : index
    %c0_118 = arith.constant 0 : index
    %265 = vector.load %arg16[%c0_117, %c0_118] : memref<8x64xf32, #tpu.memory_space<vmem>>, vector<8x64xf32>
    %cst_119 = arith.constant dense<0.000000e+00> : vector<8x128xf32>
    %266 = tpu.matmul %265, %2, %cst_119 {dimension_numbers = #tpu.dot_dimension_numbers<[1], [0], [0], [1], [0, 0, 1, 1], [], []>} : vector<8x64xf32>, vector<64x128xf32>, vector<8x128xf32> -> vector<8x128xf32>
    %267 = vector.broadcast %3 : vector<1x128xf32> to vector<8x128xf32>
    %268 = arith.addf %266, %267 : vector<8x128xf32>
    %269 = arith.negf %268 : vector<8x128xf32>
    %270 = math.exp %269 : vector<8x128xf32>
    %cst_120 = arith.constant 1.000000e+00 : f32
    %271 = vector.broadcast %cst_120 : f32 to vector<8x128xf32>
    %272 = arith.addf %271, %270 : vector<8x128xf32>
    %273 = arith.divf %271, %272 : vector<8x128xf32>
    %274 = math.tanh %268 : vector<8x128xf32>
    %275 = vector.extract_strided_slice %273 {offsets = [0, 32], sizes = [8, 32], strides = [1, 1]} : vector<8x128xf32> to vector<8x32xf32>
    %276 = arith.mulf %275, %170 : vector<8x32xf32>
    %277 = vector.extract_strided_slice %273 {offsets = [0, 0], sizes = [8, 32], strides = [1, 1]} : vector<8x128xf32> to vector<8x32xf32>
    %278 = vector.extract_strided_slice %274 {offsets = [0, 64], sizes = [8, 32], strides = [1, 1]} : vector<8x128xf32> to vector<8x32xf32>
    %279 = arith.mulf %277, %278 : vector<8x32xf32>
    %280 = arith.addf %276, %279 : vector<8x32xf32>
    %281 = vector.extract_strided_slice %273 {offsets = [0, 96], sizes = [8, 32], strides = [1, 1]} : vector<8x128xf32> to vector<8x32xf32>
    %282 = math.tanh %280 : vector<8x32xf32>
    %283 = arith.mulf %281, %282 : vector<8x32xf32>
    %cst_121 = arith.constant dense<0.000000e+00> : vector<8x128xf32>
    %284 = tpu.matmul %283, %4, %cst_121 {dimension_numbers = #tpu.dot_dimension_numbers<[1], [0], [0], [1], [0, 0, 1, 1], [], []>} : vector<8x32xf32>, vector<32x128xf32>, vector<8x128xf32> -> vector<8x128xf32>
    %285 = arith.addf %284, %10 : vector<8x128xf32>
    %cst_122 = arith.constant dense<0xFF800000> : vector<8xf32>
    %286 = vector.multi_reduction <maximumf>, %285, %cst_122 [1] : vector<8x128xf32> to vector<8xf32>
    %287 = vector.shape_cast %286 : vector<8xf32> to vector<8x1xf32>
    %288 = vector.broadcast %287 : vector<8x1xf32> to vector<8x128xf32>
    %289 = arith.subf %285, %288 : vector<8x128xf32>
    %290 = math.exp %289 : vector<8x128xf32>
    %291 = arith.mulf %290, %11 : vector<8x128xf32>
    %cst_123 = arith.constant dense<0.000000e+00> : vector<8xf32>
    %292 = vector.multi_reduction <add>, %291, %cst_123 [1] : vector<8x128xf32> to vector<8xf32>
    %293 = vector.shape_cast %292 : vector<8xf32> to vector<8x1xf32>
    %cst_124 = arith.constant 1.000000e+00 : f32
    %294 = vector.broadcast %cst_124 : f32 to vector<8x1xf32>
    %295 = arith.divf %294, %293 : vector<8x1xf32>
    %296 = vector.broadcast %295 : vector<8x1xf32> to vector<8x128xf32>
    %297 = arith.mulf %291, %296 : vector<8x128xf32>
    %cst_125 = arith.constant dense<0.000000e+00> : vector<8x32xf32>
    %298 = tpu.matmul %283, %6, %cst_125 {dimension_numbers = #tpu.dot_dimension_numbers<[1], [0], [0], [1], [0, 0, 1, 1], [], []>} : vector<8x32xf32>, vector<32x32xf32>, vector<8x32xf32> -> vector<8x32xf32>
    %cst_126 = arith.constant dense<0.000000e+00> : vector<8x32xf32>
    %299 = tpu.matmul %297, %5, %cst_126 {dimension_numbers = #tpu.dot_dimension_numbers<[1], [0], [0], [1], [0, 0, 1, 1], [], []>} : vector<8x128xf32>, vector<128x32xf32>, vector<8x32xf32> -> vector<8x32xf32>
    %300 = arith.addf %298, %299 : vector<8x32xf32>
    %301 = vector.broadcast %7 : vector<1x32xf32> to vector<8x32xf32>
    %302 = arith.addf %300, %301 : vector<8x32xf32>
    %cst_127 = arith.constant dense<0.000000e+00> : vector<8x32xf32>
    %303 = tpu.matmul %297, %8, %cst_127 {dimension_numbers = #tpu.dot_dimension_numbers<[1], [0], [0], [1], [0, 0, 1, 1], [], []>} : vector<8x128xf32>, vector<128x32xf32>, vector<8x32xf32> -> vector<8x32xf32>
    %304 = arith.mulf %303, %303 : vector<8x32xf32>
    %cst_128 = arith.constant dense<0.000000e+00> : vector<8xf32>
    %305 = vector.multi_reduction <add>, %304, %cst_128 [1] : vector<8x32xf32> to vector<8xf32>
    %306 = vector.shape_cast %305 : vector<8xf32> to vector<8x1xf32>
    %307 = math.sqrt %306 : vector<8x1xf32>
    %308 = arith.mulf %302, %302 : vector<8x32xf32>
    %cst_129 = arith.constant dense<0.000000e+00> : vector<8xf32>
    %309 = vector.multi_reduction <add>, %308, %cst_129 [1] : vector<8x32xf32> to vector<8xf32>
    %310 = vector.shape_cast %309 : vector<8xf32> to vector<8x1xf32>
    %311 = math.sqrt %310 : vector<8x1xf32>
    %cst_130 = arith.constant 2.000000e-01 : f32
    %312 = vector.broadcast %cst_130 : f32 to vector<8x1xf32>
    %313 = arith.mulf %307, %312 : vector<8x1xf32>
    %314 = arith.minimumf %311, %313 : vector<8x1xf32>
    %cst_131 = arith.constant 9.99999996E-13 : f32
    %315 = vector.broadcast %cst_131 : f32 to vector<8x1xf32>
    %316 = arith.maximumf %311, %315 : vector<8x1xf32>
    %317 = vector.broadcast %316 : vector<8x1xf32> to vector<8x32xf32>
    %318 = arith.divf %302, %317 : vector<8x32xf32>
    %319 = vector.broadcast %314 : vector<8x1xf32> to vector<8x32xf32>
    %320 = arith.mulf %318, %319 : vector<8x32xf32>
    %321 = arith.addf %303, %320 : vector<8x32xf32>
    %cst_132 = arith.constant dense<0.000000e+00> : vector<8x32xf32>
    %322 = tpu.matmul %321, %12, %cst_132 {dimension_numbers = #tpu.dot_dimension_numbers<[1], [0], [0], [1], [0, 0, 1, 1], [], []>} : vector<8x32xf32>, vector<32x32xf32>, vector<8x32xf32> -> vector<8x32xf32>
    %cst_133 = arith.constant dense<0xFF800000> : vector<8xf32>
    %323 = vector.multi_reduction <maximumf>, %322, %cst_133 [1] : vector<8x32xf32> to vector<8xf32>
    %324 = vector.shape_cast %323 : vector<8xf32> to vector<8x1xf32>
    %325 = vector.broadcast %324 : vector<8x1xf32> to vector<8x32xf32>
    %326 = arith.subf %322, %325 : vector<8x32xf32>
    %327 = math.exp %326 : vector<8x32xf32>
    %cst_134 = arith.constant dense<0.000000e+00> : vector<8xf32>
    %328 = vector.multi_reduction <add>, %327, %cst_134 [1] : vector<8x32xf32> to vector<8xf32>
    %329 = vector.shape_cast %328 : vector<8xf32> to vector<8x1xf32>
    %330 = math.log %329 : vector<8x1xf32>
    %331 = vector.broadcast %330 : vector<8x1xf32> to vector<8x32xf32>
    %332 = arith.subf %326, %331 : vector<8x32xf32>
    %cst_135 = arith.constant dense<0xFF800000> : vector<8xf32>
    %333 = vector.multi_reduction <maximumf>, %332, %cst_135 [1] : vector<8x32xf32> to vector<8xf32>
    %334 = vector.shape_cast %333 : vector<8xf32> to vector<8x1xf32>
    %335 = vector.broadcast %334 : vector<8x1xf32> to vector<8x32xf32>
    %336 = arith.cmpf oeq, %332, %335 : vector<8x32xf32>
    %c32_i32_136 = arith.constant 32 : i32
    %337 = vector.broadcast %c32_i32_136 : i32 to vector<8x32xi32>
    %338 = arith.select %336, %13, %337 : vector<8x32xi1>, vector<8x32xi32>
    %cst_137 = arith.constant dense<2147483647> : vector<8xi32>
    %339 = vector.multi_reduction <minsi>, %338, %cst_137 [1] : vector<8x32xi32> to vector<8xi32>
    %340 = vector.shape_cast %339 : vector<8xi32> to vector<8x1xi32>
    %341 = vector.broadcast %340 : vector<8x1xi32> to vector<8x32xi32>
    %342 = arith.cmpi eq, %13, %341 : vector<8x32xi32>
    %343 = arith.extui %342 : vector<8x32xi1> to vector<8x32xi32>
    %344 = arith.sitofp %343 : vector<8x32xi32> to vector<8x32xf32>
    %c2 = arith.constant 2 : index
    %c0_138 = arith.constant 0 : index
    %c0_139 = arith.constant 0 : index
    %345 = vector.load %arg14[%c2, %c0_138, %c0_139] : memref<8x8x32xf32, #tpu.memory_space<vmem>>, vector<1x8x32xf32>
    %346 = vector.shape_cast %345 : vector<1x8x32xf32> to vector<8x32xf32>
    %347 = vector.shape_cast %332 : vector<8x32xf32> to vector<1x8x32xf32>
    tpu.vector_store %arg14[%c2, %c0_138, %c0_139], %347 {strides = array<i32>} : memref<8x8x32xf32, #tpu.memory_space<vmem>>, vector<1x8x32xf32>,
    %cst_140 = arith.constant dense<0.000000e+00> : vector<8x16xf32>
    %348 = tpu.matmul %297, %9, %cst_140 {dimension_numbers = #tpu.dot_dimension_numbers<[1], [0], [0], [1], [0, 0, 1, 1], [], []>} : vector<8x128xf32>, vector<128x16xf32>, vector<8x16xf32> -> vector<8x16xf32>
    %c2_141 = arith.constant 2 : index
    %c0_142 = arith.constant 0 : index
    %c0_143 = arith.constant 0 : index
    %349 = vector.load %arg15[%c2_141, %c0_142, %c0_143] : memref<8x8x16xf32, #tpu.memory_space<vmem>>, vector<1x8x16xf32>
    %350 = vector.shape_cast %349 : vector<1x8x16xf32> to vector<8x16xf32>
    %351 = vector.shape_cast %348 : vector<8x16xf32> to vector<1x8x16xf32>
    tpu.vector_store %arg15[%c2_141, %c0_142, %c0_143], %351 {strides = array<i32>} : memref<8x8x16xf32, #tpu.memory_space<vmem>>, vector<1x8x16xf32>,
    %c0_144 = arith.constant 0 : index
    %c0_145 = arith.constant 0 : index
    %352 = vector.load %arg16[%c0_144, %c0_145] : memref<8x64xf32, #tpu.memory_space<vmem>>, vector<8x32xf32>
    tpu.vector_store %arg16[%c0_144, %c0_145], %344 {strides = array<i32>} : memref<8x64xf32, #tpu.memory_space<vmem>>, vector<8x32xf32>,
    %c0_146 = arith.constant 0 : index
    %c32_147 = arith.constant 32 : index
    %353 = vector.load %arg16[%c0_146, %c32_147] : memref<8x64xf32, #tpu.memory_space<vmem>>, vector<8x32xf32>
    tpu.vector_store %arg16[%c0_146, %c32_147], %262 {strides = array<i32>} : memref<8x64xf32, #tpu.memory_space<vmem>>, vector<8x32xf32>,
    %c0_148 = arith.constant 0 : index
    %c0_149 = arith.constant 0 : index
    %354 = vector.load %arg16[%c0_148, %c0_149] : memref<8x64xf32, #tpu.memory_space<vmem>>, vector<8x64xf32>
    %cst_150 = arith.constant dense<0.000000e+00> : vector<8x128xf32>
    %355 = tpu.matmul %354, %0, %cst_150 {dimension_numbers = #tpu.dot_dimension_numbers<[1], [0], [0], [1], [0, 0, 1, 1], [], []>} : vector<8x64xf32>, vector<64x128xf32>, vector<8x128xf32> -> vector<8x128xf32>
    %356 = vector.broadcast %1 : vector<1x128xf32> to vector<8x128xf32>
    %357 = arith.addf %355, %356 : vector<8x128xf32>
    %358 = arith.negf %357 : vector<8x128xf32>
    %359 = math.exp %358 : vector<8x128xf32>
    %cst_151 = arith.constant 1.000000e+00 : f32
    %360 = vector.broadcast %cst_151 : f32 to vector<8x128xf32>
    %361 = arith.addf %360, %359 : vector<8x128xf32>
    %362 = arith.divf %360, %361 : vector<8x128xf32>
    %363 = math.tanh %357 : vector<8x128xf32>
    %364 = vector.extract_strided_slice %362 {offsets = [0, 32], sizes = [8, 32], strides = [1, 1]} : vector<8x128xf32> to vector<8x32xf32>
    %365 = arith.mulf %364, %259 : vector<8x32xf32>
    %366 = vector.extract_strided_slice %362 {offsets = [0, 0], sizes = [8, 32], strides = [1, 1]} : vector<8x128xf32> to vector<8x32xf32>
    %367 = vector.extract_strided_slice %363 {offsets = [0, 64], sizes = [8, 32], strides = [1, 1]} : vector<8x128xf32> to vector<8x32xf32>
    %368 = arith.mulf %366, %367 : vector<8x32xf32>
    %369 = arith.addf %365, %368 : vector<8x32xf32>
    %370 = vector.extract_strided_slice %362 {offsets = [0, 96], sizes = [8, 32], strides = [1, 1]} : vector<8x128xf32> to vector<8x32xf32>
    %371 = math.tanh %369 : vector<8x32xf32>
    %372 = arith.mulf %370, %371 : vector<8x32xf32>
    %c0_152 = arith.constant 0 : index
    %c0_153 = arith.constant 0 : index
    %373 = vector.load %arg16[%c0_152, %c0_153] : memref<8x64xf32, #tpu.memory_space<vmem>>, vector<8x32xf32>
    tpu.vector_store %arg16[%c0_152, %c0_153], %372 {strides = array<i32>} : memref<8x64xf32, #tpu.memory_space<vmem>>, vector<8x32xf32>,
    %c0_154 = arith.constant 0 : index
    %c32_155 = arith.constant 32 : index
    %374 = vector.load %arg16[%c0_154, %c32_155] : memref<8x64xf32, #tpu.memory_space<vmem>>, vector<8x32xf32>
    tpu.vector_store %arg16[%c0_154, %c32_155], %283 {strides = array<i32>} : memref<8x64xf32, #tpu.memory_space<vmem>>, vector<8x32xf32>,
    %c0_156 = arith.constant 0 : index
    %c0_157 = arith.constant 0 : index
    %375 = vector.load %arg16[%c0_156, %c0_157] : memref<8x64xf32, #tpu.memory_space<vmem>>, vector<8x64xf32>
    %cst_158 = arith.constant dense<0.000000e+00> : vector<8x128xf32>
    %376 = tpu.matmul %375, %2, %cst_158 {dimension_numbers = #tpu.dot_dimension_numbers<[1], [0], [0], [1], [0, 0, 1, 1], [], []>} : vector<8x64xf32>, vector<64x128xf32>, vector<8x128xf32> -> vector<8x128xf32>
    %377 = vector.broadcast %3 : vector<1x128xf32> to vector<8x128xf32>
    %378 = arith.addf %376, %377 : vector<8x128xf32>
    %379 = arith.negf %378 : vector<8x128xf32>
    %380 = math.exp %379 : vector<8x128xf32>
    %cst_159 = arith.constant 1.000000e+00 : f32
    %381 = vector.broadcast %cst_159 : f32 to vector<8x128xf32>
    %382 = arith.addf %381, %380 : vector<8x128xf32>
    %383 = arith.divf %381, %382 : vector<8x128xf32>
    %384 = math.tanh %378 : vector<8x128xf32>
    %385 = vector.extract_strided_slice %383 {offsets = [0, 32], sizes = [8, 32], strides = [1, 1]} : vector<8x128xf32> to vector<8x32xf32>
    %386 = arith.mulf %385, %280 : vector<8x32xf32>
    %387 = vector.extract_strided_slice %383 {offsets = [0, 0], sizes = [8, 32], strides = [1, 1]} : vector<8x128xf32> to vector<8x32xf32>
    %388 = vector.extract_strided_slice %384 {offsets = [0, 64], sizes = [8, 32], strides = [1, 1]} : vector<8x128xf32> to vector<8x32xf32>
    %389 = arith.mulf %387, %388 : vector<8x32xf32>
    %390 = arith.addf %386, %389 : vector<8x32xf32>
    %391 = vector.extract_strided_slice %383 {offsets = [0, 96], sizes = [8, 32], strides = [1, 1]} : vector<8x128xf32> to vector<8x32xf32>
    %392 = math.tanh %390 : vector<8x32xf32>
    %393 = arith.mulf %391, %392 : vector<8x32xf32>
    %cst_160 = arith.constant dense<0.000000e+00> : vector<8x128xf32>
    %394 = tpu.matmul %393, %4, %cst_160 {dimension_numbers = #tpu.dot_dimension_numbers<[1], [0], [0], [1], [0, 0, 1, 1], [], []>} : vector<8x32xf32>, vector<32x128xf32>, vector<8x128xf32> -> vector<8x128xf32>
    %395 = arith.addf %394, %10 : vector<8x128xf32>
    %cst_161 = arith.constant dense<0xFF800000> : vector<8xf32>
    %396 = vector.multi_reduction <maximumf>, %395, %cst_161 [1] : vector<8x128xf32> to vector<8xf32>
    %397 = vector.shape_cast %396 : vector<8xf32> to vector<8x1xf32>
    %398 = vector.broadcast %397 : vector<8x1xf32> to vector<8x128xf32>
    %399 = arith.subf %395, %398 : vector<8x128xf32>
    %400 = math.exp %399 : vector<8x128xf32>
    %401 = arith.mulf %400, %11 : vector<8x128xf32>
    %cst_162 = arith.constant dense<0.000000e+00> : vector<8xf32>
    %402 = vector.multi_reduction <add>, %401, %cst_162 [1] : vector<8x128xf32> to vector<8xf32>
    %403 = vector.shape_cast %402 : vector<8xf32> to vector<8x1xf32>
    %cst_163 = arith.constant 1.000000e+00 : f32
    %404 = vector.broadcast %cst_163 : f32 to vector<8x1xf32>
    %405 = arith.divf %404, %403 : vector<8x1xf32>
    %406 = vector.broadcast %405 : vector<8x1xf32> to vector<8x128xf32>
    %407 = arith.mulf %401, %406 : vector<8x128xf32>
    %cst_164 = arith.constant dense<0.000000e+00> : vector<8x32xf32>
    %408 = tpu.matmul %393, %6, %cst_164 {dimension_numbers = #tpu.dot_dimension_numbers<[1], [0], [0], [1], [0, 0, 1, 1], [], []>} : vector<8x32xf32>, vector<32x32xf32>, vector<8x32xf32> -> vector<8x32xf32>
    %cst_165 = arith.constant dense<0.000000e+00> : vector<8x32xf32>
    %409 = tpu.matmul %407, %5, %cst_165 {dimension_numbers = #tpu.dot_dimension_numbers<[1], [0], [0], [1], [0, 0, 1, 1], [], []>} : vector<8x128xf32>, vector<128x32xf32>, vector<8x32xf32> -> vector<8x32xf32>
    %410 = arith.addf %408, %409 : vector<8x32xf32>
    %411 = vector.broadcast %7 : vector<1x32xf32> to vector<8x32xf32>
    %412 = arith.addf %410, %411 : vector<8x32xf32>
    %cst_166 = arith.constant dense<0.000000e+00> : vector<8x32xf32>
    %413 = tpu.matmul %407, %8, %cst_166 {dimension_numbers = #tpu.dot_dimension_numbers<[1], [0], [0], [1], [0, 0, 1, 1], [], []>} : vector<8x128xf32>, vector<128x32xf32>, vector<8x32xf32> -> vector<8x32xf32>
    %414 = arith.mulf %413, %413 : vector<8x32xf32>
    %cst_167 = arith.constant dense<0.000000e+00> : vector<8xf32>
    %415 = vector.multi_reduction <add>, %414, %cst_167 [1] : vector<8x32xf32> to vector<8xf32>
    %416 = vector.shape_cast %415 : vector<8xf32> to vector<8x1xf32>
    %417 = math.sqrt %416 : vector<8x1xf32>
    %418 = arith.mulf %412, %412 : vector<8x32xf32>
    %cst_168 = arith.constant dense<0.000000e+00> : vector<8xf32>
    %419 = vector.multi_reduction <add>, %418, %cst_168 [1] : vector<8x32xf32> to vector<8xf32>
    %420 = vector.shape_cast %419 : vector<8xf32> to vector<8x1xf32>
    %421 = math.sqrt %420 : vector<8x1xf32>
    %cst_169 = arith.constant 2.000000e-01 : f32
    %422 = vector.broadcast %cst_169 : f32 to vector<8x1xf32>
    %423 = arith.mulf %417, %422 : vector<8x1xf32>
    %424 = arith.minimumf %421, %423 : vector<8x1xf32>
    %cst_170 = arith.constant 9.99999996E-13 : f32
    %425 = vector.broadcast %cst_170 : f32 to vector<8x1xf32>
    %426 = arith.maximumf %421, %425 : vector<8x1xf32>
    %427 = vector.broadcast %426 : vector<8x1xf32> to vector<8x32xf32>
    %428 = arith.divf %412, %427 : vector<8x32xf32>
    %429 = vector.broadcast %424 : vector<8x1xf32> to vector<8x32xf32>
    %430 = arith.mulf %428, %429 : vector<8x32xf32>
    %431 = arith.addf %413, %430 : vector<8x32xf32>
    %cst_171 = arith.constant dense<0.000000e+00> : vector<8x32xf32>
    %432 = tpu.matmul %431, %12, %cst_171 {dimension_numbers = #tpu.dot_dimension_numbers<[1], [0], [0], [1], [0, 0, 1, 1], [], []>} : vector<8x32xf32>, vector<32x32xf32>, vector<8x32xf32> -> vector<8x32xf32>
    %cst_172 = arith.constant dense<0xFF800000> : vector<8xf32>
    %433 = vector.multi_reduction <maximumf>, %432, %cst_172 [1] : vector<8x32xf32> to vector<8xf32>
    %434 = vector.shape_cast %433 : vector<8xf32> to vector<8x1xf32>
    %435 = vector.broadcast %434 : vector<8x1xf32> to vector<8x32xf32>
    %436 = arith.subf %432, %435 : vector<8x32xf32>
    %437 = math.exp %436 : vector<8x32xf32>
    %cst_173 = arith.constant dense<0.000000e+00> : vector<8xf32>
    %438 = vector.multi_reduction <add>, %437, %cst_173 [1] : vector<8x32xf32> to vector<8xf32>
    %439 = vector.shape_cast %438 : vector<8xf32> to vector<8x1xf32>
    %440 = math.log %439 : vector<8x1xf32>
    %441 = vector.broadcast %440 : vector<8x1xf32> to vector<8x32xf32>
    %442 = arith.subf %436, %441 : vector<8x32xf32>
    %cst_174 = arith.constant dense<0xFF800000> : vector<8xf32>
    %443 = vector.multi_reduction <maximumf>, %442, %cst_174 [1] : vector<8x32xf32> to vector<8xf32>
    %444 = vector.shape_cast %443 : vector<8xf32> to vector<8x1xf32>
    %445 = vector.broadcast %444 : vector<8x1xf32> to vector<8x32xf32>
    %446 = arith.cmpf oeq, %442, %445 : vector<8x32xf32>
    %c32_i32_175 = arith.constant 32 : i32
    %447 = vector.broadcast %c32_i32_175 : i32 to vector<8x32xi32>
    %448 = arith.select %446, %13, %447 : vector<8x32xi1>, vector<8x32xi32>
    %cst_176 = arith.constant dense<2147483647> : vector<8xi32>
    %449 = vector.multi_reduction <minsi>, %448, %cst_176 [1] : vector<8x32xi32> to vector<8xi32>
    %450 = vector.shape_cast %449 : vector<8xi32> to vector<8x1xi32>
    %451 = vector.broadcast %450 : vector<8x1xi32> to vector<8x32xi32>
    %452 = arith.cmpi eq, %13, %451 : vector<8x32xi32>
    %453 = arith.extui %452 : vector<8x32xi1> to vector<8x32xi32>
    %454 = arith.sitofp %453 : vector<8x32xi32> to vector<8x32xf32>
    %c3 = arith.constant 3 : index
    %c0_177 = arith.constant 0 : index
    %c0_178 = arith.constant 0 : index
    %455 = vector.load %arg14[%c3, %c0_177, %c0_178] : memref<8x8x32xf32, #tpu.memory_space<vmem>>, vector<1x8x32xf32>
    %456 = vector.shape_cast %455 : vector<1x8x32xf32> to vector<8x32xf32>
    %457 = vector.shape_cast %442 : vector<8x32xf32> to vector<1x8x32xf32>
    tpu.vector_store %arg14[%c3, %c0_177, %c0_178], %457 {strides = array<i32>} : memref<8x8x32xf32, #tpu.memory_space<vmem>>, vector<1x8x32xf32>,
    %cst_179 = arith.constant dense<0.000000e+00> : vector<8x16xf32>
    %458 = tpu.matmul %407, %9, %cst_179 {dimension_numbers = #tpu.dot_dimension_numbers<[1], [0], [0], [1], [0, 0, 1, 1], [], []>} : vector<8x128xf32>, vector<128x16xf32>, vector<8x16xf32> -> vector<8x16xf32>
    %c3_180 = arith.constant 3 : index
    %c0_181 = arith.constant 0 : index
    %c0_182 = arith.constant 0 : index
    %459 = vector.load %arg15[%c3_180, %c0_181, %c0_182] : memref<8x8x16xf32, #tpu.memory_space<vmem>>, vector<1x8x16xf32>
    %460 = vector.shape_cast %459 : vector<1x8x16xf32> to vector<8x16xf32>
    %461 = vector.shape_cast %458 : vector<8x16xf32> to vector<1x8x16xf32>
    tpu.vector_store %arg15[%c3_180, %c0_181, %c0_182], %461 {strides = array<i32>} : memref<8x8x16xf32, #tpu.memory_space<vmem>>, vector<1x8x16xf32>,
    %c0_183 = arith.constant 0 : index
    %c0_184 = arith.constant 0 : index
    %462 = vector.load %arg16[%c0_183, %c0_184] : memref<8x64xf32, #tpu.memory_space<vmem>>, vector<8x32xf32>
    tpu.vector_store %arg16[%c0_183, %c0_184], %454 {strides = array<i32>} : memref<8x64xf32, #tpu.memory_space<vmem>>, vector<8x32xf32>,
    %c0_185 = arith.constant 0 : index
    %c32_186 = arith.constant 32 : index
    %463 = vector.load %arg16[%c0_185, %c32_186] : memref<8x64xf32, #tpu.memory_space<vmem>>, vector<8x32xf32>
    tpu.vector_store %arg16[%c0_185, %c32_186], %372 {strides = array<i32>} : memref<8x64xf32, #tpu.memory_space<vmem>>, vector<8x32xf32>,
    %c0_187 = arith.constant 0 : index
    %c0_188 = arith.constant 0 : index
    %464 = vector.load %arg16[%c0_187, %c0_188] : memref<8x64xf32, #tpu.memory_space<vmem>>, vector<8x64xf32>
    %cst_189 = arith.constant dense<0.000000e+00> : vector<8x128xf32>
    %465 = tpu.matmul %464, %0, %cst_189 {dimension_numbers = #tpu.dot_dimension_numbers<[1], [0], [0], [1], [0, 0, 1, 1], [], []>} : vector<8x64xf32>, vector<64x128xf32>, vector<8x128xf32> -> vector<8x128xf32>
    %466 = vector.broadcast %1 : vector<1x128xf32> to vector<8x128xf32>
    %467 = arith.addf %465, %466 : vector<8x128xf32>
    %468 = arith.negf %467 : vector<8x128xf32>
    %469 = math.exp %468 : vector<8x128xf32>
    %cst_190 = arith.constant 1.000000e+00 : f32
    %470 = vector.broadcast %cst_190 : f32 to vector<8x128xf32>
    %471 = arith.addf %470, %469 : vector<8x128xf32>
    %472 = arith.divf %470, %471 : vector<8x128xf32>
    %473 = math.tanh %467 : vector<8x128xf32>
    %474 = vector.extract_strided_slice %472 {offsets = [0, 32], sizes = [8, 32], strides = [1, 1]} : vector<8x128xf32> to vector<8x32xf32>
    %475 = arith.mulf %474, %369 : vector<8x32xf32>
    %476 = vector.extract_strided_slice %472 {offsets = [0, 0], sizes = [8, 32], strides = [1, 1]} : vector<8x128xf32> to vector<8x32xf32>
    %477 = vector.extract_strided_slice %473 {offsets = [0, 64], sizes = [8, 32], strides = [1, 1]} : vector<8x128xf32> to vector<8x32xf32>
    %478 = arith.mulf %476, %477 : vector<8x32xf32>
    %479 = arith.addf %475, %478 : vector<8x32xf32>
    %480 = vector.extract_strided_slice %472 {offsets = [0, 96], sizes = [8, 32], strides = [1, 1]} : vector<8x128xf32> to vector<8x32xf32>
    %481 = math.tanh %479 : vector<8x32xf32>
    %482 = arith.mulf %480, %481 : vector<8x32xf32>
    %c0_191 = arith.constant 0 : index
    %c0_192 = arith.constant 0 : index
    %483 = vector.load %arg16[%c0_191, %c0_192] : memref<8x64xf32, #tpu.memory_space<vmem>>, vector<8x32xf32>
    tpu.vector_store %arg16[%c0_191, %c0_192], %482 {strides = array<i32>} : memref<8x64xf32, #tpu.memory_space<vmem>>, vector<8x32xf32>,
    %c0_193 = arith.constant 0 : index
    %c32_194 = arith.constant 32 : index
    %484 = vector.load %arg16[%c0_193, %c32_194] : memref<8x64xf32, #tpu.memory_space<vmem>>, vector<8x32xf32>
    tpu.vector_store %arg16[%c0_193, %c32_194], %393 {strides = array<i32>} : memref<8x64xf32, #tpu.memory_space<vmem>>, vector<8x32xf32>,
    %c0_195 = arith.constant 0 : index
    %c0_196 = arith.constant 0 : index
    %485 = vector.load %arg16[%c0_195, %c0_196] : memref<8x64xf32, #tpu.memory_space<vmem>>, vector<8x64xf32>
    %cst_197 = arith.constant dense<0.000000e+00> : vector<8x128xf32>
    %486 = tpu.matmul %485, %2, %cst_197 {dimension_numbers = #tpu.dot_dimension_numbers<[1], [0], [0], [1], [0, 0, 1, 1], [], []>} : vector<8x64xf32>, vector<64x128xf32>, vector<8x128xf32> -> vector<8x128xf32>
    %487 = vector.broadcast %3 : vector<1x128xf32> to vector<8x128xf32>
    %488 = arith.addf %486, %487 : vector<8x128xf32>
    %489 = arith.negf %488 : vector<8x128xf32>
    %490 = math.exp %489 : vector<8x128xf32>
    %cst_198 = arith.constant 1.000000e+00 : f32
    %491 = vector.broadcast %cst_198 : f32 to vector<8x128xf32>
    %492 = arith.addf %491, %490 : vector<8x128xf32>
    %493 = arith.divf %491, %492 : vector<8x128xf32>
    %494 = math.tanh %488 : vector<8x128xf32>
    %495 = vector.extract_strided_slice %493 {offsets = [0, 32], sizes = [8, 32], strides = [1, 1]} : vector<8x128xf32> to vector<8x32xf32>
    %496 = arith.mulf %495, %390 : vector<8x32xf32>
    %497 = vector.extract_strided_slice %493 {offsets = [0, 0], sizes = [8, 32], strides = [1, 1]} : vector<8x128xf32> to vector<8x32xf32>
    %498 = vector.extract_strided_slice %494 {offsets = [0, 64], sizes = [8, 32], strides = [1, 1]} : vector<8x128xf32> to vector<8x32xf32>
    %499 = arith.mulf %497, %498 : vector<8x32xf32>
    %500 = arith.addf %496, %499 : vector<8x32xf32>
    %501 = vector.extract_strided_slice %493 {offsets = [0, 96], sizes = [8, 32], strides = [1, 1]} : vector<8x128xf32> to vector<8x32xf32>
    %502 = math.tanh %500 : vector<8x32xf32>
    %503 = arith.mulf %501, %502 : vector<8x32xf32>
    %cst_199 = arith.constant dense<0.000000e+00> : vector<8x128xf32>
    %504 = tpu.matmul %503, %4, %cst_199 {dimension_numbers = #tpu.dot_dimension_numbers<[1], [0], [0], [1], [0, 0, 1, 1], [], []>} : vector<8x32xf32>, vector<32x128xf32>, vector<8x128xf32> -> vector<8x128xf32>
    %505 = arith.addf %504, %10 : vector<8x128xf32>
    %cst_200 = arith.constant dense<0xFF800000> : vector<8xf32>
    %506 = vector.multi_reduction <maximumf>, %505, %cst_200 [1] : vector<8x128xf32> to vector<8xf32>
    %507 = vector.shape_cast %506 : vector<8xf32> to vector<8x1xf32>
    %508 = vector.broadcast %507 : vector<8x1xf32> to vector<8x128xf32>
    %509 = arith.subf %505, %508 : vector<8x128xf32>
    %510 = math.exp %509 : vector<8x128xf32>
    %511 = arith.mulf %510, %11 : vector<8x128xf32>
    %cst_201 = arith.constant dense<0.000000e+00> : vector<8xf32>
    %512 = vector.multi_reduction <add>, %511, %cst_201 [1] : vector<8x128xf32> to vector<8xf32>
    %513 = vector.shape_cast %512 : vector<8xf32> to vector<8x1xf32>
    %cst_202 = arith.constant 1.000000e+00 : f32
    %514 = vector.broadcast %cst_202 : f32 to vector<8x1xf32>
    %515 = arith.divf %514, %513 : vector<8x1xf32>
    %516 = vector.broadcast %515 : vector<8x1xf32> to vector<8x128xf32>
    %517 = arith.mulf %511, %516 : vector<8x128xf32>
    %cst_203 = arith.constant dense<0.000000e+00> : vector<8x32xf32>
    %518 = tpu.matmul %503, %6, %cst_203 {dimension_numbers = #tpu.dot_dimension_numbers<[1], [0], [0], [1], [0, 0, 1, 1], [], []>} : vector<8x32xf32>, vector<32x32xf32>, vector<8x32xf32> -> vector<8x32xf32>
    %cst_204 = arith.constant dense<0.000000e+00> : vector<8x32xf32>
    %519 = tpu.matmul %517, %5, %cst_204 {dimension_numbers = #tpu.dot_dimension_numbers<[1], [0], [0], [1], [0, 0, 1, 1], [], []>} : vector<8x128xf32>, vector<128x32xf32>, vector<8x32xf32> -> vector<8x32xf32>
    %520 = arith.addf %518, %519 : vector<8x32xf32>
    %521 = vector.broadcast %7 : vector<1x32xf32> to vector<8x32xf32>
    %522 = arith.addf %520, %521 : vector<8x32xf32>
    %cst_205 = arith.constant dense<0.000000e+00> : vector<8x32xf32>
    %523 = tpu.matmul %517, %8, %cst_205 {dimension_numbers = #tpu.dot_dimension_numbers<[1], [0], [0], [1], [0, 0, 1, 1], [], []>} : vector<8x128xf32>, vector<128x32xf32>, vector<8x32xf32> -> vector<8x32xf32>
    %524 = arith.mulf %523, %523 : vector<8x32xf32>
    %cst_206 = arith.constant dense<0.000000e+00> : vector<8xf32>
    %525 = vector.multi_reduction <add>, %524, %cst_206 [1] : vector<8x32xf32> to vector<8xf32>
    %526 = vector.shape_cast %525 : vector<8xf32> to vector<8x1xf32>
    %527 = math.sqrt %526 : vector<8x1xf32>
    %528 = arith.mulf %522, %522 : vector<8x32xf32>
    %cst_207 = arith.constant dense<0.000000e+00> : vector<8xf32>
    %529 = vector.multi_reduction <add>, %528, %cst_207 [1] : vector<8x32xf32> to vector<8xf32>
    %530 = vector.shape_cast %529 : vector<8xf32> to vector<8x1xf32>
    %531 = math.sqrt %530 : vector<8x1xf32>
    %cst_208 = arith.constant 2.000000e-01 : f32
    %532 = vector.broadcast %cst_208 : f32 to vector<8x1xf32>
    %533 = arith.mulf %527, %532 : vector<8x1xf32>
    %534 = arith.minimumf %531, %533 : vector<8x1xf32>
    %cst_209 = arith.constant 9.99999996E-13 : f32
    %535 = vector.broadcast %cst_209 : f32 to vector<8x1xf32>
    %536 = arith.maximumf %531, %535 : vector<8x1xf32>
    %537 = vector.broadcast %536 : vector<8x1xf32> to vector<8x32xf32>
    %538 = arith.divf %522, %537 : vector<8x32xf32>
    %539 = vector.broadcast %534 : vector<8x1xf32> to vector<8x32xf32>
    %540 = arith.mulf %538, %539 : vector<8x32xf32>
    %541 = arith.addf %523, %540 : vector<8x32xf32>
    %cst_210 = arith.constant dense<0.000000e+00> : vector<8x32xf32>
    %542 = tpu.matmul %541, %12, %cst_210 {dimension_numbers = #tpu.dot_dimension_numbers<[1], [0], [0], [1], [0, 0, 1, 1], [], []>} : vector<8x32xf32>, vector<32x32xf32>, vector<8x32xf32> -> vector<8x32xf32>
    %cst_211 = arith.constant dense<0xFF800000> : vector<8xf32>
    %543 = vector.multi_reduction <maximumf>, %542, %cst_211 [1] : vector<8x32xf32> to vector<8xf32>
    %544 = vector.shape_cast %543 : vector<8xf32> to vector<8x1xf32>
    %545 = vector.broadcast %544 : vector<8x1xf32> to vector<8x32xf32>
    %546 = arith.subf %542, %545 : vector<8x32xf32>
    %547 = math.exp %546 : vector<8x32xf32>
    %cst_212 = arith.constant dense<0.000000e+00> : vector<8xf32>
    %548 = vector.multi_reduction <add>, %547, %cst_212 [1] : vector<8x32xf32> to vector<8xf32>
    %549 = vector.shape_cast %548 : vector<8xf32> to vector<8x1xf32>
    %550 = math.log %549 : vector<8x1xf32>
    %551 = vector.broadcast %550 : vector<8x1xf32> to vector<8x32xf32>
    %552 = arith.subf %546, %551 : vector<8x32xf32>
    %cst_213 = arith.constant dense<0xFF800000> : vector<8xf32>
    %553 = vector.multi_reduction <maximumf>, %552, %cst_213 [1] : vector<8x32xf32> to vector<8xf32>
    %554 = vector.shape_cast %553 : vector<8xf32> to vector<8x1xf32>
    %555 = vector.broadcast %554 : vector<8x1xf32> to vector<8x32xf32>
    %556 = arith.cmpf oeq, %552, %555 : vector<8x32xf32>
    %c32_i32_214 = arith.constant 32 : i32
    %557 = vector.broadcast %c32_i32_214 : i32 to vector<8x32xi32>
    %558 = arith.select %556, %13, %557 : vector<8x32xi1>, vector<8x32xi32>
    %cst_215 = arith.constant dense<2147483647> : vector<8xi32>
    %559 = vector.multi_reduction <minsi>, %558, %cst_215 [1] : vector<8x32xi32> to vector<8xi32>
    %560 = vector.shape_cast %559 : vector<8xi32> to vector<8x1xi32>
    %561 = vector.broadcast %560 : vector<8x1xi32> to vector<8x32xi32>
    %562 = arith.cmpi eq, %13, %561 : vector<8x32xi32>
    %563 = arith.extui %562 : vector<8x32xi1> to vector<8x32xi32>
    %564 = arith.sitofp %563 : vector<8x32xi32> to vector<8x32xf32>
    %c4 = arith.constant 4 : index
    %c0_216 = arith.constant 0 : index
    %c0_217 = arith.constant 0 : index
    %565 = vector.load %arg14[%c4, %c0_216, %c0_217] : memref<8x8x32xf32, #tpu.memory_space<vmem>>, vector<1x8x32xf32>
    %566 = vector.shape_cast %565 : vector<1x8x32xf32> to vector<8x32xf32>
    %567 = vector.shape_cast %552 : vector<8x32xf32> to vector<1x8x32xf32>
    tpu.vector_store %arg14[%c4, %c0_216, %c0_217], %567 {strides = array<i32>} : memref<8x8x32xf32, #tpu.memory_space<vmem>>, vector<1x8x32xf32>,
    %cst_218 = arith.constant dense<0.000000e+00> : vector<8x16xf32>
    %568 = tpu.matmul %517, %9, %cst_218 {dimension_numbers = #tpu.dot_dimension_numbers<[1], [0], [0], [1], [0, 0, 1, 1], [], []>} : vector<8x128xf32>, vector<128x16xf32>, vector<8x16xf32> -> vector<8x16xf32>
    %c4_219 = arith.constant 4 : index
    %c0_220 = arith.constant 0 : index
    %c0_221 = arith.constant 0 : index
    %569 = vector.load %arg15[%c4_219, %c0_220, %c0_221] : memref<8x8x16xf32, #tpu.memory_space<vmem>>, vector<1x8x16xf32>
    %570 = vector.shape_cast %569 : vector<1x8x16xf32> to vector<8x16xf32>
    %571 = vector.shape_cast %568 : vector<8x16xf32> to vector<1x8x16xf32>
    tpu.vector_store %arg15[%c4_219, %c0_220, %c0_221], %571 {strides = array<i32>} : memref<8x8x16xf32, #tpu.memory_space<vmem>>, vector<1x8x16xf32>,
    %c0_222 = arith.constant 0 : index
    %c0_223 = arith.constant 0 : index
    %572 = vector.load %arg16[%c0_222, %c0_223] : memref<8x64xf32, #tpu.memory_space<vmem>>, vector<8x32xf32>
    tpu.vector_store %arg16[%c0_222, %c0_223], %564 {strides = array<i32>} : memref<8x64xf32, #tpu.memory_space<vmem>>, vector<8x32xf32>,
    %c0_224 = arith.constant 0 : index
    %c32_225 = arith.constant 32 : index
    %573 = vector.load %arg16[%c0_224, %c32_225] : memref<8x64xf32, #tpu.memory_space<vmem>>, vector<8x32xf32>
    tpu.vector_store %arg16[%c0_224, %c32_225], %482 {strides = array<i32>} : memref<8x64xf32, #tpu.memory_space<vmem>>, vector<8x32xf32>,
    %c0_226 = arith.constant 0 : index
    %c0_227 = arith.constant 0 : index
    %574 = vector.load %arg16[%c0_226, %c0_227] : memref<8x64xf32, #tpu.memory_space<vmem>>, vector<8x64xf32>
    %cst_228 = arith.constant dense<0.000000e+00> : vector<8x128xf32>
    %575 = tpu.matmul %574, %0, %cst_228 {dimension_numbers = #tpu.dot_dimension_numbers<[1], [0], [0], [1], [0, 0, 1, 1], [], []>} : vector<8x64xf32>, vector<64x128xf32>, vector<8x128xf32> -> vector<8x128xf32>
    %576 = vector.broadcast %1 : vector<1x128xf32> to vector<8x128xf32>
    %577 = arith.addf %575, %576 : vector<8x128xf32>
    %578 = arith.negf %577 : vector<8x128xf32>
    %579 = math.exp %578 : vector<8x128xf32>
    %cst_229 = arith.constant 1.000000e+00 : f32
    %580 = vector.broadcast %cst_229 : f32 to vector<8x128xf32>
    %581 = arith.addf %580, %579 : vector<8x128xf32>
    %582 = arith.divf %580, %581 : vector<8x128xf32>
    %583 = math.tanh %577 : vector<8x128xf32>
    %584 = vector.extract_strided_slice %582 {offsets = [0, 32], sizes = [8, 32], strides = [1, 1]} : vector<8x128xf32> to vector<8x32xf32>
    %585 = arith.mulf %584, %479 : vector<8x32xf32>
    %586 = vector.extract_strided_slice %582 {offsets = [0, 0], sizes = [8, 32], strides = [1, 1]} : vector<8x128xf32> to vector<8x32xf32>
    %587 = vector.extract_strided_slice %583 {offsets = [0, 64], sizes = [8, 32], strides = [1, 1]} : vector<8x128xf32> to vector<8x32xf32>
    %588 = arith.mulf %586, %587 : vector<8x32xf32>
    %589 = arith.addf %585, %588 : vector<8x32xf32>
    %590 = vector.extract_strided_slice %582 {offsets = [0, 96], sizes = [8, 32], strides = [1, 1]} : vector<8x128xf32> to vector<8x32xf32>
    %591 = math.tanh %589 : vector<8x32xf32>
    %592 = arith.mulf %590, %591 : vector<8x32xf32>
    %c0_230 = arith.constant 0 : index
    %c0_231 = arith.constant 0 : index
    %593 = vector.load %arg16[%c0_230, %c0_231] : memref<8x64xf32, #tpu.memory_space<vmem>>, vector<8x32xf32>
    tpu.vector_store %arg16[%c0_230, %c0_231], %592 {strides = array<i32>} : memref<8x64xf32, #tpu.memory_space<vmem>>, vector<8x32xf32>,
    %c0_232 = arith.constant 0 : index
    %c32_233 = arith.constant 32 : index
    %594 = vector.load %arg16[%c0_232, %c32_233] : memref<8x64xf32, #tpu.memory_space<vmem>>, vector<8x32xf32>
    tpu.vector_store %arg16[%c0_232, %c32_233], %503 {strides = array<i32>} : memref<8x64xf32, #tpu.memory_space<vmem>>, vector<8x32xf32>,
    %c0_234 = arith.constant 0 : index
    %c0_235 = arith.constant 0 : index
    %595 = vector.load %arg16[%c0_234, %c0_235] : memref<8x64xf32, #tpu.memory_space<vmem>>, vector<8x64xf32>
    %cst_236 = arith.constant dense<0.000000e+00> : vector<8x128xf32>
    %596 = tpu.matmul %595, %2, %cst_236 {dimension_numbers = #tpu.dot_dimension_numbers<[1], [0], [0], [1], [0, 0, 1, 1], [], []>} : vector<8x64xf32>, vector<64x128xf32>, vector<8x128xf32> -> vector<8x128xf32>
    %597 = vector.broadcast %3 : vector<1x128xf32> to vector<8x128xf32>
    %598 = arith.addf %596, %597 : vector<8x128xf32>
    %599 = arith.negf %598 : vector<8x128xf32>
    %600 = math.exp %599 : vector<8x128xf32>
    %cst_237 = arith.constant 1.000000e+00 : f32
    %601 = vector.broadcast %cst_237 : f32 to vector<8x128xf32>
    %602 = arith.addf %601, %600 : vector<8x128xf32>
    %603 = arith.divf %601, %602 : vector<8x128xf32>
    %604 = math.tanh %598 : vector<8x128xf32>
    %605 = vector.extract_strided_slice %603 {offsets = [0, 32], sizes = [8, 32], strides = [1, 1]} : vector<8x128xf32> to vector<8x32xf32>
    %606 = arith.mulf %605, %500 : vector<8x32xf32>
    %607 = vector.extract_strided_slice %603 {offsets = [0, 0], sizes = [8, 32], strides = [1, 1]} : vector<8x128xf32> to vector<8x32xf32>
    %608 = vector.extract_strided_slice %604 {offsets = [0, 64], sizes = [8, 32], strides = [1, 1]} : vector<8x128xf32> to vector<8x32xf32>
    %609 = arith.mulf %607, %608 : vector<8x32xf32>
    %610 = arith.addf %606, %609 : vector<8x32xf32>
    %611 = vector.extract_strided_slice %603 {offsets = [0, 96], sizes = [8, 32], strides = [1, 1]} : vector<8x128xf32> to vector<8x32xf32>
    %612 = math.tanh %610 : vector<8x32xf32>
    %613 = arith.mulf %611, %612 : vector<8x32xf32>
    %cst_238 = arith.constant dense<0.000000e+00> : vector<8x128xf32>
    %614 = tpu.matmul %613, %4, %cst_238 {dimension_numbers = #tpu.dot_dimension_numbers<[1], [0], [0], [1], [0, 0, 1, 1], [], []>} : vector<8x32xf32>, vector<32x128xf32>, vector<8x128xf32> -> vector<8x128xf32>
    %615 = arith.addf %614, %10 : vector<8x128xf32>
    %cst_239 = arith.constant dense<0xFF800000> : vector<8xf32>
    %616 = vector.multi_reduction <maximumf>, %615, %cst_239 [1] : vector<8x128xf32> to vector<8xf32>
    %617 = vector.shape_cast %616 : vector<8xf32> to vector<8x1xf32>
    %618 = vector.broadcast %617 : vector<8x1xf32> to vector<8x128xf32>
    %619 = arith.subf %615, %618 : vector<8x128xf32>
    %620 = math.exp %619 : vector<8x128xf32>
    %621 = arith.mulf %620, %11 : vector<8x128xf32>
    %cst_240 = arith.constant dense<0.000000e+00> : vector<8xf32>
    %622 = vector.multi_reduction <add>, %621, %cst_240 [1] : vector<8x128xf32> to vector<8xf32>
    %623 = vector.shape_cast %622 : vector<8xf32> to vector<8x1xf32>
    %cst_241 = arith.constant 1.000000e+00 : f32
    %624 = vector.broadcast %cst_241 : f32 to vector<8x1xf32>
    %625 = arith.divf %624, %623 : vector<8x1xf32>
    %626 = vector.broadcast %625 : vector<8x1xf32> to vector<8x128xf32>
    %627 = arith.mulf %621, %626 : vector<8x128xf32>
    %cst_242 = arith.constant dense<0.000000e+00> : vector<8x32xf32>
    %628 = tpu.matmul %613, %6, %cst_242 {dimension_numbers = #tpu.dot_dimension_numbers<[1], [0], [0], [1], [0, 0, 1, 1], [], []>} : vector<8x32xf32>, vector<32x32xf32>, vector<8x32xf32> -> vector<8x32xf32>
    %cst_243 = arith.constant dense<0.000000e+00> : vector<8x32xf32>
    %629 = tpu.matmul %627, %5, %cst_243 {dimension_numbers = #tpu.dot_dimension_numbers<[1], [0], [0], [1], [0, 0, 1, 1], [], []>} : vector<8x128xf32>, vector<128x32xf32>, vector<8x32xf32> -> vector<8x32xf32>
    %630 = arith.addf %628, %629 : vector<8x32xf32>
    %631 = vector.broadcast %7 : vector<1x32xf32> to vector<8x32xf32>
    %632 = arith.addf %630, %631 : vector<8x32xf32>
    %cst_244 = arith.constant dense<0.000000e+00> : vector<8x32xf32>
    %633 = tpu.matmul %627, %8, %cst_244 {dimension_numbers = #tpu.dot_dimension_numbers<[1], [0], [0], [1], [0, 0, 1, 1], [], []>} : vector<8x128xf32>, vector<128x32xf32>, vector<8x32xf32> -> vector<8x32xf32>
    %634 = arith.mulf %633, %633 : vector<8x32xf32>
    %cst_245 = arith.constant dense<0.000000e+00> : vector<8xf32>
    %635 = vector.multi_reduction <add>, %634, %cst_245 [1] : vector<8x32xf32> to vector<8xf32>
    %636 = vector.shape_cast %635 : vector<8xf32> to vector<8x1xf32>
    %637 = math.sqrt %636 : vector<8x1xf32>
    %638 = arith.mulf %632, %632 : vector<8x32xf32>
    %cst_246 = arith.constant dense<0.000000e+00> : vector<8xf32>
    %639 = vector.multi_reduction <add>, %638, %cst_246 [1] : vector<8x32xf32> to vector<8xf32>
    %640 = vector.shape_cast %639 : vector<8xf32> to vector<8x1xf32>
    %641 = math.sqrt %640 : vector<8x1xf32>
    %cst_247 = arith.constant 2.000000e-01 : f32
    %642 = vector.broadcast %cst_247 : f32 to vector<8x1xf32>
    %643 = arith.mulf %637, %642 : vector<8x1xf32>
    %644 = arith.minimumf %641, %643 : vector<8x1xf32>
    %cst_248 = arith.constant 9.99999996E-13 : f32
    %645 = vector.broadcast %cst_248 : f32 to vector<8x1xf32>
    %646 = arith.maximumf %641, %645 : vector<8x1xf32>
    %647 = vector.broadcast %646 : vector<8x1xf32> to vector<8x32xf32>
    %648 = arith.divf %632, %647 : vector<8x32xf32>
    %649 = vector.broadcast %644 : vector<8x1xf32> to vector<8x32xf32>
    %650 = arith.mulf %648, %649 : vector<8x32xf32>
    %651 = arith.addf %633, %650 : vector<8x32xf32>
    %cst_249 = arith.constant dense<0.000000e+00> : vector<8x32xf32>
    %652 = tpu.matmul %651, %12, %cst_249 {dimension_numbers = #tpu.dot_dimension_numbers<[1], [0], [0], [1], [0, 0, 1, 1], [], []>} : vector<8x32xf32>, vector<32x32xf32>, vector<8x32xf32> -> vector<8x32xf32>
    %cst_250 = arith.constant dense<0xFF800000> : vector<8xf32>
    %653 = vector.multi_reduction <maximumf>, %652, %cst_250 [1] : vector<8x32xf32> to vector<8xf32>
    %654 = vector.shape_cast %653 : vector<8xf32> to vector<8x1xf32>
    %655 = vector.broadcast %654 : vector<8x1xf32> to vector<8x32xf32>
    %656 = arith.subf %652, %655 : vector<8x32xf32>
    %657 = math.exp %656 : vector<8x32xf32>
    %cst_251 = arith.constant dense<0.000000e+00> : vector<8xf32>
    %658 = vector.multi_reduction <add>, %657, %cst_251 [1] : vector<8x32xf32> to vector<8xf32>
    %659 = vector.shape_cast %658 : vector<8xf32> to vector<8x1xf32>
    %660 = math.log %659 : vector<8x1xf32>
    %661 = vector.broadcast %660 : vector<8x1xf32> to vector<8x32xf32>
    %662 = arith.subf %656, %661 : vector<8x32xf32>
    %cst_252 = arith.constant dense<0xFF800000> : vector<8xf32>
    %663 = vector.multi_reduction <maximumf>, %662, %cst_252 [1] : vector<8x32xf32> to vector<8xf32>
    %664 = vector.shape_cast %663 : vector<8xf32> to vector<8x1xf32>
    %665 = vector.broadcast %664 : vector<8x1xf32> to vector<8x32xf32>
    %666 = arith.cmpf oeq, %662, %665 : vector<8x32xf32>
    %c32_i32_253 = arith.constant 32 : i32
    %667 = vector.broadcast %c32_i32_253 : i32 to vector<8x32xi32>
    %668 = arith.select %666, %13, %667 : vector<8x32xi1>, vector<8x32xi32>
    %cst_254 = arith.constant dense<2147483647> : vector<8xi32>
    %669 = vector.multi_reduction <minsi>, %668, %cst_254 [1] : vector<8x32xi32> to vector<8xi32>
    %670 = vector.shape_cast %669 : vector<8xi32> to vector<8x1xi32>
    %671 = vector.broadcast %670 : vector<8x1xi32> to vector<8x32xi32>
    %672 = arith.cmpi eq, %13, %671 : vector<8x32xi32>
    %673 = arith.extui %672 : vector<8x32xi1> to vector<8x32xi32>
    %674 = arith.sitofp %673 : vector<8x32xi32> to vector<8x32xf32>
    %c5 = arith.constant 5 : index
    %c0_255 = arith.constant 0 : index
    %c0_256 = arith.constant 0 : index
    %675 = vector.load %arg14[%c5, %c0_255, %c0_256] : memref<8x8x32xf32, #tpu.memory_space<vmem>>, vector<1x8x32xf32>
    %676 = vector.shape_cast %675 : vector<1x8x32xf32> to vector<8x32xf32>
    %677 = vector.shape_cast %662 : vector<8x32xf32> to vector<1x8x32xf32>
    tpu.vector_store %arg14[%c5, %c0_255, %c0_256], %677 {strides = array<i32>} : memref<8x8x32xf32, #tpu.memory_space<vmem>>, vector<1x8x32xf32>,
    %cst_257 = arith.constant dense<0.000000e+00> : vector<8x16xf32>
    %678 = tpu.matmul %627, %9, %cst_257 {dimension_numbers = #tpu.dot_dimension_numbers<[1], [0], [0], [1], [0, 0, 1, 1], [], []>} : vector<8x128xf32>, vector<128x16xf32>, vector<8x16xf32> -> vector<8x16xf32>
    %c5_258 = arith.constant 5 : index
    %c0_259 = arith.constant 0 : index
    %c0_260 = arith.constant 0 : index
    %679 = vector.load %arg15[%c5_258, %c0_259, %c0_260] : memref<8x8x16xf32, #tpu.memory_space<vmem>>, vector<1x8x16xf32>
    %680 = vector.shape_cast %679 : vector<1x8x16xf32> to vector<8x16xf32>
    %681 = vector.shape_cast %678 : vector<8x16xf32> to vector<1x8x16xf32>
    tpu.vector_store %arg15[%c5_258, %c0_259, %c0_260], %681 {strides = array<i32>} : memref<8x8x16xf32, #tpu.memory_space<vmem>>, vector<1x8x16xf32>,
    %c0_261 = arith.constant 0 : index
    %c0_262 = arith.constant 0 : index
    %682 = vector.load %arg16[%c0_261, %c0_262] : memref<8x64xf32, #tpu.memory_space<vmem>>, vector<8x32xf32>
    tpu.vector_store %arg16[%c0_261, %c0_262], %674 {strides = array<i32>} : memref<8x64xf32, #tpu.memory_space<vmem>>, vector<8x32xf32>,
    %c0_263 = arith.constant 0 : index
    %c32_264 = arith.constant 32 : index
    %683 = vector.load %arg16[%c0_263, %c32_264] : memref<8x64xf32, #tpu.memory_space<vmem>>, vector<8x32xf32>
    tpu.vector_store %arg16[%c0_263, %c32_264], %592 {strides = array<i32>} : memref<8x64xf32, #tpu.memory_space<vmem>>, vector<8x32xf32>,
    %c0_265 = arith.constant 0 : index
    %c0_266 = arith.constant 0 : index
    %684 = vector.load %arg16[%c0_265, %c0_266] : memref<8x64xf32, #tpu.memory_space<vmem>>, vector<8x64xf32>
    %cst_267 = arith.constant dense<0.000000e+00> : vector<8x128xf32>
    %685 = tpu.matmul %684, %0, %cst_267 {dimension_numbers = #tpu.dot_dimension_numbers<[1], [0], [0], [1], [0, 0, 1, 1], [], []>} : vector<8x64xf32>, vector<64x128xf32>, vector<8x128xf32> -> vector<8x128xf32>
    %686 = vector.broadcast %1 : vector<1x128xf32> to vector<8x128xf32>
    %687 = arith.addf %685, %686 : vector<8x128xf32>
    %688 = arith.negf %687 : vector<8x128xf32>
    %689 = math.exp %688 : vector<8x128xf32>
    %cst_268 = arith.constant 1.000000e+00 : f32
    %690 = vector.broadcast %cst_268 : f32 to vector<8x128xf32>
    %691 = arith.addf %690, %689 : vector<8x128xf32>
    %692 = arith.divf %690, %691 : vector<8x128xf32>
    %693 = math.tanh %687 : vector<8x128xf32>
    %694 = vector.extract_strided_slice %692 {offsets = [0, 32], sizes = [8, 32], strides = [1, 1]} : vector<8x128xf32> to vector<8x32xf32>
    %695 = arith.mulf %694, %589 : vector<8x32xf32>
    %696 = vector.extract_strided_slice %692 {offsets = [0, 0], sizes = [8, 32], strides = [1, 1]} : vector<8x128xf32> to vector<8x32xf32>
    %697 = vector.extract_strided_slice %693 {offsets = [0, 64], sizes = [8, 32], strides = [1, 1]} : vector<8x128xf32> to vector<8x32xf32>
    %698 = arith.mulf %696, %697 : vector<8x32xf32>
    %699 = arith.addf %695, %698 : vector<8x32xf32>
    %700 = vector.extract_strided_slice %692 {offsets = [0, 96], sizes = [8, 32], strides = [1, 1]} : vector<8x128xf32> to vector<8x32xf32>
    %701 = math.tanh %699 : vector<8x32xf32>
    %702 = arith.mulf %700, %701 : vector<8x32xf32>
    %c0_269 = arith.constant 0 : index
    %c0_270 = arith.constant 0 : index
    %703 = vector.load %arg16[%c0_269, %c0_270] : memref<8x64xf32, #tpu.memory_space<vmem>>, vector<8x32xf32>
    tpu.vector_store %arg16[%c0_269, %c0_270], %702 {strides = array<i32>} : memref<8x64xf32, #tpu.memory_space<vmem>>, vector<8x32xf32>,
    %c0_271 = arith.constant 0 : index
    %c32_272 = arith.constant 32 : index
    %704 = vector.load %arg16[%c0_271, %c32_272] : memref<8x64xf32, #tpu.memory_space<vmem>>, vector<8x32xf32>
    tpu.vector_store %arg16[%c0_271, %c32_272], %613 {strides = array<i32>} : memref<8x64xf32, #tpu.memory_space<vmem>>, vector<8x32xf32>,
    %c0_273 = arith.constant 0 : index
    %c0_274 = arith.constant 0 : index
    %705 = vector.load %arg16[%c0_273, %c0_274] : memref<8x64xf32, #tpu.memory_space<vmem>>, vector<8x64xf32>
    %cst_275 = arith.constant dense<0.000000e+00> : vector<8x128xf32>
    %706 = tpu.matmul %705, %2, %cst_275 {dimension_numbers = #tpu.dot_dimension_numbers<[1], [0], [0], [1], [0, 0, 1, 1], [], []>} : vector<8x64xf32>, vector<64x128xf32>, vector<8x128xf32> -> vector<8x128xf32>
    %707 = vector.broadcast %3 : vector<1x128xf32> to vector<8x128xf32>
    %708 = arith.addf %706, %707 : vector<8x128xf32>
    %709 = arith.negf %708 : vector<8x128xf32>
    %710 = math.exp %709 : vector<8x128xf32>
    %cst_276 = arith.constant 1.000000e+00 : f32
    %711 = vector.broadcast %cst_276 : f32 to vector<8x128xf32>
    %712 = arith.addf %711, %710 : vector<8x128xf32>
    %713 = arith.divf %711, %712 : vector<8x128xf32>
    %714 = math.tanh %708 : vector<8x128xf32>
    %715 = vector.extract_strided_slice %713 {offsets = [0, 32], sizes = [8, 32], strides = [1, 1]} : vector<8x128xf32> to vector<8x32xf32>
    %716 = arith.mulf %715, %610 : vector<8x32xf32>
    %717 = vector.extract_strided_slice %713 {offsets = [0, 0], sizes = [8, 32], strides = [1, 1]} : vector<8x128xf32> to vector<8x32xf32>
    %718 = vector.extract_strided_slice %714 {offsets = [0, 64], sizes = [8, 32], strides = [1, 1]} : vector<8x128xf32> to vector<8x32xf32>
    %719 = arith.mulf %717, %718 : vector<8x32xf32>
    %720 = arith.addf %716, %719 : vector<8x32xf32>
    %721 = vector.extract_strided_slice %713 {offsets = [0, 96], sizes = [8, 32], strides = [1, 1]} : vector<8x128xf32> to vector<8x32xf32>
    %722 = math.tanh %720 : vector<8x32xf32>
    %723 = arith.mulf %721, %722 : vector<8x32xf32>
    %cst_277 = arith.constant dense<0.000000e+00> : vector<8x128xf32>
    %724 = tpu.matmul %723, %4, %cst_277 {dimension_numbers = #tpu.dot_dimension_numbers<[1], [0], [0], [1], [0, 0, 1, 1], [], []>} : vector<8x32xf32>, vector<32x128xf32>, vector<8x128xf32> -> vector<8x128xf32>
    %725 = arith.addf %724, %10 : vector<8x128xf32>
    %cst_278 = arith.constant dense<0xFF800000> : vector<8xf32>
    %726 = vector.multi_reduction <maximumf>, %725, %cst_278 [1] : vector<8x128xf32> to vector<8xf32>
    %727 = vector.shape_cast %726 : vector<8xf32> to vector<8x1xf32>
    %728 = vector.broadcast %727 : vector<8x1xf32> to vector<8x128xf32>
    %729 = arith.subf %725, %728 : vector<8x128xf32>
    %730 = math.exp %729 : vector<8x128xf32>
    %731 = arith.mulf %730, %11 : vector<8x128xf32>
    %cst_279 = arith.constant dense<0.000000e+00> : vector<8xf32>
    %732 = vector.multi_reduction <add>, %731, %cst_279 [1] : vector<8x128xf32> to vector<8xf32>
    %733 = vector.shape_cast %732 : vector<8xf32> to vector<8x1xf32>
    %cst_280 = arith.constant 1.000000e+00 : f32
    %734 = vector.broadcast %cst_280 : f32 to vector<8x1xf32>
    %735 = arith.divf %734, %733 : vector<8x1xf32>
    %736 = vector.broadcast %735 : vector<8x1xf32> to vector<8x128xf32>
    %737 = arith.mulf %731, %736 : vector<8x128xf32>
    %cst_281 = arith.constant dense<0.000000e+00> : vector<8x32xf32>
    %738 = tpu.matmul %723, %6, %cst_281 {dimension_numbers = #tpu.dot_dimension_numbers<[1], [0], [0], [1], [0, 0, 1, 1], [], []>} : vector<8x32xf32>, vector<32x32xf32>, vector<8x32xf32> -> vector<8x32xf32>
    %cst_282 = arith.constant dense<0.000000e+00> : vector<8x32xf32>
    %739 = tpu.matmul %737, %5, %cst_282 {dimension_numbers = #tpu.dot_dimension_numbers<[1], [0], [0], [1], [0, 0, 1, 1], [], []>} : vector<8x128xf32>, vector<128x32xf32>, vector<8x32xf32> -> vector<8x32xf32>
    %740 = arith.addf %738, %739 : vector<8x32xf32>
    %741 = vector.broadcast %7 : vector<1x32xf32> to vector<8x32xf32>
    %742 = arith.addf %740, %741 : vector<8x32xf32>
    %cst_283 = arith.constant dense<0.000000e+00> : vector<8x32xf32>
    %743 = tpu.matmul %737, %8, %cst_283 {dimension_numbers = #tpu.dot_dimension_numbers<[1], [0], [0], [1], [0, 0, 1, 1], [], []>} : vector<8x128xf32>, vector<128x32xf32>, vector<8x32xf32> -> vector<8x32xf32>
    %744 = arith.mulf %743, %743 : vector<8x32xf32>
    %cst_284 = arith.constant dense<0.000000e+00> : vector<8xf32>
    %745 = vector.multi_reduction <add>, %744, %cst_284 [1] : vector<8x32xf32> to vector<8xf32>
    %746 = vector.shape_cast %745 : vector<8xf32> to vector<8x1xf32>
    %747 = math.sqrt %746 : vector<8x1xf32>
    %748 = arith.mulf %742, %742 : vector<8x32xf32>
    %cst_285 = arith.constant dense<0.000000e+00> : vector<8xf32>
    %749 = vector.multi_reduction <add>, %748, %cst_285 [1] : vector<8x32xf32> to vector<8xf32>
    %750 = vector.shape_cast %749 : vector<8xf32> to vector<8x1xf32>
    %751 = math.sqrt %750 : vector<8x1xf32>
    %cst_286 = arith.constant 2.000000e-01 : f32
    %752 = vector.broadcast %cst_286 : f32 to vector<8x1xf32>
    %753 = arith.mulf %747, %752 : vector<8x1xf32>
    %754 = arith.minimumf %751, %753 : vector<8x1xf32>
    %cst_287 = arith.constant 9.99999996E-13 : f32
    %755 = vector.broadcast %cst_287 : f32 to vector<8x1xf32>
    %756 = arith.maximumf %751, %755 : vector<8x1xf32>
    %757 = vector.broadcast %756 : vector<8x1xf32> to vector<8x32xf32>
    %758 = arith.divf %742, %757 : vector<8x32xf32>
    %759 = vector.broadcast %754 : vector<8x1xf32> to vector<8x32xf32>
    %760 = arith.mulf %758, %759 : vector<8x32xf32>
    %761 = arith.addf %743, %760 : vector<8x32xf32>
    %cst_288 = arith.constant dense<0.000000e+00> : vector<8x32xf32>
    %762 = tpu.matmul %761, %12, %cst_288 {dimension_numbers = #tpu.dot_dimension_numbers<[1], [0], [0], [1], [0, 0, 1, 1], [], []>} : vector<8x32xf32>, vector<32x32xf32>, vector<8x32xf32> -> vector<8x32xf32>
    %cst_289 = arith.constant dense<0xFF800000> : vector<8xf32>
    %763 = vector.multi_reduction <maximumf>, %762, %cst_289 [1] : vector<8x32xf32> to vector<8xf32>
    %764 = vector.shape_cast %763 : vector<8xf32> to vector<8x1xf32>
    %765 = vector.broadcast %764 : vector<8x1xf32> to vector<8x32xf32>
    %766 = arith.subf %762, %765 : vector<8x32xf32>
    %767 = math.exp %766 : vector<8x32xf32>
    %cst_290 = arith.constant dense<0.000000e+00> : vector<8xf32>
    %768 = vector.multi_reduction <add>, %767, %cst_290 [1] : vector<8x32xf32> to vector<8xf32>
    %769 = vector.shape_cast %768 : vector<8xf32> to vector<8x1xf32>
    %770 = math.log %769 : vector<8x1xf32>
    %771 = vector.broadcast %770 : vector<8x1xf32> to vector<8x32xf32>
    %772 = arith.subf %766, %771 : vector<8x32xf32>
    %cst_291 = arith.constant dense<0xFF800000> : vector<8xf32>
    %773 = vector.multi_reduction <maximumf>, %772, %cst_291 [1] : vector<8x32xf32> to vector<8xf32>
    %774 = vector.shape_cast %773 : vector<8xf32> to vector<8x1xf32>
    %775 = vector.broadcast %774 : vector<8x1xf32> to vector<8x32xf32>
    %776 = arith.cmpf oeq, %772, %775 : vector<8x32xf32>
    %c32_i32_292 = arith.constant 32 : i32
    %777 = vector.broadcast %c32_i32_292 : i32 to vector<8x32xi32>
    %778 = arith.select %776, %13, %777 : vector<8x32xi1>, vector<8x32xi32>
    %cst_293 = arith.constant dense<2147483647> : vector<8xi32>
    %779 = vector.multi_reduction <minsi>, %778, %cst_293 [1] : vector<8x32xi32> to vector<8xi32>
    %780 = vector.shape_cast %779 : vector<8xi32> to vector<8x1xi32>
    %781 = vector.broadcast %780 : vector<8x1xi32> to vector<8x32xi32>
    %782 = arith.cmpi eq, %13, %781 : vector<8x32xi32>
    %783 = arith.extui %782 : vector<8x32xi1> to vector<8x32xi32>
    %784 = arith.sitofp %783 : vector<8x32xi32> to vector<8x32xf32>
    %c6 = arith.constant 6 : index
    %c0_294 = arith.constant 0 : index
    %c0_295 = arith.constant 0 : index
    %785 = vector.load %arg14[%c6, %c0_294, %c0_295] : memref<8x8x32xf32, #tpu.memory_space<vmem>>, vector<1x8x32xf32>
    %786 = vector.shape_cast %785 : vector<1x8x32xf32> to vector<8x32xf32>
    %787 = vector.shape_cast %772 : vector<8x32xf32> to vector<1x8x32xf32>
    tpu.vector_store %arg14[%c6, %c0_294, %c0_295], %787 {strides = array<i32>} : memref<8x8x32xf32, #tpu.memory_space<vmem>>, vector<1x8x32xf32>,
    %cst_296 = arith.constant dense<0.000000e+00> : vector<8x16xf32>
    %788 = tpu.matmul %737, %9, %cst_296 {dimension_numbers = #tpu.dot_dimension_numbers<[1], [0], [0], [1], [0, 0, 1, 1], [], []>} : vector<8x128xf32>, vector<128x16xf32>, vector<8x16xf32> -> vector<8x16xf32>
    %c6_297 = arith.constant 6 : index
    %c0_298 = arith.constant 0 : index
    %c0_299 = arith.constant 0 : index
    %789 = vector.load %arg15[%c6_297, %c0_298, %c0_299] : memref<8x8x16xf32, #tpu.memory_space<vmem>>, vector<1x8x16xf32>
    %790 = vector.shape_cast %789 : vector<1x8x16xf32> to vector<8x16xf32>
    %791 = vector.shape_cast %788 : vector<8x16xf32> to vector<1x8x16xf32>
    tpu.vector_store %arg15[%c6_297, %c0_298, %c0_299], %791 {strides = array<i32>} : memref<8x8x16xf32, #tpu.memory_space<vmem>>, vector<1x8x16xf32>,
    %c0_300 = arith.constant 0 : index
    %c0_301 = arith.constant 0 : index
    %792 = vector.load %arg16[%c0_300, %c0_301] : memref<8x64xf32, #tpu.memory_space<vmem>>, vector<8x32xf32>
    tpu.vector_store %arg16[%c0_300, %c0_301], %784 {strides = array<i32>} : memref<8x64xf32, #tpu.memory_space<vmem>>, vector<8x32xf32>,
    %c0_302 = arith.constant 0 : index
    %c32_303 = arith.constant 32 : index
    %793 = vector.load %arg16[%c0_302, %c32_303] : memref<8x64xf32, #tpu.memory_space<vmem>>, vector<8x32xf32>
    tpu.vector_store %arg16[%c0_302, %c32_303], %702 {strides = array<i32>} : memref<8x64xf32, #tpu.memory_space<vmem>>, vector<8x32xf32>,
    %c0_304 = arith.constant 0 : index
    %c0_305 = arith.constant 0 : index
    %794 = vector.load %arg16[%c0_304, %c0_305] : memref<8x64xf32, #tpu.memory_space<vmem>>, vector<8x64xf32>
    %cst_306 = arith.constant dense<0.000000e+00> : vector<8x128xf32>
    %795 = tpu.matmul %794, %0, %cst_306 {dimension_numbers = #tpu.dot_dimension_numbers<[1], [0], [0], [1], [0, 0, 1, 1], [], []>} : vector<8x64xf32>, vector<64x128xf32>, vector<8x128xf32> -> vector<8x128xf32>
    %796 = vector.broadcast %1 : vector<1x128xf32> to vector<8x128xf32>
    %797 = arith.addf %795, %796 : vector<8x128xf32>
    %798 = arith.negf %797 : vector<8x128xf32>
    %799 = math.exp %798 : vector<8x128xf32>
    %cst_307 = arith.constant 1.000000e+00 : f32
    %800 = vector.broadcast %cst_307 : f32 to vector<8x128xf32>
    %801 = arith.addf %800, %799 : vector<8x128xf32>
    %802 = arith.divf %800, %801 : vector<8x128xf32>
    %803 = math.tanh %797 : vector<8x128xf32>
    %804 = vector.extract_strided_slice %802 {offsets = [0, 32], sizes = [8, 32], strides = [1, 1]} : vector<8x128xf32> to vector<8x32xf32>
    %805 = arith.mulf %804, %699 : vector<8x32xf32>
    %806 = vector.extract_strided_slice %802 {offsets = [0, 0], sizes = [8, 32], strides = [1, 1]} : vector<8x128xf32> to vector<8x32xf32>
    %807 = vector.extract_strided_slice %803 {offsets = [0, 64], sizes = [8, 32], strides = [1, 1]} : vector<8x128xf32> to vector<8x32xf32>
    %808 = arith.mulf %806, %807 : vector<8x32xf32>
    %809 = arith.addf %805, %808 : vector<8x32xf32>
    %810 = vector.extract_strided_slice %802 {offsets = [0, 96], sizes = [8, 32], strides = [1, 1]} : vector<8x128xf32> to vector<8x32xf32>
    %811 = math.tanh %809 : vector<8x32xf32>
    %812 = arith.mulf %810, %811 : vector<8x32xf32>
    %c0_308 = arith.constant 0 : index
    %c0_309 = arith.constant 0 : index
    %813 = vector.load %arg16[%c0_308, %c0_309] : memref<8x64xf32, #tpu.memory_space<vmem>>, vector<8x32xf32>
    tpu.vector_store %arg16[%c0_308, %c0_309], %812 {strides = array<i32>} : memref<8x64xf32, #tpu.memory_space<vmem>>, vector<8x32xf32>,
    %c0_310 = arith.constant 0 : index
    %c32_311 = arith.constant 32 : index
    %814 = vector.load %arg16[%c0_310, %c32_311] : memref<8x64xf32, #tpu.memory_space<vmem>>, vector<8x32xf32>
    tpu.vector_store %arg16[%c0_310, %c32_311], %723 {strides = array<i32>} : memref<8x64xf32, #tpu.memory_space<vmem>>, vector<8x32xf32>,
    %c0_312 = arith.constant 0 : index
    %c0_313 = arith.constant 0 : index
    %815 = vector.load %arg16[%c0_312, %c0_313] : memref<8x64xf32, #tpu.memory_space<vmem>>, vector<8x64xf32>
    %cst_314 = arith.constant dense<0.000000e+00> : vector<8x128xf32>
    %816 = tpu.matmul %815, %2, %cst_314 {dimension_numbers = #tpu.dot_dimension_numbers<[1], [0], [0], [1], [0, 0, 1, 1], [], []>} : vector<8x64xf32>, vector<64x128xf32>, vector<8x128xf32> -> vector<8x128xf32>
    %817 = vector.broadcast %3 : vector<1x128xf32> to vector<8x128xf32>
    %818 = arith.addf %816, %817 : vector<8x128xf32>
    %819 = arith.negf %818 : vector<8x128xf32>
    %820 = math.exp %819 : vector<8x128xf32>
    %cst_315 = arith.constant 1.000000e+00 : f32
    %821 = vector.broadcast %cst_315 : f32 to vector<8x128xf32>
    %822 = arith.addf %821, %820 : vector<8x128xf32>
    %823 = arith.divf %821, %822 : vector<8x128xf32>
    %824 = math.tanh %818 : vector<8x128xf32>
    %825 = vector.extract_strided_slice %823 {offsets = [0, 32], sizes = [8, 32], strides = [1, 1]} : vector<8x128xf32> to vector<8x32xf32>
    %826 = arith.mulf %825, %720 : vector<8x32xf32>
    %827 = vector.extract_strided_slice %823 {offsets = [0, 0], sizes = [8, 32], strides = [1, 1]} : vector<8x128xf32> to vector<8x32xf32>
    %828 = vector.extract_strided_slice %824 {offsets = [0, 64], sizes = [8, 32], strides = [1, 1]} : vector<8x128xf32> to vector<8x32xf32>
    %829 = arith.mulf %827, %828 : vector<8x32xf32>
    %830 = arith.addf %826, %829 : vector<8x32xf32>
    %831 = vector.extract_strided_slice %823 {offsets = [0, 96], sizes = [8, 32], strides = [1, 1]} : vector<8x128xf32> to vector<8x32xf32>
    %832 = math.tanh %830 : vector<8x32xf32>
    %833 = arith.mulf %831, %832 : vector<8x32xf32>
    %cst_316 = arith.constant dense<0.000000e+00> : vector<8x128xf32>
    %834 = tpu.matmul %833, %4, %cst_316 {dimension_numbers = #tpu.dot_dimension_numbers<[1], [0], [0], [1], [0, 0, 1, 1], [], []>} : vector<8x32xf32>, vector<32x128xf32>, vector<8x128xf32> -> vector<8x128xf32>
    %835 = arith.addf %834, %10 : vector<8x128xf32>
    %cst_317 = arith.constant dense<0xFF800000> : vector<8xf32>
    %836 = vector.multi_reduction <maximumf>, %835, %cst_317 [1] : vector<8x128xf32> to vector<8xf32>
    %837 = vector.shape_cast %836 : vector<8xf32> to vector<8x1xf32>
    %838 = vector.broadcast %837 : vector<8x1xf32> to vector<8x128xf32>
    %839 = arith.subf %835, %838 : vector<8x128xf32>
    %840 = math.exp %839 : vector<8x128xf32>
    %841 = arith.mulf %840, %11 : vector<8x128xf32>
    %cst_318 = arith.constant dense<0.000000e+00> : vector<8xf32>
    %842 = vector.multi_reduction <add>, %841, %cst_318 [1] : vector<8x128xf32> to vector<8xf32>
    %843 = vector.shape_cast %842 : vector<8xf32> to vector<8x1xf32>
    %cst_319 = arith.constant 1.000000e+00 : f32
    %844 = vector.broadcast %cst_319 : f32 to vector<8x1xf32>
    %845 = arith.divf %844, %843 : vector<8x1xf32>
    %846 = vector.broadcast %845 : vector<8x1xf32> to vector<8x128xf32>
    %847 = arith.mulf %841, %846 : vector<8x128xf32>
    %cst_320 = arith.constant dense<0.000000e+00> : vector<8x32xf32>
    %848 = tpu.matmul %833, %6, %cst_320 {dimension_numbers = #tpu.dot_dimension_numbers<[1], [0], [0], [1], [0, 0, 1, 1], [], []>} : vector<8x32xf32>, vector<32x32xf32>, vector<8x32xf32> -> vector<8x32xf32>
    %cst_321 = arith.constant dense<0.000000e+00> : vector<8x32xf32>
    %849 = tpu.matmul %847, %5, %cst_321 {dimension_numbers = #tpu.dot_dimension_numbers<[1], [0], [0], [1], [0, 0, 1, 1], [], []>} : vector<8x128xf32>, vector<128x32xf32>, vector<8x32xf32> -> vector<8x32xf32>
    %850 = arith.addf %848, %849 : vector<8x32xf32>
    %851 = vector.broadcast %7 : vector<1x32xf32> to vector<8x32xf32>
    %852 = arith.addf %850, %851 : vector<8x32xf32>
    %cst_322 = arith.constant dense<0.000000e+00> : vector<8x32xf32>
    %853 = tpu.matmul %847, %8, %cst_322 {dimension_numbers = #tpu.dot_dimension_numbers<[1], [0], [0], [1], [0, 0, 1, 1], [], []>} : vector<8x128xf32>, vector<128x32xf32>, vector<8x32xf32> -> vector<8x32xf32>
    %854 = arith.mulf %853, %853 : vector<8x32xf32>
    %cst_323 = arith.constant dense<0.000000e+00> : vector<8xf32>
    %855 = vector.multi_reduction <add>, %854, %cst_323 [1] : vector<8x32xf32> to vector<8xf32>
    %856 = vector.shape_cast %855 : vector<8xf32> to vector<8x1xf32>
    %857 = math.sqrt %856 : vector<8x1xf32>
    %858 = arith.mulf %852, %852 : vector<8x32xf32>
    %cst_324 = arith.constant dense<0.000000e+00> : vector<8xf32>
    %859 = vector.multi_reduction <add>, %858, %cst_324 [1] : vector<8x32xf32> to vector<8xf32>
    %860 = vector.shape_cast %859 : vector<8xf32> to vector<8x1xf32>
    %861 = math.sqrt %860 : vector<8x1xf32>
    %cst_325 = arith.constant 2.000000e-01 : f32
    %862 = vector.broadcast %cst_325 : f32 to vector<8x1xf32>
    %863 = arith.mulf %857, %862 : vector<8x1xf32>
    %864 = arith.minimumf %861, %863 : vector<8x1xf32>
    %cst_326 = arith.constant 9.99999996E-13 : f32
    %865 = vector.broadcast %cst_326 : f32 to vector<8x1xf32>
    %866 = arith.maximumf %861, %865 : vector<8x1xf32>
    %867 = vector.broadcast %866 : vector<8x1xf32> to vector<8x32xf32>
    %868 = arith.divf %852, %867 : vector<8x32xf32>
    %869 = vector.broadcast %864 : vector<8x1xf32> to vector<8x32xf32>
    %870 = arith.mulf %868, %869 : vector<8x32xf32>
    %871 = arith.addf %853, %870 : vector<8x32xf32>
    %cst_327 = arith.constant dense<0.000000e+00> : vector<8x32xf32>
    %872 = tpu.matmul %871, %12, %cst_327 {dimension_numbers = #tpu.dot_dimension_numbers<[1], [0], [0], [1], [0, 0, 1, 1], [], []>} : vector<8x32xf32>, vector<32x32xf32>, vector<8x32xf32> -> vector<8x32xf32>
    %cst_328 = arith.constant dense<0xFF800000> : vector<8xf32>
    %873 = vector.multi_reduction <maximumf>, %872, %cst_328 [1] : vector<8x32xf32> to vector<8xf32>
    %874 = vector.shape_cast %873 : vector<8xf32> to vector<8x1xf32>
    %875 = vector.broadcast %874 : vector<8x1xf32> to vector<8x32xf32>
    %876 = arith.subf %872, %875 : vector<8x32xf32>
    %877 = math.exp %876 : vector<8x32xf32>
    %cst_329 = arith.constant dense<0.000000e+00> : vector<8xf32>
    %878 = vector.multi_reduction <add>, %877, %cst_329 [1] : vector<8x32xf32> to vector<8xf32>
    %879 = vector.shape_cast %878 : vector<8xf32> to vector<8x1xf32>
    %880 = math.log %879 : vector<8x1xf32>
    %881 = vector.broadcast %880 : vector<8x1xf32> to vector<8x32xf32>
    %882 = arith.subf %876, %881 : vector<8x32xf32>
    %c7 = arith.constant 7 : index
    %c0_330 = arith.constant 0 : index
    %c0_331 = arith.constant 0 : index
    %883 = vector.load %arg14[%c7, %c0_330, %c0_331] : memref<8x8x32xf32, #tpu.memory_space<vmem>>, vector<1x8x32xf32>
    %884 = vector.shape_cast %883 : vector<1x8x32xf32> to vector<8x32xf32>
    %885 = vector.shape_cast %882 : vector<8x32xf32> to vector<1x8x32xf32>
    tpu.vector_store %arg14[%c7, %c0_330, %c0_331], %885 {strides = array<i32>} : memref<8x8x32xf32, #tpu.memory_space<vmem>>, vector<1x8x32xf32>,
    %cst_332 = arith.constant dense<0.000000e+00> : vector<8x16xf32>
    %886 = tpu.matmul %847, %9, %cst_332 {dimension_numbers = #tpu.dot_dimension_numbers<[1], [0], [0], [1], [0, 0, 1, 1], [], []>} : vector<8x128xf32>, vector<128x16xf32>, vector<8x16xf32> -> vector<8x16xf32>
    %c7_333 = arith.constant 7 : index
    %c0_334 = arith.constant 0 : index
    %c0_335 = arith.constant 0 : index
    %887 = vector.load %arg15[%c7_333, %c0_334, %c0_335] : memref<8x8x16xf32, #tpu.memory_space<vmem>>, vector<1x8x16xf32>
    %888 = vector.shape_cast %887 : vector<1x8x16xf32> to vector<8x16xf32>
    %889 = vector.shape_cast %886 : vector<8x16xf32> to vector<1x8x16xf32>
    tpu.vector_store %arg15[%c7_333, %c0_334, %c0_335], %889 {strides = array<i32>} : memref<8x8x16xf32, #tpu.memory_space<vmem>>, vector<1x8x16xf32>,
    return
  }
  func.func @transform_0(%arg0: i32) -> (i32, i32) {
    %c0_i32 = arith.constant 0 : i32
    %c0_i32_0 = arith.constant 0 : i32
    %c0_i32_1 = arith.constant 0 : i32
    return %c0_i32, %c0_i32_0 : i32, i32
  }
  func.func @transform_1(%arg0: i32) -> (i32, i32) {
    %c0_i32 = arith.constant 0 : i32
    %c0_i32_0 = arith.constant 0 : i32
    %c0_i32_1 = arith.constant 0 : i32
    return %c0_i32, %c0_i32_0 : i32, i32
  }
  func.func @transform_2(%arg0: i32) -> (i32, i32) {
    %c0_i32 = arith.constant 0 : i32
    %c0_i32_0 = arith.constant 0 : i32
    %c0_i32_1 = arith.constant 0 : i32
    return %c0_i32, %c0_i32_0 : i32, i32
  }
  func.func @transform_3(%arg0: i32) -> (i32, i32) {
    %c0_i32 = arith.constant 0 : i32
    %c0_i32_0 = arith.constant 0 : i32
    %c0_i32_1 = arith.constant 0 : i32
    return %c0_i32, %c0_i32_0 : i32, i32
  }
  func.func @transform_4(%arg0: i32) -> (i32, i32) {
    %c0_i32 = arith.constant 0 : i32
    %c0_i32_0 = arith.constant 0 : i32
    %c0_i32_1 = arith.constant 0 : i32
    return %c0_i32, %c0_i32_0 : i32, i32
  }
  func.func @transform_5(%arg0: i32) -> (i32, i32) {
    %c0_i32 = arith.constant 0 : i32
    %c0_i32_0 = arith.constant 0 : i32
    %c0_i32_1 = arith.constant 0 : i32
    return %c0_i32, %c0_i32_0 : i32, i32
  }
  func.func @transform_6(%arg0: i32) -> (i32, i32) {
    %c0_i32 = arith.constant 0 : i32
    %c0_i32_0 = arith.constant 0 : i32
    %c0_i32_1 = arith.constant 0 : i32
    return %c0_i32, %c0_i32_0 : i32, i32
  }
  func.func @transform_7(%arg0: i32) -> (i32, i32) {
    %c0_i32 = arith.constant 0 : i32
    %c0_i32_0 = arith.constant 0 : i32
    %c0_i32_1 = arith.constant 0 : i32
    return %c0_i32, %c0_i32_0 : i32, i32
  }
  func.func @transform_8(%arg0: i32) -> (i32, i32) {
    %c0_i32 = arith.constant 0 : i32
    %c0_i32_0 = arith.constant 0 : i32
    %c0_i32_1 = arith.constant 0 : i32
    return %c0_i32, %c0_i32_0 : i32, i32
  }
  func.func @transform_9(%arg0: i32) -> (i32, i32) {
    %c0_i32 = arith.constant 0 : i32
    %c0_i32_0 = arith.constant 0 : i32
    %c0_i32_1 = arith.constant 0 : i32
    return %c0_i32, %c0_i32_0 : i32, i32
  }
  func.func @transform_10(%arg0: i32) -> (i32, i32) {
    %c0_i32 = arith.constant 0 : i32
    %c0_i32_0 = arith.constant 0 : i32
    %c0_i32_1 = arith.constant 0 : i32
    return %c0_i32, %c0_i32_0 : i32, i32
  }
  func.func @transform_11(%arg0: i32) -> (i32, i32) {
    %c0_i32 = arith.constant 0 : i32
    %c0_i32_0 = arith.constant 0 : i32
    %c0_i32_1 = arith.constant 0 : i32
    return %c0_i32, %c0_i32_0 : i32, i32
  }
  func.func @transform_12(%arg0: i32) -> (i32, i32) {
    %c0_i32 = arith.constant 0 : i32
    %c0_i32_0 = arith.constant 0 : i32
    %c0_i32_1 = arith.constant 0 : i32
    return %c0_i32, %c0_i32_0 : i32, i32
  }
  func.func @transform_13(%arg0: i32) -> (i32, i32, i32) {
    %c0_i32 = arith.constant 0 : i32
    %c0_i32_0 = arith.constant 0 : i32
    %c0_i32_1 = arith.constant 0 : i32
    %c0_i32_2 = arith.constant 0 : i32
    return %c0_i32, %c0_i32_0, %c0_i32_1 : i32, i32, i32
  }
  func.func @transform_14(%arg0: i32) -> (i32, i32, i32) {
    %c0_i32 = arith.constant 0 : i32
    %c0_i32_0 = arith.constant 0 : i32
    %c0_i32_1 = arith.constant 0 : i32
    %c0_i32_2 = arith.constant 0 : i32
    return %c0_i32, %c0_i32_0, %c0_i32_1 : i32, i32, i32
  }
}

</mosaic_0001>

<llo_original>
// kernel: tpu_custom_call.1
$region0: #{tpu_custom_call.1}
  #allocation0 [shape = 'u32[]', space=smem, size = 0x4, offset = 0x4, fixed_abs, tag = 'smem constant byte address 0x4 - core index']
  #allocation1 [shape = 'u32[144,128]{1,0:T(1,128)}', space=vmem, size = 0x12000, scoped, tag = 'internal scratch']
  #allocation2 [shape = 'f32[8,64]{1,0:T(8,128)}', space=vmem, size = 0x1000, scoped, tag = 'scratch operand']
  %s0 = inlined_call_operand.vmem [shape: f32[64,128], index: 0, kind: input, shape index: {}]
  %s1 = inlined_call_operand.vmem [shape: f32[1,128], index: 1, kind: input, shape index: {}]
  %s2 = inlined_call_operand.vmem [shape: f32[64,128], index: 2, kind: input, shape index: {}]
  %s3 = inlined_call_operand.vmem [shape: f32[1,128], index: 3, kind: input, shape index: {}]
  %s4 = inlined_call_operand.vmem [shape: f32[32,128], index: 4, kind: input, shape index: {}]
  %s5 = inlined_call_operand.vmem [shape: f32[128,32], index: 5, kind: input, shape index: {}]
  %s6 = inlined_call_operand.vmem [shape: f32[32,32], index: 6, kind: input, shape index: {}]
  %s7 = inlined_call_operand.vmem [shape: f32[1,32], index: 7, kind: input, shape index: {}]
  %s8 = inlined_call_operand.vmem [shape: f32[128,32], index: 8, kind: input, shape index: {}]
  %s9 = inlined_call_operand.vmem [shape: f32[128,16], index: 9, kind: input, shape index: {}]
  %s10 = inlined_call_operand.vmem [shape: f32[8,128], index: 10, kind: input, shape index: {}]
  %s11 = inlined_call_operand.vmem [shape: f32[8,128], index: 11, kind: input, shape index: {}]
  %s12 = inlined_call_operand.vmem [shape: f32[32,32], index: 12, kind: input, shape index: {}]
  %s13 = inlined_call_operand.hbm [shape: f32[8,8,32], index: 13, kind: output, shape index: {0}]
  %s14 = inlined_call_operand.hbm [shape: f32[8,8,16], index: 14, kind: output, shape index: {1}]
  %15 = xla_tuple %s13, %s14
  %s16 = sld [smem:[#allocation0]]
  $region70: #{tpu_custom_call.1} parent=0
    _
  %s18 = ssub.s32 1, %s16
  %s19 = scalar_select 0, %s18, %s16
  $region1: #{tpu_custom_call.1} parent=0
    #allocation3 [shape = 'u8[32768]{0}', space=vmem, size = 0x8000, scoped, tag = 'output window, operand 0, single buffered']
    #allocation4 [shape = 's32[1]{0}', space=sflag, size = 0x4, scoped, tag = 'scoped memory for tpu_custom_call.1']
    #allocation5 [shape = 'u8[32768]{0}', space=vmem, size = 0x8000, scoped, tag = 'output window, operand 1, single buffered']
    #allocation6 [shape = 's32[1]{0}', space=sflag, size = 0x4, scoped, tag = 'scoped memory for tpu_custom_call.1']
    %20 = vsyncpa [#allocation4], 0
    %21 = vsyncpa [#allocation6], 0
    // Predicated region
    $region2: #{tpu_custom_call.1} parent=1 // pred_check
      _
    $region3: #{tpu_custom_call.1} parent=1 // pred_check_branch
      %23 = sbr.rel (0) target = $region5
    $region4: #{tpu_custom_call.1} parent=1 // pred_region
      _
    $region5: #{tpu_custom_call.1} parent=1 // pred_fallthru
      _
    // Predicated region
    $region6: #{tpu_custom_call.1} parent=1 // pred_check
      _
    $region7: #{tpu_custom_call.1} parent=1 // pred_check_branch
      %25 = sbr.rel (0) target = $region9
    $region8: #{tpu_custom_call.1} parent=1 // pred_region
      _
    $region9: #{tpu_custom_call.1} parent=1 // pred_fallthru
      _
    // Predicated region
    $region10: #{tpu_custom_call.1} parent=1 // pred_check
      _
    $region11: #{tpu_custom_call.1} parent=1 // pred_check_branch
      %27 = sbr.rel (0) target = $region13
    $region12: #{tpu_custom_call.1} parent=1 // pred_region
      _
    $region13: #{tpu_custom_call.1} parent=1 // pred_fallthru
      _
    // Predicated region
    $region14: #{tpu_custom_call.1} parent=1 // pred_check
      _
    $region15: #{tpu_custom_call.1} parent=1 // pred_check_branch
      %29 = sbr.rel (0) target = $region17
    $region16: #{tpu_custom_call.1} parent=1 // pred_region
      _
    $region17: #{tpu_custom_call.1} parent=1 // pred_fallthru
      _
    // Predicated region
    $region18: #{tpu_custom_call.1} parent=1 // pred_check
      _
    $region19: #{tpu_custom_call.1} parent=1 // pred_check_branch
      %31 = sbr.rel (0) target = $region21
    $region20: #{tpu_custom_call.1} parent=1 // pred_region
      _
    $region21: #{tpu_custom_call.1} parent=1 // pred_fallthru
      _
    // Predicated region
    $region22: #{tpu_custom_call.1} parent=1 // pred_check
      _
    $region23: #{tpu_custom_call.1} parent=1 // pred_check_branch
      %33 = sbr.rel (0) target = $region25
    $region24: #{tpu_custom_call.1} parent=1 // pred_region
      _
    $region25: #{tpu_custom_call.1} parent=1 // pred_fallthru
      _
    // Predicated region
    $region26: #{tpu_custom_call.1} parent=1 // pred_check
      _
    $region27: #{tpu_custom_call.1} parent=1 // pred_check_branch
      %35 = sbr.rel (0) target = $region29
    $region28: #{tpu_custom_call.1} parent=1 // pred_region
      _
    $region29: #{tpu_custom_call.1} parent=1 // pred_fallthru
      _
    // Predicated region
    $region30: #{tpu_custom_call.1} parent=1 // pred_check
      _
    $region31: #{tpu_custom_call.1} parent=1 // pred_check_branch
      %37 = sbr.rel (0) target = $region33
    $region32: #{tpu_custom_call.1} parent=1 // pred_region
      _
    $region33: #{tpu_custom_call.1} parent=1 // pred_fallthru
      _
    // Predicated region
    $region34: #{tpu_custom_call.1} parent=1 // pred_check
      _
    $region35: #{tpu_custom_call.1} parent=1 // pred_check_branch
      %39 = sbr.rel (0) target = $region37
    $region36: #{tpu_custom_call.1} parent=1 // pred_region
      _
    $region37: #{tpu_custom_call.1} parent=1 // pred_fallthru
      _
    // Predicated region
    $region38: #{tpu_custom_call.1} parent=1 // pred_check
      _
    $region39: #{tpu_custom_call.1} parent=1 // pred_check_branch
      %41 = sbr.rel (0) target = $region41
    $region40: #{tpu_custom_call.1} parent=1 // pred_region
      _
    $region41: #{tpu_custom_call.1} parent=1 // pred_fallthru
      _
    // Predicated region
    $region42: #{tpu_custom_call.1} parent=1 // pred_check
      _
    $region43: #{tpu_custom_call.1} parent=1 // pred_check_branch
      %43 = sbr.rel (0) target = $region45
    $region44: #{tpu_custom_call.1} parent=1 // pred_region
      _
    $region45: #{tpu_custom_call.1} parent=1 // pred_fallthru
      _
    // Predicated region
    $region46: #{tpu_custom_call.1} parent=1 // pred_check
      _
    $region47: #{tpu_custom_call.1} parent=1 // pred_check_branch
      %45 = sbr.rel (0) target = $region49
    $region48: #{tpu_custom_call.1} parent=1 // pred_region
      _
    $region49: #{tpu_custom_call.1} parent=1 // pred_fallthru
      _
    // Predicated region
    $region50: #{tpu_custom_call.1} parent=1 // pred_check
      _
    $region51: #{tpu_custom_call.1} parent=1 // pred_check_branch
      %47 = sbr.rel (0) target = $region53
    $region52: #{tpu_custom_call.1} parent=1 // pred_region
      _
    $region53: #{tpu_custom_call.1} parent=1 // pred_fallthru
      _
    %v48 = vld [vmem:[%s0] sm:$0xff]
    %v49 = vld [vmem:[%s0 + $0x8] sm:$0xff]
    %v50 = vld [vmem:[%s0 + $0x10] sm:$0xff]
    %v51 = vld [vmem:[%s0 + $0x18] sm:$0xff]
    %v52 = vld [vmem:[%s0 + $0x20] sm:$0xff]
    %v53 = vld [vmem:[%s0 + $0x28] sm:$0xff]
    %v54 = vld [vmem:[%s0 + $0x30] sm:$0xff]
    %v55 = vld [vmem:[%s0 + $0x38] sm:$0xff]
    %v56 = vld [vmem:[%s1] sm:$0x1]
    %v57 = vld [vmem:[%s2] sm:$0xff]
    %v58 = vld [vmem:[%s2 + $0x8] sm:$0xff]
    %v59 = vld [vmem:[%s2 + $0x10] sm:$0xff]
    %v60 = vld [vmem:[%s2 + $0x18] sm:$0xff]
    %v61 = vld [vmem:[%s2 + $0x20] sm:$0xff]
    %v62 = vld [vmem:[%s2 + $0x28] sm:$0xff]
    %v63 = vld [vmem:[%s2 + $0x30] sm:$0xff]
    %v64 = vld [vmem:[%s2 + $0x38] sm:$0xff]
    %v65 = vld [vmem:[%s3] sm:$0x1]
    %v66 = vld [vmem:[%s4] sm:$0xff]
    %v67 = vld [vmem:[%s4 + $0x8] sm:$0xff]
    %v68 = vld [vmem:[%s4 + $0x10] sm:$0xff]
    %v69 = vld [vmem:[%s4 + $0x18] sm:$0xff]
    %v70 = vld [vmem:[%s5] sm:$0xff]
    %v71 = vld [vmem:[%s5 + $0x8] sm:$0xff]
    %v72 = vld [vmem:[%s5 + $0x10] sm:$0xff]
    %v73 = vld [vmem:[%s5 + $0x18] sm:$0xff]
    %v74 = vld [vmem:[%s5 + $0x20] sm:$0xff]
    %v75 = vld [vmem:[%s5 + $0x28] sm:$0xff]
    %v76 = vld [vmem:[%s5 + $0x30] sm:$0xff]
    %v77 = vld [vmem:[%s5 + $0x38] sm:$0xff]
    %v78 = vld [vmem:[%s5 + $0x40] sm:$0xff]
    %v79 = vld [vmem:[%s5 + $0x48] sm:$0xff]
    %v80 = vld [vmem:[%s5 + $0x50] sm:$0xff]
    %v81 = vld [vmem:[%s5 + $0x58] sm:$0xff]
    %v82 = vld [vmem:[%s5 + $0x60] sm:$0xff]
    %v83 = vld [vmem:[%s5 + $0x68] sm:$0xff]
    %v84 = vld [vmem:[%s5 + $0x70] sm:$0xff]
    %v85 = vld [vmem:[%s5 + $0x78] sm:$0xff]
    %v86 = vld [vmem:[%s6] sm:$0xff]
    %v87 = vld [vmem:[%s6 + $0x8] sm:$0xff]
    %v88 = vld [vmem:[%s6 + $0x10] sm:$0xff]
    %v89 = vld [vmem:[%s6 + $0x18] sm:$0xff]
    %v90 = vld [vmem:[%s7] sm:$0x1]
    %v91 = vld [vmem:[%s8] sm:$0xff]
    %v92 = vld [vmem:[%s8 + $0x8] sm:$0xff]
    %v93 = vld [vmem:[%s8 + $0x10] sm:$0xff]
    %v94 = vld [vmem:[%s8 + $0x18] sm:$0xff]
    %v95 = vld [vmem:[%s8 + $0x20] sm:$0xff]
    %v96 = vld [vmem:[%s8 + $0x28] sm:$0xff]
    %v97 = vld [vmem:[%s8 + $0x30] sm:$0xff]
    %v98 = vld [vmem:[%s8 + $0x38] sm:$0xff]
    %v99 = vld [vmem:[%s8 + $0x40] sm:$0xff]
    %v100 = vld [vmem:[%s8 + $0x48] sm:$0xff]
    %v101 = vld [vmem:[%s8 + $0x50] sm:$0xff]
    %v102 = vld [vmem:[%s8 + $0x58] sm:$0xff]
    %v103 = vld [vmem:[%s8 + $0x60] sm:$0xff]
    %v104 = vld [vmem:[%s8 + $0x68] sm:$0xff]
    %v105 = vld [vmem:[%s8 + $0x70] sm:$0xff]
    %v106 = vld [vmem:[%s8 + $0x78] sm:$0xff]
    %v107 = vld [vmem:[%s9] sm:$0xff]
    %v108 = vld [vmem:[%s9 + $0x8] sm:$0xff]
    %v109 = vld [vmem:[%s9 + $0x10] sm:$0xff]
    %v110 = vld [vmem:[%s9 + $0x18] sm:$0xff]
    %v111 = vld [vmem:[%s9 + $0x20] sm:$0xff]
    %v112 = vld [vmem:[%s9 + $0x28] sm:$0xff]
    %v113 = vld [vmem:[%s9 + $0x30] sm:$0xff]
    %v114 = vld [vmem:[%s9 + $0x38] sm:$0xff]
    %v115 = vld [vmem:[%s9 + $0x40] sm:$0xff]
    %v116 = vld [vmem:[%s9 + $0x48] sm:$0xff]
    %v117 = vld [vmem:[%s9 + $0x50] sm:$0xff]
    %v118 = vld [vmem:[%s9 + $0x58] sm:$0xff]
    %v119 = vld [vmem:[%s9 + $0x60] sm:$0xff]
    %v120 = vld [vmem:[%s9 + $0x68] sm:$0xff]
    %v121 = vld [vmem:[%s9 + $0x70] sm:$0xff]
    %v122 = vld [vmem:[%s9 + $0x78] sm:$0xff]
    %v123 = vld [vmem:[%s10] sm:$0xff]
    %v124 = vld [vmem:[%s11] sm:$0xff]
    %v125 = vld [vmem:[%s12] sm:$0xff]
    %v126 = vld [vmem:[%s12 + $0x8] sm:$0xff]
    %v127 = vld [vmem:[%s12 + $0x10] sm:$0xff]
    %v128 = vld [vmem:[%s12 + $0x18] sm:$0xff]
    %v129 = vlaneseq
    %v130 = vand.u32 %v129, 127
    %vm131 = vcmp.eq.s32.totalorder %v130, 1
    %v132 = vsel %vm131, 1, 0
    %v133 = vcvt.s32.f32 %v132
    %vm134 = vcmask 261120
    %135 = vst.msk [vmem:[#allocation2] sm:$0xff] %vm134, %v133
    %vm136 = vcmask 523520
    %137 = vst.msk [vmem:[#allocation2] sm:$0xff] %vm136, 0.0
    %v138 = vld [vmem:[#allocation2] sm:$0xff]
    %v140 = vlaneseq
    %v141 = vshrl.u32 %v140, 7
    %v142 = vsub.s32 0, %v141
    %v143 = vrot.slane %v56, %v142
    %vm145 = vcmask 523264
    %v147 = vsel %vm145, %v138, 0
    %149 = vmatprep.subr.mxu0 0.0
    %150 = vmatpush1.msra.mxu0 %v48
    %151 = vmatprep.subr.mxu0 0.0
    %152 = vmatpush1.msra.mxu0 %v49
    %153 = vmatprep.subr.mxu0 0.0
    %154 = vmatpush1.msra.mxu0 %v50
    %155 = vmatprep.subr.mxu0 0.0
    %156 = vmatpush1.msra.mxu0 %v51
    %157 = vmatprep.subr.mxu0 0.0
    %158 = vmatpush1.msra.mxu0 %v52
    %159 = vmatprep.subr.mxu0 0.0
    %160 = vmatpush1.msra.mxu0 %v53
    %161 = vmatprep.subr.mxu0 0.0
    %162 = vmatpush1.msra.mxu0 %v54
    %163 = vmatprep.subr.mxu0 0.0
    %164 = vmatpush1.msra.mxu0 %v55
    %165 = vmatprep.subr.mxu0 0.0
    %166 = vmatpush1.msra.mxu0 0.0
    %167 = vmatprep.subr.mxu0 0.0
    %168 = vmatpush1.msra.mxu0 0.0
    %169 = vmatprep.subr.mxu0 0.0
    %170 = vmatpush1.msra.mxu0 0.0
    %171 = vmatprep.subr.mxu0 0.0
    %172 = vmatpush1.msra.mxu0 0.0
    %173 = vmatprep.subr.mxu0 0.0
    %174 = vmatpush1.msra.mxu0 0.0
    %175 = vmatprep.subr.mxu0 0.0
    %176 = vmatpush1.msra.mxu0 0.0
    %177 = vmatprep.subr.mxu0 0.0
    %178 = vmatpush1.msra.mxu0 0.0
    %179 = vmatprep.subr.mxu0 0.0
    %180 = vmatpush1.msra.mxu0 0.0
    %181 = vmatprep.subr.mxu0 0.0
    %182 = vmatpush1.msra.mxu0 0.0
    %183 = vmatprep.subr.mxu0 0.0
    %184 = vmatpush1.msra.mxu0 0.0
    %185 = vmatprep.subr.mxu0 0.0
    %186 = vmatpush1.msra.mxu0 0.0
    %187 = vmatprep.subr.mxu0 0.0
    %188 = vmatpush1.msra.mxu0 0.0
    %189 = vmatprep.subr.mxu0 0.0
    %190 = vmatpush1.msra.mxu0 0.0
    %191 = vmatprep.subr.mxu0 0.0
    %192 = vmatpush1.msra.mxu0 0.0
    %193 = vmatprep.subr.mxu0 0.0
    %194 = vmatpush1.msra.mxu0 0.0
    %195 = vmatprep.subr.mxu0 0.0
    %196 = vmatpush1.msra.mxu0 0.0
    %197 = vmatprep.subr.mxu0 0.0
    %198 = vmatpush1.msra.mxu0 0.0
    %199 = vmatprep.subr.mxu0 0.0
    %200 = vmatpush1.msra.mxu0 0.0
    %201 = vmatprep.subr.mxu0 0.0
    %202 = vmatpush1.msra.mxu0 0.0
    %203 = vmatprep.subr.mxu0 0.0
    %204 = vmatpush1.msra.mxu0 0.0
    %205 = vmatprep.subr.mxu0 0.0
    %206 = vmatpush1.msra.mxu0 0.0
    %207 = vmatprep.subr.mxu0 0.0
    %208 = vmatpush1.msra.mxu0 0.0
    %209 = vmatprep.subr.mxu0 0.0
    %210 = vmatpush1.msra.mxu0 0.0
    %211 = vmatprep.subr.mxu0 0.0
    %212 = vmatpush1.msra.mxu0 0.0
    %213 = vmatprep.mubr.f32.mxu0 0.0
    %214 = vmatmul.mubr.f32.gmra.mrb[0].mxu0 %v147
    %v215 = vpop.f32.mrb[0].mxu0
    %v216 = vadd.f32 %v143, %v215
    %v217 = vpop.f32.mrb[0].mxu0
    %218 = vdwg.mxu0
    %v219 = vxor.u32 %v216, 2147483648
    %v220 = vmul.f32 %v219, 1.442695
    %v221 = vpow.pop %v220
    %v222 = vadd.f32 %v221, 1.0
    %v223 = vrcp.pop %v222
    %v224 = vmul.f32 1.0, %v223
    %v225 = vtanh.pop %v216
    %v226 = vmul.f32 %v224, 0.0
    %228 = vrot.lane.b32.xlu0 %v225, 64
    %v229 = vpop.permute.xlu0 %228
    %v231 = vmul.f32 %v224, %v229
    %233 = vrot.lane.b32.xlu0 %v231, 32
    %v234 = vpop.permute.xlu0 %233
    %v236 = vadd.f32 %v226, %v234
    %v237 = vtanh.pop %v236
    %239 = vrot.lane.b32.xlu0 %v237, 64
    %v240 = vpop.permute.xlu0 %239
    %v242 = vmul.f32 %v224, %v240
    %244 = vrot.lane.b32.xlu0 %v242, 32
    %v245 = vpop.permute.xlu0 %244
    %247 = vst.msk [vmem:[#allocation2] sm:$0xff] %vm134, %v245
    %248 = vst.msk [vmem:[#allocation2] sm:$0xff] %vm136, 0.0
    %v249 = vld [vmem:[#allocation2] sm:$0xff]
    %v251 = vlaneseq
    %v252 = vshrl.u32 %v251, 7
    %v253 = vsub.s32 0, %v252
    %v254 = vrot.slane %v65, %v253
    %v257 = vsel %vm145, %v249, 0
    %259 = vmatprep.subr.mxu0 0.0
    %260 = vmatpush1.msra.mxu0 %v57
    %261 = vmatprep.subr.mxu0 0.0
    %262 = vmatpush1.msra.mxu0 %v58
    %263 = vmatprep.subr.mxu0 0.0
    %264 = vmatpush1.msra.mxu0 %v59
    %265 = vmatprep.subr.mxu0 0.0
    %266 = vmatpush1.msra.mxu0 %v60
    %267 = vmatprep.subr.mxu0 0.0
    %268 = vmatpush1.msra.mxu0 %v61
    %269 = vmatprep.subr.mxu0 0.0
    %270 = vmatpush1.msra.mxu0 %v62
    %271 = vmatprep.subr.mxu0 0.0
    %272 = vmatpush1.msra.mxu0 %v63
    %273 = vmatprep.subr.mxu0 0.0
    %274 = vmatpush1.msra.mxu0 %v64
    %275 = vmatprep.subr.mxu0 0.0
    %276 = vmatpush1.msra.mxu0 0.0
    %277 = vmatprep.subr.mxu0 0.0
    %278 = vmatpush1.msra.mxu0 0.0
    %279 = vmatprep.subr.mxu0 0.0
    %280 = vmatpush1.msra.mxu0 0.0
    %281 = vmatprep.subr.mxu0 0.0
    %282 = vmatpush1.msra.mxu0 0.0
    %283 = vmatprep.subr.mxu0 0.0
    %284 = vmatpush1.msra.mxu0 0.0
    %285 = vmatprep.subr.mxu0 0.0
    %286 = vmatpush1.msra.mxu0 0.0
    %287 = vmatprep.subr.mxu0 0.0
    %288 = vmatpush1.msra.mxu0 0.0
    %289 = vmatprep.subr.mxu0 0.0
    %290 = vmatpush1.msra.mxu0 0.0
    %291 = vmatprep.subr.mxu0 0.0
    %292 = vmatpush1.msra.mxu0 0.0
    %293 = vmatprep.subr.mxu0 0.0
    %294 = vmatpush1.msra.mxu0 0.0
    %295 = vmatprep.subr.mxu0 0.0
    %296 = vmatpush1.msra.mxu0 0.0
    %297 = vmatprep.subr.mxu0 0.0
    %298 = vmatpush1.msra.mxu0 0.0
    %299 = vmatprep.subr.mxu0 0.0
    %300 = vmatpush1.msra.mxu0 0.0
    %301 = vmatprep.subr.mxu0 0.0
    %302 = vmatpush1.msra.mxu0 0.0
    %303 = vmatprep.subr.mxu0 0.0
    %304 = vmatpush1.msra.mxu0 0.0
    %305 = vmatprep.subr.mxu0 0.0
    %306 = vmatpush1.msra.mxu0 0.0
    %307 = vmatprep.subr.mxu0 0.0
    %308 = vmatpush1.msra.mxu0 0.0
    %309 = vmatprep.subr.mxu0 0.0
    %310 = vmatpush1.msra.mxu0 0.0
    %311 = vmatprep.subr.mxu0 0.0
    %312 = vmatpush1.msra.mxu0 0.0
    %313 = vmatprep.subr.mxu0 0.0
    %314 = vmatpush1.msra.mxu0 0.0
    %315 = vmatprep.subr.mxu0 0.0
    %316 = vmatpush1.msra.mxu0 0.0
    %317 = vmatprep.subr.mxu0 0.0
    %318 = vmatpush1.msra.mxu0 0.0
    %319 = vmatprep.subr.mxu0 0.0
    %320 = vmatpush1.msra.mxu0 0.0
    %321 = vmatprep.subr.mxu0 0.0
    %322 = vmatpush1.msra.mxu0 0.0
    %323 = vmatprep.mubr.f32.mxu0 0.0
    %324 = vmatmul.mubr.f32.gmra.mrb[0].mxu0 %v257
    %v325 = vpop.f32.mrb[0].mxu0
    %v326 = vadd.f32 %v254, %v325
    %v327 = vpop.f32.mrb[0].mxu0
    %328 = vdwg.mxu0
    %v329 = vxor.u32 %v326, 2147483648
    %v330 = vmul.f32 %v329, 1.442695
    %v331 = vpow.pop %v330
    %v332 = vadd.f32 %v331, 1.0
    %v333 = vrcp.pop %v332
    %v334 = vmul.f32 1.0, %v333
    %v335 = vtanh.pop %v326
    %v336 = vmul.f32 %v334, 0.0
    %338 = vrot.lane.b32.xlu0 %v335, 64
    %v339 = vpop.permute.xlu0 %338
    %v341 = vmul.f32 %v334, %v339
    %343 = vrot.lane.b32.xlu0 %v341, 32
    %v344 = vpop.permute.xlu0 %343
    %v346 = vadd.f32 %v336, %v344
    %v347 = vtanh.pop %v346
    %349 = vrot.lane.b32.xlu0 %v347, 64
    %v350 = vpop.permute.xlu0 %349
    %v352 = vmul.f32 %v334, %v350
    %354 = vrot.lane.b32.xlu0 %v352, 32
    %v355 = vpop.permute.xlu0 %354
    %v356 = vsel %vm134, %v355, 0
    %358 = vmatprep.subr.mxu0 0.0
    %359 = vmatpush1.msra.mxu0 %v66
    %360 = vmatprep.subr.mxu0 0.0
    %361 = vmatpush1.msra.mxu0 %v67
    %362 = vmatprep.subr.mxu0 0.0
    %363 = vmatpush1.msra.mxu0 %v68
    %364 = vmatprep.subr.mxu0 0.0
    %365 = vmatpush1.msra.mxu0 %v69
    %366 = vmatprep.subr.mxu0 0.0
    %367 = vmatpush1.msra.mxu0 0.0
    %368 = vmatprep.subr.mxu0 0.0
    %369 = vmatpush1.msra.mxu0 0.0
    %370 = vmatprep.subr.mxu0 0.0
    %371 = vmatpush1.msra.mxu0 0.0
    %372 = vmatprep.subr.mxu0 0.0
    %373 = vmatpush1.msra.mxu0 0.0
    %374 = vmatprep.subr.mxu0 0.0
    %375 = vmatpush1.msra.mxu0 0.0
    %376 = vmatprep.subr.mxu0 0.0
    %377 = vmatpush1.msra.mxu0 0.0
    %378 = vmatprep.subr.mxu0 0.0
    %379 = vmatpush1.msra.mxu0 0.0
    %380 = vmatprep.subr.mxu0 0.0
    %381 = vmatpush1.msra.mxu0 0.0
    %382 = vmatprep.subr.mxu0 0.0
    %383 = vmatpush1.msra.mxu0 0.0
    %384 = vmatprep.subr.mxu0 0.0
    %385 = vmatpush1.msra.mxu0 0.0
    %386 = vmatprep.subr.mxu0 0.0
    %387 = vmatpush1.msra.mxu0 0.0
    %388 = vmatprep.subr.mxu0 0.0
    %389 = vmatpush1.msra.mxu0 0.0
    %390 = vmatprep.subr.mxu0 0.0
    %391 = vmatpush1.msra.mxu0 0.0
    %392 = vmatprep.subr.mxu0 0.0
    %393 = vmatpush1.msra.mxu0 0.0
    %394 = vmatprep.subr.mxu0 0.0
    %395 = vmatpush1.msra.mxu0 0.0
    %396 = vmatprep.subr.mxu0 0.0
    %397 = vmatpush1.msra.mxu0 0.0
    %398 = vmatprep.subr.mxu0 0.0
    %399 = vmatpush1.msra.mxu0 0.0
    %400 = vmatprep.subr.mxu0 0.0
    %401 = vmatpush1.msra.mxu0 0.0
    %402 = vmatprep.subr.mxu0 0.0
    %403 = vmatpush1.msra.mxu0 0.0
    %404 = vmatprep.subr.mxu0 0.0
    %405 = vmatpush1.msra.mxu0 0.0
    %406 = vmatprep.subr.mxu0 0.0
    %407 = vmatpush1.msra.mxu0 0.0
    %408 = vmatprep.subr.mxu0 0.0
    %409 = vmatpush1.msra.mxu0 0.0
    %410 = vmatprep.subr.mxu0 0.0
    %411 = vmatpush1.msra.mxu0 0.0
    %412 = vmatprep.subr.mxu0 0.0
    %413 = vmatpush1.msra.mxu0 0.0
    %414 = vmatprep.subr.mxu0 0.0
    %415 = vmatpush1.msra.mxu0 0.0
    %416 = vmatprep.subr.mxu0 0.0
    %417 = vmatpush1.msra.mxu0 0.0
    %418 = vmatprep.subr.mxu0 0.0
    %419 = vmatpush1.msra.mxu0 0.0
    %420 = vmatprep.subr.mxu0 0.0
    %421 = vmatpush1.msra.mxu0 0.0
    %422 = vmatprep.mubr.f32.mxu0 0.0
    %423 = vmatmul.mubr.f32.gmra.mrb[0].mxu0 %v356
    %v424 = vpop.f32.mrb[0].mxu0
    %v425 = vadd.f32 %v123, %v424
    %v426 = vpop.f32.mrb[0].mxu0
    %427 = vdwg.mxu0
    %428 = vmax.xlane.f32.xlu0 %v425
    %v429 = vpop.xlane.xlu0 %428
    %v430 = vsub.f32 %v425, %v429
    %v431 = vmul.f32 %v430, 1.442695
    %v432 = vpow.pop %v431
    %v433 = vmul.f32 %v432, %v124
    %434 = vadd.xlane.f32.xlu0 %v433
    %v435 = vpop.xlane.xlu0 %434
    %v436 = vrcp.pop %v435
    %v437 = vmul.f32 1.0, %v436
    %v438 = vmul.f32 %v433, %v437
    %439 = vmatprep.subr.mxu0 0.0
    %440 = vmatpush1.msra.mxu0 %v70
    %441 = vmatprep.subr.mxu0 0.0
    %442 = vmatpush1.msra.mxu0 %v71
    %443 = vmatprep.subr.mxu0 0.0
    %444 = vmatpush1.msra.mxu0 %v72
    %445 = vmatprep.subr.mxu0 0.0
    %446 = vmatpush1.msra.mxu0 %v73
    %447 = vmatprep.subr.mxu0 0.0
    %448 = vmatpush1.msra.mxu0 %v74
    %449 = vmatprep.subr.mxu0 0.0
    %450 = vmatpush1.msra.mxu0 %v75
    %451 = vmatprep.subr.mxu0 0.0
    %452 = vmatpush1.msra.mxu0 %v76
    %453 = vmatprep.subr.mxu0 0.0
    %454 = vmatpush1.msra.mxu0 %v77
    %455 = vmatprep.subr.mxu0 0.0
    %456 = vmatpush1.msra.mxu0 %v78
    %457 = vmatprep.subr.mxu0 0.0
    %458 = vmatpush1.msra.mxu0 %v79
    %459 = vmatprep.subr.mxu0 0.0
    %460 = vmatpush1.msra.mxu0 %v80
    %461 = vmatprep.subr.mxu0 0.0
    %462 = vmatpush1.msra.mxu0 %v81
    %463 = vmatprep.subr.mxu0 0.0
    %464 = vmatpush1.msra.mxu0 %v82
    %465 = vmatprep.subr.mxu0 0.0
    %466 = vmatpush1.msra.mxu0 %v83
    %467 = vmatprep.subr.mxu0 0.0
    %468 = vmatpush1.msra.mxu0 %v84
    %469 = vmatprep.subr.mxu0 0.0
    %470 = vmatpush1.msra.mxu0 %v85
    %471 = vmatprep.subr.mxu0 0.0
    %472 = vmatpush1.msra.mxu0 0.0
    %473 = vmatprep.subr.mxu0 0.0
    %474 = vmatpush1.msra.mxu0 0.0
    %475 = vmatprep.subr.mxu0 0.0
    %476 = vmatpush1.msra.mxu0 0.0
    %477 = vmatprep.subr.mxu0 0.0
    %478 = vmatpush1.msra.mxu0 0.0
    %479 = vmatprep.subr.mxu0 0.0
    %480 = vmatpush1.msra.mxu0 0.0
    %481 = vmatprep.subr.mxu0 0.0
    %482 = vmatpush1.msra.mxu0 0.0
    %483 = vmatprep.subr.mxu0 0.0
    %484 = vmatpush1.msra.mxu0 0.0
    %485 = vmatprep.subr.mxu0 0.0
    %486 = vmatpush1.msra.mxu0 0.0
    %487 = vmatprep.subr.mxu0 0.0
    %488 = vmatpush1.msra.mxu0 0.0
    %489 = vmatprep.subr.mxu0 0.0
    %490 = vmatpush1.msra.mxu0 0.0
    %491 = vmatprep.subr.mxu0 0.0
    %492 = vmatpush1.msra.mxu0 0.0
    %493 = vmatprep.subr.mxu0 0.0
    %494 = vmatpush1.msra.mxu0 0.0
    %495 = vmatprep.subr.mxu0 0.0
    %496 = vmatpush1.msra.mxu0 0.0
    %497 = vmatprep.subr.mxu0 0.0
    %498 = vmatpush1.msra.mxu0 0.0
    %499 = vmatprep.subr.mxu0 0.0
    %500 = vmatpush1.msra.mxu0 0.0
    %501 = vmatprep.subr.mxu0 0.0
    %502 = vmatpush1.msra.mxu0 0.0
    %503 = vmatprep.mubr.f32.mxu0 0.0
    %504 = vmatmul.mubr.f32.gmra.mrb[0].mxu0 %v438
    %v505 = vpop.f32.mrb[0].mxu0
    %v506 = vadd.f32 0.0, %v505
    %v507 = vpop.f32.mrb[0].mxu0
    %508 = vdwg.mxu0
    %509 = vmatprep.subr.mxu0 0.0
    %510 = vmatpush1.msra.mxu0 %v86
    %511 = vmatprep.subr.mxu0 0.0
    %512 = vmatpush1.msra.mxu0 %v87
    %513 = vmatprep.subr.mxu0 0.0
    %514 = vmatpush1.msra.mxu0 %v88
    %515 = vmatprep.subr.mxu0 0.0
    %516 = vmatpush1.msra.mxu0 %v89
    %517 = vmatprep.subr.mxu0 0.0
    %518 = vmatpush1.msra.mxu0 0.0
    %519 = vmatprep.subr.mxu0 0.0
    %520 = vmatpush1.msra.mxu0 0.0
    %521 = vmatprep.subr.mxu0 0.0
    %522 = vmatpush1.msra.mxu0 0.0
    %523 = vmatprep.subr.mxu0 0.0
    %524 = vmatpush1.msra.mxu0 0.0
    %525 = vmatprep.subr.mxu0 0.0
    %526 = vmatpush1.msra.mxu0 0.0
    %527 = vmatprep.subr.mxu0 0.0
    %528 = vmatpush1.msra.mxu0 0.0
    %529 = vmatprep.subr.mxu0 0.0
    %530 = vmatpush1.msra.mxu0 0.0
    %531 = vmatprep.subr.mxu0 0.0
    %532 = vmatpush1.msra.mxu0 0.0
    %533 = vmatprep.subr.mxu0 0.0
    %534 = vmatpush1.msra.mxu0 0.0
    %535 = vmatprep.subr.mxu0 0.0
    %536 = vmatpush1.msra.mxu0 0.0
    %537 = vmatprep.subr.mxu0 0.0
    %538 = vmatpush1.msra.mxu0 0.0
    %539 = vmatprep.subr.mxu0 0.0
    %540 = vmatpush1.msra.mxu0 0.0
    %541 = vmatprep.subr.mxu0 0.0
    %542 = vmatpush1.msra.mxu0 0.0
    %543 = vmatprep.subr.mxu0 0.0
    %544 = vmatpush1.msra.mxu0 0.0
    %545 = vmatprep.subr.mxu0 0.0
    %546 = vmatpush1.msra.mxu0 0.0
    %547 = vmatprep.subr.mxu0 0.0
    %548 = vmatpush1.msra.mxu0 0.0
    %549 = vmatprep.subr.mxu0 0.0
    %550 = vmatpush1.msra.mxu0 0.0
    %551 = vmatprep.subr.mxu0 0.0
    %552 = vmatpush1.msra.mxu0 0.0
    %553 = vmatprep.subr.mxu0 0.0
    %554 = vmatpush1.msra.mxu0 0.0
    %555 = vmatprep.subr.mxu0 0.0
    %556 = vmatpush1.msra.mxu0 0.0
    %557 = vmatprep.subr.mxu0 0.0
    %558 = vmatpush1.msra.mxu0 0.0
    %559 = vmatprep.subr.mxu0 0.0
    %560 = vmatpush1.msra.mxu0 0.0
    %561 = vmatprep.subr.mxu0 0.0
    %562 = vmatpush1.msra.mxu0 0.0
    %563 = vmatprep.subr.mxu0 0.0
    %564 = vmatpush1.msra.mxu0 0.0
    %565 = vmatprep.subr.mxu0 0.0
    %566 = vmatpush1.msra.mxu0 0.0
    %567 = vmatprep.subr.mxu0 0.0
    %568 = vmatpush1.msra.mxu0 0.0
    %569 = vmatprep.subr.mxu0 0.0
    %570 = vmatpush1.msra.mxu0 0.0
    %571 = vmatprep.subr.mxu0 0.0
    %572 = vmatpush1.msra.mxu0 0.0
    %573 = vmatprep.mubr.f32.mxu0 0.0
    %574 = vmatmul.mubr.f32.gmra.mrb[0].mxu0 %v356
    %v575 = vpop.f32.mrb[0].mxu0
    %v576 = vadd.f32 %v506, %v575
    %v577 = vpop.f32.mrb[0].mxu0
    %578 = vdwg.mxu0
    %v580 = vlaneseq
    %v581 = vshrl.u32 %v580, 7
    %v582 = vsub.s32 0, %v581
    %v583 = vrot.slane %v90, %v582
    %v585 = vadd.f32 %v576, %v583
    %586 = vmatprep.subr.mxu0 0.0
    %587 = vmatpush1.msra.mxu0 %v91
    %588 = vmatprep.subr.mxu0 0.0
    %589 = vmatpush1.msra.mxu0 %v92
    %590 = vmatprep.subr.mxu0 0.0
    %591 = vmatpush1.msra.mxu0 %v93
    %592 = vmatprep.subr.mxu0 0.0
    %593 = vmatpush1.msra.mxu0 %v94
    %594 = vmatprep.subr.mxu0 0.0
    %595 = vmatpush1.msra.mxu0 %v95
    %596 = vmatprep.subr.mxu0 0.0
    %597 = vmatpush1.msra.mxu0 %v96
    %598 = vmatprep.subr.mxu0 0.0
    %599 = vmatpush1.msra.mxu0 %v97
    %600 = vmatprep.subr.mxu0 0.0
    %601 = vmatpush1.msra.mxu0 %v98
    %602 = vmatprep.subr.mxu0 0.0
    %603 = vmatpush1.msra.mxu0 %v99
    %604 = vmatprep.subr.mxu0 0.0
    %605 = vmatpush1.msra.mxu0 %v100
    %606 = vmatprep.subr.mxu0 0.0
    %607 = vmatpush1.msra.mxu0 %v101
    %608 = vmatprep.subr.mxu0 0.0
    %609 = vmatpush1.msra.mxu0 %v102
    %610 = vmatprep.subr.mxu0 0.0
    %611 = vmatpush1.msra.mxu0 %v103
    %612 = vmatprep.subr.mxu0 0.0
    %613 = vmatpush1.msra.mxu0 %v104
    %614 = vmatprep.subr.mxu0 0.0
    %615 = vmatpush1.msra.mxu0 %v105
    %616 = vmatprep.subr.mxu0 0.0
    %617 = vmatpush1.msra.mxu0 %v106
    %618 = vmatprep.subr.mxu0 0.0
    %619 = vmatpush1.msra.mxu0 0.0
    %620 = vmatprep.subr.mxu0 0.0
    %621 = vmatpush1.msra.mxu0 0.0
    %622 = vmatprep.subr.mxu0 0.0
    %623 = vmatpush1.msra.mxu0 0.0
    %624 = vmatprep.subr.mxu0 0.0
    %625 = vmatpush1.msra.mxu0 0.0
    %626 = vmatprep.subr.mxu0 0.0
    %627 = vmatpush1.msra.mxu0 0.0
    %628 = vmatprep.subr.mxu0 0.0
    %629 = vmatpush1.msra.mxu0 0.0
    %630 = vmatprep.subr.mxu0 0.0
    %631 = vmatpush1.msra.mxu0 0.0
    %632 = vmatprep.subr.mxu0 0.0
    %633 = vmatpush1.msra.mxu0 0.0
    %634 = vmatprep.subr.mxu0 0.0
    %635 = vmatpush1.msra.mxu0 0.0
    %636 = vmatprep.subr.mxu0 0.0
    %637 = vmatpush1.msra.mxu0 0.0
    %638 = vmatprep.subr.mxu0 0.0
    %639 = vmatpush1.msra.mxu0 0.0
    %640 = vmatprep.subr.mxu0 0.0
    %641 = vmatpush1.msra.mxu0 0.0
    %642 = vmatprep.subr.mxu0 0.0
    %643 = vmatpush1.msra.mxu0 0.0
    %644 = vmatprep.subr.mxu0 0.0
    %645 = vmatpush1.msra.mxu0 0.0
    %646 = vmatprep.subr.mxu0 0.0
    %647 = vmatpush1.msra.mxu0 0.0
    %648 = vmatprep.subr.mxu0 0.0
    %649 = vmatpush1.msra.mxu0 0.0
    %650 = vmatprep.mubr.f32.mxu0 0.0
    %651 = vmatmul.mubr.f32.gmra.mrb[0].mxu0 %v438
    %v652 = vpop.f32.mrb[0].mxu0
    %v653 = vadd.f32 0.0, %v652
    %v654 = vpop.f32.mrb[0].mxu0
    %655 = vdwg.mxu0
    %v656 = vmul.f32 %v653, %v653
    %v657 = vsel %vm134, %v656, 0.0
    %658 = vadd.xlane.f32.xlu0 %v657
    %v659 = vpop.xlane.xlu0 %658
    %v660 = vrsqrt.pop %v659
    %v661 = vmul.f32 %v659, %v660
    %vm662 = vcmp.eq.f32.partialorder %v659, inf
    %v663 = vsel %vm662, %v659, %v661
    %vm664 = vcmp.eq.f32.partialorder %v659, 0.0
    %v665 = vand.u32 %v659, 2147483648
    %v666 = vsel %vm664, %v665, %v663
    %v667 = vmul.f32 %v585, %v585
    %v668 = vsel %vm134, %v667, 0.0
    %669 = vadd.xlane.f32.xlu0 %v668
    %v670 = vpop.xlane.xlu0 %669
    %v671 = vrsqrt.pop %v670
    %v672 = vmul.f32 %v670, %v671
    %vm673 = vcmp.eq.f32.partialorder %v670, inf
    %v674 = vsel %vm673, %v670, %v672
    %vm675 = vcmp.eq.f32.partialorder %v670, 0.0
    %v676 = vand.u32 %v670, 2147483648
    %v677 = vsel %vm675, %v676, %v674
    %v678 = vmul.f32 %v666, 0.2
    %v679 = vmin.f32 %v677, %v678
    %v680 = vmax.f32 %v677, 1e-12
    %v681 = vrcp.pop %v680
    %v682 = vmul.f32 %v585, %v681
    %v683 = vmul.f32 %v682, %v679
    %v684 = vadd.f32 %v653, %v683
    %v686 = vsel %vm134, %v684, 0
    %688 = vmatprep.subr.mxu0 0.0
    %689 = vmatpush1.msra.mxu0 %v125
    %690 = vmatprep.subr.mxu0 0.0
    %691 = vmatpush1.msra.mxu0 %v126
    %692 = vmatprep.subr.mxu0 0.0
    %693 = vmatpush1.msra.mxu0 %v127
    %694 = vmatprep.subr.mxu0 0.0
    %695 = vmatpush1.msra.mxu0 %v128
    %696 = vmatprep.subr.mxu0 0.0
    %697 = vmatpush1.msra.mxu0 0.0
    %698 = vmatprep.subr.mxu0 0.0
    %699 = vmatpush1.msra.mxu0 0.0
    %700 = vmatprep.subr.mxu0 0.0
    %701 = vmatpush1.msra.mxu0 0.0
    %702 = vmatprep.subr.mxu0 0.0
    %703 = vmatpush1.msra.mxu0 0.0
    %704 = vmatprep.subr.mxu0 0.0
    %705 = vmatpush1.msra.mxu0 0.0
    %706 = vmatprep.subr.mxu0 0.0
    %707 = vmatpush1.msra.mxu0 0.0
    %708 = vmatprep.subr.mxu0 0.0
    %709 = vmatpush1.msra.mxu0 0.0
    %710 = vmatprep.subr.mxu0 0.0
    %711 = vmatpush1.msra.mxu0 0.0
    %712 = vmatprep.subr.mxu0 0.0
    %713 = vmatpush1.msra.mxu0 0.0
    %714 = vmatprep.subr.mxu0 0.0
    %715 = vmatpush1.msra.mxu0 0.0
    %716 = vmatprep.subr.mxu0 0.0
    %717 = vmatpush1.msra.mxu0 0.0
    %718 = vmatprep.subr.mxu0 0.0
    %719 = vmatpush1.msra.mxu0 0.0
    %720 = vmatprep.subr.mxu0 0.0
    %721 = vmatpush1.msra.mxu0 0.0
    %722 = vmatprep.subr.mxu0 0.0
    %723 = vmatpush1.msra.mxu0 0.0
    %724 = vmatprep.subr.mxu0 0.0
    %725 = vmatpush1.msra.mxu0 0.0
    %726 = vmatprep.subr.mxu0 0.0
    %727 = vmatpush1.msra.mxu0 0.0
    %728 = vmatprep.subr.mxu0 0.0
    %729 = vmatpush1.msra.mxu0 0.0
    %730 = vmatprep.subr.mxu0 0.0
    %731 = vmatpush1.msra.mxu0 0.0
    %732 = vmatprep.subr.mxu0 0.0
    %733 = vmatpush1.msra.mxu0 0.0
    %734 = vmatprep.subr.mxu0 0.0
    %735 = vmatpush1.msra.mxu0 0.0
    %736 = vmatprep.subr.mxu0 0.0
    %737 = vmatpush1.msra.mxu0 0.0
    %738 = vmatprep.subr.mxu0 0.0
    %739 = vmatpush1.msra.mxu0 0.0
    %740 = vmatprep.subr.mxu0 0.0
    %741 = vmatpush1.msra.mxu0 0.0
    %742 = vmatprep.subr.mxu0 0.0
    %743 = vmatpush1.msra.mxu0 0.0
    %744 = vmatprep.subr.mxu0 0.0
    %745 = vmatpush1.msra.mxu0 0.0
    %746 = vmatprep.subr.mxu0 0.0
    %747 = vmatpush1.msra.mxu0 0.0
    %748 = vmatprep.subr.mxu0 0.0
    %749 = vmatpush1.msra.mxu0 0.0
    %750 = vmatprep.subr.mxu0 0.0
    %751 = vmatpush1.msra.mxu0 0.0
    %752 = vmatprep.mubr.f32.mxu0 0.0
    %753 = vmatmul.mubr.f32.gmra.mrb[0].mxu0 %v686
    %v754 = vpop.f32.mrb[0].mxu0
    %v755 = vadd.f32 0.0, %v754
    %v756 = vpop.f32.mrb[0].mxu0
    %757 = vdwg.mxu0
    %v758 = vsel %vm134, %v755, -inf
    %759 = vmax.xlane.f32.xlu0 %v758
    %v760 = vpop.xlane.xlu0 %759
    %v761 = vsub.f32 %v755, %v760
    %v762 = vmul.f32 %v761, 1.442695
    %v763 = vpow.pop %v762
    %v764 = vsel %vm134, %v763, 0.0
    %765 = vadd.xlane.f32.xlu0 %v764
    %v766 = vpop.xlane.xlu0 %765
    %v767 = vlog2.pop %v766
    %v768 = vmul.f32 %v767, 0.6931472
    %v769 = vsub.f32 %v761, %v768
    %v770 = vsel %vm134, %v769, -inf
    %771 = vmax.xlane.f32.xlu0 %v770
    %v772 = vpop.xlane.xlu0 %771
    %vm773 = vcmp.eq.f32.partialorder %v769, %v772
    %v774 = vsel %vm773, %v130, 32
    %v775 = vsel %vm134, %v774, 2147483647
    %v776 = vand.u32 %v775, 65535
    %v777 = vshra.s32 %v775, 16
    %v778 = vcvt.s32.f32 %v776
    %v779 = vcvt.s32.f32 %v777
    %780 = vmin.xlane.f32.xlu0 %v779
    %v781 = vpop.xlane.xlu0 %780
    %vm782 = vcmp.eq.f32.partialorder %v779, %v781
    %v783 = vsel %vm782, %v778, inf
    %784 = vmin.xlane.f32.xlu0 %v783
    %v785 = vpop.xlane.xlu0 %784
    %v786 = vcvt.f32.s32 %v785
    %v787 = vcvt.f32.s32 %v781
    %v788 = vshll.u32 %v787, 16
    %v789 = vadd.s32 %v788, %v786
    %vm790 = vcmp.eq.s32.totalorder %v130, %v789
    %v791 = vsel %vm790, 1, 0
    %v792 = vcvt.s32.f32 %v791
    %793 = vst.msk [vmem:[#allocation3] sm:$0xff] %vm134, %v769
    %794 = vmatprep.subr.mxu0 0.0
    %795 = vmatpush1.msra.mxu0 %v107
    %796 = vmatprep.subr.mxu0 0.0
    %797 = vmatpush1.msra.mxu0 %v108
    %798 = vmatprep.subr.mxu0 0.0
    %799 = vmatpush1.msra.mxu0 %v109
    %800 = vmatprep.subr.mxu0 0.0
    %801 = vmatpush1.msra.mxu0 %v110
    %802 = vmatprep.subr.mxu0 0.0
    %803 = vmatpush1.msra.mxu0 %v111
    %804 = vmatprep.subr.mxu0 0.0
    %805 = vmatpush1.msra.mxu0 %v112
    %806 = vmatprep.subr.mxu0 0.0
    %807 = vmatpush1.msra.mxu0 %v113
    %808 = vmatprep.subr.mxu0 0.0
    %809 = vmatpush1.msra.mxu0 %v114
    %810 = vmatprep.subr.mxu0 0.0
    %811 = vmatpush1.msra.mxu0 %v115
    %812 = vmatprep.subr.mxu0 0.0
    %813 = vmatpush1.msra.mxu0 %v116
    %814 = vmatprep.subr.mxu0 0.0
    %815 = vmatpush1.msra.mxu0 %v117
    %816 = vmatprep.subr.mxu0 0.0
    %817 = vmatpush1.msra.mxu0 %v118
    %818 = vmatprep.subr.mxu0 0.0
    %819 = vmatpush1.msra.mxu0 %v119
    %820 = vmatprep.subr.mxu0 0.0
    %821 = vmatpush1.msra.mxu0 %v120
    %822 = vmatprep.subr.mxu0 0.0
    %823 = vmatpush1.msra.mxu0 %v121
    %824 = vmatprep.subr.mxu0 0.0
    %825 = vmatpush1.msra.mxu0 %v122
    %826 = vmatprep.subr.mxu0 0.0
    %827 = vmatpush1.msra.mxu0 0.0
    %828 = vmatprep.subr.mxu0 0.0
    %829 = vmatpush1.msra.mxu0 0.0
    %830 = vmatprep.subr.mxu0 0.0
    %831 = vmatpush1.msra.mxu0 0.0
    %832 = vmatprep.subr.mxu0 0.0
    %833 = vmatpush1.msra.mxu0 0.0
    %834 = vmatprep.subr.mxu0 0.0
    %835 = vmatpush1.msra.mxu0 0.0
    %836 = vmatprep.subr.mxu0 0.0
    %837 = vmatpush1.msra.mxu0 0.0
    %838 = vmatprep.subr.mxu0 0.0
    %839 = vmatpush1.msra.mxu0 0.0
    %840 = vmatprep.subr.mxu0 0.0
    %841 = vmatpush1.msra.mxu0 0.0
    %842 = vmatprep.subr.mxu0 0.0
    %843 = vmatpush1.msra.mxu0 0.0
    %844 = vmatprep.subr.mxu0 0.0
    %845 = vmatpush1.msra.mxu0 0.0
    %846 = vmatprep.subr.mxu0 0.0
    %847 = vmatpush1.msra.mxu0 0.0
    %848 = vmatprep.subr.mxu0 0.0
    %849 = vmatpush1.msra.mxu0 0.0
    %850 = vmatprep.subr.mxu0 0.0
    %851 = vmatpush1.msra.mxu0 0.0
    %852 = vmatprep.subr.mxu0 0.0
    %853 = vmatpush1.msra.mxu0 0.0
    %854 = vmatprep.subr.mxu0 0.0
    %855 = vmatpush1.msra.mxu0 0.0
    %856 = vmatprep.subr.mxu0 0.0
    %857 = vmatpush1.msra.mxu0 0.0
    %858 = vmatprep.mubr.f32.mxu0 0.0
    %859 = vmatmul.mubr.f32.gmra.mrb[0].mxu0 %v438
    %v860 = vpop.f32.mrb[0].mxu0
    %v861 = vadd.f32 0.0, %v860
    %v862 = vpop.f32.mrb[0].mxu0
    %863 = vdwg.mxu0
    %vm864 = vcmask 130048
    %865 = vst.msk [vmem:[#allocation5] sm:$0xff] %vm864, %v861
    %866 = vst.msk [vmem:[#allocation2] sm:$0xff] %vm134, %v792
    %867 = vrot.lane.b32.xlu0 %v242, 64
    %v868 = vpop.permute.xlu0 %867
    %870 = vst.msk [vmem:[#allocation2] sm:$0xff] %vm136, %v868
    %v871 = vld [vmem:[#allocation2] sm:$0xff]
    %v873 = vsel %vm145, %v871, 0
    %875 = vmatprep.subr.mxu0 0.0
    %876 = vmatpush1.msra.mxu0 %v48
    %877 = vmatprep.subr.mxu0 0.0
    %878 = vmatpush1.msra.mxu0 %v49
    %879 = vmatprep.subr.mxu0 0.0
    %880 = vmatpush1.msra.mxu0 %v50
    %881 = vmatprep.subr.mxu0 0.0
    %882 = vmatpush1.msra.mxu0 %v51
    %883 = vmatprep.subr.mxu0 0.0
    %884 = vmatpush1.msra.mxu0 %v52
    %885 = vmatprep.subr.mxu0 0.0
    %886 = vmatpush1.msra.mxu0 %v53
    %887 = vmatprep.subr.mxu0 0.0
    %888 = vmatpush1.msra.mxu0 %v54
    %889 = vmatprep.subr.mxu0 0.0
    %890 = vmatpush1.msra.mxu0 %v55
    %891 = vmatprep.subr.mxu0 0.0
    %892 = vmatpush1.msra.mxu0 0.0
    %893 = vmatprep.subr.mxu0 0.0
    %894 = vmatpush1.msra.mxu0 0.0
    %895 = vmatprep.subr.mxu0 0.0
    %896 = vmatpush1.msra.mxu0 0.0
    %897 = vmatprep.subr.mxu0 0.0
    %898 = vmatpush1.msra.mxu0 0.0
    %899 = vmatprep.subr.mxu0 0.0
    %900 = vmatpush1.msra.mxu0 0.0
    %901 = vmatprep.subr.mxu0 0.0
    %902 = vmatpush1.msra.mxu0 0.0
    %903 = vmatprep.subr.mxu0 0.0
    %904 = vmatpush1.msra.mxu0 0.0
    %905 = vmatprep.subr.mxu0 0.0
    %906 = vmatpush1.msra.mxu0 0.0
    %907 = vmatprep.subr.mxu0 0.0
    %908 = vmatpush1.msra.mxu0 0.0
    %909 = vmatprep.subr.mxu0 0.0
    %910 = vmatpush1.msra.mxu0 0.0
    %911 = vmatprep.subr.mxu0 0.0
    %912 = vmatpush1.msra.mxu0 0.0
    %913 = vmatprep.subr.mxu0 0.0
    %914 = vmatpush1.msra.mxu0 0.0
    %915 = vmatprep.subr.mxu0 0.0
    %916 = vmatpush1.msra.mxu0 0.0
    %917 = vmatprep.subr.mxu0 0.0
    %918 = vmatpush1.msra.mxu0 0.0
    %919 = vmatprep.subr.mxu0 0.0
    %920 = vmatpush1.msra.mxu0 0.0
    %921 = vmatprep.subr.mxu0 0.0
    %922 = vmatpush1.msra.mxu0 0.0
    %923 = vmatprep.subr.mxu0 0.0
    %924 = vmatpush1.msra.mxu0 0.0
    %925 = vmatprep.subr.mxu0 0.0
    %926 = vmatpush1.msra.mxu0 0.0
    %927 = vmatprep.subr.mxu0 0.0
    %928 = vmatpush1.msra.mxu0 0.0
    %929 = vmatprep.subr.mxu0 0.0
    %930 = vmatpush1.msra.mxu0 0.0
    %931 = vmatprep.subr.mxu0 0.0
    %932 = vmatpush1.msra.mxu0 0.0
    %933 = vmatprep.subr.mxu0 0.0
    %934 = vmatpush1.msra.mxu0 0.0
    %935 = vmatprep.subr.mxu0 0.0
    %936 = vmatpush1.msra.mxu0 0.0
    %937 = vmatprep.subr.mxu0 0.0
    %938 = vmatpush1.msra.mxu0 0.0
    %939 = vmatprep.mubr.f32.mxu0 0.0
    %940 = vmatmul.mubr.f32.gmra.mrb[0].mxu0 %v873
    %v941 = vpop.f32.mrb[0].mxu0
    %v942 = vadd.f32 %v143, %v941
    %v943 = vpop.f32.mrb[0].mxu0
    %944 = vdwg.mxu0
    %v945 = vxor.u32 %v942, 2147483648
    %v946 = vmul.f32 %v945, 1.442695
    %v947 = vpow.pop %v946
    %v948 = vadd.f32 %v947, 1.0
    %v949 = vrcp.pop %v948
    %v950 = vmul.f32 1.0, %v949
    %v951 = vtanh.pop %v942
    %v952 = vmul.f32 %v950, %v236
    %954 = vrot.lane.b32.xlu0 %v951, 64
    %v955 = vpop.permute.xlu0 %954
    %v957 = vmul.f32 %v950, %v955
    %959 = vrot.lane.b32.xlu0 %v957, 32
    %v960 = vpop.permute.xlu0 %959
    %v962 = vadd.f32 %v952, %v960
    %v963 = vtanh.pop %v962
    %965 = vrot.lane.b32.xlu0 %v963, 64
    %v966 = vpop.permute.xlu0 %965
    %v968 = vmul.f32 %v950, %v966
    %970 = vrot.lane.b32.xlu0 %v968, 32
    %v971 = vpop.permute.xlu0 %970
    %973 = vst.msk [vmem:[#allocation2] sm:$0xff] %vm134, %v971
    %974 = vrot.lane.b32.xlu0 %v352, 64
    %v975 = vpop.permute.xlu0 %974
    %977 = vst.msk [vmem:[#allocation2] sm:$0xff] %vm136, %v975
    %v978 = vld [vmem:[#allocation2] sm:$0xff]
    %v980 = vsel %vm145, %v978, 0
    %982 = vmatprep.subr.mxu0 0.0
    %983 = vmatpush1.msra.mxu0 %v57
    %984 = vmatprep.subr.mxu0 0.0
    %985 = vmatpush1.msra.mxu0 %v58
    %986 = vmatprep.subr.mxu0 0.0
    %987 = vmatpush1.msra.mxu0 %v59
    %988 = vmatprep.subr.mxu0 0.0
    %989 = vmatpush1.msra.mxu0 %v60
    %990 = vmatprep.subr.mxu0 0.0
    %991 = vmatpush1.msra.mxu0 %v61
    %992 = vmatprep.subr.mxu0 0.0
    %993 = vmatpush1.msra.mxu0 %v62
    %994 = vmatprep.subr.mxu0 0.0
    %995 = vmatpush1.msra.mxu0 %v63
    %996 = vmatprep.subr.mxu0 0.0
    %997 = vmatpush1.msra.mxu0 %v64
    %998 = vmatprep.subr.mxu0 0.0
    %999 = vmatpush1.msra.mxu0 0.0
    %1000 = vmatprep.subr.mxu0 0.0
    %1001 = vmatpush1.msra.mxu0 0.0
    %1002 = vmatprep.subr.mxu0 0.0
    %1003 = vmatpush1.msra.mxu0 0.0
    %1004 = vmatprep.subr.mxu0 0.0
    %1005 = vmatpush1.msra.mxu0 0.0
    %1006 = vmatprep.subr.mxu0 0.0
    %1007 = vmatpush1.msra.mxu0 0.0
    %1008 = vmatprep.subr.mxu0 0.0
    %1009 = vmatpush1.msra.mxu0 0.0
    %1010 = vmatprep.subr.mxu0 0.0
    %1011 = vmatpush1.msra.mxu0 0.0
    %1012 = vmatprep.subr.mxu0 0.0
    %1013 = vmatpush1.msra.mxu0 0.0
    %1014 = vmatprep.subr.mxu0 0.0
    %1015 = vmatpush1.msra.mxu0 0.0
    %1016 = vmatprep.subr.mxu0 0.0
    %1017 = vmatpush1.msra.mxu0 0.0
    %1018 = vmatprep.subr.mxu0 0.0
    %1019 = vmatpush1.msra.mxu0 0.0
    %1020 = vmatprep.subr.mxu0 0.0
    %1021 = vmatpush1.msra.mxu0 0.0
    %1022 = vmatprep.subr.mxu0 0.0
    %1023 = vmatpush1.msra.mxu0 0.0
    %1024 = vmatprep.subr.mxu0 0.0
    %1025 = vmatpush1.msra.mxu0 0.0
    %1026 = vmatprep.subr.mxu0 0.0
    %1027 = vmatpush1.msra.mxu0 0.0
    %1028 = vmatprep.subr.mxu0 0.0
    %1029 = vmatpush1.msra.mxu0 0.0
    %1030 = vmatprep.subr.mxu0 0.0
    %1031 = vmatpush1.msra.mxu0 0.0
    %1032 = vmatprep.subr.mxu0 0.0
    %1033 = vmatpush1.msra.mxu0 0.0
    %1034 = vmatprep.subr.mxu0 0.0
    %1035 = vmatpush1.msra.mxu0 0.0
    %1036 = vmatprep.subr.mxu0 0.0
    %1037 = vmatpush1.msra.mxu0 0.0
    %1038 = vmatprep.subr.mxu0 0.0
    %1039 = vmatpush1.msra.mxu0 0.0
    %1040 = vmatprep.subr.mxu0 0.0
    %1041 = vmatpush1.msra.mxu0 0.0
    %1042 = vmatprep.subr.mxu0 0.0
    %1043 = vmatpush1.msra.mxu0 0.0
    %1044 = vmatprep.subr.mxu0 0.0
    %1045 = vmatpush1.msra.mxu0 0.0
    %1046 = vmatprep.mubr.f32.mxu0 0.0
    %1047 = vmatmul.mubr.f32.gmra.mrb[0].mxu0 %v980
    %v1048 = vpop.f32.mrb[0].mxu0
    %v1049 = vadd.f32 %v254, %v1048
    %v1050 = vpop.f32.mrb[0].mxu0
    %1051 = vdwg.mxu0
    %v1052 = vxor.u32 %v1049, 2147483648
    %v1053 = vmul.f32 %v1052, 1.442695
    %v1054 = vpow.pop %v1053
    %v1055 = vadd.f32 %v1054, 1.0
    %v1056 = vrcp.pop %v1055
    %v1057 = vmul.f32 1.0, %v1056
    %v1058 = vtanh.pop %v1049
    %v1059 = vmul.f32 %v1057, %v346
    %1061 = vrot.lane.b32.xlu0 %v1058, 64
    %v1062 = vpop.permute.xlu0 %1061
    %v1064 = vmul.f32 %v1057, %v1062
    %1066 = vrot.lane.b32.xlu0 %v1064, 32
    %v1067 = vpop.permute.xlu0 %1066
    %v1069 = vadd.f32 %v1059, %v1067
    %v1070 = vtanh.pop %v1069
    %1072 = vrot.lane.b32.xlu0 %v1070, 64
    %v1073 = vpop.permute.xlu0 %1072
    %v1075 = vmul.f32 %v1057, %v1073
    %1077 = vrot.lane.b32.xlu0 %v1075, 32
    %v1078 = vpop.permute.xlu0 %1077
    %v1079 = vsel %vm134, %v1078, 0
    %1081 = vmatprep.subr.mxu0 0.0
    %1082 = vmatpush1.msra.mxu0 %v66
    %1083 = vmatprep.subr.mxu0 0.0
    %1084 = vmatpush1.msra.mxu0 %v67
    %1085 = vmatprep.subr.mxu0 0.0
    %1086 = vmatpush1.msra.mxu0 %v68
    %1087 = vmatprep.subr.mxu0 0.0
    %1088 = vmatpush1.msra.mxu0 %v69
    %1089 = vmatprep.subr.mxu0 0.0
    %1090 = vmatpush1.msra.mxu0 0.0
    %1091 = vmatprep.subr.mxu0 0.0
    %1092 = vmatpush1.msra.mxu0 0.0
    %1093 = vmatprep.subr.mxu0 0.0
    %1094 = vmatpush1.msra.mxu0 0.0
    %1095 = vmatprep.subr.mxu0 0.0
    %1096 = vmatpush1.msra.mxu0 0.0
    %1097 = vmatprep.subr.mxu0 0.0
    %1098 = vmatpush1.msra.mxu0 0.0
    %1099 = vmatprep.subr.mxu0 0.0
    %1100 = vmatpush1.msra.mxu0 0.0
    %1101 = vmatprep.subr.mxu0 0.0
    %1102 = vmatpush1.msra.mxu0 0.0
    %1103 = vmatprep.subr.mxu0 0.0
    %1104 = vmatpush1.msra.mxu0 0.0
    %1105 = vmatprep.subr.mxu0 0.0
    %1106 = vmatpush1.msra.mxu0 0.0
    %1107 = vmatprep.subr.mxu0 0.0
    %1108 = vmatpush1.msra.mxu0 0.0
    %1109 = vmatprep.subr.mxu0 0.0
    %1110 = vmatpush1.msra.mxu0 0.0
    %1111 = vmatprep.subr.mxu0 0.0
    %1112 = vmatpush1.msra.mxu0 0.0
    %1113 = vmatprep.subr.mxu0 0.0
    %1114 = vmatpush1.msra.mxu0 0.0
    %1115 = vmatprep.subr.mxu0 0.0
    %1116 = vmatpush1.msra.mxu0 0.0
    %1117 = vmatprep.subr.mxu0 0.0
    %1118 = vmatpush1.msra.mxu0 0.0
    %1119 = vmatprep.subr.mxu0 0.0
    %1120 = vmatpush1.msra.mxu0 0.0
    %1121 = vmatprep.subr.mxu0 0.0
    %1122 = vmatpush1.msra.mxu0 0.0
    %1123 = vmatprep.subr.mxu0 0.0
    %1124 = vmatpush1.msra.mxu0 0.0
    %1125 = vmatprep.subr.mxu0 0.0
    %1126 = vmatpush1.msra.mxu0 0.0
    %1127 = vmatprep.subr.mxu0 0.0
    %1128 = vmatpush1.msra.mxu0 0.0
    %1129 = vmatprep.subr.mxu0 0.0
    %1130 = vmatpush1.msra.mxu0 0.0
    %1131 = vmatprep.subr.mxu0 0.0
    %1132 = vmatpush1.msra.mxu0 0.0
    %1133 = vmatprep.subr.mxu0 0.0
    %1134 = vmatpush1.msra.mxu0 0.0
    %1135 = vmatprep.subr.mxu0 0.0
    %1136 = vmatpush1.msra.mxu0 0.0
    %1137 = vmatprep.subr.mxu0 0.0
    %1138 = vmatpush1.msra.mxu0 0.0
    %1139 = vmatprep.subr.mxu0 0.0
    %1140 = vmatpush1.msra.mxu0 0.0
    %1141 = vmatprep.subr.mxu0 0.0
    %1142 = vmatpush1.msra.mxu0 0.0
    %1143 = vmatprep.subr.mxu0 0.0
    %1144 = vmatpush1.msra.mxu0 0.0
    %1145 = vmatprep.mubr.f32.mxu0 0.0
    %1146 = vmatmul.mubr.f32.gmra.mrb[0].mxu0 %v1079
    %v1147 = vpop.f32.mrb[0].mxu0
    %v1148 = vadd.f32 %v123, %v1147
    %v1149 = vpop.f32.mrb[0].mxu0
    %1150 = vdwg.mxu0
    %1151 = vmax.xlane.f32.xlu0 %v1148
    %v1152 = vpop.xlane.xlu0 %1151
    %v1153 = vsub.f32 %v1148, %v1152
    %v1154 = vmul.f32 %v1153, 1.442695
    %v1155 = vpow.pop %v1154
    %v1156 = vmul.f32 %v1155, %v124
    %1157 = vadd.xlane.f32.xlu0 %v1156
    %v1158 = vpop.xlane.xlu0 %1157
    %v1159 = vrcp.pop %v1158
    %v1160 = vmul.f32 1.0, %v1159
    %v1161 = vmul.f32 %v1156, %v1160
    %1162 = vmatprep.subr.mxu0 0.0
    %1163 = vmatpush1.msra.mxu0 %v70
    %1164 = vmatprep.subr.mxu0 0.0
    %1165 = vmatpush1.msra.mxu0 %v71
    %1166 = vmatprep.subr.mxu0 0.0
    %1167 = vmatpush1.msra.mxu0 %v72
    %1168 = vmatprep.subr.mxu0 0.0
    %1169 = vmatpush1.msra.mxu0 %v73
    %1170 = vmatprep.subr.mxu0 0.0
    %1171 = vmatpush1.msra.mxu0 %v74
    %1172 = vmatprep.subr.mxu0 0.0
    %1173 = vmatpush1.msra.mxu0 %v75
    %1174 = vmatprep.subr.mxu0 0.0
    %1175 = vmatpush1.msra.mxu0 %v76
    %1176 = vmatprep.subr.mxu0 0.0
    %1177 = vmatpush1.msra.mxu0 %v77
    %1178 = vmatprep.subr.mxu0 0.0
    %1179 = vmatpush1.msra.mxu0 %v78
    %1180 = vmatprep.subr.mxu0 0.0
    %1181 = vmatpush1.msra.mxu0 %v79
    %1182 = vmatprep.subr.mxu0 0.0
    %1183 = vmatpush1.msra.mxu0 %v80
    %1184 = vmatprep.subr.mxu0 0.0
    %1185 = vmatpush1.msra.mxu0 %v81
    %1186 = vmatprep.subr.mxu0 0.0
    %1187 = vmatpush1.msra.mxu0 %v82
    %1188 = vmatprep.subr.mxu0 0.0
    %1189 = vmatpush1.msra.mxu0 %v83
    %1190 = vmatprep.subr.mxu0 0.0
    %1191 = vmatpush1.msra.mxu0 %v84
    %1192 = vmatprep.subr.mxu0 0.0
    %1193 = vmatpush1.msra.mxu0 %v85
    %1194 = vmatprep.subr.mxu0 0.0
    %1195 = vmatpush1.msra.mxu0 0.0
    %1196 = vmatprep.subr.mxu0 0.0
    %1197 = vmatpush1.msra.mxu0 0.0
    %1198 = vmatprep.subr.mxu0 0.0
    %1199 = vmatpush1.msra.mxu0 0.0
    %1200 = vmatprep.subr.mxu0 0.0
    %1201 = vmatpush1.msra.mxu0 0.0
    %1202 = vmatprep.subr.mxu0 0.0
    %1203 = vmatpush1.msra.mxu0 0.0
    %1204 = vmatprep.subr.mxu0 0.0
    %1205 = vmatpush1.msra.mxu0 0.0
    %1206 = vmatprep.subr.mxu0 0.0
    %1207 = vmatpush1.msra.mxu0 0.0
    %1208 = vmatprep.subr.mxu0 0.0
    %1209 = vmatpush1.msra.mxu0 0.0
    %1210 = vmatprep.subr.mxu0 0.0
    %1211 = vmatpush1.msra.mxu0 0.0
    %1212 = vmatprep.subr.mxu0 0.0
    %1213 = vmatpush1.msra.mxu0 0.0
    %1214 = vmatprep.subr.mxu0 0.0
    %1215 = vmatpush1.msra.mxu0 0.0
    %1216 = vmatprep.subr.mxu0 0.0
    %1217 = vmatpush1.msra.mxu0 0.0
    %1218 = vmatprep.subr.mxu0 0.0
    %1219 = vmatpush1.msra.mxu0 0.0
    %1220 = vmatprep.subr.mxu0 0.0
    %1221 = vmatpush1.msra.mxu0 0.0
    %1222 = vmatprep.subr.mxu0 0.0
    %1223 = vmatpush1.msra.mxu0 0.0
    %1224 = vmatprep.subr.mxu0 0.0
    %1225 = vmatpush1.msra.mxu0 0.0
    %1226 = vmatprep.mubr.f32.mxu0 0.0
    %1227 = vmatmul.mubr.f32.gmra.mrb[0].mxu0 %v1161
    %v1228 = vpop.f32.mrb[0].mxu0
    %v1229 = vadd.f32 0.0, %v1228
    %v1230 = vpop.f32.mrb[0].mxu0
    %1231 = vdwg.mxu0
    %1232 = vmatprep.subr.mxu0 0.0
    %1233 = vmatpush1.msra.mxu0 %v86
    %1234 = vmatprep.subr.mxu0 0.0
    %1235 = vmatpush1.msra.mxu0 %v87
    %1236 = vmatprep.subr.mxu0 0.0
    %1237 = vmatpush1.msra.mxu0 %v88
    %1238 = vmatprep.subr.mxu0 0.0
    %1239 = vmatpush1.msra.mxu0 %v89
    %1240 = vmatprep.subr.mxu0 0.0
    %1241 = vmatpush1.msra.mxu0 0.0
    %1242 = vmatprep.subr.mxu0 0.0
    %1243 = vmatpush1.msra.mxu0 0.0
    %1244 = vmatprep.subr.mxu0 0.0
    %1245 = vmatpush1.msra.mxu0 0.0
    %1246 = vmatprep.subr.mxu0 0.0
    %1247 = vmatpush1.msra.mxu0 0.0
    %1248 = vmatprep.subr.mxu0 0.0
    %1249 = vmatpush1.msra.mxu0 0.0
    %1250 = vmatprep.subr.mxu0 0.0
    %1251 = vmatpush1.msra.mxu0 0.0
    %1252 = vmatprep.subr.mxu0 0.0
    %1253 = vmatpush1.msra.mxu0 0.0
    %1254 = vmatprep.subr.mxu0 0.0
    %1255 = vmatpush1.msra.mxu0 0.0
    %1256 = vmatprep.subr.mxu0 0.0
    %1257 = vmatpush1.msra.mxu0 0.0
    %1258 = vmatprep.subr.mxu0 0.0
    %1259 = vmatpush1.msra.mxu0 0.0
    %1260 = vmatprep.subr.mxu0 0.0
    %1261 = vmatpush1.msra.mxu0 0.0
    %1262 = vmatprep.subr.mxu0 0.0
    %1263 = vmatpush1.msra.mxu0 0.0
    %1264 = vmatprep.subr.mxu0 0.0
    %1265 = vmatpush1.msra.mxu0 0.0
    %1266 = vmatprep.subr.mxu0 0.0
    %1267 = vmatpush1.msra.mxu0 0.0
    %1268 = vmatprep.subr.mxu0 0.0
    %1269 = vmatpush1.msra.mxu0 0.0
    %1270 = vmatprep.subr.mxu0 0.0
    %1271 = vmatpush1.msra.mxu0 0.0
    %1272 = vmatprep.subr.mxu0 0.0
    %1273 = vmatpush1.msra.mxu0 0.0
    %1274 = vmatprep.subr.mxu0 0.0
    %1275 = vmatpush1.msra.mxu0 0.0
    %1276 = vmatprep.subr.mxu0 0.0
    %1277 = vmatpush1.msra.mxu0 0.0
    %1278 = vmatprep.subr.mxu0 0.0
    %1279 = vmatpush1.msra.mxu0 0.0
    %1280 = vmatprep.subr.mxu0 0.0
    %1281 = vmatpush1.msra.mxu0 0.0
    %1282 = vmatprep.subr.mxu0 0.0
    %1283 = vmatpush1.msra.mxu0 0.0
    %1284 = vmatprep.subr.mxu0 0.0
    %1285 = vmatpush1.msra.mxu0 0.0
    %1286 = vmatprep.subr.mxu0 0.0
    %1287 = vmatpush1.msra.mxu0 0.0
    %1288 = vmatprep.subr.mxu0 0.0
    %1289 = vmatpush1.msra.mxu0 0.0
    %1290 = vmatprep.subr.mxu0 0.0
    %1291 = vmatpush1.msra.mxu0 0.0
    %1292 = vmatprep.subr.mxu0 0.0
    %1293 = vmatpush1.msra.mxu0 0.0
    %1294 = vmatprep.subr.mxu0 0.0
    %1295 = vmatpush1.msra.mxu0 0.0
    %1296 = vmatprep.mubr.f32.mxu0 0.0
    %1297 = vmatmul.mubr.f32.gmra.mrb[0].mxu0 %v1079
    %v1298 = vpop.f32.mrb[0].mxu0
    %v1299 = vadd.f32 %v1229, %v1298
    %v1300 = vpop.f32.mrb[0].mxu0
    %1301 = vdwg.mxu0
    %v1302 = vadd.f32 %v1299, %v583
    %1303 = vmatprep.subr.mxu0 0.0
    %1304 = vmatpush1.msra.mxu0 %v91
    %1305 = vmatprep.subr.mxu0 0.0
    %1306 = vmatpush1.msra.mxu0 %v92
    %1307 = vmatprep.subr.mxu0 0.0
    %1308 = vmatpush1.msra.mxu0 %v93
    %1309 = vmatprep.subr.mxu0 0.0
    %1310 = vmatpush1.msra.mxu0 %v94
    %1311 = vmatprep.subr.mxu0 0.0
    %1312 = vmatpush1.msra.mxu0 %v95
    %1313 = vmatprep.subr.mxu0 0.0
    %1314 = vmatpush1.msra.mxu0 %v96
    %1315 = vmatprep.subr.mxu0 0.0
    %1316 = vmatpush1.msra.mxu0 %v97
    %1317 = vmatprep.subr.mxu0 0.0
    %1318 = vmatpush1.msra.mxu0 %v98
    %1319 = vmatprep.subr.mxu0 0.0
    %1320 = vmatpush1.msra.mxu0 %v99
    %1321 = vmatprep.subr.mxu0 0.0
    %1322 = vmatpush1.msra.mxu0 %v100
    %1323 = vmatprep.subr.mxu0 0.0
    %1324 = vmatpush1.msra.mxu0 %v101
    %1325 = vmatprep.subr.mxu0 0.0
    %1326 = vmatpush1.msra.mxu0 %v102
    %1327 = vmatprep.subr.mxu0 0.0
    %1328 = vmatpush1.msra.mxu0 %v103
    %1329 = vmatprep.subr.mxu0 0.0
    %1330 = vmatpush1.msra.mxu0 %v104
    %1331 = vmatprep.subr.mxu0 0.0
    %1332 = vmatpush1.msra.mxu0 %v105
    %1333 = vmatprep.subr.mxu0 0.0
    %1334 = vmatpush1.msra.mxu0 %v106
    %1335 = vmatprep.subr.mxu0 0.0
    %1336 = vmatpush1.msra.mxu0 0.0
    %1337 = vmatprep.subr.mxu0 0.0
    %1338 = vmatpush1.msra.mxu0 0.0
    %1339 = vmatprep.subr.mxu0 0.0
    %1340 = vmatpush1.msra.mxu0 0.0
    %1341 = vmatprep.subr.mxu0 0.0
    %1342 = vmatpush1.msra.mxu0 0.0
    %1343 = vmatprep.subr.mxu0 0.0
    %1344 = vmatpush1.msra.mxu0 0.0
    %1345 = vmatprep.subr.mxu0 0.0
    %1346 = vmatpush1.msra.mxu0 0.0
    %1347 = vmatprep.subr.mxu0 0.0
    %1348 = vmatpush1.msra.mxu0 0.0
    %1349 = vmatprep.subr.mxu0 0.0
    %1350 = vmatpush1.msra.mxu0 0.0
    %1351 = vmatprep.subr.mxu0 0.0
    %1352 = vmatpush1.msra.mxu0 0.0
    %1353 = vmatprep.subr.mxu0 0.0
    %1354 = vmatpush1.msra.mxu0 0.0
    %1355 = vmatprep.subr.mxu0 0.0
    %1356 = vmatpush1.msra.mxu0 0.0
    %1357 = vmatprep.subr.mxu0 0.0
    %1358 = vmatpush1.msra.mxu0 0.0
    %1359 = vmatprep.subr.mxu0 0.0
    %1360 = vmatpush1.msra.mxu0 0.0
    %1361 = vmatprep.subr.mxu0 0.0
    %1362 = vmatpush1.msra.mxu0 0.0
    %1363 = vmatprep.subr.mxu0 0.0
    %1364 = vmatpush1.msra.mxu0 0.0
    %1365 = vmatprep.subr.mxu0 0.0
    %1366 = vmatpush1.msra.mxu0 0.0
    %1367 = vmatprep.mubr.f32.mxu0 0.0
    %1368 = vmatmul.mubr.f32.gmra.mrb[0].mxu0 %v1161
    %v1369 = vpop.f32.mrb[0].mxu0
    %v1370 = vadd.f32 0.0, %v1369
    %v1371 = vpop.f32.mrb[0].mxu0
    %1372 = vdwg.mxu0
    %v1373 = vmul.f32 %v1370, %v1370
    %v1374 = vsel %vm134, %v1373, 0.0
    %1375 = vadd.xlane.f32.xlu0 %v1374
    %v1376 = vpop.xlane.xlu0 %1375
    %v1377 = vrsqrt.pop %v1376
    %v1378 = vmul.f32 %v1376, %v1377
    %vm1379 = vcmp.eq.f32.partialorder %v1376, inf
    %v1380 = vsel %vm1379, %v1376, %v1378
    %vm1381 = vcmp.eq.f32.partialorder %v1376, 0.0
    %v1382 = vand.u32 %v1376, 2147483648
    %v1383 = vsel %vm1381, %v1382, %v1380
    %v1384 = vmul.f32 %v1302, %v1302
    %v1385 = vsel %vm134, %v1384, 0.0
    %1386 = vadd.xlane.f32.xlu0 %v1385
    %v1387 = vpop.xlane.xlu0 %1386
    %v1388 = vrsqrt.pop %v1387
    %v1389 = vmul.f32 %v1387, %v1388
    %vm1390 = vcmp.eq.f32.partialorder %v1387, inf
    %v1391 = vsel %vm1390, %v1387, %v1389
    %vm1392 = vcmp.eq.f32.partialorder %v1387, 0.0
    %v1393 = vand.u32 %v1387, 2147483648
    %v1394 = vsel %vm1392, %v1393, %v1391
    %v1395 = vmul.f32 %v1383, 0.2
    %v1396 = vmin.f32 %v1394, %v1395
    %v1397 = vmax.f32 %v1394, 1e-12
    %v1398 = vrcp.pop %v1397
    %v1399 = vmul.f32 %v1302, %v1398
    %v1400 = vmul.f32 %v1399, %v1396
    %v1401 = vadd.f32 %v1370, %v1400
    %v1403 = vsel %vm134, %v1401, 0
    %1405 = vmatprep.subr.mxu0 0.0
    %1406 = vmatpush1.msra.mxu0 %v125
    %1407 = vmatprep.subr.mxu0 0.0
    %1408 = vmatpush1.msra.mxu0 %v126
    %1409 = vmatprep.subr.mxu0 0.0
    %1410 = vmatpush1.msra.mxu0 %v127
    %1411 = vmatprep.subr.mxu0 0.0
    %1412 = vmatpush1.msra.mxu0 %v128
    %1413 = vmatprep.subr.mxu0 0.0
    %1414 = vmatpush1.msra.mxu0 0.0
    %1415 = vmatprep.subr.mxu0 0.0
    %1416 = vmatpush1.msra.mxu0 0.0
    %1417 = vmatprep.subr.mxu0 0.0
    %1418 = vmatpush1.msra.mxu0 0.0
    %1419 = vmatprep.subr.mxu0 0.0
    %1420 = vmatpush1.msra.mxu0 0.0
    %1421 = vmatprep.subr.mxu0 0.0
    %1422 = vmatpush1.msra.mxu0 0.0
    %1423 = vmatprep.subr.mxu0 0.0
    %1424 = vmatpush1.msra.mxu0 0.0
    %1425 = vmatprep.subr.mxu0 0.0
    %1426 = vmatpush1.msra.mxu0 0.0
    %1427 = vmatprep.subr.mxu0 0.0
    %1428 = vmatpush1.msra.mxu0 0.0
    %1429 = vmatprep.subr.mxu0 0.0
    %1430 = vmatpush1.msra.mxu0 0.0
    %1431 = vmatprep.subr.mxu0 0.0
    %1432 = vmatpush1.msra.mxu0 0.0
    %1433 = vmatprep.subr.mxu0 0.0
    %1434 = vmatpush1.msra.mxu0 0.0
    %1435 = vmatprep.subr.mxu0 0.0
    %1436 = vmatpush1.msra.mxu0 0.0
    %1437 = vmatprep.subr.mxu0 0.0
    %1438 = vmatpush1.msra.mxu0 0.0
    %1439 = vmatprep.subr.mxu0 0.0
    %1440 = vmatpush1.msra.mxu0 0.0
    %1441 = vmatprep.subr.mxu0 0.0
    %1442 = vmatpush1.msra.mxu0 0.0
    %1443 = vmatprep.subr.mxu0 0.0
    %1444 = vmatpush1.msra.mxu0 0.0
    %1445 = vmatprep.subr.mxu0 0.0
    %1446 = vmatpush1.msra.mxu0 0.0
    %1447 = vmatprep.subr.mxu0 0.0
    %1448 = vmatpush1.msra.mxu0 0.0
    %1449 = vmatprep.subr.mxu0 0.0
    %1450 = vmatpush1.msra.mxu0 0.0
    %1451 = vmatprep.subr.mxu0 0.0
    %1452 = vmatpush1.msra.mxu0 0.0
    %1453 = vmatprep.subr.mxu0 0.0
    %1454 = vmatpush1.msra.mxu0 0.0
    %1455 = vmatprep.subr.mxu0 0.0
    %1456 = vmatpush1.msra.mxu0 0.0
    %1457 = vmatprep.subr.mxu0 0.0
    %1458 = vmatpush1.msra.mxu0 0.0
    %1459 = vmatprep.subr.mxu0 0.0
    %1460 = vmatpush1.msra.mxu0 0.0
    %1461 = vmatprep.subr.mxu0 0.0
    %1462 = vmatpush1.msra.mxu0 0.0
    %1463 = vmatprep.subr.mxu0 0.0
    %1464 = vmatpush1.msra.mxu0 0.0
    %1465 = vmatprep.subr.mxu0 0.0
    %1466 = vmatpush1.msra.mxu0 0.0
    %1467 = vmatprep.subr.mxu0 0.0
    %1468 = vmatpush1.msra.mxu0 0.0
    %1469 = vmatprep.mubr.f32.mxu0 0.0
    %1470 = vmatmul.mubr.f32.gmra.mrb[0].mxu0 %v1403
    %v1471 = vpop.f32.mrb[0].mxu0
    %v1472 = vadd.f32 0.0, %v1471
    %v1473 = vpop.f32.mrb[0].mxu0
    %1474 = vdwg.mxu0
    %v1475 = vsel %vm134, %v1472, -inf
    %1476 = vmax.xlane.f32.xlu0 %v1475
    %v1477 = vpop.xlane.xlu0 %1476
    %v1478 = vsub.f32 %v1472, %v1477
    %v1479 = vmul.f32 %v1478, 1.442695
    %v1480 = vpow.pop %v1479
    %v1481 = vsel %vm134, %v1480, 0.0
    %1482 = vadd.xlane.f32.xlu0 %v1481
    %v1483 = vpop.xlane.xlu0 %1482
    %v1484 = vlog2.pop %v1483
    %v1485 = vmul.f32 %v1484, 0.6931472
    %v1486 = vsub.f32 %v1478, %v1485
    %v1487 = vsel %vm134, %v1486, -inf
    %1488 = vmax.xlane.f32.xlu0 %v1487
    %v1489 = vpop.xlane.xlu0 %1488
    %vm1490 = vcmp.eq.f32.partialorder %v1486, %v1489
    %v1491 = vsel %vm1490, %v130, 32
    %v1492 = vsel %vm134, %v1491, 2147483647
    %v1493 = vand.u32 %v1492, 65535
    %v1494 = vshra.s32 %v1492, 16
    %v1495 = vcvt.s32.f32 %v1493
    %v1496 = vcvt.s32.f32 %v1494
    %1497 = vmin.xlane.f32.xlu0 %v1496
    %v1498 = vpop.xlane.xlu0 %1497
    %vm1499 = vcmp.eq.f32.partialorder %v1496, %v1498
    %v1500 = vsel %vm1499, %v1495, inf
    %1501 = vmin.xlane.f32.xlu0 %v1500
    %v1502 = vpop.xlane.xlu0 %1501
    %v1503 = vcvt.f32.s32 %v1502
    %v1504 = vcvt.f32.s32 %v1498
    %v1505 = vshll.u32 %v1504, 16
    %v1506 = vadd.s32 %v1505, %v1503
    %vm1507 = vcmp.eq.s32.totalorder %v130, %v1506
    %v1508 = vsel %vm1507, 1, 0
    %v1509 = vcvt.s32.f32 %v1508
    %s1510 = scalar_lea.vmem [#allocation3], 8
    %1511 = vst.msk [vmem:[%s1510] sm:$0xff] %vm134, %v1486
    %1512 = vmatprep.subr.mxu0 0.0
    %1513 = vmatpush1.msra.mxu0 %v107
    %1514 = vmatprep.subr.mxu0 0.0
    %1515 = vmatpush1.msra.mxu0 %v108
    %1516 = vmatprep.subr.mxu0 0.0
    %1517 = vmatpush1.msra.mxu0 %v109
    %1518 = vmatprep.subr.mxu0 0.0
    %1519 = vmatpush1.msra.mxu0 %v110
    %1520 = vmatprep.subr.mxu0 0.0
    %1521 = vmatpush1.msra.mxu0 %v111
    %1522 = vmatprep.subr.mxu0 0.0
    %1523 = vmatpush1.msra.mxu0 %v112
    %1524 = vmatprep.subr.mxu0 0.0
    %1525 = vmatpush1.msra.mxu0 %v113
    %1526 = vmatprep.subr.mxu0 0.0
    %1527 = vmatpush1.msra.mxu0 %v114
    %1528 = vmatprep.subr.mxu0 0.0
    %1529 = vmatpush1.msra.mxu0 %v115
    %1530 = vmatprep.subr.mxu0 0.0
    %1531 = vmatpush1.msra.mxu0 %v116
    %1532 = vmatprep.subr.mxu0 0.0
    %1533 = vmatpush1.msra.mxu0 %v117
    %1534 = vmatprep.subr.mxu0 0.0
    %1535 = vmatpush1.msra.mxu0 %v118
    %1536 = vmatprep.subr.mxu0 0.0
    %1537 = vmatpush1.msra.mxu0 %v119
    %1538 = vmatprep.subr.mxu0 0.0
    %1539 = vmatpush1.msra.mxu0 %v120
    %1540 = vmatprep.subr.mxu0 0.0
    %1541 = vmatpush1.msra.mxu0 %v121
    %1542 = vmatprep.subr.mxu0 0.0
    %1543 = vmatpush1.msra.mxu0 %v122
    %1544 = vmatprep.subr.mxu0 0.0
    %1545 = vmatpush1.msra.mxu0 0.0
    %1546 = vmatprep.subr.mxu0 0.0
    %1547 = vmatpush1.msra.mxu0 0.0
    %1548 = vmatprep.subr.mxu0 0.0
    %1549 = vmatpush1.msra.mxu0 0.0
    %1550 = vmatprep.subr.mxu0 0.0
    %1551 = vmatpush1.msra.mxu0 0.0
    %1552 = vmatprep.subr.mxu0 0.0
    %1553 = vmatpush1.msra.mxu0 0.0
    %1554 = vmatprep.subr.mxu0 0.0
    %1555 = vmatpush1.msra.mxu0 0.0
    %1556 = vmatprep.subr.mxu0 0.0
    %1557 = vmatpush1.msra.mxu0 0.0
    %1558 = vmatprep.subr.mxu0 0.0
    %1559 = vmatpush1.msra.mxu0 0.0
    %1560 = vmatprep.subr.mxu0 0.0
    %1561 = vmatpush1.msra.mxu0 0.0
    %1562 = vmatprep.subr.mxu0 0.0
    %1563 = vmatpush1.msra.mxu0 0.0
    %1564 = vmatprep.subr.mxu0 0.0
    %1565 = vmatpush1.msra.mxu0 0.0
    %1566 = vmatprep.subr.mxu0 0.0
    %1567 = vmatpush1.msra.mxu0 0.0
    %1568 = vmatprep.subr.mxu0 0.0
    %1569 = vmatpush1.msra.mxu0 0.0
    %1570 = vmatprep.subr.mxu0 0.0
    %1571 = vmatpush1.msra.mxu0 0.0
    %1572 = vmatprep.subr.mxu0 0.0
    %1573 = vmatpush1.msra.mxu0 0.0
    %1574 = vmatprep.subr.mxu0 0.0
    %1575 = vmatpush1.msra.mxu0 0.0
    %1576 = vmatprep.mubr.f32.mxu0 0.0
    %1577 = vmatmul.mubr.f32.gmra.mrb[0].mxu0 %v1161
    %v1578 = vpop.f32.mrb[0].mxu0
    %v1579 = vadd.f32 0.0, %v1578
    %v1580 = vpop.f32.mrb[0].mxu0
    %1581 = vdwg.mxu0
    %s1582 = scalar_lea.vmem [#allocation5], 8
    %1583 = vst.msk [vmem:[%s1582] sm:$0xff] %vm864, %v1579
    %1584 = vst.msk [vmem:[#allocation2] sm:$0xff] %vm134, %v1509
    %1585 = vrot.lane.b32.xlu0 %v968, 64
    %v1586 = vpop.permute.xlu0 %1585
    %1588 = vst.msk [vmem:[#allocation2] sm:$0xff] %vm136, %v1586
    %v1589 = vld [vmem:[#allocation2] sm:$0xff]
    %v1591 = vsel %vm145, %v1589, 0
    %1593 = vmatprep.subr.mxu0 0.0
    %1594 = vmatpush1.msra.mxu0 %v48
    %1595 = vmatprep.subr.mxu0 0.0
    %1596 = vmatpush1.msra.mxu0 %v49
    %1597 = vmatprep.subr.mxu0 0.0
    %1598 = vmatpush1.msra.mxu0 %v50
    %1599 = vmatprep.subr.mxu0 0.0
    %1600 = vmatpush1.msra.mxu0 %v51
    %1601 = vmatprep.subr.mxu0 0.0
    %1602 = vmatpush1.msra.mxu0 %v52
    %1603 = vmatprep.subr.mxu0 0.0
    %1604 = vmatpush1.msra.mxu0 %v53
    %1605 = vmatprep.subr.mxu0 0.0
    %1606 = vmatpush1.msra.mxu0 %v54
    %1607 = vmatprep.subr.mxu0 0.0
    %1608 = vmatpush1.msra.mxu0 %v55
    %1609 = vmatprep.subr.mxu0 0.0
    %1610 = vmatpush1.msra.mxu0 0.0
    %1611 = vmatprep.subr.mxu0 0.0
    %1612 = vmatpush1.msra.mxu0 0.0
    %1613 = vmatprep.subr.mxu0 0.0
    %1614 = vmatpush1.msra.mxu0 0.0
    %1615 = vmatprep.subr.mxu0 0.0
    %1616 = vmatpush1.msra.mxu0 0.0
    %1617 = vmatprep.subr.mxu0 0.0
    %1618 = vmatpush1.msra.mxu0 0.0
    %1619 = vmatprep.subr.mxu0 0.0
    %1620 = vmatpush1.msra.mxu0 0.0
    %1621 = vmatprep.subr.mxu0 0.0
    %1622 = vmatpush1.msra.mxu0 0.0
    %1623 = vmatprep.subr.mxu0 0.0
    %1624 = vmatpush1.msra.mxu0 0.0
    %1625 = vmatprep.subr.mxu0 0.0
    %1626 = vmatpush1.msra.mxu0 0.0
    %1627 = vmatprep.subr.mxu0 0.0
    %1628 = vmatpush1.msra.mxu0 0.0
    %1629 = vmatprep.subr.mxu0 0.0
    %1630 = vmatpush1.msra.mxu0 0.0
    %1631 = vmatprep.subr.mxu0 0.0
    %1632 = vmatpush1.msra.mxu0 0.0
    %1633 = vmatprep.subr.mxu0 0.0
    %1634 = vmatpush1.msra.mxu0 0.0
    %1635 = vmatprep.subr.mxu0 0.0
    %1636 = vmatpush1.msra.mxu0 0.0
    %1637 = vmatprep.subr.mxu0 0.0
    %1638 = vmatpush1.msra.mxu0 0.0
    %1639 = vmatprep.subr.mxu0 0.0
    %1640 = vmatpush1.msra.mxu0 0.0
    %1641 = vmatprep.subr.mxu0 0.0
    %1642 = vmatpush1.msra.mxu0 0.0
    %1643 = vmatprep.subr.mxu0 0.0
    %1644 = vmatpush1.msra.mxu0 0.0
    %1645 = vmatprep.subr.mxu0 0.0
    %1646 = vmatpush1.msra.mxu0 0.0
    %1647 = vmatprep.subr.mxu0 0.0
    %1648 = vmatpush1.msra.mxu0 0.0
    %1649 = vmatprep.subr.mxu0 0.0
    %1650 = vmatpush1.msra.mxu0 0.0
    %1651 = vmatprep.subr.mxu0 0.0
    %1652 = vmatpush1.msra.mxu0 0.0
    %1653 = vmatprep.subr.mxu0 0.0
    %1654 = vmatpush1.msra.mxu0 0.0
    %1655 = vmatprep.subr.mxu0 0.0
    %1656 = vmatpush1.msra.mxu0 0.0
    %1657 = vmatprep.mubr.f32.mxu0 0.0
    %1658 = vmatmul.mubr.f32.gmra.mrb[0].mxu0 %v1591
    %v1659 = vpop.f32.mrb[0].mxu0
    %v1660 = vadd.f32 %v143, %v1659
    %v1661 = vpop.f32.mrb[0].mxu0
    %1662 = vdwg.mxu0
    %v1663 = vxor.u32 %v1660, 2147483648
    %v1664 = vmul.f32 %v1663, 1.442695
    %v1665 = vpow.pop %v1664
    %v1666 = vadd.f32 %v1665, 1.0
    %v1667 = vrcp.pop %v1666
    %v1668 = vmul.f32 1.0, %v1667
    %v1669 = vtanh.pop %v1660
    %v1670 = vmul.f32 %v1668, %v962
    %1672 = vrot.lane.b32.xlu0 %v1669, 64
    %v1673 = vpop.permute.xlu0 %1672
    %v1675 = vmul.f32 %v1668, %v1673
    %1677 = vrot.lane.b32.xlu0 %v1675, 32
    %v1678 = vpop.permute.xlu0 %1677
    %v1680 = vadd.f32 %v1670, %v1678
    %v1681 = vtanh.pop %v1680
    %1683 = vrot.lane.b32.xlu0 %v1681, 64
    %v1684 = vpop.permute.xlu0 %1683
    %v1686 = vmul.f32 %v1668, %v1684
    %1688 = vrot.lane.b32.xlu0 %v1686, 32
    %v1689 = vpop.permute.xlu0 %1688
    %1691 = vst.msk [vmem:[#allocation2] sm:$0xff] %vm134, %v1689
    %1692 = vrot.lane.b32.xlu0 %v1075, 64
    %v1693 = vpop.permute.xlu0 %1692
    %1695 = vst.msk [vmem:[#allocation2] sm:$0xff] %vm136, %v1693
    %v1696 = vld [vmem:[#allocation2] sm:$0xff]
    %v1698 = vsel %vm145, %v1696, 0
    %1700 = vmatprep.subr.mxu0 0.0
    %1701 = vmatpush1.msra.mxu0 %v57
    %1702 = vmatprep.subr.mxu0 0.0
    %1703 = vmatpush1.msra.mxu0 %v58
    %1704 = vmatprep.subr.mxu0 0.0
    %1705 = vmatpush1.msra.mxu0 %v59
    %1706 = vmatprep.subr.mxu0 0.0
    %1707 = vmatpush1.msra.mxu0 %v60
    %1708 = vmatprep.subr.mxu0 0.0
    %1709 = vmatpush1.msra.mxu0 %v61
    %1710 = vmatprep.subr.mxu0 0.0
    %1711 = vmatpush1.msra.mxu0 %v62
    %1712 = vmatprep.subr.mxu0 0.0
    %1713 = vmatpush1.msra.mxu0 %v63
    %1714 = vmatprep.subr.mxu0 0.0
    %1715 = vmatpush1.msra.mxu0 %v64
    %1716 = vmatprep.subr.mxu0 0.0
    %1717 = vmatpush1.msra.mxu0 0.0
    %1718 = vmatprep.subr.mxu0 0.0
    %1719 = vmatpush1.msra.mxu0 0.0
    %1720 = vmatprep.subr.mxu0 0.0
    %1721 = vmatpush1.msra.mxu0 0.0
    %1722 = vmatprep.subr.mxu0 0.0
    %1723 = vmatpush1.msra.mxu0 0.0
    %1724 = vmatprep.subr.mxu0 0.0
    %1725 = vmatpush1.msra.mxu0 0.0
    %1726 = vmatprep.subr.mxu0 0.0
    %1727 = vmatpush1.msra.mxu0 0.0
    %1728 = vmatprep.subr.mxu0 0.0
    %1729 = vmatpush1.msra.mxu0 0.0
    %1730 = vmatprep.subr.mxu0 0.0
    %1731 = vmatpush1.msra.mxu0 0.0
    %1732 = vmatprep.subr.mxu0 0.0
    %1733 = vmatpush1.msra.mxu0 0.0
    %1734 = vmatprep.subr.mxu0 0.0
    %1735 = vmatpush1.msra.mxu0 0.0
    %1736 = vmatprep.subr.mxu0 0.0
    %1737 = vmatpush1.msra.mxu0 0.0
    %1738 = vmatprep.subr.mxu0 0.0
    %1739 = vmatpush1.msra.mxu0 0.0
    %1740 = vmatprep.subr.mxu0 0.0
    %1741 = vmatpush1.msra.mxu0 0.0
    %1742 = vmatprep.subr.mxu0 0.0
    %1743 = vmatpush1.msra.mxu0 0.0
    %1744 = vmatprep.subr.mxu0 0.0
    %1745 = vmatpush1.msra.mxu0 0.0
    %1746 = vmatprep.subr.mxu0 0.0
    %1747 = vmatpush1.msra.mxu0 0.0
    %1748 = vmatprep.subr.mxu0 0.0
    %1749 = vmatpush1.msra.mxu0 0.0
    %1750 = vmatprep.subr.mxu0 0.0
    %1751 = vmatpush1.msra.mxu0 0.0
    %1752 = vmatprep.subr.mxu0 0.0
    %1753 = vmatpush1.msra.mxu0 0.0
    %1754 = vmatprep.subr.mxu0 0.0
    %1755 = vmatpush1.msra.mxu0 0.0
    %1756 = vmatprep.subr.mxu0 0.0
    %1757 = vmatpush1.msra.mxu0 0.0
    %1758 = vmatprep.subr.mxu0 0.0
    %1759 = vmatpush1.msra.mxu0 0.0
    %1760 = vmatprep.subr.mxu0 0.0
    %1761 = vmatpush1.msra.mxu0 0.0
    %1762 = vmatprep.subr.mxu0 0.0
    %1763 = vmatpush1.msra.mxu0 0.0
    %1764 = vmatprep.mubr.f32.mxu0 0.0
    %1765 = vmatmul.mubr.f32.gmra.mrb[0].mxu0 %v1698
    %v1766 = vpop.f32.mrb[0].mxu0
    %v1767 = vadd.f32 %v254, %v1766
    %v1768 = vpop.f32.mrb[0].mxu0
    %1769 = vdwg.mxu0
    %v1770 = vxor.u32 %v1767, 2147483648
    %v1771 = vmul.f32 %v1770, 1.442695
    %v1772 = vpow.pop %v1771
    %v1773 = vadd.f32 %v1772, 1.0
    %v1774 = vrcp.pop %v1773
    %v1775 = vmul.f32 1.0, %v1774
    %v1776 = vtanh.pop %v1767
    %v1777 = vmul.f32 %v1775, %v1069
    %1779 = vrot.lane.b32.xlu0 %v1776, 64
    %v1780 = vpop.permute.xlu0 %1779
    %v1782 = vmul.f32 %v1775, %v1780
    %1784 = vrot.lane.b32.xlu0 %v1782, 32
    %v1785 = vpop.permute.xlu0 %1784
    %v1787 = vadd.f32 %v1777, %v1785
    %v1788 = vtanh.pop %v1787
    %1790 = vrot.lane.b32.xlu0 %v1788, 64
    %v1791 = vpop.permute.xlu0 %1790
    %v1793 = vmul.f32 %v1775, %v1791
    %1795 = vrot.lane.b32.xlu0 %v1793, 32
    %v1796 = vpop.permute.xlu0 %1795
    %v1797 = vsel %vm134, %v1796, 0
    %1799 = vmatprep.subr.mxu0 0.0
    %1800 = vmatpush1.msra.mxu0 %v66
    %1801 = vmatprep.subr.mxu0 0.0
    %1802 = vmatpush1.msra.mxu0 %v67
    %1803 = vmatprep.subr.mxu0 0.0
    %1804 = vmatpush1.msra.mxu0 %v68
    %1805 = vmatprep.subr.mxu0 0.0
    %1806 = vmatpush1.msra.mxu0 %v69
    %1807 = vmatprep.subr.mxu0 0.0
    %1808 = vmatpush1.msra.mxu0 0.0
    %1809 = vmatprep.subr.mxu0 0.0
    %1810 = vmatpush1.msra.mxu0 0.0
    %1811 = vmatprep.subr.mxu0 0.0
    %1812 = vmatpush1.msra.mxu0 0.0
    %1813 = vmatprep.subr.mxu0 0.0
    %1814 = vmatpush1.msra.mxu0 0.0
    %1815 = vmatprep.subr.mxu0 0.0
    %1816 = vmatpush1.msra.mxu0 0.0
    %1817 = vmatprep.subr.mxu0 0.0
    %1818 = vmatpush1.msra.mxu0 0.0
    %1819 = vmatprep.subr.mxu0 0.0
    %1820 = vmatpush1.msra.mxu0 0.0
    %1821 = vmatprep.subr.mxu0 0.0
    %1822 = vmatpush1.msra.mxu0 0.0
    %1823 = vmatprep.subr.mxu0 0.0
    %1824 = vmatpush1.msra.mxu0 0.0
    %1825 = vmatprep.subr.mxu0 0.0
    %1826 = vmatpush1.msra.mxu0 0.0
    %1827 = vmatprep.subr.mxu0 0.0
    %1828 = vmatpush1.msra.mxu0 0.0
    %1829 = vmatprep.subr.mxu0 0.0
    %1830 = vmatpush1.msra.mxu0 0.0
    %1831 = vmatprep.subr.mxu0 0.0
    %1832 = vmatpush1.msra.mxu0 0.0
    %1833 = vmatprep.subr.mxu0 0.0
    %1834 = vmatpush1.msra.mxu0 0.0
    %1835 = vmatprep.subr.mxu0 0.0
    %1836 = vmatpush1.msra.mxu0 0.0
    %1837 = vmatprep.subr.mxu0 0.0
    %1838 = vmatpush1.msra.mxu0 0.0
    %1839 = vmatprep.subr.mxu0 0.0
    %1840 = vmatpush1.msra.mxu0 0.0
    %1841 = vmatprep.subr.mxu0 0.0
    %1842 = vmatpush1.msra.mxu0 0.0
    %1843 = vmatprep.subr.mxu0 0.0
    %1844 = vmatpush1.msra.mxu0 0.0
    %1845 = vmatprep.subr.mxu0 0.0
    %1846 = vmatpush1.msra.mxu0 0.0
    %1847 = vmatprep.subr.mxu0 0.0
    %1848 = vmatpush1.msra.mxu0 0.0
    %1849 = vmatprep.subr.mxu0 0.0
    %1850 = vmatpush1.msra.mxu0 0.0
    %1851 = vmatprep.subr.mxu0 0.0
    %1852 = vmatpush1.msra.mxu0 0.0
    %1853 = vmatprep.subr.mxu0 0.0
    %1854 = vmatpush1.msra.mxu0 0.0
    %1855 = vmatprep.subr.mxu0 0.0
    %1856 = vmatpush1.msra.mxu0 0.0
    %1857 = vmatprep.subr.mxu0 0.0
    %1858 = vmatpush1.msra.mxu0 0.0
    %1859 = vmatprep.subr.mxu0 0.0
    %1860 = vmatpush1.msra.mxu0 0.0
    %1861 = vmatprep.subr.mxu0 0.0
    %1862 = vmatpush1.msra.mxu0 0.0
    %1863 = vmatprep.mubr.f32.mxu0 0.0
    %1864 = vmatmul.mubr.f32.gmra.mrb[0].mxu0 %v1797
    %v1865 = vpop.f32.mrb[0].mxu0
    %v1866 = vadd.f32 %v123, %v1865
    %v1867 = vpop.f32.mrb[0].mxu0
    %1868 = vdwg.mxu0
    %1869 = vmax.xlane.f32.xlu0 %v1866
    %v1870 = vpop.xlane.xlu0 %1869
    %v1871 = vsub.f32 %v1866, %v1870
    %v1872 = vmul.f32 %v1871, 1.442695
    %v1873 = vpow.pop %v1872
    %v1874 = vmul.f32 %v1873, %v124
    %1875 = vadd.xlane.f32.xlu0 %v1874
    %v1876 = vpop.xlane.xlu0 %1875
    %v1877 = vrcp.pop %v1876
    %v1878 = vmul.f32 1.0, %v1877
    %v1879 = vmul.f32 %v1874, %v1878
    %1880 = vmatprep.subr.mxu0 0.0
    %1881 = vmatpush1.msra.mxu0 %v70
    %1882 = vmatprep.subr.mxu0 0.0
    %1883 = vmatpush1.msra.mxu0 %v71
    %1884 = vmatprep.subr.mxu0 0.0
    %1885 = vmatpush1.msra.mxu0 %v72
    %1886 = vmatprep.subr.mxu0 0.0
    %1887 = vmatpush1.msra.mxu0 %v73
    %1888 = vmatprep.subr.mxu0 0.0
    %1889 = vmatpush1.msra.mxu0 %v74
    %1890 = vmatprep.subr.mxu0 0.0
    %1891 = vmatpush1.msra.mxu0 %v75
    %1892 = vmatprep.subr.mxu0 0.0
    %1893 = vmatpush1.msra.mxu0 %v76
    %1894 = vmatprep.subr.mxu0 0.0
    %1895 = vmatpush1.msra.mxu0 %v77
    %1896 = vmatprep.subr.mxu0 0.0
    %1897 = vmatpush1.msra.mxu0 %v78
    %1898 = vmatprep.subr.mxu0 0.0
    %1899 = vmatpush1.msra.mxu0 %v79
    %1900 = vmatprep.subr.mxu0 0.0
    %1901 = vmatpush1.msra.mxu0 %v80
    %1902 = vmatprep.subr.mxu0 0.0
    %1903 = vmatpush1.msra.mxu0 %v81
    %1904 = vmatprep.subr.mxu0 0.0
    %1905 = vmatpush1.msra.mxu0 %v82
    %1906 = vmatprep.subr.mxu0 0.0
    %1907 = vmatpush1.msra.mxu0 %v83
    %1908 = vmatprep.subr.mxu0 0.0
    %1909 = vmatpush1.msra.mxu0 %v84
    %1910 = vmatprep.subr.mxu0 0.0
    %1911 = vmatpush1.msra.mxu0 %v85
    %1912 = vmatprep.subr.mxu0 0.0
    %1913 = vmatpush1.msra.mxu0 0.0
    %1914 = vmatprep.subr.mxu0 0.0
    %1915 = vmatpush1.msra.mxu0 0.0
    %1916 = vmatprep.subr.mxu0 0.0
    %1917 = vmatpush1.msra.mxu0 0.0
    %1918 = vmatprep.subr.mxu0 0.0
    %1919 = vmatpush1.msra.mxu0 0.0
    %1920 = vmatprep.subr.mxu0 0.0
    %1921 = vmatpush1.msra.mxu0 0.0
    %1922 = vmatprep.subr.mxu0 0.0
    %1923 = vmatpush1.msra.mxu0 0.0
    %1924 = vmatprep.subr.mxu0 0.0
    %1925 = vmatpush1.msra.mxu0 0.0
    %1926 = vmatprep.subr.mxu0 0.0
    %1927 = vmatpush1.msra.mxu0 0.0
    %1928 = vmatprep.subr.mxu0 0.0
    %1929 = vmatpush1.msra.mxu0 0.0
    %1930 = vmatprep.subr.mxu0 0.0
    %1931 = vmatpush1.msra.mxu0 0.0
    %1932 = vmatprep.subr.mxu0 0.0
    %1933 = vmatpush1.msra.mxu0 0.0
    %1934 = vmatprep.subr.mxu0 0.0
    %1935 = vmatpush1.msra.mxu0 0.0
    %1936 = vmatprep.subr.mxu0 0.0
    %1937 = vmatpush1.msra.mxu0 0.0
    %1938 = vmatprep.subr.mxu0 0.0
    %1939 = vmatpush1.msra.mxu0 0.0
    %1940 = vmatprep.subr.mxu0 0.0
    %1941 = vmatpush1.msra.mxu0 0.0
    %1942 = vmatprep.subr.mxu0 0.0
    %1943 = vmatpush1.msra.mxu0 0.0
    %1944 = vmatprep.mubr.f32.mxu0 0.0
    %1945 = vmatmul.mubr.f32.gmra.mrb[0].mxu0 %v1879
    %v1946 = vpop.f32.mrb[0].mxu0
    %v1947 = vadd.f32 0.0, %v1946
    %v1948 = vpop.f32.mrb[0].mxu0
    %1949 = vdwg.mxu0
    %1950 = vmatprep.subr.mxu0 0.0
    %1951 = vmatpush1.msra.mxu0 %v86
    %1952 = vmatprep.subr.mxu0 0.0
    %1953 = vmatpush1.msra.mxu0 %v87
    %1954 = vmatprep.subr.mxu0 0.0
    %1955 = vmatpush1.msra.mxu0 %v88
    %1956 = vmatprep.subr.mxu0 0.0
    %1957 = vmatpush1.msra.mxu0 %v89
    %1958 = vmatprep.subr.mxu0 0.0
    %1959 = vmatpush1.msra.mxu0 0.0
    %1960 = vmatprep.subr.mxu0 0.0
    %1961 = vmatpush1.msra.mxu0 0.0
    %1962 = vmatprep.subr.mxu0 0.0
    %1963 = vmatpush1.msra.mxu0 0.0
    %1964 = vmatprep.subr.mxu0 0.0
    %1965 = vmatpush1.msra.mxu0 0.0
    %1966 = vmatprep.subr.mxu0 0.0
    %1967 = vmatpush1.msra.mxu0 0.0
    %1968 = vmatprep.subr.mxu0 0.0
    %1969 = vmatpush1.msra.mxu0 0.0
    %1970 = vmatprep.subr.mxu0 0.0
    %1971 = vmatpush1.msra.mxu0 0.0
    %1972 = vmatprep.subr.mxu0 0.0
    %1973 = vmatpush1.msra.mxu0 0.0
    %1974 = vmatprep.subr.mxu0 0.0
    %1975 = vmatpush1.msra.mxu0 0.0
    %1976 = vmatprep.subr.mxu0 0.0
    %1977 = vmatpush1.msra.mxu0 0.0
    %1978 = vmatprep.subr.mxu0 0.0
    %1979 = vmatpush1.msra.mxu0 0.0
    %1980 = vmatprep.subr.mxu0 0.0
    %1981 = vmatpush1.msra.mxu0 0.0
    %1982 = vmatprep.subr.mxu0 0.0
    %1983 = vmatpush1.msra.mxu0 0.0
    %1984 = vmatprep.subr.mxu0 0.0
    %1985 = vmatpush1.msra.mxu0 0.0
    %1986 = vmatprep.subr.mxu0 0.0
    %1987 = vmatpush1.msra.mxu0 0.0
    %1988 = vmatprep.subr.mxu0 0.0
    %1989 = vmatpush1.msra.mxu0 0.0
    %1990 = vmatprep.subr.mxu0 0.0
    %1991 = vmatpush1.msra.mxu0 0.0
    %1992 = vmatprep.subr.mxu0 0.0
    %1993 = vmatpush1.msra.mxu0 0.0
    %1994 = vmatprep.subr.mxu0 0.0
    %1995 = vmatpush1.msra.mxu0 0.0
    %1996 = vmatprep.subr.mxu0 0.0
    %1997 = vmatpush1.msra.mxu0 0.0
    %1998 = vmatprep.subr.mxu0 0.0
    %1999 = vmatpush1.msra.mxu0 0.0
    %2000 = vmatprep.subr.mxu0 0.0
    %2001 = vmatpush1.msra.mxu0 0.0
    %2002 = vmatprep.subr.mxu0 0.0
    %2003 = vmatpush1.msra.mxu0 0.0
    %2004 = vmatprep.subr.mxu0 0.0
    %2005 = vmatpush1.msra.mxu0 0.0
    %2006 = vmatprep.subr.mxu0 0.0
    %2007 = vmatpush1.msra.mxu0 0.0
    %2008 = vmatprep.subr.mxu0 0.0
    %2009 = vmatpush1.msra.mxu0 0.0
    %2010 = vmatprep.subr.mxu0 0.0
    %2011 = vmatpush1.msra.mxu0 0.0
    %2012 = vmatprep.subr.mxu0 0.0
    %2013 = vmatpush1.msra.mxu0 0.0
    %2014 = vmatprep.mubr.f32.mxu0 0.0
    %2015 = vmatmul.mubr.f32.gmra.mrb[0].mxu0 %v1797
    %v2016 = vpop.f32.mrb[0].mxu0
    %v2017 = vadd.f32 %v1947, %v2016
    %v2018 = vpop.f32.mrb[0].mxu0
    %2019 = vdwg.mxu0
    %v2020 = vadd.f32 %v2017, %v583
    %2021 = vmatprep.subr.mxu0 0.0
    %2022 = vmatpush1.msra.mxu0 %v91
    %2023 = vmatprep.subr.mxu0 0.0
    %2024 = vmatpush1.msra.mxu0 %v92
    %2025 = vmatprep.subr.mxu0 0.0
    %2026 = vmatpush1.msra.mxu0 %v93
    %2027 = vmatprep.subr.mxu0 0.0
    %2028 = vmatpush1.msra.mxu0 %v94
    %2029 = vmatprep.subr.mxu0 0.0
    %2030 = vmatpush1.msra.mxu0 %v95
    %2031 = vmatprep.subr.mxu0 0.0
    %2032 = vmatpush1.msra.mxu0 %v96
    %2033 = vmatprep.subr.mxu0 0.0
    %2034 = vmatpush1.msra.mxu0 %v97
    %2035 = vmatprep.subr.mxu0 0.0
    %2036 = vmatpush1.msra.mxu0 %v98
    %2037 = vmatprep.subr.mxu0 0.0
    %2038 = vmatpush1.msra.mxu0 %v99
    %2039 = vmatprep.subr.mxu0 0.0
    %2040 = vmatpush1.msra.mxu0 %v100
    %2041 = vmatprep.subr.mxu0 0.0
    %2042 = vmatpush1.msra.mxu0 %v101
    %2043 = vmatprep.subr.mxu0 0.0
    %2044 = vmatpush1.msra.mxu0 %v102
    %2045 = vmatprep.subr.mxu0 0.0
    %2046 = vmatpush1.msra.mxu0 %v103
    %2047 = vmatprep.subr.mxu0 0.0
    %2048 = vmatpush1.msra.mxu0 %v104
    %2049 = vmatprep.subr.mxu0 0.0
    %2050 = vmatpush1.msra.mxu0 %v105
    %2051 = vmatprep.subr.mxu0 0.0
    %2052 = vmatpush1.msra.mxu0 %v106
    %2053 = vmatprep.subr.mxu0 0.0
    %2054 = vmatpush1.msra.mxu0 0.0
    %2055 = vmatprep.subr.mxu0 0.0
    %2056 = vmatpush1.msra.mxu0 0.0
    %2057 = vmatprep.subr.mxu0 0.0
    %2058 = vmatpush1.msra.mxu0 0.0
    %2059 = vmatprep.subr.mxu0 0.0
    %2060 = vmatpush1.msra.mxu0 0.0
    %2061 = vmatprep.subr.mxu0 0.0
    %2062 = vmatpush1.msra.mxu0 0.0
    %2063 = vmatprep.subr.mxu0 0.0
    %2064 = vmatpush1.msra.mxu0 0.0
    %2065 = vmatprep.subr.mxu0 0.0
    %2066 = vmatpush1.msra.mxu0 0.0
    %2067 = vmatprep.subr.mxu0 0.0
    %2068 = vmatpush1.msra.mxu0 0.0
    %2069 = vmatprep.subr.mxu0 0.0
    %2070 = vmatpush1.msra.mxu0 0.0
    %2071 = vmatprep.subr.mxu0 0.0
    %2072 = vmatpush1.msra.mxu0 0.0
    %2073 = vmatprep.subr.mxu0 0.0
    %2074 = vmatpush1.msra.mxu0 0.0
    %2075 = vmatprep.subr.mxu0 0.0
    %2076 = vmatpush1.msra.mxu0 0.0
    %2077 = vmatprep.subr.mxu0 0.0
    %2078 = vmatpush1.msra.mxu0 0.0
    %2079 = vmatprep.subr.mxu0 0.0
    %2080 = vmatpush1.msra.mxu0 0.0
    %2081 = vmatprep.subr.mxu0 0.0
    %2082 = vmatpush1.msra.mxu0 0.0
    %2083 = vmatprep.subr.mxu0 0.0
    %2084 = vmatpush1.msra.mxu0 0.0
    %2085 = vmatprep.mubr.f32.mxu0 0.0
    %2086 = vmatmul.mubr.f32.gmra.mrb[0].mxu0 %v1879
    %v2087 = vpop.f32.mrb[0].mxu0
    %v2088 = vadd.f32 0.0, %v2087
    %v2089 = vpop.f32.mrb[0].mxu0
    %2090 = vdwg.mxu0
    %v2091 = vmul.f32 %v2088, %v2088
    %v2092 = vsel %vm134, %v2091, 0.0
    %2093 = vadd.xlane.f32.xlu0 %v2092
    %v2094 = vpop.xlane.xlu0 %2093
    %v2095 = vrsqrt.pop %v2094
    %v2096 = vmul.f32 %v2094, %v2095
    %vm2097 = vcmp.eq.f32.partialorder %v2094, inf
    %v2098 = vsel %vm2097, %v2094, %v2096
    %vm2099 = vcmp.eq.f32.partialorder %v2094, 0.0
    %v2100 = vand.u32 %v2094, 2147483648
    %v2101 = vsel %vm2099, %v2100, %v2098
    %v2102 = vmul.f32 %v2020, %v2020
    %v2103 = vsel %vm134, %v2102, 0.0
    %2104 = vadd.xlane.f32.xlu0 %v2103
    %v2105 = vpop.xlane.xlu0 %2104
    %v2106 = vrsqrt.pop %v2105
    %v2107 = vmul.f32 %v2105, %v2106
    %vm2108 = vcmp.eq.f32.partialorder %v2105, inf
    %v2109 = vsel %vm2108, %v2105, %v2107
    %vm2110 = vcmp.eq.f32.partialorder %v2105, 0.0
    %v2111 = vand.u32 %v2105, 2147483648
    %v2112 = vsel %vm2110, %v2111, %v2109
    %v2113 = vmul.f32 %v2101, 0.2
    %v2114 = vmin.f32 %v2112, %v2113
    %v2115 = vmax.f32 %v2112, 1e-12
    %v2116 = vrcp.pop %v2115
    %v2117 = vmul.f32 %v2020, %v2116
    %v2118 = vmul.f32 %v2117, %v2114
    %v2119 = vadd.f32 %v2088, %v2118
    %v2121 = vsel %vm134, %v2119, 0
    %2123 = vmatprep.subr.mxu0 0.0
    %2124 = vmatpush1.msra.mxu0 %v125
    %2125 = vmatprep.subr.mxu0 0.0
    %2126 = vmatpush1.msra.mxu0 %v126
    %2127 = vmatprep.subr.mxu0 0.0
    %2128 = vmatpush1.msra.mxu0 %v127
    %2129 = vmatprep.subr.mxu0 0.0
    %2130 = vmatpush1.msra.mxu0 %v128
    %2131 = vmatprep.subr.mxu0 0.0
    %2132 = vmatpush1.msra.mxu0 0.0
    %2133 = vmatprep.subr.mxu0 0.0
    %2134 = vmatpush1.msra.mxu0 0.0
    %2135 = vmatprep.subr.mxu0 0.0
    %2136 = vmatpush1.msra.mxu0 0.0
    %2137 = vmatprep.subr.mxu0 0.0
    %2138 = vmatpush1.msra.mxu0 0.0
    %2139 = vmatprep.subr.mxu0 0.0
    %2140 = vmatpush1.msra.mxu0 0.0
    %2141 = vmatprep.subr.mxu0 0.0
    %2142 = vmatpush1.msra.mxu0 0.0
    %2143 = vmatprep.subr.mxu0 0.0
    %2144 = vmatpush1.msra.mxu0 0.0
    %2145 = vmatprep.subr.mxu0 0.0
    %2146 = vmatpush1.msra.mxu0 0.0
    %2147 = vmatprep.subr.mxu0 0.0
    %2148 = vmatpush1.msra.mxu0 0.0
    %2149 = vmatprep.subr.mxu0 0.0
    %2150 = vmatpush1.msra.mxu0 0.0
    %2151 = vmatprep.subr.mxu0 0.0
    %2152 = vmatpush1.msra.mxu0 0.0
    %2153 = vmatprep.subr.mxu0 0.0
    %2154 = vmatpush1.msra.mxu0 0.0
    %2155 = vmatprep.subr.mxu0 0.0
    %2156 = vmatpush1.msra.mxu0 0.0
    %2157 = vmatprep.subr.mxu0 0.0
    %2158 = vmatpush1.msra.mxu0 0.0
    %2159 = vmatprep.subr.mxu0 0.0
    %2160 = vmatpush1.msra.mxu0 0.0
    %2161 = vmatprep.subr.mxu0 0.0
    %2162 = vmatpush1.msra.mxu0 0.0
    %2163 = vmatprep.subr.mxu0 0.0
    %2164 = vmatpush1.msra.mxu0 0.0
    %2165 = vmatprep.subr.mxu0 0.0
    %2166 = vmatpush1.msra.mxu0 0.0
    %2167 = vmatprep.subr.mxu0 0.0
    %2168 = vmatpush1.msra.mxu0 0.0
    %2169 = vmatprep.subr.mxu0 0.0
    %2170 = vmatpush1.msra.mxu0 0.0
    %2171 = vmatprep.subr.mxu0 0.0
    %2172 = vmatpush1.msra.mxu0 0.0
    %2173 = vmatprep.subr.mxu0 0.0
    %2174 = vmatpush1.msra.mxu0 0.0
    %2175 = vmatprep.subr.mxu0 0.0
    %2176 = vmatpush1.msra.mxu0 0.0
    %2177 = vmatprep.subr.mxu0 0.0
    %2178 = vmatpush1.msra.mxu0 0.0
    %2179 = vmatprep.subr.mxu0 0.0
    %2180 = vmatpush1.msra.mxu0 0.0
    %2181 = vmatprep.subr.mxu0 0.0
    %2182 = vmatpush1.msra.mxu0 0.0
    %2183 = vmatprep.subr.mxu0 0.0
    %2184 = vmatpush1.msra.mxu0 0.0
    %2185 = vmatprep.subr.mxu0 0.0
    %2186 = vmatpush1.msra.mxu0 0.0
    %2187 = vmatprep.mubr.f32.mxu0 0.0
    %2188 = vmatmul.mubr.f32.gmra.mrb[0].mxu0 %v2121
    %v2189 = vpop.f32.mrb[0].mxu0
    %v2190 = vadd.f32 0.0, %v2189
    %v2191 = vpop.f32.mrb[0].mxu0
    %2192 = vdwg.mxu0
    %v2193 = vsel %vm134, %v2190, -inf
    %2194 = vmax.xlane.f32.xlu0 %v2193
    %v2195 = vpop.xlane.xlu0 %2194
    %v2196 = vsub.f32 %v2190, %v2195
    %v2197 = vmul.f32 %v2196, 1.442695
    %v2198 = vpow.pop %v2197
    %v2199 = vsel %vm134, %v2198, 0.0
    %2200 = vadd.xlane.f32.xlu0 %v2199
    %v2201 = vpop.xlane.xlu0 %2200
    %v2202 = vlog2.pop %v2201
    %v2203 = vmul.f32 %v2202, 0.6931472
    %v2204 = vsub.f32 %v2196, %v2203
    %v2205 = vsel %vm134, %v2204, -inf
    %2206 = vmax.xlane.f32.xlu0 %v2205
    %v2207 = vpop.xlane.xlu0 %2206
    %vm2208 = vcmp.eq.f32.partialorder %v2204, %v2207
    %v2209 = vsel %vm2208, %v130, 32
    %v2210 = vsel %vm134, %v2209, 2147483647
    %v2211 = vand.u32 %v2210, 65535
    %v2212 = vshra.s32 %v2210, 16
    %v2213 = vcvt.s32.f32 %v2211
    %v2214 = vcvt.s32.f32 %v2212
    %2215 = vmin.xlane.f32.xlu0 %v2214
    %v2216 = vpop.xlane.xlu0 %2215
    %vm2217 = vcmp.eq.f32.partialorder %v2214, %v2216
    %v2218 = vsel %vm2217, %v2213, inf
    %2219 = vmin.xlane.f32.xlu0 %v2218
    %v2220 = vpop.xlane.xlu0 %2219
    %v2221 = vcvt.f32.s32 %v2220
    %v2222 = vcvt.f32.s32 %v2216
    %v2223 = vshll.u32 %v2222, 16
    %v2224 = vadd.s32 %v2223, %v2221
    %vm2225 = vcmp.eq.s32.totalorder %v130, %v2224
    %v2226 = vsel %vm2225, 1, 0
    %v2227 = vcvt.s32.f32 %v2226
    %s2228 = scalar_lea.vmem [#allocation3], 16
    %2229 = vst.msk [vmem:[%s2228] sm:$0xff] %vm134, %v2204
    %2230 = vmatprep.subr.mxu0 0.0
    %2231 = vmatpush1.msra.mxu0 %v107
    %2232 = vmatprep.subr.mxu0 0.0
    %2233 = vmatpush1.msra.mxu0 %v108
    %2234 = vmatprep.subr.mxu0 0.0
    %2235 = vmatpush1.msra.mxu0 %v109
    %2236 = vmatprep.subr.mxu0 0.0
    %2237 = vmatpush1.msra.mxu0 %v110
    %2238 = vmatprep.subr.mxu0 0.0
    %2239 = vmatpush1.msra.mxu0 %v111
    %2240 = vmatprep.subr.mxu0 0.0
    %2241 = vmatpush1.msra.mxu0 %v112
    %2242 = vmatprep.subr.mxu0 0.0
    %2243 = vmatpush1.msra.mxu0 %v113
    %2244 = vmatprep.subr.mxu0 0.0
    %2245 = vmatpush1.msra.mxu0 %v114
    %2246 = vmatprep.subr.mxu0 0.0
    %2247 = vmatpush1.msra.mxu0 %v115
    %2248 = vmatprep.subr.mxu0 0.0
    %2249 = vmatpush1.msra.mxu0 %v116
    %2250 = vmatprep.subr.mxu0 0.0
    %2251 = vmatpush1.msra.mxu0 %v117
    %2252 = vmatprep.subr.mxu0 0.0
    %2253 = vmatpush1.msra.mxu0 %v118
    %2254 = vmatprep.subr.mxu0 0.0
    %2255 = vmatpush1.msra.mxu0 %v119
    %2256 = vmatprep.subr.mxu0 0.0
    %2257 = vmatpush1.msra.mxu0 %v120
    %2258 = vmatprep.subr.mxu0 0.0
    %2259 = vmatpush1.msra.mxu0 %v121
    %2260 = vmatprep.subr.mxu0 0.0
    %2261 = vmatpush1.msra.mxu0 %v122
    %2262 = vmatprep.subr.mxu0 0.0
    %2263 = vmatpush1.msra.mxu0 0.0
    %2264 = vmatprep.subr.mxu0 0.0
    %2265 = vmatpush1.msra.mxu0 0.0
    %2266 = vmatprep.subr.mxu0 0.0
    %2267 = vmatpush1.msra.mxu0 0.0
    %2268 = vmatprep.subr.mxu0 0.0
    %2269 = vmatpush1.msra.mxu0 0.0
    %2270 = vmatprep.subr.mxu0 0.0
    %2271 = vmatpush1.msra.mxu0 0.0
    %2272 = vmatprep.subr.mxu0 0.0
    %2273 = vmatpush1.msra.mxu0 0.0
    %2274 = vmatprep.subr.mxu0 0.0
    %2275 = vmatpush1.msra.mxu0 0.0
    %2276 = vmatprep.subr.mxu0 0.0
    %2277 = vmatpush1.msra.mxu0 0.0
    %2278 = vmatprep.subr.mxu0 0.0
    %2279 = vmatpush1.msra.mxu0 0.0
    %2280 = vmatprep.subr.mxu0 0.0
    %2281 = vmatpush1.msra.mxu0 0.0
    %2282 = vmatprep.subr.mxu0 0.0
    %2283 = vmatpush1.msra.mxu0 0.0
    %2284 = vmatprep.subr.mxu0 0.0
    %2285 = vmatpush1.msra.mxu0 0.0
    %2286 = vmatprep.subr.mxu0 0.0
    %2287 = vmatpush1.msra.mxu0 0.0
    %2288 = vmatprep.subr.mxu0 0.0
    %2289 = vmatpush1.msra.mxu0 0.0
    %2290 = vmatprep.subr.mxu0 0.0
    %2291 = vmatpush1.msra.mxu0 0.0
    %2292 = vmatprep.subr.mxu0 0.0
    %2293 = vmatpush1.msra.mxu0 0.0
    %2294 = vmatprep.mubr.f32.mxu0 0.0
    %2295 = vmatmul.mubr.f32.gmra.mrb[0].mxu0 %v1879
    %v2296 = vpop.f32.mrb[0].mxu0
    %v2297 = vadd.f32 0.0, %v2296
    %v2298 = vpop.f32.mrb[0].mxu0
    %2299 = vdwg.mxu0
    %s2300 = scalar_lea.vmem [#allocation5], 16
    %2301 = vst.msk [vmem:[%s2300] sm:$0xff] %vm864, %v2297
    %2302 = vst.msk [vmem:[#allocation2] sm:$0xff] %vm134, %v2227
    %2303 = vrot.lane.b32.xlu0 %v1686, 64
    %v2304 = vpop.permute.xlu0 %2303
    %2306 = vst.msk [vmem:[#allocation2] sm:$0xff] %vm136, %v2304
    %v2307 = vld [vmem:[#allocation2] sm:$0xff]
    %v2309 = vsel %vm145, %v2307, 0
    %2311 = vmatprep.subr.mxu0 0.0
    %2312 = vmatpush1.msra.mxu0 %v48
    %2313 = vmatprep.subr.mxu0 0.0
    %2314 = vmatpush1.msra.mxu0 %v49
    %2315 = vmatprep.subr.mxu0 0.0
    %2316 = vmatpush1.msra.mxu0 %v50
    %2317 = vmatprep.subr.mxu0 0.0
    %2318 = vmatpush1.msra.mxu0 %v51
    %2319 = vmatprep.subr.mxu0 0.0
    %2320 = vmatpush1.msra.mxu0 %v52
    %2321 = vmatprep.subr.mxu0 0.0
    %2322 = vmatpush1.msra.mxu0 %v53
    %2323 = vmatprep.subr.mxu0 0.0
    %2324 = vmatpush1.msra.mxu0 %v54
    %2325 = vmatprep.subr.mxu0 0.0
    %2326 = vmatpush1.msra.mxu0 %v55
    %2327 = vmatprep.subr.mxu0 0.0
    %2328 = vmatpush1.msra.mxu0 0.0
    %2329 = vmatprep.subr.mxu0 0.0
    %2330 = vmatpush1.msra.mxu0 0.0
    %2331 = vmatprep.subr.mxu0 0.0
    %2332 = vmatpush1.msra.mxu0 0.0
    %2333 = vmatprep.subr.mxu0 0.0
    %2334 = vmatpush1.msra.mxu0 0.0
    %2335 = vmatprep.subr.mxu0 0.0
    %2336 = vmatpush1.msra.mxu0 0.0
    %2337 = vmatprep.subr.mxu0 0.0
    %2338 = vmatpush1.msra.mxu0 0.0
    %2339 = vmatprep.subr.mxu0 0.0
    %2340 = vmatpush1.msra.mxu0 0.0
    %2341 = vmatprep.subr.mxu0 0.0
    %2342 = vmatpush1.msra.mxu0 0.0
    %2343 = vmatprep.subr.mxu0 0.0
    %2344 = vmatpush1.msra.mxu0 0.0
    %2345 = vmatprep.subr.mxu0 0.0
    %2346 = vmatpush1.msra.mxu0 0.0
    %2347 = vmatprep.subr.mxu0 0.0
    %2348 = vmatpush1.msra.mxu0 0.0
    %2349 = vmatprep.subr.mxu0 0.0
    %2350 = vmatpush1.msra.mxu0 0.0
    %2351 = vmatprep.subr.mxu0 0.0
    %2352 = vmatpush1.msra.mxu0 0.0
    %2353 = vmatprep.subr.mxu0 0.0
    %2354 = vmatpush1.msra.mxu0 0.0
    %2355 = vmatprep.subr.mxu0 0.0
    %2356 = vmatpush1.msra.mxu0 0.0
    %2357 = vmatprep.subr.mxu0 0.0
    %2358 = vmatpush1.msra.mxu0 0.0
    %2359 = vmatprep.subr.mxu0 0.0
    %2360 = vmatpush1.msra.mxu0 0.0
    %2361 = vmatprep.subr.mxu0 0.0
    %2362 = vmatpush1.msra.mxu0 0.0
    %2363 = vmatprep.subr.mxu0 0.0
    %2364 = vmatpush1.msra.mxu0 0.0
    %2365 = vmatprep.subr.mxu0 0.0
    %2366 = vmatpush1.msra.mxu0 0.0
    %2367 = vmatprep.subr.mxu0 0.0
    %2368 = vmatpush1.msra.mxu0 0.0
    %2369 = vmatprep.subr.mxu0 0.0
    %2370 = vmatpush1.msra.mxu0 0.0
    %2371 = vmatprep.subr.mxu0 0.0
    %2372 = vmatpush1.msra.mxu0 0.0
    %2373 = vmatprep.subr.mxu0 0.0
    %2374 = vmatpush1.msra.mxu0 0.0
    %2375 = vmatprep.mubr.f32.mxu0 0.0
    %2376 = vmatmul.mubr.f32.gmra.mrb[0].mxu0 %v2309
    %v2377 = vpop.f32.mrb[0].mxu0
    %v2378 = vadd.f32 %v143, %v2377
    %v2379 = vpop.f32.mrb[0].mxu0
    %2380 = vdwg.mxu0
    %v2381 = vxor.u32 %v2378, 2147483648
    %v2382 = vmul.f32 %v2381, 1.442695
    %v2383 = vpow.pop %v2382
    %v2384 = vadd.f32 %v2383, 1.0
    %v2385 = vrcp.pop %v2384
    %v2386 = vmul.f32 1.0, %v2385
    %v2387 = vtanh.pop %v2378
    %v2388 = vmul.f32 %v2386, %v1680
    %2390 = vrot.lane.b32.xlu0 %v2387, 64
    %v2391 = vpop.permute.xlu0 %2390
    %v2393 = vmul.f32 %v2386, %v2391
    %2395 = vrot.lane.b32.xlu0 %v2393, 32
    %v2396 = vpop.permute.xlu0 %2395
    %v2398 = vadd.f32 %v2388, %v2396
    %v2399 = vtanh.pop %v2398
    %2401 = vrot.lane.b32.xlu0 %v2399, 64
    %v2402 = vpop.permute.xlu0 %2401
    %v2404 = vmul.f32 %v2386, %v2402
    %2406 = vrot.lane.b32.xlu0 %v2404, 32
    %v2407 = vpop.permute.xlu0 %2406
    %2409 = vst.msk [vmem:[#allocation2] sm:$0xff] %vm134, %v2407
    %2410 = vrot.lane.b32.xlu0 %v1793, 64
    %v2411 = vpop.permute.xlu0 %2410
    %2413 = vst.msk [vmem:[#allocation2] sm:$0xff] %vm136, %v2411
    %v2414 = vld [vmem:[#allocation2] sm:$0xff]
    %v2416 = vsel %vm145, %v2414, 0
    %2418 = vmatprep.subr.mxu0 0.0
    %2419 = vmatpush1.msra.mxu0 %v57
    %2420 = vmatprep.subr.mxu0 0.0
    %2421 = vmatpush1.msra.mxu0 %v58
    %2422 = vmatprep.subr.mxu0 0.0
    %2423 = vmatpush1.msra.mxu0 %v59
    %2424 = vmatprep.subr.mxu0 0.0
    %2425 = vmatpush1.msra.mxu0 %v60
    %2426 = vmatprep.subr.mxu0 0.0
    %2427 = vmatpush1.msra.mxu0 %v61
    %2428 = vmatprep.subr.mxu0 0.0
    %2429 = vmatpush1.msra.mxu0 %v62
    %2430 = vmatprep.subr.mxu0 0.0
    %2431 = vmatpush1.msra.mxu0 %v63
    %2432 = vmatprep.subr.mxu0 0.0
    %2433 = vmatpush1.msra.mxu0 %v64
    %2434 = vmatprep.subr.mxu0 0.0
    %2435 = vmatpush1.msra.mxu0 0.0
    %2436 = vmatprep.subr.mxu0 0.0
    %2437 = vmatpush1.msra.mxu0 0.0
    %2438 = vmatprep.subr.mxu0 0.0
    %2439 = vmatpush1.msra.mxu0 0.0
    %2440 = vmatprep.subr.mxu0 0.0
    %2441 = vmatpush1.msra.mxu0 0.0
    %2442 = vmatprep.subr.mxu0 0.0
    %2443 = vmatpush1.msra.mxu0 0.0
    %2444 = vmatprep.subr.mxu0 0.0
    %2445 = vmatpush1.msra.mxu0 0.0
    %2446 = vmatprep.subr.mxu0 0.0
    %2447 = vmatpush1.msra.mxu0 0.0
    %2448 = vmatprep.subr.mxu0 0.0
    %2449 = vmatpush1.msra.mxu0 0.0
    %2450 = vmatprep.subr.mxu0 0.0
    %2451 = vmatpush1.msra.mxu0 0.0
    %2452 = vmatprep.subr.mxu0 0.0
    %2453 = vmatpush1.msra.mxu0 0.0
    %2454 = vmatprep.subr.mxu0 0.0
    %2455 = vmatpush1.msra.mxu0 0.0
    %2456 = vmatprep.subr.mxu0 0.0
    %2457 = vmatpush1.msra.mxu0 0.0
    %2458 = vmatprep.subr.mxu0 0.0
    %2459 = vmatpush1.msra.mxu0 0.0
    %2460 = vmatprep.subr.mxu0 0.0
    %2461 = vmatpush1.msra.mxu0 0.0
    %2462 = vmatprep.subr.mxu0 0.0
    %2463 = vmatpush1.msra.mxu0 0.0
    %2464 = vmatprep.subr.mxu0 0.0
    %2465 = vmatpush1.msra.mxu0 0.0
    %2466 = vmatprep.subr.mxu0 0.0
    %2467 = vmatpush1.msra.mxu0 0.0
    %2468 = vmatprep.subr.mxu0 0.0
    %2469 = vmatpush1.msra.mxu0 0.0
    %2470 = vmatprep.subr.mxu0 0.0
    %2471 = vmatpush1.msra.mxu0 0.0
    %2472 = vmatprep.subr.mxu0 0.0
    %2473 = vmatpush1.msra.mxu0 0.0
    %2474 = vmatprep.subr.mxu0 0.0
    %2475 = vmatpush1.msra.mxu0 0.0
    %2476 = vmatprep.subr.mxu0 0.0
    %2477 = vmatpush1.msra.mxu0 0.0
    %2478 = vmatprep.subr.mxu0 0.0
    %2479 = vmatpush1.msra.mxu0 0.0
    %2480 = vmatprep.subr.mxu0 0.0
    %2481 = vmatpush1.msra.mxu0 0.0
    %2482 = vmatprep.mubr.f32.mxu0 0.0
    %2483 = vmatmul.mubr.f32.gmra.mrb[0].mxu0 %v2416
    %v2484 = vpop.f32.mrb[0].mxu0
    %v2485 = vadd.f32 %v254, %v2484
    %v2486 = vpop.f32.mrb[0].mxu0
    %2487 = vdwg.mxu0
    %v2488 = vxor.u32 %v2485, 2147483648
    %v2489 = vmul.f32 %v2488, 1.442695
    %v2490 = vpow.pop %v2489
    %v2491 = vadd.f32 %v2490, 1.0
    %v2492 = vrcp.pop %v2491
    %v2493 = vmul.f32 1.0, %v2492
    %v2494 = vtanh.pop %v2485
    %v2495 = vmul.f32 %v2493, %v1787
    %2497 = vrot.lane.b32.xlu0 %v2494, 64
    %v2498 = vpop.permute.xlu0 %2497
    %v2500 = vmul.f32 %v2493, %v2498
    %2502 = vrot.lane.b32.xlu0 %v2500, 32
    %v2503 = vpop.permute.xlu0 %2502
    %v2505 = vadd.f32 %v2495, %v2503
    %v2506 = vtanh.pop %v2505
    %2508 = vrot.lane.b32.xlu0 %v2506, 64
    %v2509 = vpop.permute.xlu0 %2508
    %v2511 = vmul.f32 %v2493, %v2509
    %2513 = vrot.lane.b32.xlu0 %v2511, 32
    %v2514 = vpop.permute.xlu0 %2513
    %v2515 = vsel %vm134, %v2514, 0
    %2517 = vmatprep.subr.mxu0 0.0
    %2518 = vmatpush1.msra.mxu0 %v66
    %2519 = vmatprep.subr.mxu0 0.0
    %2520 = vmatpush1.msra.mxu0 %v67
    %2521 = vmatprep.subr.mxu0 0.0
    %2522 = vmatpush1.msra.mxu0 %v68
    %2523 = vmatprep.subr.mxu0 0.0
    %2524 = vmatpush1.msra.mxu0 %v69
    %2525 = vmatprep.subr.mxu0 0.0
    %2526 = vmatpush1.msra.mxu0 0.0
    %2527 = vmatprep.subr.mxu0 0.0
    %2528 = vmatpush1.msra.mxu0 0.0
    %2529 = vmatprep.subr.mxu0 0.0
    %2530 = vmatpush1.msra.mxu0 0.0
    %2531 = vmatprep.subr.mxu0 0.0
    %2532 = vmatpush1.msra.mxu0 0.0
    %2533 = vmatprep.subr.mxu0 0.0
    %2534 = vmatpush1.msra.mxu0 0.0
    %2535 = vmatprep.subr.mxu0 0.0
    %2536 = vmatpush1.msra.mxu0 0.0
    %2537 = vmatprep.subr.mxu0 0.0
    %2538 = vmatpush1.msra.mxu0 0.0
    %2539 = vmatprep.subr.mxu0 0.0
    %2540 = vmatpush1.msra.mxu0 0.0
    %2541 = vmatprep.subr.mxu0 0.0
    %2542 = vmatpush1.msra.mxu0 0.0
    %2543 = vmatprep.subr.mxu0 0.0
    %2544 = vmatpush1.msra.mxu0 0.0
    %2545 = vmatprep.subr.mxu0 0.0
    %2546 = vmatpush1.msra.mxu0 0.0
    %2547 = vmatprep.subr.mxu0 0.0
    %2548 = vmatpush1.msra.mxu0 0.0
    %2549 = vmatprep.subr.mxu0 0.0
    %2550 = vmatpush1.msra.mxu0 0.0
    %2551 = vmatprep.subr.mxu0 0.0
    %2552 = vmatpush1.msra.mxu0 0.0
    %2553 = vmatprep.subr.mxu0 0.0
    %2554 = vmatpush1.msra.mxu0 0.0
    %2555 = vmatprep.subr.mxu0 0.0
    %2556 = vmatpush1.msra.mxu0 0.0
    %2557 = vmatprep.subr.mxu0 0.0
    %2558 = vmatpush1.msra.mxu0 0.0
    %2559 = vmatprep.subr.mxu0 0.0
    %2560 = vmatpush1.msra.mxu0 0.0
    %2561 = vmatprep.subr.mxu0 0.0
    %2562 = vmatpush1.msra.mxu0 0.0
    %2563 = vmatprep.subr.mxu0 0.0
    %2564 = vmatpush1.msra.mxu0 0.0
    %2565 = vmatprep.subr.mxu0 0.0
    %2566 = vmatpush1.msra.mxu0 0.0
    %2567 = vmatprep.subr.mxu0 0.0
    %2568 = vmatpush1.msra.mxu0 0.0
    %2569 = vmatprep.subr.mxu0 0.0
    %2570 = vmatpush1.msra.mxu0 0.0
    %2571 = vmatprep.subr.mxu0 0.0
    %2572 = vmatpush1.msra.mxu0 0.0
    %2573 = vmatprep.subr.mxu0 0.0
    %2574 = vmatpush1.msra.mxu0 0.0
    %2575 = vmatprep.subr.mxu0 0.0
    %2576 = vmatpush1.msra.mxu0 0.0
    %2577 = vmatprep.subr.mxu0 0.0
    %2578 = vmatpush1.msra.mxu0 0.0
    %2579 = vmatprep.subr.mxu0 0.0
    %2580 = vmatpush1.msra.mxu0 0.0
    %2581 = vmatprep.mubr.f32.mxu0 0.0
    %2582 = vmatmul.mubr.f32.gmra.mrb[0].mxu0 %v2515
    %v2583 = vpop.f32.mrb[0].mxu0
    %v2584 = vadd.f32 %v123, %v2583
    %v2585 = vpop.f32.mrb[0].mxu0
    %2586 = vdwg.mxu0
    %2587 = vmax.xlane.f32.xlu0 %v2584
    %v2588 = vpop.xlane.xlu0 %2587
    %v2589 = vsub.f32 %v2584, %v2588
    %v2590 = vmul.f32 %v2589, 1.442695
    %v2591 = vpow.pop %v2590
    %v2592 = vmul.f32 %v2591, %v124
    %2593 = vadd.xlane.f32.xlu0 %v2592
    %v2594 = vpop.xlane.xlu0 %2593
    %v2595 = vrcp.pop %v2594
    %v2596 = vmul.f32 1.0, %v2595
    %v2597 = vmul.f32 %v2592, %v2596
    %2598 = vmatprep.subr.mxu0 0.0
    %2599 = vmatpush1.msra.mxu0 %v70
    %2600 = vmatprep.subr.mxu0 0.0
    %2601 = vmatpush1.msra.mxu0 %v71
    %2602 = vmatprep.subr.mxu0 0.0
    %2603 = vmatpush1.msra.mxu0 %v72
    %2604 = vmatprep.subr.mxu0 0.0
    %2605 = vmatpush1.msra.mxu0 %v73
    %2606 = vmatprep.subr.mxu0 0.0
    %2607 = vmatpush1.msra.mxu0 %v74
    %2608 = vmatprep.subr.mxu0 0.0
    %2609 = vmatpush1.msra.mxu0 %v75
    %2610 = vmatprep.subr.mxu0 0.0
    %2611 = vmatpush1.msra.mxu0 %v76
    %2612 = vmatprep.subr.mxu0 0.0
    %2613 = vmatpush1.msra.mxu0 %v77
    %2614 = vmatprep.subr.mxu0 0.0
    %2615 = vmatpush1.msra.mxu0 %v78
    %2616 = vmatprep.subr.mxu0 0.0
    %2617 = vmatpush1.msra.mxu0 %v79
    %2618 = vmatprep.subr.mxu0 0.0
    %2619 = vmatpush1.msra.mxu0 %v80
    %2620 = vmatprep.subr.mxu0 0.0
    %2621 = vmatpush1.msra.mxu0 %v81
    %2622 = vmatprep.subr.mxu0 0.0
    %2623 = vmatpush1.msra.mxu0 %v82
    %2624 = vmatprep.subr.mxu0 0.0
    %2625 = vmatpush1.msra.mxu0 %v83
    %2626 = vmatprep.subr.mxu0 0.0
    %2627 = vmatpush1.msra.mxu0 %v84
    %2628 = vmatprep.subr.mxu0 0.0
    %2629 = vmatpush1.msra.mxu0 %v85
    %2630 = vmatprep.subr.mxu0 0.0
    %2631 = vmatpush1.msra.mxu0 0.0
    %2632 = vmatprep.subr.mxu0 0.0
    %2633 = vmatpush1.msra.mxu0 0.0
    %2634 = vmatprep.subr.mxu0 0.0
    %2635 = vmatpush1.msra.mxu0 0.0
    %2636 = vmatprep.subr.mxu0 0.0
    %2637 = vmatpush1.msra.mxu0 0.0
    %2638 = vmatprep.subr.mxu0 0.0
    %2639 = vmatpush1.msra.mxu0 0.0
    %2640 = vmatprep.subr.mxu0 0.0
    %2641 = vmatpush1.msra.mxu0 0.0
    %2642 = vmatprep.subr.mxu0 0.0
    %2643 = vmatpush1.msra.mxu0 0.0
    %2644 = vmatprep.subr.mxu0 0.0
    %2645 = vmatpush1.msra.mxu0 0.0
    %2646 = vmatprep.subr.mxu0 0.0
    %2647 = vmatpush1.msra.mxu0 0.0
    %2648 = vmatprep.subr.mxu0 0.0
    %2649 = vmatpush1.msra.mxu0 0.0
    %2650 = vmatprep.subr.mxu0 0.0
    %2651 = vmatpush1.msra.mxu0 0.0
    %2652 = vmatprep.subr.mxu0 0.0
    %2653 = vmatpush1.msra.mxu0 0.0
    %2654 = vmatprep.subr.mxu0 0.0
    %2655 = vmatpush1.msra.mxu0 0.0
    %2656 = vmatprep.subr.mxu0 0.0
    %2657 = vmatpush1.msra.mxu0 0.0
    %2658 = vmatprep.subr.mxu0 0.0
    %2659 = vmatpush1.msra.mxu0 0.0
    %2660 = vmatprep.subr.mxu0 0.0
    %2661 = vmatpush1.msra.mxu0 0.0
    %2662 = vmatprep.mubr.f32.mxu0 0.0
    %2663 = vmatmul.mubr.f32.gmra.mrb[0].mxu0 %v2597
    %v2664 = vpop.f32.mrb[0].mxu0
    %v2665 = vadd.f32 0.0, %v2664
    %v2666 = vpop.f32.mrb[0].mxu0
    %2667 = vdwg.mxu0
    %2668 = vmatprep.subr.mxu0 0.0
    %2669 = vmatpush1.msra.mxu0 %v86
    %2670 = vmatprep.subr.mxu0 0.0
    %2671 = vmatpush1.msra.mxu0 %v87
    %2672 = vmatprep.subr.mxu0 0.0
    %2673 = vmatpush1.msra.mxu0 %v88
    %2674 = vmatprep.subr.mxu0 0.0
    %2675 = vmatpush1.msra.mxu0 %v89
    %2676 = vmatprep.subr.mxu0 0.0
    %2677 = vmatpush1.msra.mxu0 0.0
    %2678 = vmatprep.subr.mxu0 0.0
    %2679 = vmatpush1.msra.mxu0 0.0
    %2680 = vmatprep.subr.mxu0 0.0
    %2681 = vmatpush1.msra.mxu0 0.0
    %2682 = vmatprep.subr.mxu0 0.0
    %2683 = vmatpush1.msra.mxu0 0.0
    %2684 = vmatprep.subr.mxu0 0.0
    %2685 = vmatpush1.msra.mxu0 0.0
    %2686 = vmatprep.subr.mxu0 0.0
    %2687 = vmatpush1.msra.mxu0 0.0
    %2688 = vmatprep.subr.mxu0 0.0
    %2689 = vmatpush1.msra.mxu0 0.0
    %2690 = vmatprep.subr.mxu0 0.0
    %2691 = vmatpush1.msra.mxu0 0.0
    %2692 = vmatprep.subr.mxu0 0.0
    %2693 = vmatpush1.msra.mxu0 0.0
    %2694 = vmatprep.subr.mxu0 0.0
    %2695 = vmatpush1.msra.mxu0 0.0
    %2696 = vmatprep.subr.mxu0 0.0
    %2697 = vmatpush1.msra.mxu0 0.0
    %2698 = vmatprep.subr.mxu0 0.0
    %2699 = vmatpush1.msra.mxu0 0.0
    %2700 = vmatprep.subr.mxu0 0.0
    %2701 = vmatpush1.msra.mxu0 0.0
    %2702 = vmatprep.subr.mxu0 0.0
    %2703 = vmatpush1.msra.mxu0 0.0
    %2704 = vmatprep.subr.mxu0 0.0
    %2705 = vmatpush1.msra.mxu0 0.0
    %2706 = vmatprep.subr.mxu0 0.0
    %2707 = vmatpush1.msra.mxu0 0.0
    %2708 = vmatprep.subr.mxu0 0.0
    %2709 = vmatpush1.msra.mxu0 0.0
    %2710 = vmatprep.subr.mxu0 0.0
    %2711 = vmatpush1.msra.mxu0 0.0
    %2712 = vmatprep.subr.mxu0 0.0
    %2713 = vmatpush1.msra.mxu0 0.0
    %2714 = vmatprep.subr.mxu0 0.0
    %2715 = vmatpush1.msra.mxu0 0.0
    %2716 = vmatprep.subr.mxu0 0.0
    %2717 = vmatpush1.msra.mxu0 0.0
    %2718 = vmatprep.subr.mxu0 0.0
    %2719 = vmatpush1.msra.mxu0 0.0
    %2720 = vmatprep.subr.mxu0 0.0
    %2721 = vmatpush1.msra.mxu0 0.0
    %2722 = vmatprep.subr.mxu0 0.0
    %2723 = vmatpush1.msra.mxu0 0.0
    %2724 = vmatprep.subr.mxu0 0.0
    %2725 = vmatpush1.msra.mxu0 0.0
    %2726 = vmatprep.subr.mxu0 0.0
    %2727 = vmatpush1.msra.mxu0 0.0
    %2728 = vmatprep.subr.mxu0 0.0
    %2729 = vmatpush1.msra.mxu0 0.0
    %2730 = vmatprep.subr.mxu0 0.0
    %2731 = vmatpush1.msra.mxu0 0.0
    %2732 = vmatprep.mubr.f32.mxu0 0.0
    %2733 = vmatmul.mubr.f32.gmra.mrb[0].mxu0 %v2515
    %v2734 = vpop.f32.mrb[0].mxu0
    %v2735 = vadd.f32 %v2665, %v2734
    %v2736 = vpop.f32.mrb[0].mxu0
    %2737 = vdwg.mxu0
    %v2738 = vadd.f32 %v2735, %v583
    %2739 = vmatprep.subr.mxu0 0.0
    %2740 = vmatpush1.msra.mxu0 %v91
    %2741 = vmatprep.subr.mxu0 0.0
    %2742 = vmatpush1.msra.mxu0 %v92
    %2743 = vmatprep.subr.mxu0 0.0
    %2744 = vmatpush1.msra.mxu0 %v93
    %2745 = vmatprep.subr.mxu0 0.0
    %2746 = vmatpush1.msra.mxu0 %v94
    %2747 = vmatprep.subr.mxu0 0.0
    %2748 = vmatpush1.msra.mxu0 %v95
    %2749 = vmatprep.subr.mxu0 0.0
    %2750 = vmatpush1.msra.mxu0 %v96
    %2751 = vmatprep.subr.mxu0 0.0
    %2752 = vmatpush1.msra.mxu0 %v97
    %2753 = vmatprep.subr.mxu0 0.0
    %2754 = vmatpush1.msra.mxu0 %v98
    %2755 = vmatprep.subr.mxu0 0.0
    %2756 = vmatpush1.msra.mxu0 %v99
    %2757 = vmatprep.subr.mxu0 0.0
    %2758 = vmatpush1.msra.mxu0 %v100
    %2759 = vmatprep.subr.mxu0 0.0
    %2760 = vmatpush1.msra.mxu0 %v101
    %2761 = vmatprep.subr.mxu0 0.0
    %2762 = vmatpush1.msra.mxu0 %v102
    %2763 = vmatprep.subr.mxu0 0.0
    %2764 = vmatpush1.msra.mxu0 %v103
    %2765 = vmatprep.subr.mxu0 0.0
    %2766 = vmatpush1.msra.mxu0 %v104
    %2767 = vmatprep.subr.mxu0 0.0
    %2768 = vmatpush1.msra.mxu0 %v105
    %2769 = vmatprep.subr.mxu0 0.0
    %2770 = vmatpush1.msra.mxu0 %v106
    %2771 = vmatprep.subr.mxu0 0.0
    %2772 = vmatpush1.msra.mxu0 0.0
    %2773 = vmatprep.subr.mxu0 0.0
    %2774 = vmatpush1.msra.mxu0 0.0
    %2775 = vmatprep.subr.mxu0 0.0
    %2776 = vmatpush1.msra.mxu0 0.0
    %2777 = vmatprep.subr.mxu0 0.0
    %2778 = vmatpush1.msra.mxu0 0.0
    %2779 = vmatprep.subr.mxu0 0.0
    %2780 = vmatpush1.msra.mxu0 0.0
    %2781 = vmatprep.subr.mxu0 0.0
    %2782 = vmatpush1.msra.mxu0 0.0
    %2783 = vmatprep.subr.mxu0 0.0
    %2784 = vmatpush1.msra.mxu0 0.0
    %2785 = vmatprep.subr.mxu0 0.0
    %2786 = vmatpush1.msra.mxu0 0.0
    %2787 = vmatprep.subr.mxu0 0.0
    %2788 = vmatpush1.msra.mxu0 0.0
    %2789 = vmatprep.subr.mxu0 0.0
    %2790 = vmatpush1.msra.mxu0 0.0
    %2791 = vmatprep.subr.mxu0 0.0
    %2792 = vmatpush1.msra.mxu0 0.0
    %2793 = vmatprep.subr.mxu0 0.0
    %2794 = vmatpush1.msra.mxu0 0.0
    %2795 = vmatprep.subr.mxu0 0.0
    %2796 = vmatpush1.msra.mxu0 0.0
    %2797 = vmatprep.subr.mxu0 0.0
    %2798 = vmatpush1.msra.mxu0 0.0
    %2799 = vmatprep.subr.mxu0 0.0
    %2800 = vmatpush1.msra.mxu0 0.0
    %2801 = vmatprep.subr.mxu0 0.0
    %2802 = vmatpush1.msra.mxu0 0.0
    %2803 = vmatprep.mubr.f32.mxu0 0.0
    %2804 = vmatmul.mubr.f32.gmra.mrb[0].mxu0 %v2597
    %v2805 = vpop.f32.mrb[0].mxu0
    %v2806 = vadd.f32 0.0, %v2805
    %v2807 = vpop.f32.mrb[0].mxu0
    %2808 = vdwg.mxu0
    %v2809 = vmul.f32 %v2806, %v2806
    %v2810 = vsel %vm134, %v2809, 0.0
    %2811 = vadd.xlane.f32.xlu0 %v2810
    %v2812 = vpop.xlane.xlu0 %2811
    %v2813 = vrsqrt.pop %v2812
    %v2814 = vmul.f32 %v2812, %v2813
    %vm2815 = vcmp.eq.f32.partialorder %v2812, inf
    %v2816 = vsel %vm2815, %v2812, %v2814
    %vm2817 = vcmp.eq.f32.partialorder %v2812, 0.0
    %v2818 = vand.u32 %v2812, 2147483648
    %v2819 = vsel %vm2817, %v2818, %v2816
    %v2820 = vmul.f32 %v2738, %v2738
    %v2821 = vsel %vm134, %v2820, 0.0
    %2822 = vadd.xlane.f32.xlu0 %v2821
    %v2823 = vpop.xlane.xlu0 %2822
    %v2824 = vrsqrt.pop %v2823
    %v2825 = vmul.f32 %v2823, %v2824
    %vm2826 = vcmp.eq.f32.partialorder %v2823, inf
    %v2827 = vsel %vm2826, %v2823, %v2825
    %vm2828 = vcmp.eq.f32.partialorder %v2823, 0.0
    %v2829 = vand.u32 %v2823, 2147483648
    %v2830 = vsel %vm2828, %v2829, %v2827
    %v2831 = vmul.f32 %v2819, 0.2
    %v2832 = vmin.f32 %v2830, %v2831
    %v2833 = vmax.f32 %v2830, 1e-12
    %v2834 = vrcp.pop %v2833
    %v2835 = vmul.f32 %v2738, %v2834
    %v2836 = vmul.f32 %v2835, %v2832
    %v2837 = vadd.f32 %v2806, %v2836
    %v2839 = vsel %vm134, %v2837, 0
    %2841 = vmatprep.subr.mxu0 0.0
    %2842 = vmatpush1.msra.mxu0 %v125
    %2843 = vmatprep.subr.mxu0 0.0
    %2844 = vmatpush1.msra.mxu0 %v126
    %2845 = vmatprep.subr.mxu0 0.0
    %2846 = vmatpush1.msra.mxu0 %v127
    %2847 = vmatprep.subr.mxu0 0.0
    %2848 = vmatpush1.msra.mxu0 %v128
    %2849 = vmatprep.subr.mxu0 0.0
    %2850 = vmatpush1.msra.mxu0 0.0
    %2851 = vmatprep.subr.mxu0 0.0
    %2852 = vmatpush1.msra.mxu0 0.0
    %2853 = vmatprep.subr.mxu0 0.0
    %2854 = vmatpush1.msra.mxu0 0.0
    %2855 = vmatprep.subr.mxu0 0.0
    %2856 = vmatpush1.msra.mxu0 0.0
    %2857 = vmatprep.subr.mxu0 0.0
    %2858 = vmatpush1.msra.mxu0 0.0
    %2859 = vmatprep.subr.mxu0 0.0
    %2860 = vmatpush1.msra.mxu0 0.0
    %2861 = vmatprep.subr.mxu0 0.0
    %2862 = vmatpush1.msra.mxu0 0.0
    %2863 = vmatprep.subr.mxu0 0.0
    %2864 = vmatpush1.msra.mxu0 0.0
    %2865 = vmatprep.subr.mxu0 0.0
    %2866 = vmatpush1.msra.mxu0 0.0
    %2867 = vmatprep.subr.mxu0 0.0
    %2868 = vmatpush1.msra.mxu0 0.0
    %2869 = vmatprep.subr.mxu0 0.0
    %2870 = vmatpush1.msra.mxu0 0.0
    %2871 = vmatprep.subr.mxu0 0.0
    %2872 = vmatpush1.msra.mxu0 0.0
    %2873 = vmatprep.subr.mxu0 0.0
    %2874 = vmatpush1.msra.mxu0 0.0
    %2875 = vmatprep.subr.mxu0 0.0
    %2876 = vmatpush1.msra.mxu0 0.0
    %2877 = vmatprep.subr.mxu0 0.0
    %2878 = vmatpush1.msra.mxu0 0.0
    %2879 = vmatprep.subr.mxu0 0.0
    %2880 = vmatpush1.msra.mxu0 0.0
    %2881 = vmatprep.subr.mxu0 0.0
    %2882 = vmatpush1.msra.mxu0 0.0
    %2883 = vmatprep.subr.mxu0 0.0
    %2884 = vmatpush1.msra.mxu0 0.0
    %2885 = vmatprep.subr.mxu0 0.0
    %2886 = vmatpush1.msra.mxu0 0.0
    %2887 = vmatprep.subr.mxu0 0.0
    %2888 = vmatpush1.msra.mxu0 0.0
    %2889 = vmatprep.subr.mxu0 0.0
    %2890 = vmatpush1.msra.mxu0 0.0
    %2891 = vmatprep.subr.mxu0 0.0
    %2892 = vmatpush1.msra.mxu0 0.0
    %2893 = vmatprep.subr.mxu0 0.0
    %2894 = vmatpush1.msra.mxu0 0.0
    %2895 = vmatprep.subr.mxu0 0.0
    %2896 = vmatpush1.msra.mxu0 0.0
    %2897 = vmatprep.subr.mxu0 0.0
    %2898 = vmatpush1.msra.mxu0 0.0
    %2899 = vmatprep.subr.mxu0 0.0
    %2900 = vmatpush1.msra.mxu0 0.0
    %2901 = vmatprep.subr.mxu0 0.0
    %2902 = vmatpush1.msra.mxu0 0.0
    %2903 = vmatprep.subr.mxu0 0.0
    %2904 = vmatpush1.msra.mxu0 0.0
    %2905 = vmatprep.mubr.f32.mxu0 0.0
    %2906 = vmatmul.mubr.f32.gmra.mrb[0].mxu0 %v2839
    %v2907 = vpop.f32.mrb[0].mxu0
    %v2908 = vadd.f32 0.0, %v2907
    %v2909 = vpop.f32.mrb[0].mxu0
    %2910 = vdwg.mxu0
    %v2911 = vsel %vm134, %v2908, -inf
    %2912 = vmax.xlane.f32.xlu0 %v2911
    %v2913 = vpop.xlane.xlu0 %2912
    %v2914 = vsub.f32 %v2908, %v2913
    %v2915 = vmul.f32 %v2914, 1.442695
    %v2916 = vpow.pop %v2915
    %v2917 = vsel %vm134, %v2916, 0.0
    %2918 = vadd.xlane.f32.xlu0 %v2917
    %v2919 = vpop.xlane.xlu0 %2918
    %v2920 = vlog2.pop %v2919
    %v2921 = vmul.f32 %v2920, 0.6931472
    %v2922 = vsub.f32 %v2914, %v2921
    %v2923 = vsel %vm134, %v2922, -inf
    %2924 = vmax.xlane.f32.xlu0 %v2923
    %v2925 = vpop.xlane.xlu0 %2924
    %vm2926 = vcmp.eq.f32.partialorder %v2922, %v2925
    %v2927 = vsel %vm2926, %v130, 32
    %v2928 = vsel %vm134, %v2927, 2147483647
    %v2929 = vand.u32 %v2928, 65535
    %v2930 = vshra.s32 %v2928, 16
    %v2931 = vcvt.s32.f32 %v2929
    %v2932 = vcvt.s32.f32 %v2930
    %2933 = vmin.xlane.f32.xlu0 %v2932
    %v2934 = vpop.xlane.xlu0 %2933
    %vm2935 = vcmp.eq.f32.partialorder %v2932, %v2934
    %v2936 = vsel %vm2935, %v2931, inf
    %2937 = vmin.xlane.f32.xlu0 %v2936
    %v2938 = vpop.xlane.xlu0 %2937
    %v2939 = vcvt.f32.s32 %v2938
    %v2940 = vcvt.f32.s32 %v2934
    %v2941 = vshll.u32 %v2940, 16
    %v2942 = vadd.s32 %v2941, %v2939
    %vm2943 = vcmp.eq.s32.totalorder %v130, %v2942
    %v2944 = vsel %vm2943, 1, 0
    %v2945 = vcvt.s32.f32 %v2944
    %s2946 = scalar_lea.vmem [#allocation3], 24
    %2947 = vst.msk [vmem:[%s2946] sm:$0xff] %vm134, %v2922
    %2948 = vmatprep.subr.mxu0 0.0
    %2949 = vmatpush1.msra.mxu0 %v107
    %2950 = vmatprep.subr.mxu0 0.0
    %2951 = vmatpush1.msra.mxu0 %v108
    %2952 = vmatprep.subr.mxu0 0.0
    %2953 = vmatpush1.msra.mxu0 %v109
    %2954 = vmatprep.subr.mxu0 0.0
    %2955 = vmatpush1.msra.mxu0 %v110
    %2956 = vmatprep.subr.mxu0 0.0
    %2957 = vmatpush1.msra.mxu0 %v111
    %2958 = vmatprep.subr.mxu0 0.0
    %2959 = vmatpush1.msra.mxu0 %v112
    %2960 = vmatprep.subr.mxu0 0.0
    %2961 = vmatpush1.msra.mxu0 %v113
    %2962 = vmatprep.subr.mxu0 0.0
    %2963 = vmatpush1.msra.mxu0 %v114
    %2964 = vmatprep.subr.mxu0 0.0
    %2965 = vmatpush1.msra.mxu0 %v115
    %2966 = vmatprep.subr.mxu0 0.0
    %2967 = vmatpush1.msra.mxu0 %v116
    %2968 = vmatprep.subr.mxu0 0.0
    %2969 = vmatpush1.msra.mxu0 %v117
    %2970 = vmatprep.subr.mxu0 0.0
    %2971 = vmatpush1.msra.mxu0 %v118
    %2972 = vmatprep.subr.mxu0 0.0
    %2973 = vmatpush1.msra.mxu0 %v119
    %2974 = vmatprep.subr.mxu0 0.0
    %2975 = vmatpush1.msra.mxu0 %v120
    %2976 = vmatprep.subr.mxu0 0.0
    %2977 = vmatpush1.msra.mxu0 %v121
    %2978 = vmatprep.subr.mxu0 0.0
    %2979 = vmatpush1.msra.mxu0 %v122
    %2980 = vmatprep.subr.mxu0 0.0
    %2981 = vmatpush1.msra.mxu0 0.0
    %2982 = vmatprep.subr.mxu0 0.0
    %2983 = vmatpush1.msra.mxu0 0.0
    %2984 = vmatprep.subr.mxu0 0.0
    %2985 = vmatpush1.msra.mxu0 0.0
    %2986 = vmatprep.subr.mxu0 0.0
    %2987 = vmatpush1.msra.mxu0 0.0
    %2988 = vmatprep.subr.mxu0 0.0
    %2989 = vmatpush1.msra.mxu0 0.0
    %2990 = vmatprep.subr.mxu0 0.0
    %2991 = vmatpush1.msra.mxu0 0.0
    %2992 = vmatprep.subr.mxu0 0.0
    %2993 = vmatpush1.msra.mxu0 0.0
    %2994 = vmatprep.subr.mxu0 0.0
    %2995 = vmatpush1.msra.mxu0 0.0
    %2996 = vmatprep.subr.mxu0 0.0
    %2997 = vmatpush1.msra.mxu0 0.0
    %2998 = vmatprep.subr.mxu0 0.0
    %2999 = vmatpush1.msra.mxu0 0.0
    %3000 = vmatprep.subr.mxu0 0.0
    %3001 = vmatpush1.msra.mxu0 0.0
    %3002 = vmatprep.subr.mxu0 0.0
    %3003 = vmatpush1.msra.mxu0 0.0
    %3004 = vmatprep.subr.mxu0 0.0
    %3005 = vmatpush1.msra.mxu0 0.0
    %3006 = vmatprep.subr.mxu0 0.0
    %3007 = vmatpush1.msra.mxu0 0.0
    %3008 = vmatprep.subr.mxu0 0.0
    %3009 = vmatpush1.msra.mxu0 0.0
    %3010 = vmatprep.subr.mxu0 0.0
    %3011 = vmatpush1.msra.mxu0 0.0
    %3012 = vmatprep.mubr.f32.mxu0 0.0
    %3013 = vmatmul.mubr.f32.gmra.mrb[0].mxu0 %v2597
    %v3014 = vpop.f32.mrb[0].mxu0
    %v3015 = vadd.f32 0.0, %v3014
    %v3016 = vpop.f32.mrb[0].mxu0
    %3017 = vdwg.mxu0
    %s3018 = scalar_lea.vmem [#allocation5], 24
    %3019 = vst.msk [vmem:[%s3018] sm:$0xff] %vm864, %v3015
    %3020 = vst.msk [vmem:[#allocation2] sm:$0xff] %vm134, %v2945
    %3021 = vrot.lane.b32.xlu0 %v2404, 64
    %v3022 = vpop.permute.xlu0 %3021
    %3024 = vst.msk [vmem:[#allocation2] sm:$0xff] %vm136, %v3022
    %v3025 = vld [vmem:[#allocation2] sm:$0xff]
    %v3027 = vsel %vm145, %v3025, 0
    %3029 = vmatprep.subr.mxu0 0.0
    %3030 = vmatpush1.msra.mxu0 %v48
    %3031 = vmatprep.subr.mxu0 0.0
    %3032 = vmatpush1.msra.mxu0 %v49
    %3033 = vmatprep.subr.mxu0 0.0
    %3034 = vmatpush1.msra.mxu0 %v50
    %3035 = vmatprep.subr.mxu0 0.0
    %3036 = vmatpush1.msra.mxu0 %v51
    %3037 = vmatprep.subr.mxu0 0.0
    %3038 = vmatpush1.msra.mxu0 %v52
    %3039 = vmatprep.subr.mxu0 0.0
    %3040 = vmatpush1.msra.mxu0 %v53
    %3041 = vmatprep.subr.mxu0 0.0
    %3042 = vmatpush1.msra.mxu0 %v54
    %3043 = vmatprep.subr.mxu0 0.0
    %3044 = vmatpush1.msra.mxu0 %v55
    %3045 = vmatprep.subr.mxu0 0.0
    %3046 = vmatpush1.msra.mxu0 0.0
    %3047 = vmatprep.subr.mxu0 0.0
    %3048 = vmatpush1.msra.mxu0 0.0
    %3049 = vmatprep.subr.mxu0 0.0
    %3050 = vmatpush1.msra.mxu0 0.0
    %3051 = vmatprep.subr.mxu0 0.0
    %3052 = vmatpush1.msra.mxu0 0.0
    %3053 = vmatprep.subr.mxu0 0.0
    %3054 = vmatpush1.msra.mxu0 0.0
    %3055 = vmatprep.subr.mxu0 0.0
    %3056 = vmatpush1.msra.mxu0 0.0
    %3057 = vmatprep.subr.mxu0 0.0
    %3058 = vmatpush1.msra.mxu0 0.0
    %3059 = vmatprep.subr.mxu0 0.0
    %3060 = vmatpush1.msra.mxu0 0.0
    %3061 = vmatprep.subr.mxu0 0.0
    %3062 = vmatpush1.msra.mxu0 0.0
    %3063 = vmatprep.subr.mxu0 0.0
    %3064 = vmatpush1.msra.mxu0 0.0
    %3065 = vmatprep.subr.mxu0 0.0
    %3066 = vmatpush1.msra.mxu0 0.0
    %3067 = vmatprep.subr.mxu0 0.0
    %3068 = vmatpush1.msra.mxu0 0.0
    %3069 = vmatprep.subr.mxu0 0.0
    %3070 = vmatpush1.msra.mxu0 0.0
    %3071 = vmatprep.subr.mxu0 0.0
    %3072 = vmatpush1.msra.mxu0 0.0
    %3073 = vmatprep.subr.mxu0 0.0
    %3074 = vmatpush1.msra.mxu0 0.0
    %3075 = vmatprep.subr.mxu0 0.0
    %3076 = vmatpush1.msra.mxu0 0.0
    %3077 = vmatprep.subr.mxu0 0.0
    %3078 = vmatpush1.msra.mxu0 0.0
    %3079 = vmatprep.subr.mxu0 0.0
    %3080 = vmatpush1.msra.mxu0 0.0
    %3081 = vmatprep.subr.mxu0 0.0
    %3082 = vmatpush1.msra.mxu0 0.0
    %3083 = vmatprep.subr.mxu0 0.0
    %3084 = vmatpush1.msra.mxu0 0.0
    %3085 = vmatprep.subr.mxu0 0.0
    %3086 = vmatpush1.msra.mxu0 0.0
    %3087 = vmatprep.subr.mxu0 0.0
    %3088 = vmatpush1.msra.mxu0 0.0
    %3089 = vmatprep.subr.mxu0 0.0
    %3090 = vmatpush1.msra.mxu0 0.0
    %3091 = vmatprep.subr.mxu0 0.0
    %3092 = vmatpush1.msra.mxu0 0.0
    %3093 = vmatprep.mubr.f32.mxu0 0.0
    %3094 = vmatmul.mubr.f32.gmra.mrb[0].mxu0 %v3027
    %v3095 = vpop.f32.mrb[0].mxu0
    %v3096 = vadd.f32 %v143, %v3095
    %v3097 = vpop.f32.mrb[0].mxu0
    %3098 = vdwg.mxu0
    %v3099 = vxor.u32 %v3096, 2147483648
    %v3100 = vmul.f32 %v3099, 1.442695
    %v3101 = vpow.pop %v3100
    %v3102 = vadd.f32 %v3101, 1.0
    %v3103 = vrcp.pop %v3102
    %v3104 = vmul.f32 1.0, %v3103
    %v3105 = vtanh.pop %v3096
    %v3106 = vmul.f32 %v3104, %v2398
    %3108 = vrot.lane.b32.xlu0 %v3105, 64
    %v3109 = vpop.permute.xlu0 %3108
    %v3111 = vmul.f32 %v3104, %v3109
    %3113 = vrot.lane.b32.xlu0 %v3111, 32
    %v3114 = vpop.permute.xlu0 %3113
    %v3116 = vadd.f32 %v3106, %v3114
    %v3117 = vtanh.pop %v3116
    %3119 = vrot.lane.b32.xlu0 %v3117, 64
    %v3120 = vpop.permute.xlu0 %3119
    %v3122 = vmul.f32 %v3104, %v3120
    %3124 = vrot.lane.b32.xlu0 %v3122, 32
    %v3125 = vpop.permute.xlu0 %3124
    %3127 = vst.msk [vmem:[#allocation2] sm:$0xff] %vm134, %v3125
    %3128 = vrot.lane.b32.xlu0 %v2511, 64
    %v3129 = vpop.permute.xlu0 %3128
    %3131 = vst.msk [vmem:[#allocation2] sm:$0xff] %vm136, %v3129
    %v3132 = vld [vmem:[#allocation2] sm:$0xff]
    %v3134 = vsel %vm145, %v3132, 0
    %3136 = vmatprep.subr.mxu0 0.0
    %3137 = vmatpush1.msra.mxu0 %v57
    %3138 = vmatprep.subr.mxu0 0.0
    %3139 = vmatpush1.msra.mxu0 %v58
    %3140 = vmatprep.subr.mxu0 0.0
    %3141 = vmatpush1.msra.mxu0 %v59
    %3142 = vmatprep.subr.mxu0 0.0
    %3143 = vmatpush1.msra.mxu0 %v60
    %3144 = vmatprep.subr.mxu0 0.0
    %3145 = vmatpush1.msra.mxu0 %v61
    %3146 = vmatprep.subr.mxu0 0.0
    %3147 = vmatpush1.msra.mxu0 %v62
    %3148 = vmatprep.subr.mxu0 0.0
    %3149 = vmatpush1.msra.mxu0 %v63
    %3150 = vmatprep.subr.mxu0 0.0
    %3151 = vmatpush1.msra.mxu0 %v64
    %3152 = vmatprep.subr.mxu0 0.0
    %3153 = vmatpush1.msra.mxu0 0.0
    %3154 = vmatprep.subr.mxu0 0.0
    %3155 = vmatpush1.msra.mxu0 0.0
    %3156 = vmatprep.subr.mxu0 0.0
    %3157 = vmatpush1.msra.mxu0 0.0
    %3158 = vmatprep.subr.mxu0 0.0
    %3159 = vmatpush1.msra.mxu0 0.0
    %3160 = vmatprep.subr.mxu0 0.0
    %3161 = vmatpush1.msra.mxu0 0.0
    %3162 = vmatprep.subr.mxu0 0.0
    %3163 = vmatpush1.msra.mxu0 0.0
    %3164 = vmatprep.subr.mxu0 0.0
    %3165 = vmatpush1.msra.mxu0 0.0
    %3166 = vmatprep.subr.mxu0 0.0
    %3167 = vmatpush1.msra.mxu0 0.0
    %3168 = vmatprep.subr.mxu0 0.0
    %3169 = vmatpush1.msra.mxu0 0.0
    %3170 = vmatprep.subr.mxu0 0.0
    %3171 = vmatpush1.msra.mxu0 0.0
    %3172 = vmatprep.subr.mxu0 0.0
    %3173 = vmatpush1.msra.mxu0 0.0
    %3174 = vmatprep.subr.mxu0 0.0
    %3175 = vmatpush1.msra.mxu0 0.0
    %3176 = vmatprep.subr.mxu0 0.0
    %3177 = vmatpush1.msra.mxu0 0.0
    %3178 = vmatprep.subr.mxu0 0.0
    %3179 = vmatpush1.msra.mxu0 0.0
    %3180 = vmatprep.subr.mxu0 0.0
    %3181 = vmatpush1.msra.mxu0 0.0
    %3182 = vmatprep.subr.mxu0 0.0
    %3183 = vmatpush1.msra.mxu0 0.0
    %3184 = vmatprep.subr.mxu0 0.0
    %3185 = vmatpush1.msra.mxu0 0.0
    %3186 = vmatprep.subr.mxu0 0.0
    %3187 = vmatpush1.msra.mxu0 0.0
    %3188 = vmatprep.subr.mxu0 0.0
    %3189 = vmatpush1.msra.mxu0 0.0
    %3190 = vmatprep.subr.mxu0 0.0
    %3191 = vmatpush1.msra.mxu0 0.0
    %3192 = vmatprep.subr.mxu0 0.0
    %3193 = vmatpush1.msra.mxu0 0.0
    %3194 = vmatprep.subr.mxu0 0.0
    %3195 = vmatpush1.msra.mxu0 0.0
    %3196 = vmatprep.subr.mxu0 0.0
    %3197 = vmatpush1.msra.mxu0 0.0
    %3198 = vmatprep.subr.mxu0 0.0
    %3199 = vmatpush1.msra.mxu0 0.0
    %3200 = vmatprep.mubr.f32.mxu0 0.0
    %3201 = vmatmul.mubr.f32.gmra.mrb[0].mxu0 %v3134
    %v3202 = vpop.f32.mrb[0].mxu0
    %v3203 = vadd.f32 %v254, %v3202
    %v3204 = vpop.f32.mrb[0].mxu0
    %3205 = vdwg.mxu0
    %v3206 = vxor.u32 %v3203, 2147483648
    %v3207 = vmul.f32 %v3206, 1.442695
    %v3208 = vpow.pop %v3207
    %v3209 = vadd.f32 %v3208, 1.0
    %v3210 = vrcp.pop %v3209
    %v3211 = vmul.f32 1.0, %v3210
    %v3212 = vtanh.pop %v3203
    %v3213 = vmul.f32 %v3211, %v2505
    %3215 = vrot.lane.b32.xlu0 %v3212, 64
    %v3216 = vpop.permute.xlu0 %3215
    %v3218 = vmul.f32 %v3211, %v3216
    %3220 = vrot.lane.b32.xlu0 %v3218, 32
    %v3221 = vpop.permute.xlu0 %3220
    %v3223 = vadd.f32 %v3213, %v3221
    %v3224 = vtanh.pop %v3223
    %3226 = vrot.lane.b32.xlu0 %v3224, 64
    %v3227 = vpop.permute.xlu0 %3226
    %v3229 = vmul.f32 %v3211, %v3227
    %3231 = vrot.lane.b32.xlu0 %v3229, 32
    %v3232 = vpop.permute.xlu0 %3231
    %v3233 = vsel %vm134, %v3232, 0
    %3235 = vmatprep.subr.mxu0 0.0
    %3236 = vmatpush1.msra.mxu0 %v66
    %3237 = vmatprep.subr.mxu0 0.0
    %3238 = vmatpush1.msra.mxu0 %v67
    %3239 = vmatprep.subr.mxu0 0.0
    %3240 = vmatpush1.msra.mxu0 %v68
    %3241 = vmatprep.subr.mxu0 0.0
    %3242 = vmatpush1.msra.mxu0 %v69
    %3243 = vmatprep.subr.mxu0 0.0
    %3244 = vmatpush1.msra.mxu0 0.0
    %3245 = vmatprep.subr.mxu0 0.0
    %3246 = vmatpush1.msra.mxu0 0.0
    %3247 = vmatprep.subr.mxu0 0.0
    %3248 = vmatpush1.msra.mxu0 0.0
    %3249 = vmatprep.subr.mxu0 0.0
    %3250 = vmatpush1.msra.mxu0 0.0
    %3251 = vmatprep.subr.mxu0 0.0
    %3252 = vmatpush1.msra.mxu0 0.0
    %3253 = vmatprep.subr.mxu0 0.0
    %3254 = vmatpush1.msra.mxu0 0.0
    %3255 = vmatprep.subr.mxu0 0.0
    %3256 = vmatpush1.msra.mxu0 0.0
    %3257 = vmatprep.subr.mxu0 0.0
    %3258 = vmatpush1.msra.mxu0 0.0
    %3259 = vmatprep.subr.mxu0 0.0
    %3260 = vmatpush1.msra.mxu0 0.0
    %3261 = vmatprep.subr.mxu0 0.0
    %3262 = vmatpush1.msra.mxu0 0.0
    %3263 = vmatprep.subr.mxu0 0.0
    %3264 = vmatpush1.msra.mxu0 0.0
    %3265 = vmatprep.subr.mxu0 0.0
    %3266 = vmatpush1.msra.mxu0 0.0
    %3267 = vmatprep.subr.mxu0 0.0
    %3268 = vmatpush1.msra.mxu0 0.0
    %3269 = vmatprep.subr.mxu0 0.0
    %3270 = vmatpush1.msra.mxu0 0.0
    %3271 = vmatprep.subr.mxu0 0.0
    %3272 = vmatpush1.msra.mxu0 0.0
    %3273 = vmatprep.subr.mxu0 0.0
    %3274 = vmatpush1.msra.mxu0 0.0
    %3275 = vmatprep.subr.mxu0 0.0
    %3276 = vmatpush1.msra.mxu0 0.0
    %3277 = vmatprep.subr.mxu0 0.0
    %3278 = vmatpush1.msra.mxu0 0.0
    %3279 = vmatprep.subr.mxu0 0.0
    %3280 = vmatpush1.msra.mxu0 0.0
    %3281 = vmatprep.subr.mxu0 0.0
    %3282 = vmatpush1.msra.mxu0 0.0
    %3283 = vmatprep.subr.mxu0 0.0
    %3284 = vmatpush1.msra.mxu0 0.0
    %3285 = vmatprep.subr.mxu0 0.0
    %3286 = vmatpush1.msra.mxu0 0.0
    %3287 = vmatprep.subr.mxu0 0.0
    %3288 = vmatpush1.msra.mxu0 0.0
    %3289 = vmatprep.subr.mxu0 0.0
    %3290 = vmatpush1.msra.mxu0 0.0
    %3291 = vmatprep.subr.mxu0 0.0
    %3292 = vmatpush1.msra.mxu0 0.0
    %3293 = vmatprep.subr.mxu0 0.0
    %3294 = vmatpush1.msra.mxu0 0.0
    %3295 = vmatprep.subr.mxu0 0.0
    %3296 = vmatpush1.msra.mxu0 0.0
    %3297 = vmatprep.subr.mxu0 0.0
    %3298 = vmatpush1.msra.mxu0 0.0
    %3299 = vmatprep.mubr.f32.mxu0 0.0
    %3300 = vmatmul.mubr.f32.gmra.mrb[0].mxu0 %v3233
    %v3301 = vpop.f32.mrb[0].mxu0
    %v3302 = vadd.f32 %v123, %v3301
    %v3303 = vpop.f32.mrb[0].mxu0
    %3304 = vdwg.mxu0
    %3305 = vmax.xlane.f32.xlu0 %v3302
    %v3306 = vpop.xlane.xlu0 %3305
    %v3307 = vsub.f32 %v3302, %v3306
    %v3308 = vmul.f32 %v3307, 1.442695
    %v3309 = vpow.pop %v3308
    %v3310 = vmul.f32 %v3309, %v124
    %3311 = vadd.xlane.f32.xlu0 %v3310
    %v3312 = vpop.xlane.xlu0 %3311
    %v3313 = vrcp.pop %v3312
    %v3314 = vmul.f32 1.0, %v3313
    %v3315 = vmul.f32 %v3310, %v3314
    %3316 = vmatprep.subr.mxu0 0.0
    %3317 = vmatpush1.msra.mxu0 %v70
    %3318 = vmatprep.subr.mxu0 0.0
    %3319 = vmatpush1.msra.mxu0 %v71
    %3320 = vmatprep.subr.mxu0 0.0
    %3321 = vmatpush1.msra.mxu0 %v72
    %3322 = vmatprep.subr.mxu0 0.0
    %3323 = vmatpush1.msra.mxu0 %v73
    %3324 = vmatprep.subr.mxu0 0.0
    %3325 = vmatpush1.msra.mxu0 %v74
    %3326 = vmatprep.subr.mxu0 0.0
    %3327 = vmatpush1.msra.mxu0 %v75
    %3328 = vmatprep.subr.mxu0 0.0
    %3329 = vmatpush1.msra.mxu0 %v76
    %3330 = vmatprep.subr.mxu0 0.0
    %3331 = vmatpush1.msra.mxu0 %v77
    %3332 = vmatprep.subr.mxu0 0.0
    %3333 = vmatpush1.msra.mxu0 %v78
    %3334 = vmatprep.subr.mxu0 0.0
    %3335 = vmatpush1.msra.mxu0 %v79
    %3336 = vmatprep.subr.mxu0 0.0
    %3337 = vmatpush1.msra.mxu0 %v80
    %3338 = vmatprep.subr.mxu0 0.0
    %3339 = vmatpush1.msra.mxu0 %v81
    %3340 = vmatprep.subr.mxu0 0.0
    %3341 = vmatpush1.msra.mxu0 %v82
    %3342 = vmatprep.subr.mxu0 0.0
    %3343 = vmatpush1.msra.mxu0 %v83
    %3344 = vmatprep.subr.mxu0 0.0
    %3345 = vmatpush1.msra.mxu0 %v84
    %3346 = vmatprep.subr.mxu0 0.0
    %3347 = vmatpush1.msra.mxu0 %v85
    %3348 = vmatprep.subr.mxu0 0.0
    %3349 = vmatpush1.msra.mxu0 0.0
    %3350 = vmatprep.subr.mxu0 0.0
    %3351 = vmatpush1.msra.mxu0 0.0
    %3352 = vmatprep.subr.mxu0 0.0
    %3353 = vmatpush1.msra.mxu0 0.0
    %3354 = vmatprep.subr.mxu0 0.0
    %3355 = vmatpush1.msra.mxu0 0.0
    %3356 = vmatprep.subr.mxu0 0.0
    %3357 = vmatpush1.msra.mxu0 0.0
    %3358 = vmatprep.subr.mxu0 0.0
    %3359 = vmatpush1.msra.mxu0 0.0
    %3360 = vmatprep.subr.mxu0 0.0
    %3361 = vmatpush1.msra.mxu0 0.0
    %3362 = vmatprep.subr.mxu0 0.0
    %3363 = vmatpush1.msra.mxu0 0.0
    %3364 = vmatprep.subr.mxu0 0.0
    %3365 = vmatpush1.msra.mxu0 0.0
    %3366 = vmatprep.subr.mxu0 0.0
    %3367 = vmatpush1.msra.mxu0 0.0
    %3368 = vmatprep.subr.mxu0 0.0
    %3369 = vmatpush1.msra.mxu0 0.0
    %3370 = vmatprep.subr.mxu0 0.0
    %3371 = vmatpush1.msra.mxu0 0.0
    %3372 = vmatprep.subr.mxu0 0.0
    %3373 = vmatpush1.msra.mxu0 0.0
    %3374 = vmatprep.subr.mxu0 0.0
    %3375 = vmatpush1.msra.mxu0 0.0
    %3376 = vmatprep.subr.mxu0 0.0
    %3377 = vmatpush1.msra.mxu0 0.0
    %3378 = vmatprep.subr.mxu0 0.0
    %3379 = vmatpush1.msra.mxu0 0.0
    %3380 = vmatprep.mubr.f32.mxu0 0.0
    %3381 = vmatmul.mubr.f32.gmra.mrb[0].mxu0 %v3315
    %v3382 = vpop.f32.mrb[0].mxu0
    %v3383 = vadd.f32 0.0, %v3382
    %v3384 = vpop.f32.mrb[0].mxu0
    %3385 = vdwg.mxu0
    %3386 = vmatprep.subr.mxu0 0.0
    %3387 = vmatpush1.msra.mxu0 %v86
    %3388 = vmatprep.subr.mxu0 0.0
    %3389 = vmatpush1.msra.mxu0 %v87
    %3390 = vmatprep.subr.mxu0 0.0
    %3391 = vmatpush1.msra.mxu0 %v88
    %3392 = vmatprep.subr.mxu0 0.0
    %3393 = vmatpush1.msra.mxu0 %v89
    %3394 = vmatprep.subr.mxu0 0.0
    %3395 = vmatpush1.msra.mxu0 0.0
    %3396 = vmatprep.subr.mxu0 0.0
    %3397 = vmatpush1.msra.mxu0 0.0
    %3398 = vmatprep.subr.mxu0 0.0
    %3399 = vmatpush1.msra.mxu0 0.0
    %3400 = vmatprep.subr.mxu0 0.0
    %3401 = vmatpush1.msra.mxu0 0.0
    %3402 = vmatprep.subr.mxu0 0.0
    %3403 = vmatpush1.msra.mxu0 0.0
    %3404 = vmatprep.subr.mxu0 0.0
    %3405 = vmatpush1.msra.mxu0 0.0
    %3406 = vmatprep.subr.mxu0 0.0
    %3407 = vmatpush1.msra.mxu0 0.0
    %3408 = vmatprep.subr.mxu0 0.0
    %3409 = vmatpush1.msra.mxu0 0.0
    %3410 = vmatprep.subr.mxu0 0.0
    %3411 = vmatpush1.msra.mxu0 0.0
    %3412 = vmatprep.subr.mxu0 0.0
    %3413 = vmatpush1.msra.mxu0 0.0
    %3414 = vmatprep.subr.mxu0 0.0
    %3415 = vmatpush1.msra.mxu0 0.0
    %3416 = vmatprep.subr.mxu0 0.0
    %3417 = vmatpush1.msra.mxu0 0.0
    %3418 = vmatprep.subr.mxu0 0.0
    %3419 = vmatpush1.msra.mxu0 0.0
    %3420 = vmatprep.subr.mxu0 0.0
    %3421 = vmatpush1.msra.mxu0 0.0
    %3422 = vmatprep.subr.mxu0 0.0
    %3423 = vmatpush1.msra.mxu0 0.0
    %3424 = vmatprep.subr.mxu0 0.0
    %3425 = vmatpush1.msra.mxu0 0.0
    %3426 = vmatprep.subr.mxu0 0.0
    %3427 = vmatpush1.msra.mxu0 0.0
    %3428 = vmatprep.subr.mxu0 0.0
    %3429 = vmatpush1.msra.mxu0 0.0
    %3430 = vmatprep.subr.mxu0 0.0
    %3431 = vmatpush1.msra.mxu0 0.0
    %3432 = vmatprep.subr.mxu0 0.0
    %3433 = vmatpush1.msra.mxu0 0.0
    %3434 = vmatprep.subr.mxu0 0.0
    %3435 = vmatpush1.msra.mxu0 0.0
    %3436 = vmatprep.subr.mxu0 0.0
    %3437 = vmatpush1.msra.mxu0 0.0
    %3438 = vmatprep.subr.mxu0 0.0
    %3439 = vmatpush1.msra.mxu0 0.0
    %3440 = vmatprep.subr.mxu0 0.0
    %3441 = vmatpush1.msra.mxu0 0.0
    %3442 = vmatprep.subr.mxu0 0.0
    %3443 = vmatpush1.msra.mxu0 0.0
    %3444 = vmatprep.subr.mxu0 0.0
    %3445 = vmatpush1.msra.mxu0 0.0
    %3446 = vmatprep.subr.mxu0 0.0
    %3447 = vmatpush1.msra.mxu0 0.0
    %3448 = vmatprep.subr.mxu0 0.0
    %3449 = vmatpush1.msra.mxu0 0.0
    %3450 = vmatprep.mubr.f32.mxu0 0.0
    %3451 = vmatmul.mubr.f32.gmra.mrb[0].mxu0 %v3233
    %v3452 = vpop.f32.mrb[0].mxu0
    %v3453 = vadd.f32 %v3383, %v3452
    %v3454 = vpop.f32.mrb[0].mxu0
    %3455 = vdwg.mxu0
    %v3456 = vadd.f32 %v3453, %v583
    %3457 = vmatprep.subr.mxu0 0.0
    %3458 = vmatpush1.msra.mxu0 %v91
    %3459 = vmatprep.subr.mxu0 0.0
    %3460 = vmatpush1.msra.mxu0 %v92
    %3461 = vmatprep.subr.mxu0 0.0
    %3462 = vmatpush1.msra.mxu0 %v93
    %3463 = vmatprep.subr.mxu0 0.0
    %3464 = vmatpush1.msra.mxu0 %v94
    %3465 = vmatprep.subr.mxu0 0.0
    %3466 = vmatpush1.msra.mxu0 %v95
    %3467 = vmatprep.subr.mxu0 0.0
    %3468 = vmatpush1.msra.mxu0 %v96
    %3469 = vmatprep.subr.mxu0 0.0
    %3470 = vmatpush1.msra.mxu0 %v97
    %3471 = vmatprep.subr.mxu0 0.0
    %3472 = vmatpush1.msra.mxu0 %v98
    %3473 = vmatprep.subr.mxu0 0.0
    %3474 = vmatpush1.msra.mxu0 %v99
    %3475 = vmatprep.subr.mxu0 0.0
    %3476 = vmatpush1.msra.mxu0 %v100
    %3477 = vmatprep.subr.mxu0 0.0
    %3478 = vmatpush1.msra.mxu0 %v101
    %3479 = vmatprep.subr.mxu0 0.0
    %3480 = vmatpush1.msra.mxu0 %v102
    %3481 = vmatprep.subr.mxu0 0.0
    %3482 = vmatpush1.msra.mxu0 %v103
    %3483 = vmatprep.subr.mxu0 0.0
    %3484 = vmatpush1.msra.mxu0 %v104
    %3485 = vmatprep.subr.mxu0 0.0
    %3486 = vmatpush1.msra.mxu0 %v105
    %3487 = vmatprep.subr.mxu0 0.0
    %3488 = vmatpush1.msra.mxu0 %v106
    %3489 = vmatprep.subr.mxu0 0.0
    %3490 = vmatpush1.msra.mxu0 0.0
    %3491 = vmatprep.subr.mxu0 0.0
    %3492 = vmatpush1.msra.mxu0 0.0
    %3493 = vmatprep.subr.mxu0 0.0
    %3494 = vmatpush1.msra.mxu0 0.0
    %3495 = vmatprep.subr.mxu0 0.0
    %3496 = vmatpush1.msra.mxu0 0.0
    %3497 = vmatprep.subr.mxu0 0.0
    %3498 = vmatpush1.msra.mxu0 0.0
    %3499 = vmatprep.subr.mxu0 0.0
    %3500 = vmatpush1.msra.mxu0 0.0
    %3501 = vmatprep.subr.mxu0 0.0
    %3502 = vmatpush1.msra.mxu0 0.0
    %3503 = vmatprep.subr.mxu0 0.0
    %3504 = vmatpush1.msra.mxu0 0.0
    %3505 = vmatprep.subr.mxu0 0.0
    %3506 = vmatpush1.msra.mxu0 0.0
    %3507 = vmatprep.subr.mxu0 0.0
    %3508 = vmatpush1.msra.mxu0 0.0
    %3509 = vmatprep.subr.mxu0 0.0
    %3510 = vmatpush1.msra.mxu0 0.0
    %3511 = vmatprep.subr.mxu0 0.0
    %3512 = vmatpush1.msra.mxu0 0.0
    %3513 = vmatprep.subr.mxu0 0.0
    %3514 = vmatpush1.msra.mxu0 0.0
    %3515 = vmatprep.subr.mxu0 0.0
    %3516 = vmatpush1.msra.mxu0 0.0
    %3517 = vmatprep.subr.mxu0 0.0
    %3518 = vmatpush1.msra.mxu0 0.0
    %3519 = vmatprep.subr.mxu0 0.0
    %3520 = vmatpush1.msra.mxu0 0.0
    %3521 = vmatprep.mubr.f32.mxu0 0.0
    %3522 = vmatmul.mubr.f32.gmra.mrb[0].mxu0 %v3315
    %v3523 = vpop.f32.mrb[0].mxu0
    %v3524 = vadd.f32 0.0, %v3523
    %v3525 = vpop.f32.mrb[0].mxu0
    %3526 = vdwg.mxu0
    %v3527 = vmul.f32 %v3524, %v3524
    %v3528 = vsel %vm134, %v3527, 0.0
    %3529 = vadd.xlane.f32.xlu0 %v3528
    %v3530 = vpop.xlane.xlu0 %3529
    %v3531 = vrsqrt.pop %v3530
    %v3532 = vmul.f32 %v3530, %v3531
    %vm3533 = vcmp.eq.f32.partialorder %v3530, inf
    %v3534 = vsel %vm3533, %v3530, %v3532
    %vm3535 = vcmp.eq.f32.partialorder %v3530, 0.0
    %v3536 = vand.u32 %v3530, 2147483648
    %v3537 = vsel %vm3535, %v3536, %v3534
    %v3538 = vmul.f32 %v3456, %v3456
    %v3539 = vsel %vm134, %v3538, 0.0
    %3540 = vadd.xlane.f32.xlu0 %v3539
    %v3541 = vpop.xlane.xlu0 %3540
    %v3542 = vrsqrt.pop %v3541
    %v3543 = vmul.f32 %v3541, %v3542
    %vm3544 = vcmp.eq.f32.partialorder %v3541, inf
    %v3545 = vsel %vm3544, %v3541, %v3543
    %vm3546 = vcmp.eq.f32.partialorder %v3541, 0.0
    %v3547 = vand.u32 %v3541, 2147483648
    %v3548 = vsel %vm3546, %v3547, %v3545
    %v3549 = vmul.f32 %v3537, 0.2
    %v3550 = vmin.f32 %v3548, %v3549
    %v3551 = vmax.f32 %v3548, 1e-12
    %v3552 = vrcp.pop %v3551
    %v3553 = vmul.f32 %v3456, %v3552
    %v3554 = vmul.f32 %v3553, %v3550
    %v3555 = vadd.f32 %v3524, %v3554
    %v3557 = vsel %vm134, %v3555, 0
    %3559 = vmatprep.subr.mxu0 0.0
    %3560 = vmatpush1.msra.mxu0 %v125
    %3561 = vmatprep.subr.mxu0 0.0
    %3562 = vmatpush1.msra.mxu0 %v126
    %3563 = vmatprep.subr.mxu0 0.0
    %3564 = vmatpush1.msra.mxu0 %v127
    %3565 = vmatprep.subr.mxu0 0.0
    %3566 = vmatpush1.msra.mxu0 %v128
    %3567 = vmatprep.subr.mxu0 0.0
    %3568 = vmatpush1.msra.mxu0 0.0
    %3569 = vmatprep.subr.mxu0 0.0
    %3570 = vmatpush1.msra.mxu0 0.0
    %3571 = vmatprep.subr.mxu0 0.0
    %3572 = vmatpush1.msra.mxu0 0.0
    %3573 = vmatprep.subr.mxu0 0.0
    %3574 = vmatpush1.msra.mxu0 0.0
    %3575 = vmatprep.subr.mxu0 0.0
    %3576 = vmatpush1.msra.mxu0 0.0
    %3577 = vmatprep.subr.mxu0 0.0
    %3578 = vmatpush1.msra.mxu0 0.0
    %3579 = vmatprep.subr.mxu0 0.0
    %3580 = vmatpush1.msra.mxu0 0.0
    %3581 = vmatprep.subr.mxu0 0.0
    %3582 = vmatpush1.msra.mxu0 0.0
    %3583 = vmatprep.subr.mxu0 0.0
    %3584 = vmatpush1.msra.mxu0 0.0
    %3585 = vmatprep.subr.mxu0 0.0
    %3586 = vmatpush1.msra.mxu0 0.0
    %3587 = vmatprep.subr.mxu0 0.0
    %3588 = vmatpush1.msra.mxu0 0.0
    %3589 = vmatprep.subr.mxu0 0.0
    %3590 = vmatpush1.msra.mxu0 0.0
    %3591 = vmatprep.subr.mxu0 0.0
    %3592 = vmatpush1.msra.mxu0 0.0
    %3593 = vmatprep.subr.mxu0 0.0
    %3594 = vmatpush1.msra.mxu0 0.0
    %3595 = vmatprep.subr.mxu0 0.0
    %3596 = vmatpush1.msra.mxu0 0.0
    %3597 = vmatprep.subr.mxu0 0.0
    %3598 = vmatpush1.msra.mxu0 0.0
    %3599 = vmatprep.subr.mxu0 0.0
    %3600 = vmatpush1.msra.mxu0 0.0
    %3601 = vmatprep.subr.mxu0 0.0
    %3602 = vmatpush1.msra.mxu0 0.0
    %3603 = vmatprep.subr.mxu0 0.0
    %3604 = vmatpush1.msra.mxu0 0.0
    %3605 = vmatprep.subr.mxu0 0.0
    %3606 = vmatpush1.msra.mxu0 0.0
    %3607 = vmatprep.subr.mxu0 0.0
    %3608 = vmatpush1.msra.mxu0 0.0
    %3609 = vmatprep.subr.mxu0 0.0
    %3610 = vmatpush1.msra.mxu0 0.0
    %3611 = vmatprep.subr.mxu0 0.0
    %3612 = vmatpush1.msra.mxu0 0.0
    %3613 = vmatprep.subr.mxu0 0.0
    %3614 = vmatpush1.msra.mxu0 0.0
    %3615 = vmatprep.subr.mxu0 0.0
    %3616 = vmatpush1.msra.mxu0 0.0
    %3617 = vmatprep.subr.mxu0 0.0
    %3618 = vmatpush1.msra.mxu0 0.0
    %3619 = vmatprep.subr.mxu0 0.0
    %3620 = vmatpush1.msra.mxu0 0.0
    %3621 = vmatprep.subr.mxu0 0.0
    %3622 = vmatpush1.msra.mxu0 0.0
    %3623 = vmatprep.mubr.f32.mxu0 0.0
    %3624 = vmatmul.mubr.f32.gmra.mrb[0].mxu0 %v3557
    %v3625 = vpop.f32.mrb[0].mxu0
    %v3626 = vadd.f32 0.0, %v3625
    %v3627 = vpop.f32.mrb[0].mxu0
    %3628 = vdwg.mxu0
    %v3629 = vsel %vm134, %v3626, -inf
    %3630 = vmax.xlane.f32.xlu0 %v3629
    %v3631 = vpop.xlane.xlu0 %3630
    %v3632 = vsub.f32 %v3626, %v3631
    %v3633 = vmul.f32 %v3632, 1.442695
    %v3634 = vpow.pop %v3633
    %v3635 = vsel %vm134, %v3634, 0.0
    %3636 = vadd.xlane.f32.xlu0 %v3635
    %v3637 = vpop.xlane.xlu0 %3636
    %v3638 = vlog2.pop %v3637
    %v3639 = vmul.f32 %v3638, 0.6931472
    %v3640 = vsub.f32 %v3632, %v3639
    %v3641 = vsel %vm134, %v3640, -inf
    %3642 = vmax.xlane.f32.xlu0 %v3641
    %v3643 = vpop.xlane.xlu0 %3642
    %vm3644 = vcmp.eq.f32.partialorder %v3640, %v3643
    %v3645 = vsel %vm3644, %v130, 32
    %v3646 = vsel %vm134, %v3645, 2147483647
    %v3647 = vand.u32 %v3646, 65535
    %v3648 = vshra.s32 %v3646, 16
    %v3649 = vcvt.s32.f32 %v3647
    %v3650 = vcvt.s32.f32 %v3648
    %3651 = vmin.xlane.f32.xlu0 %v3650
    %v3652 = vpop.xlane.xlu0 %3651
    %vm3653 = vcmp.eq.f32.partialorder %v3650, %v3652
    %v3654 = vsel %vm3653, %v3649, inf
    %3655 = vmin.xlane.f32.xlu0 %v3654
    %v3656 = vpop.xlane.xlu0 %3655
    %v3657 = vcvt.f32.s32 %v3656
    %v3658 = vcvt.f32.s32 %v3652
    %v3659 = vshll.u32 %v3658, 16
    %v3660 = vadd.s32 %v3659, %v3657
    %vm3661 = vcmp.eq.s32.totalorder %v130, %v3660
    %v3662 = vsel %vm3661, 1, 0
    %v3663 = vcvt.s32.f32 %v3662
    %s3664 = scalar_lea.vmem [#allocation3], 32
    %3665 = vst.msk [vmem:[%s3664] sm:$0xff] %vm134, %v3640
    %3666 = vmatprep.subr.mxu0 0.0
    %3667 = vmatpush1.msra.mxu0 %v107
    %3668 = vmatprep.subr.mxu0 0.0
    %3669 = vmatpush1.msra.mxu0 %v108
    %3670 = vmatprep.subr.mxu0 0.0
    %3671 = vmatpush1.msra.mxu0 %v109
    %3672 = vmatprep.subr.mxu0 0.0
    %3673 = vmatpush1.msra.mxu0 %v110
    %3674 = vmatprep.subr.mxu0 0.0
    %3675 = vmatpush1.msra.mxu0 %v111
    %3676 = vmatprep.subr.mxu0 0.0
    %3677 = vmatpush1.msra.mxu0 %v112
    %3678 = vmatprep.subr.mxu0 0.0
    %3679 = vmatpush1.msra.mxu0 %v113
    %3680 = vmatprep.subr.mxu0 0.0
    %3681 = vmatpush1.msra.mxu0 %v114
    %3682 = vmatprep.subr.mxu0 0.0
    %3683 = vmatpush1.msra.mxu0 %v115
    %3684 = vmatprep.subr.mxu0 0.0
    %3685 = vmatpush1.msra.mxu0 %v116
    %3686 = vmatprep.subr.mxu0 0.0
    %3687 = vmatpush1.msra.mxu0 %v117
    %3688 = vmatprep.subr.mxu0 0.0
    %3689 = vmatpush1.msra.mxu0 %v118
    %3690 = vmatprep.subr.mxu0 0.0
    %3691 = vmatpush1.msra.mxu0 %v119
    %3692 = vmatprep.subr.mxu0 0.0
    %3693 = vmatpush1.msra.mxu0 %v120
    %3694 = vmatprep.subr.mxu0 0.0
    %3695 = vmatpush1.msra.mxu0 %v121
    %3696 = vmatprep.subr.mxu0 0.0
    %3697 = vmatpush1.msra.mxu0 %v122
    %3698 = vmatprep.subr.mxu0 0.0
    %3699 = vmatpush1.msra.mxu0 0.0
    %3700 = vmatprep.subr.mxu0 0.0
    %3701 = vmatpush1.msra.mxu0 0.0
    %3702 = vmatprep.subr.mxu0 0.0
    %3703 = vmatpush1.msra.mxu0 0.0
    %3704 = vmatprep.subr.mxu0 0.0
    %3705 = vmatpush1.msra.mxu0 0.0
    %3706 = vmatprep.subr.mxu0 0.0
    %3707 = vmatpush1.msra.mxu0 0.0
    %3708 = vmatprep.subr.mxu0 0.0
    %3709 = vmatpush1.msra.mxu0 0.0
    %3710 = vmatprep.subr.mxu0 0.0
    %3711 = vmatpush1.msra.mxu0 0.0
    %3712 = vmatprep.subr.mxu0 0.0
    %3713 = vmatpush1.msra.mxu0 0.0
    %3714 = vmatprep.subr.mxu0 0.0
    %3715 = vmatpush1.msra.mxu0 0.0
    %3716 = vmatprep.subr.mxu0 0.0
    %3717 = vmatpush1.msra.mxu0 0.0
    %3718 = vmatprep.subr.mxu0 0.0
    %3719 = vmatpush1.msra.mxu0 0.0
    %3720 = vmatprep.subr.mxu0 0.0
    %3721 = vmatpush1.msra.mxu0 0.0
    %3722 = vmatprep.subr.mxu0 0.0
    %3723 = vmatpush1.msra.mxu0 0.0
    %3724 = vmatprep.subr.mxu0 0.0
    %3725 = vmatpush1.msra.mxu0 0.0
    %3726 = vmatprep.subr.mxu0 0.0
    %3727 = vmatpush1.msra.mxu0 0.0
    %3728 = vmatprep.subr.mxu0 0.0
    %3729 = vmatpush1.msra.mxu0 0.0
    %3730 = vmatprep.mubr.f32.mxu0 0.0
    %3731 = vmatmul.mubr.f32.gmra.mrb[0].mxu0 %v3315
    %v3732 = vpop.f32.mrb[0].mxu0
    %v3733 = vadd.f32 0.0, %v3732
    %v3734 = vpop.f32.mrb[0].mxu0
    %3735 = vdwg.mxu0
    %s3736 = scalar_lea.vmem [#allocation5], 32
    %3737 = vst.msk [vmem:[%s3736] sm:$0xff] %vm864, %v3733
    %3738 = vst.msk [vmem:[#allocation2] sm:$0xff] %vm134, %v3663
    %3739 = vrot.lane.b32.xlu0 %v3122, 64
    %v3740 = vpop.permute.xlu0 %3739
    %3742 = vst.msk [vmem:[#allocation2] sm:$0xff] %vm136, %v3740
    %v3743 = vld [vmem:[#allocation2] sm:$0xff]
    %v3745 = vsel %vm145, %v3743, 0
    %3747 = vmatprep.subr.mxu0 0.0
    %3748 = vmatpush1.msra.mxu0 %v48
    %3749 = vmatprep.subr.mxu0 0.0
    %3750 = vmatpush1.msra.mxu0 %v49
    %3751 = vmatprep.subr.mxu0 0.0
    %3752 = vmatpush1.msra.mxu0 %v50
    %3753 = vmatprep.subr.mxu0 0.0
    %3754 = vmatpush1.msra.mxu0 %v51
    %3755 = vmatprep.subr.mxu0 0.0
    %3756 = vmatpush1.msra.mxu0 %v52
    %3757 = vmatprep.subr.mxu0 0.0
    %3758 = vmatpush1.msra.mxu0 %v53
    %3759 = vmatprep.subr.mxu0 0.0
    %3760 = vmatpush1.msra.mxu0 %v54
    %3761 = vmatprep.subr.mxu0 0.0
    %3762 = vmatpush1.msra.mxu0 %v55
    %3763 = vmatprep.subr.mxu0 0.0
    %3764 = vmatpush1.msra.mxu0 0.0
    %3765 = vmatprep.subr.mxu0 0.0
    %3766 = vmatpush1.msra.mxu0 0.0
    %3767 = vmatprep.subr.mxu0 0.0
    %3768 = vmatpush1.msra.mxu0 0.0
    %3769 = vmatprep.subr.mxu0 0.0
    %3770 = vmatpush1.msra.mxu0 0.0
    %3771 = vmatprep.subr.mxu0 0.0
    %3772 = vmatpush1.msra.mxu0 0.0
    %3773 = vmatprep.subr.mxu0 0.0
    %3774 = vmatpush1.msra.mxu0 0.0
    %3775 = vmatprep.subr.mxu0 0.0
    %3776 = vmatpush1.msra.mxu0 0.0
    %3777 = vmatprep.subr.mxu0 0.0
    %3778 = vmatpush1.msra.mxu0 0.0
    %3779 = vmatprep.subr.mxu0 0.0
    %3780 = vmatpush1.msra.mxu0 0.0
    %3781 = vmatprep.subr.mxu0 0.0
    %3782 = vmatpush1.msra.mxu0 0.0
    %3783 = vmatprep.subr.mxu0 0.0
    %3784 = vmatpush1.msra.mxu0 0.0
    %3785 = vmatprep.subr.mxu0 0.0
    %3786 = vmatpush1.msra.mxu0 0.0
    %3787 = vmatprep.subr.mxu0 0.0
    %3788 = vmatpush1.msra.mxu0 0.0
    %3789 = vmatprep.subr.mxu0 0.0
    %3790 = vmatpush1.msra.mxu0 0.0
    %3791 = vmatprep.subr.mxu0 0.0
    %3792 = vmatpush1.msra.mxu0 0.0
    %3793 = vmatprep.subr.mxu0 0.0
    %3794 = vmatpush1.msra.mxu0 0.0
    %3795 = vmatprep.subr.mxu0 0.0
    %3796 = vmatpush1.msra.mxu0 0.0
    %3797 = vmatprep.subr.mxu0 0.0
    %3798 = vmatpush1.msra.mxu0 0.0
    %3799 = vmatprep.subr.mxu0 0.0
    %3800 = vmatpush1.msra.mxu0 0.0
    %3801 = vmatprep.subr.mxu0 0.0
    %3802 = vmatpush1.msra.mxu0 0.0
    %3803 = vmatprep.subr.mxu0 0.0
    %3804 = vmatpush1.msra.mxu0 0.0
    %3805 = vmatprep.subr.mxu0 0.0
    %3806 = vmatpush1.msra.mxu0 0.0
    %3807 = vmatprep.subr.mxu0 0.0
    %3808 = vmatpush1.msra.mxu0 0.0
    %3809 = vmatprep.subr.mxu0 0.0
    %3810 = vmatpush1.msra.mxu0 0.0
    %3811 = vmatprep.mubr.f32.mxu0 0.0
    %3812 = vmatmul.mubr.f32.gmra.mrb[0].mxu0 %v3745
    %v3813 = vpop.f32.mrb[0].mxu0
    %v3814 = vadd.f32 %v143, %v3813
    %v3815 = vpop.f32.mrb[0].mxu0
    %3816 = vdwg.mxu0
    %v3817 = vxor.u32 %v3814, 2147483648
    %v3818 = vmul.f32 %v3817, 1.442695
    %v3819 = vpow.pop %v3818
    %v3820 = vadd.f32 %v3819, 1.0
    %v3821 = vrcp.pop %v3820
    %v3822 = vmul.f32 1.0, %v3821
    %v3823 = vtanh.pop %v3814
    %v3824 = vmul.f32 %v3822, %v3116
    %3826 = vrot.lane.b32.xlu0 %v3823, 64
    %v3827 = vpop.permute.xlu0 %3826
    %v3829 = vmul.f32 %v3822, %v3827
    %3831 = vrot.lane.b32.xlu0 %v3829, 32
    %v3832 = vpop.permute.xlu0 %3831
    %v3834 = vadd.f32 %v3824, %v3832
    %v3835 = vtanh.pop %v3834
    %3837 = vrot.lane.b32.xlu0 %v3835, 64
    %v3838 = vpop.permute.xlu0 %3837
    %v3840 = vmul.f32 %v3822, %v3838
    %3842 = vrot.lane.b32.xlu0 %v3840, 32
    %v3843 = vpop.permute.xlu0 %3842
    %3845 = vst.msk [vmem:[#allocation2] sm:$0xff] %vm134, %v3843
    %3846 = vrot.lane.b32.xlu0 %v3229, 64
    %v3847 = vpop.permute.xlu0 %3846
    %3849 = vst.msk [vmem:[#allocation2] sm:$0xff] %vm136, %v3847
    %v3850 = vld [vmem:[#allocation2] sm:$0xff]
    %v3852 = vsel %vm145, %v3850, 0
    %3854 = vmatprep.subr.mxu0 0.0
    %3855 = vmatpush1.msra.mxu0 %v57
    %3856 = vmatprep.subr.mxu0 0.0
    %3857 = vmatpush1.msra.mxu0 %v58
    %3858 = vmatprep.subr.mxu0 0.0
    %3859 = vmatpush1.msra.mxu0 %v59
    %3860 = vmatprep.subr.mxu0 0.0
    %3861 = vmatpush1.msra.mxu0 %v60
    %3862 = vmatprep.subr.mxu0 0.0
    %3863 = vmatpush1.msra.mxu0 %v61
    %3864 = vmatprep.subr.mxu0 0.0
    %3865 = vmatpush1.msra.mxu0 %v62
    %3866 = vmatprep.subr.mxu0 0.0
    %3867 = vmatpush1.msra.mxu0 %v63
    %3868 = vmatprep.subr.mxu0 0.0
    %3869 = vmatpush1.msra.mxu0 %v64
    %3870 = vmatprep.subr.mxu0 0.0
    %3871 = vmatpush1.msra.mxu0 0.0
    %3872 = vmatprep.subr.mxu0 0.0
    %3873 = vmatpush1.msra.mxu0 0.0
    %3874 = vmatprep.subr.mxu0 0.0
    %3875 = vmatpush1.msra.mxu0 0.0
    %3876 = vmatprep.subr.mxu0 0.0
    %3877 = vmatpush1.msra.mxu0 0.0
    %3878 = vmatprep.subr.mxu0 0.0
    %3879 = vmatpush1.msra.mxu0 0.0
    %3880 = vmatprep.subr.mxu0 0.0
    %3881 = vmatpush1.msra.mxu0 0.0
    %3882 = vmatprep.subr.mxu0 0.0
    %3883 = vmatpush1.msra.mxu0 0.0
    %3884 = vmatprep.subr.mxu0 0.0
    %3885 = vmatpush1.msra.mxu0 0.0
    %3886 = vmatprep.subr.mxu0 0.0
    %3887 = vmatpush1.msra.mxu0 0.0
    %3888 = vmatprep.subr.mxu0 0.0
    %3889 = vmatpush1.msra.mxu0 0.0
    %3890 = vmatprep.subr.mxu0 0.0
    %3891 = vmatpush1.msra.mxu0 0.0
    %3892 = vmatprep.subr.mxu0 0.0
    %3893 = vmatpush1.msra.mxu0 0.0
    %3894 = vmatprep.subr.mxu0 0.0
    %3895 = vmatpush1.msra.mxu0 0.0
    %3896 = vmatprep.subr.mxu0 0.0
    %3897 = vmatpush1.msra.mxu0 0.0
    %3898 = vmatprep.subr.mxu0 0.0
    %3899 = vmatpush1.msra.mxu0 0.0
    %3900 = vmatprep.subr.mxu0 0.0
    %3901 = vmatpush1.msra.mxu0 0.0
    %3902 = vmatprep.subr.mxu0 0.0
    %3903 = vmatpush1.msra.mxu0 0.0
    %3904 = vmatprep.subr.mxu0 0.0
    %3905 = vmatpush1.msra.mxu0 0.0
    %3906 = vmatprep.subr.mxu0 0.0
    %3907 = vmatpush1.msra.mxu0 0.0
    %3908 = vmatprep.subr.mxu0 0.0
    %3909 = vmatpush1.msra.mxu0 0.0
    %3910 = vmatprep.subr.mxu0 0.0
    %3911 = vmatpush1.msra.mxu0 0.0
    %3912 = vmatprep.subr.mxu0 0.0
    %3913 = vmatpush1.msra.mxu0 0.0
    %3914 = vmatprep.subr.mxu0 0.0
    %3915 = vmatpush1.msra.mxu0 0.0
    %3916 = vmatprep.subr.mxu0 0.0
    %3917 = vmatpush1.msra.mxu0 0.0
    %3918 = vmatprep.mubr.f32.mxu0 0.0
    %3919 = vmatmul.mubr.f32.gmra.mrb[0].mxu0 %v3852
    %v3920 = vpop.f32.mrb[0].mxu0
    %v3921 = vadd.f32 %v254, %v3920
    %v3922 = vpop.f32.mrb[0].mxu0
    %3923 = vdwg.mxu0
    %v3924 = vxor.u32 %v3921, 2147483648
    %v3925 = vmul.f32 %v3924, 1.442695
    %v3926 = vpow.pop %v3925
    %v3927 = vadd.f32 %v3926, 1.0
    %v3928 = vrcp.pop %v3927
    %v3929 = vmul.f32 1.0, %v3928
    %v3930 = vtanh.pop %v3921
    %v3931 = vmul.f32 %v3929, %v3223
    %3933 = vrot.lane.b32.xlu0 %v3930, 64
    %v3934 = vpop.permute.xlu0 %3933
    %v3936 = vmul.f32 %v3929, %v3934
    %3938 = vrot.lane.b32.xlu0 %v3936, 32
    %v3939 = vpop.permute.xlu0 %3938
    %v3941 = vadd.f32 %v3931, %v3939
    %v3942 = vtanh.pop %v3941
    %3944 = vrot.lane.b32.xlu0 %v3942, 64
    %v3945 = vpop.permute.xlu0 %3944
    %v3947 = vmul.f32 %v3929, %v3945
    %3949 = vrot.lane.b32.xlu0 %v3947, 32
    %v3950 = vpop.permute.xlu0 %3949
    %v3951 = vsel %vm134, %v3950, 0
    %3953 = vmatprep.subr.mxu0 0.0
    %3954 = vmatpush1.msra.mxu0 %v66
    %3955 = vmatprep.subr.mxu0 0.0
    %3956 = vmatpush1.msra.mxu0 %v67
    %3957 = vmatprep.subr.mxu0 0.0
    %3958 = vmatpush1.msra.mxu0 %v68
    %3959 = vmatprep.subr.mxu0 0.0
    %3960 = vmatpush1.msra.mxu0 %v69
    %3961 = vmatprep.subr.mxu0 0.0
    %3962 = vmatpush1.msra.mxu0 0.0
    %3963 = vmatprep.subr.mxu0 0.0
    %3964 = vmatpush1.msra.mxu0 0.0
    %3965 = vmatprep.subr.mxu0 0.0
    %3966 = vmatpush1.msra.mxu0 0.0
    %3967 = vmatprep.subr.mxu0 0.0
    %3968 = vmatpush1.msra.mxu0 0.0
    %3969 = vmatprep.subr.mxu0 0.0
    %3970 = vmatpush1.msra.mxu0 0.0
    %3971 = vmatprep.subr.mxu0 0.0
    %3972 = vmatpush1.msra.mxu0 0.0
    %3973 = vmatprep.subr.mxu0 0.0
    %3974 = vmatpush1.msra.mxu0 0.0
    %3975 = vmatprep.subr.mxu0 0.0
    %3976 = vmatpush1.msra.mxu0 0.0
    %3977 = vmatprep.subr.mxu0 0.0
    %3978 = vmatpush1.msra.mxu0 0.0
    %3979 = vmatprep.subr.mxu0 0.0
    %3980 = vmatpush1.msra.mxu0 0.0
    %3981 = vmatprep.subr.mxu0 0.0
    %3982 = vmatpush1.msra.mxu0 0.0
    %3983 = vmatprep.subr.mxu0 0.0
    %3984 = vmatpush1.msra.mxu0 0.0
    %3985 = vmatprep.subr.mxu0 0.0
    %3986 = vmatpush1.msra.mxu0 0.0
    %3987 = vmatprep.subr.mxu0 0.0
    %3988 = vmatpush1.msra.mxu0 0.0
    %3989 = vmatprep.subr.mxu0 0.0
    %3990 = vmatpush1.msra.mxu0 0.0
    %3991 = vmatprep.subr.mxu0 0.0
    %3992 = vmatpush1.msra.mxu0 0.0
    %3993 = vmatprep.subr.mxu0 0.0
    %3994 = vmatpush1.msra.mxu0 0.0
    %3995 = vmatprep.subr.mxu0 0.0
    %3996 = vmatpush1.msra.mxu0 0.0
    %3997 = vmatprep.subr.mxu0 0.0
    %3998 = vmatpush1.msra.mxu0 0.0
    %3999 = vmatprep.subr.mxu0 0.0
    %4000 = vmatpush1.msra.mxu0 0.0
    %4001 = vmatprep.subr.mxu0 0.0
    %4002 = vmatpush1.msra.mxu0 0.0
    %4003 = vmatprep.subr.mxu0 0.0
    %4004 = vmatpush1.msra.mxu0 0.0
    %4005 = vmatprep.subr.mxu0 0.0
    %4006 = vmatpush1.msra.mxu0 0.0
    %4007 = vmatprep.subr.mxu0 0.0
    %4008 = vmatpush1.msra.mxu0 0.0
    %4009 = vmatprep.subr.mxu0 0.0
    %4010 = vmatpush1.msra.mxu0 0.0
    %4011 = vmatprep.subr.mxu0 0.0
    %4012 = vmatpush1.msra.mxu0 0.0
    %4013 = vmatprep.subr.mxu0 0.0
    %4014 = vmatpush1.msra.mxu0 0.0
    %4015 = vmatprep.subr.mxu0 0.0
    %4016 = vmatpush1.msra.mxu0 0.0
    %4017 = vmatprep.mubr.f32.mxu0 0.0
    %4018 = vmatmul.mubr.f32.gmra.mrb[0].mxu0 %v3951
    %v4019 = vpop.f32.mrb[0].mxu0
    %v4020 = vadd.f32 %v123, %v4019
    %v4021 = vpop.f32.mrb[0].mxu0
    %4022 = vdwg.mxu0
    %4023 = vmax.xlane.f32.xlu0 %v4020
    %v4024 = vpop.xlane.xlu0 %4023
    %v4025 = vsub.f32 %v4020, %v4024
    %v4026 = vmul.f32 %v4025, 1.442695
    %v4027 = vpow.pop %v4026
    %v4028 = vmul.f32 %v4027, %v124
    %4029 = vadd.xlane.f32.xlu0 %v4028
    %v4030 = vpop.xlane.xlu0 %4029
    %v4031 = vrcp.pop %v4030
    %v4032 = vmul.f32 1.0, %v4031
    %v4033 = vmul.f32 %v4028, %v4032
    %4034 = vmatprep.subr.mxu0 0.0
    %4035 = vmatpush1.msra.mxu0 %v70
    %4036 = vmatprep.subr.mxu0 0.0
    %4037 = vmatpush1.msra.mxu0 %v71
    %4038 = vmatprep.subr.mxu0 0.0
    %4039 = vmatpush1.msra.mxu0 %v72
    %4040 = vmatprep.subr.mxu0 0.0
    %4041 = vmatpush1.msra.mxu0 %v73
    %4042 = vmatprep.subr.mxu0 0.0
    %4043 = vmatpush1.msra.mxu0 %v74
    %4044 = vmatprep.subr.mxu0 0.0
    %4045 = vmatpush1.msra.mxu0 %v75
    %4046 = vmatprep.subr.mxu0 0.0
    %4047 = vmatpush1.msra.mxu0 %v76
    %4048 = vmatprep.subr.mxu0 0.0
    %4049 = vmatpush1.msra.mxu0 %v77
    %4050 = vmatprep.subr.mxu0 0.0
    %4051 = vmatpush1.msra.mxu0 %v78
    %4052 = vmatprep.subr.mxu0 0.0
    %4053 = vmatpush1.msra.mxu0 %v79
    %4054 = vmatprep.subr.mxu0 0.0
    %4055 = vmatpush1.msra.mxu0 %v80
    %4056 = vmatprep.subr.mxu0 0.0
    %4057 = vmatpush1.msra.mxu0 %v81
    %4058 = vmatprep.subr.mxu0 0.0
    %4059 = vmatpush1.msra.mxu0 %v82
    %4060 = vmatprep.subr.mxu0 0.0
    %4061 = vmatpush1.msra.mxu0 %v83
    %4062 = vmatprep.subr.mxu0 0.0
    %4063 = vmatpush1.msra.mxu0 %v84
    %4064 = vmatprep.subr.mxu0 0.0
    %4065 = vmatpush1.msra.mxu0 %v85
    %4066 = vmatprep.subr.mxu0 0.0
    %4067 = vmatpush1.msra.mxu0 0.0
    %4068 = vmatprep.subr.mxu0 0.0
    %4069 = vmatpush1.msra.mxu0 0.0
    %4070 = vmatprep.subr.mxu0 0.0
    %4071 = vmatpush1.msra.mxu0 0.0
    %4072 = vmatprep.subr.mxu0 0.0
    %4073 = vmatpush1.msra.mxu0 0.0
    %4074 = vmatprep.subr.mxu0 0.0
    %4075 = vmatpush1.msra.mxu0 0.0
    %4076 = vmatprep.subr.mxu0 0.0
    %4077 = vmatpush1.msra.mxu0 0.0
    %4078 = vmatprep.subr.mxu0 0.0
    %4079 = vmatpush1.msra.mxu0 0.0
    %4080 = vmatprep.subr.mxu0 0.0
    %4081 = vmatpush1.msra.mxu0 0.0
    %4082 = vmatprep.subr.mxu0 0.0
    %4083 = vmatpush1.msra.mxu0 0.0
    %4084 = vmatprep.subr.mxu0 0.0
    %4085 = vmatpush1.msra.mxu0 0.0
    %4086 = vmatprep.subr.mxu0 0.0
    %4087 = vmatpush1.msra.mxu0 0.0
    %4088 = vmatprep.subr.mxu0 0.0
    %4089 = vmatpush1.msra.mxu0 0.0
    %4090 = vmatprep.subr.mxu0 0.0
    %4091 = vmatpush1.msra.mxu0 0.0
    %4092 = vmatprep.subr.mxu0 0.0
    %4093 = vmatpush1.msra.mxu0 0.0
    %4094 = vmatprep.subr.mxu0 0.0
    %4095 = vmatpush1.msra.mxu0 0.0
    %4096 = vmatprep.subr.mxu0 0.0
    %4097 = vmatpush1.msra.mxu0 0.0
    %4098 = vmatprep.mubr.f32.mxu0 0.0
    %4099 = vmatmul.mubr.f32.gmra.mrb[0].mxu0 %v4033
    %v4100 = vpop.f32.mrb[0].mxu0
    %v4101 = vadd.f32 0.0, %v4100
    %v4102 = vpop.f32.mrb[0].mxu0
    %4103 = vdwg.mxu0
    %4104 = vmatprep.subr.mxu0 0.0
    %4105 = vmatpush1.msra.mxu0 %v86
    %4106 = vmatprep.subr.mxu0 0.0
    %4107 = vmatpush1.msra.mxu0 %v87
    %4108 = vmatprep.subr.mxu0 0.0
    %4109 = vmatpush1.msra.mxu0 %v88
    %4110 = vmatprep.subr.mxu0 0.0
    %4111 = vmatpush1.msra.mxu0 %v89
    %4112 = vmatprep.subr.mxu0 0.0
    %4113 = vmatpush1.msra.mxu0 0.0
    %4114 = vmatprep.subr.mxu0 0.0
    %4115 = vmatpush1.msra.mxu0 0.0
    %4116 = vmatprep.subr.mxu0 0.0
    %4117 = vmatpush1.msra.mxu0 0.0
    %4118 = vmatprep.subr.mxu0 0.0
    %4119 = vmatpush1.msra.mxu0 0.0
    %4120 = vmatprep.subr.mxu0 0.0
    %4121 = vmatpush1.msra.mxu0 0.0
    %4122 = vmatprep.subr.mxu0 0.0
    %4123 = vmatpush1.msra.mxu0 0.0
    %4124 = vmatprep.subr.mxu0 0.0
    %4125 = vmatpush1.msra.mxu0 0.0
    %4126 = vmatprep.subr.mxu0 0.0
    %4127 = vmatpush1.msra.mxu0 0.0
    %4128 = vmatprep.subr.mxu0 0.0
    %4129 = vmatpush1.msra.mxu0 0.0
    %4130 = vmatprep.subr.mxu0 0.0
    %4131 = vmatpush1.msra.mxu0 0.0
    %4132 = vmatprep.subr.mxu0 0.0
    %4133 = vmatpush1.msra.mxu0 0.0
    %4134 = vmatprep.subr.mxu0 0.0
    %4135 = vmatpush1.msra.mxu0 0.0
    %4136 = vmatprep.subr.mxu0 0.0
    %4137 = vmatpush1.msra.mxu0 0.0
    %4138 = vmatprep.subr.mxu0 0.0
    %4139 = vmatpush1.msra.mxu0 0.0
    %4140 = vmatprep.subr.mxu0 0.0
    %4141 = vmatpush1.msra.mxu0 0.0
    %4142 = vmatprep.subr.mxu0 0.0
    %4143 = vmatpush1.msra.mxu0 0.0
    %4144 = vmatprep.subr.mxu0 0.0
    %4145 = vmatpush1.msra.mxu0 0.0
    %4146 = vmatprep.subr.mxu0 0.0
    %4147 = vmatpush1.msra.mxu0 0.0
    %4148 = vmatprep.subr.mxu0 0.0
    %4149 = vmatpush1.msra.mxu0 0.0
    %4150 = vmatprep.subr.mxu0 0.0
    %4151 = vmatpush1.msra.mxu0 0.0
    %4152 = vmatprep.subr.mxu0 0.0
    %4153 = vmatpush1.msra.mxu0 0.0
    %4154 = vmatprep.subr.mxu0 0.0
    %4155 = vmatpush1.msra.mxu0 0.0
    %4156 = vmatprep.subr.mxu0 0.0
    %4157 = vmatpush1.msra.mxu0 0.0
    %4158 = vmatprep.subr.mxu0 0.0
    %4159 = vmatpush1.msra.mxu0 0.0
    %4160 = vmatprep.subr.mxu0 0.0
    %4161 = vmatpush1.msra.mxu0 0.0
    %4162 = vmatprep.subr.mxu0 0.0
    %4163 = vmatpush1.msra.mxu0 0.0
    %4164 = vmatprep.subr.mxu0 0.0
    %4165 = vmatpush1.msra.mxu0 0.0
    %4166 = vmatprep.subr.mxu0 0.0
    %4167 = vmatpush1.msra.mxu0 0.0
    %4168 = vmatprep.mubr.f32.mxu0 0.0
    %4169 = vmatmul.mubr.f32.gmra.mrb[0].mxu0 %v3951
    %v4170 = vpop.f32.mrb[0].mxu0
    %v4171 = vadd.f32 %v4101, %v4170
    %v4172 = vpop.f32.mrb[0].mxu0
    %4173 = vdwg.mxu0
    %v4174 = vadd.f32 %v4171, %v583
    %4175 = vmatprep.subr.mxu0 0.0
    %4176 = vmatpush1.msra.mxu0 %v91
    %4177 = vmatprep.subr.mxu0 0.0
    %4178 = vmatpush1.msra.mxu0 %v92
    %4179 = vmatprep.subr.mxu0 0.0
    %4180 = vmatpush1.msra.mxu0 %v93
    %4181 = vmatprep.subr.mxu0 0.0
    %4182 = vmatpush1.msra.mxu0 %v94
    %4183 = vmatprep.subr.mxu0 0.0
    %4184 = vmatpush1.msra.mxu0 %v95
    %4185 = vmatprep.subr.mxu0 0.0
    %4186 = vmatpush1.msra.mxu0 %v96
    %4187 = vmatprep.subr.mxu0 0.0
    %4188 = vmatpush1.msra.mxu0 %v97
    %4189 = vmatprep.subr.mxu0 0.0
    %4190 = vmatpush1.msra.mxu0 %v98
    %4191 = vmatprep.subr.mxu0 0.0
    %4192 = vmatpush1.msra.mxu0 %v99
    %4193 = vmatprep.subr.mxu0 0.0
    %4194 = vmatpush1.msra.mxu0 %v100
    %4195 = vmatprep.subr.mxu0 0.0
    %4196 = vmatpush1.msra.mxu0 %v101
    %4197 = vmatprep.subr.mxu0 0.0
    %4198 = vmatpush1.msra.mxu0 %v102
    %4199 = vmatprep.subr.mxu0 0.0
    %4200 = vmatpush1.msra.mxu0 %v103
    %4201 = vmatprep.subr.mxu0 0.0
    %4202 = vmatpush1.msra.mxu0 %v104
    %4203 = vmatprep.subr.mxu0 0.0
    %4204 = vmatpush1.msra.mxu0 %v105
    %4205 = vmatprep.subr.mxu0 0.0
    %4206 = vmatpush1.msra.mxu0 %v106
    %4207 = vmatprep.subr.mxu0 0.0
    %4208 = vmatpush1.msra.mxu0 0.0
    %4209 = vmatprep.subr.mxu0 0.0
    %4210 = vmatpush1.msra.mxu0 0.0
    %4211 = vmatprep.subr.mxu0 0.0
    %4212 = vmatpush1.msra.mxu0 0.0
    %4213 = vmatprep.subr.mxu0 0.0
    %4214 = vmatpush1.msra.mxu0 0.0
    %4215 = vmatprep.subr.mxu0 0.0
    %4216 = vmatpush1.msra.mxu0 0.0
    %4217 = vmatprep.subr.mxu0 0.0
    %4218 = vmatpush1.msra.mxu0 0.0
    %4219 = vmatprep.subr.mxu0 0.0
    %4220 = vmatpush1.msra.mxu0 0.0
    %4221 = vmatprep.subr.mxu0 0.0
    %4222 = vmatpush1.msra.mxu0 0.0
    %4223 = vmatprep.subr.mxu0 0.0
    %4224 = vmatpush1.msra.mxu0 0.0
    %4225 = vmatprep.subr.mxu0 0.0
    %4226 = vmatpush1.msra.mxu0 0.0
    %4227 = vmatprep.subr.mxu0 0.0
    %4228 = vmatpush1.msra.mxu0 0.0
    %4229 = vmatprep.subr.mxu0 0.0
    %4230 = vmatpush1.msra.mxu0 0.0
    %4231 = vmatprep.subr.mxu0 0.0
    %4232 = vmatpush1.msra.mxu0 0.0
    %4233 = vmatprep.subr.mxu0 0.0
    %4234 = vmatpush1.msra.mxu0 0.0
    %4235 = vmatprep.subr.mxu0 0.0
    %4236 = vmatpush1.msra.mxu0 0.0
    %4237 = vmatprep.subr.mxu0 0.0
    %4238 = vmatpush1.msra.mxu0 0.0
    %4239 = vmatprep.mubr.f32.mxu0 0.0
    %4240 = vmatmul.mubr.f32.gmra.mrb[0].mxu0 %v4033
    %v4241 = vpop.f32.mrb[0].mxu0
    %v4242 = vadd.f32 0.0, %v4241
    %v4243 = vpop.f32.mrb[0].mxu0
    %4244 = vdwg.mxu0
    %v4245 = vmul.f32 %v4242, %v4242
    %v4246 = vsel %vm134, %v4245, 0.0
    %4247 = vadd.xlane.f32.xlu0 %v4246
    %v4248 = vpop.xlane.xlu0 %4247
    %v4249 = vrsqrt.pop %v4248
    %v4250 = vmul.f32 %v4248, %v4249
    %vm4251 = vcmp.eq.f32.partialorder %v4248, inf
    %v4252 = vsel %vm4251, %v4248, %v4250
    %vm4253 = vcmp.eq.f32.partialorder %v4248, 0.0
    %v4254 = vand.u32 %v4248, 2147483648
    %v4255 = vsel %vm4253, %v4254, %v4252
    %v4256 = vmul.f32 %v4174, %v4174
    %v4257 = vsel %vm134, %v4256, 0.0
    %4258 = vadd.xlane.f32.xlu0 %v4257
    %v4259 = vpop.xlane.xlu0 %4258
    %v4260 = vrsqrt.pop %v4259
    %v4261 = vmul.f32 %v4259, %v4260
    %vm4262 = vcmp.eq.f32.partialorder %v4259, inf
    %v4263 = vsel %vm4262, %v4259, %v4261
    %vm4264 = vcmp.eq.f32.partialorder %v4259, 0.0
    %v4265 = vand.u32 %v4259, 2147483648
    %v4266 = vsel %vm4264, %v4265, %v4263
    %v4267 = vmul.f32 %v4255, 0.2
    %v4268 = vmin.f32 %v4266, %v4267
    %v4269 = vmax.f32 %v4266, 1e-12
    %v4270 = vrcp.pop %v4269
    %v4271 = vmul.f32 %v4174, %v4270
    %v4272 = vmul.f32 %v4271, %v4268
    %v4273 = vadd.f32 %v4242, %v4272
    %v4275 = vsel %vm134, %v4273, 0
    %4277 = vmatprep.subr.mxu0 0.0
    %4278 = vmatpush1.msra.mxu0 %v125
    %4279 = vmatprep.subr.mxu0 0.0
    %4280 = vmatpush1.msra.mxu0 %v126
    %4281 = vmatprep.subr.mxu0 0.0
    %4282 = vmatpush1.msra.mxu0 %v127
    %4283 = vmatprep.subr.mxu0 0.0
    %4284 = vmatpush1.msra.mxu0 %v128
    %4285 = vmatprep.subr.mxu0 0.0
    %4286 = vmatpush1.msra.mxu0 0.0
    %4287 = vmatprep.subr.mxu0 0.0
    %4288 = vmatpush1.msra.mxu0 0.0
    %4289 = vmatprep.subr.mxu0 0.0
    %4290 = vmatpush1.msra.mxu0 0.0
    %4291 = vmatprep.subr.mxu0 0.0
    %4292 = vmatpush1.msra.mxu0 0.0
    %4293 = vmatprep.subr.mxu0 0.0
    %4294 = vmatpush1.msra.mxu0 0.0
    %4295 = vmatprep.subr.mxu0 0.0
    %4296 = vmatpush1.msra.mxu0 0.0
    %4297 = vmatprep.subr.mxu0 0.0
    %4298 = vmatpush1.msra.mxu0 0.0
    %4299 = vmatprep.subr.mxu0 0.0
    %4300 = vmatpush1.msra.mxu0 0.0
    %4301 = vmatprep.subr.mxu0 0.0
    %4302 = vmatpush1.msra.mxu0 0.0
    %4303 = vmatprep.subr.mxu0 0.0
    %4304 = vmatpush1.msra.mxu0 0.0
    %4305 = vmatprep.subr.mxu0 0.0
    %4306 = vmatpush1.msra.mxu0 0.0
    %4307 = vmatprep.subr.mxu0 0.0
    %4308 = vmatpush1.msra.mxu0 0.0
    %4309 = vmatprep.subr.mxu0 0.0
    %4310 = vmatpush1.msra.mxu0 0.0
    %4311 = vmatprep.subr.mxu0 0.0
    %4312 = vmatpush1.msra.mxu0 0.0
    %4313 = vmatprep.subr.mxu0 0.0
    %4314 = vmatpush1.msra.mxu0 0.0
    %4315 = vmatprep.subr.mxu0 0.0
    %4316 = vmatpush1.msra.mxu0 0.0
    %4317 = vmatprep.subr.mxu0 0.0
    %4318 = vmatpush1.msra.mxu0 0.0
    %4319 = vmatprep.subr.mxu0 0.0
    %4320 = vmatpush1.msra.mxu0 0.0
    %4321 = vmatprep.subr.mxu0 0.0
    %4322 = vmatpush1.msra.mxu0 0.0
    %4323 = vmatprep.subr.mxu0 0.0
    %4324 = vmatpush1.msra.mxu0 0.0
    %4325 = vmatprep.subr.mxu0 0.0
    %4326 = vmatpush1.msra.mxu0 0.0
    %4327 = vmatprep.subr.mxu0 0.0
    %4328 = vmatpush1.msra.mxu0 0.0
    %4329 = vmatprep.subr.mxu0 0.0
    %4330 = vmatpush1.msra.mxu0 0.0
    %4331 = vmatprep.subr.mxu0 0.0
    %4332 = vmatpush1.msra.mxu0 0.0
    %4333 = vmatprep.subr.mxu0 0.0
    %4334 = vmatpush1.msra.mxu0 0.0
    %4335 = vmatprep.subr.mxu0 0.0
    %4336 = vmatpush1.msra.mxu0 0.0
    %4337 = vmatprep.subr.mxu0 0.0
    %4338 = vmatpush1.msra.mxu0 0.0
    %4339 = vmatprep.subr.mxu0 0.0
    %4340 = vmatpush1.msra.mxu0 0.0
    %4341 = vmatprep.mubr.f32.mxu0 0.0
    %4342 = vmatmul.mubr.f32.gmra.mrb[0].mxu0 %v4275
    %v4343 = vpop.f32.mrb[0].mxu0
    %v4344 = vadd.f32 0.0, %v4343
    %v4345 = vpop.f32.mrb[0].mxu0
    %4346 = vdwg.mxu0
    %v4347 = vsel %vm134, %v4344, -inf
    %4348 = vmax.xlane.f32.xlu0 %v4347
    %v4349 = vpop.xlane.xlu0 %4348
    %v4350 = vsub.f32 %v4344, %v4349
    %v4351 = vmul.f32 %v4350, 1.442695
    %v4352 = vpow.pop %v4351
    %v4353 = vsel %vm134, %v4352, 0.0
    %4354 = vadd.xlane.f32.xlu0 %v4353
    %v4355 = vpop.xlane.xlu0 %4354
    %v4356 = vlog2.pop %v4355
    %v4357 = vmul.f32 %v4356, 0.6931472
    %v4358 = vsub.f32 %v4350, %v4357
    %v4359 = vsel %vm134, %v4358, -inf
    %4360 = vmax.xlane.f32.xlu0 %v4359
    %v4361 = vpop.xlane.xlu0 %4360
    %vm4362 = vcmp.eq.f32.partialorder %v4358, %v4361
    %v4363 = vsel %vm4362, %v130, 32
    %v4364 = vsel %vm134, %v4363, 2147483647
    %v4365 = vand.u32 %v4364, 65535
    %v4366 = vshra.s32 %v4364, 16
    %v4367 = vcvt.s32.f32 %v4365
    %v4368 = vcvt.s32.f32 %v4366
    %4369 = vmin.xlane.f32.xlu0 %v4368
    %v4370 = vpop.xlane.xlu0 %4369
    %vm4371 = vcmp.eq.f32.partialorder %v4368, %v4370
    %v4372 = vsel %vm4371, %v4367, inf
    %4373 = vmin.xlane.f32.xlu0 %v4372
    %v4374 = vpop.xlane.xlu0 %4373
    %v4375 = vcvt.f32.s32 %v4374
    %v4376 = vcvt.f32.s32 %v4370
    %v4377 = vshll.u32 %v4376, 16
    %v4378 = vadd.s32 %v4377, %v4375
    %vm4379 = vcmp.eq.s32.totalorder %v130, %v4378
    %v4380 = vsel %vm4379, 1, 0
    %v4381 = vcvt.s32.f32 %v4380
    %s4382 = scalar_lea.vmem [#allocation3], 40
    %4383 = vst.msk [vmem:[%s4382] sm:$0xff] %vm134, %v4358
    %4384 = vmatprep.subr.mxu0 0.0
    %4385 = vmatpush1.msra.mxu0 %v107
    %4386 = vmatprep.subr.mxu0 0.0
    %4387 = vmatpush1.msra.mxu0 %v108
    %4388 = vmatprep.subr.mxu0 0.0
    %4389 = vmatpush1.msra.mxu0 %v109
    %4390 = vmatprep.subr.mxu0 0.0
    %4391 = vmatpush1.msra.mxu0 %v110
    %4392 = vmatprep.subr.mxu0 0.0
    %4393 = vmatpush1.msra.mxu0 %v111
    %4394 = vmatprep.subr.mxu0 0.0
    %4395 = vmatpush1.msra.mxu0 %v112
    %4396 = vmatprep.subr.mxu0 0.0
    %4397 = vmatpush1.msra.mxu0 %v113
    %4398 = vmatprep.subr.mxu0 0.0
    %4399 = vmatpush1.msra.mxu0 %v114
    %4400 = vmatprep.subr.mxu0 0.0
    %4401 = vmatpush1.msra.mxu0 %v115
    %4402 = vmatprep.subr.mxu0 0.0
    %4403 = vmatpush1.msra.mxu0 %v116
    %4404 = vmatprep.subr.mxu0 0.0
    %4405 = vmatpush1.msra.mxu0 %v117
    %4406 = vmatprep.subr.mxu0 0.0
    %4407 = vmatpush1.msra.mxu0 %v118
    %4408 = vmatprep.subr.mxu0 0.0
    %4409 = vmatpush1.msra.mxu0 %v119
    %4410 = vmatprep.subr.mxu0 0.0
    %4411 = vmatpush1.msra.mxu0 %v120
    %4412 = vmatprep.subr.mxu0 0.0
    %4413 = vmatpush1.msra.mxu0 %v121
    %4414 = vmatprep.subr.mxu0 0.0
    %4415 = vmatpush1.msra.mxu0 %v122
    %4416 = vmatprep.subr.mxu0 0.0
    %4417 = vmatpush1.msra.mxu0 0.0
    %4418 = vmatprep.subr.mxu0 0.0
    %4419 = vmatpush1.msra.mxu0 0.0
    %4420 = vmatprep.subr.mxu0 0.0
    %4421 = vmatpush1.msra.mxu0 0.0
    %4422 = vmatprep.subr.mxu0 0.0
    %4423 = vmatpush1.msra.mxu0 0.0
    %4424 = vmatprep.subr.mxu0 0.0
    %4425 = vmatpush1.msra.mxu0 0.0
    %4426 = vmatprep.subr.mxu0 0.0
    %4427 = vmatpush1.msra.mxu0 0.0
    %4428 = vmatprep.subr.mxu0 0.0
    %4429 = vmatpush1.msra.mxu0 0.0
    %4430 = vmatprep.subr.mxu0 0.0
    %4431 = vmatpush1.msra.mxu0 0.0
    %4432 = vmatprep.subr.mxu0 0.0
    %4433 = vmatpush1.msra.mxu0 0.0
    %4434 = vmatprep.subr.mxu0 0.0
    %4435 = vmatpush1.msra.mxu0 0.0
    %4436 = vmatprep.subr.mxu0 0.0
    %4437 = vmatpush1.msra.mxu0 0.0
    %4438 = vmatprep.subr.mxu0 0.0
    %4439 = vmatpush1.msra.mxu0 0.0
    %4440 = vmatprep.subr.mxu0 0.0
    %4441 = vmatpush1.msra.mxu0 0.0
    %4442 = vmatprep.subr.mxu0 0.0
    %4443 = vmatpush1.msra.mxu0 0.0
    %4444 = vmatprep.subr.mxu0 0.0
    %4445 = vmatpush1.msra.mxu0 0.0
    %4446 = vmatprep.subr.mxu0 0.0
    %4447 = vmatpush1.msra.mxu0 0.0
    %4448 = vmatprep.mubr.f32.mxu0 0.0
    %4449 = vmatmul.mubr.f32.gmra.mrb[0].mxu0 %v4033
    %v4450 = vpop.f32.mrb[0].mxu0
    %v4451 = vadd.f32 0.0, %v4450
    %v4452 = vpop.f32.mrb[0].mxu0
    %4453 = vdwg.mxu0
    %s4454 = scalar_lea.vmem [#allocation5], 40
    %4455 = vst.msk [vmem:[%s4454] sm:$0xff] %vm864, %v4451
    %4456 = vst.msk [vmem:[#allocation2] sm:$0xff] %vm134, %v4381
    %4457 = vrot.lane.b32.xlu0 %v3840, 64
    %v4458 = vpop.permute.xlu0 %4457
    %4460 = vst.msk [vmem:[#allocation2] sm:$0xff] %vm136, %v4458
    %v4461 = vld [vmem:[#allocation2] sm:$0xff]
    %v4463 = vsel %vm145, %v4461, 0
    %4465 = vmatprep.subr.mxu0 0.0
    %4466 = vmatpush1.msra.mxu0 %v48
    %4467 = vmatprep.subr.mxu0 0.0
    %4468 = vmatpush1.msra.mxu0 %v49
    %4469 = vmatprep.subr.mxu0 0.0
    %4470 = vmatpush1.msra.mxu0 %v50
    %4471 = vmatprep.subr.mxu0 0.0
    %4472 = vmatpush1.msra.mxu0 %v51
    %4473 = vmatprep.subr.mxu0 0.0
    %4474 = vmatpush1.msra.mxu0 %v52
    %4475 = vmatprep.subr.mxu0 0.0
    %4476 = vmatpush1.msra.mxu0 %v53
    %4477 = vmatprep.subr.mxu0 0.0
    %4478 = vmatpush1.msra.mxu0 %v54
    %4479 = vmatprep.subr.mxu0 0.0
    %4480 = vmatpush1.msra.mxu0 %v55
    %4481 = vmatprep.subr.mxu0 0.0
    %4482 = vmatpush1.msra.mxu0 0.0
    %4483 = vmatprep.subr.mxu0 0.0
    %4484 = vmatpush1.msra.mxu0 0.0
    %4485 = vmatprep.subr.mxu0 0.0
    %4486 = vmatpush1.msra.mxu0 0.0
    %4487 = vmatprep.subr.mxu0 0.0
    %4488 = vmatpush1.msra.mxu0 0.0
    %4489 = vmatprep.subr.mxu0 0.0
    %4490 = vmatpush1.msra.mxu0 0.0
    %4491 = vmatprep.subr.mxu0 0.0
    %4492 = vmatpush1.msra.mxu0 0.0
    %4493 = vmatprep.subr.mxu0 0.0
    %4494 = vmatpush1.msra.mxu0 0.0
    %4495 = vmatprep.subr.mxu0 0.0
    %4496 = vmatpush1.msra.mxu0 0.0
    %4497 = vmatprep.subr.mxu0 0.0
    %4498 = vmatpush1.msra.mxu0 0.0
    %4499 = vmatprep.subr.mxu0 0.0
    %4500 = vmatpush1.msra.mxu0 0.0
    %4501 = vmatprep.subr.mxu0 0.0
    %4502 = vmatpush1.msra.mxu0 0.0
    %4503 = vmatprep.subr.mxu0 0.0
    %4504 = vmatpush1.msra.mxu0 0.0
    %4505 = vmatprep.subr.mxu0 0.0
    %4506 = vmatpush1.msra.mxu0 0.0
    %4507 = vmatprep.subr.mxu0 0.0
    %4508 = vmatpush1.msra.mxu0 0.0
    %4509 = vmatprep.subr.mxu0 0.0
    %4510 = vmatpush1.msra.mxu0 0.0
    %4511 = vmatprep.subr.mxu0 0.0
    %4512 = vmatpush1.msra.mxu0 0.0
    %4513 = vmatprep.subr.mxu0 0.0
    %4514 = vmatpush1.msra.mxu0 0.0
    %4515 = vmatprep.subr.mxu0 0.0
    %4516 = vmatpush1.msra.mxu0 0.0
    %4517 = vmatprep.subr.mxu0 0.0
    %4518 = vmatpush1.msra.mxu0 0.0
    %4519 = vmatprep.subr.mxu0 0.0
    %4520 = vmatpush1.msra.mxu0 0.0
    %4521 = vmatprep.subr.mxu0 0.0
    %4522 = vmatpush1.msra.mxu0 0.0
    %4523 = vmatprep.subr.mxu0 0.0
    %4524 = vmatpush1.msra.mxu0 0.0
    %4525 = vmatprep.subr.mxu0 0.0
    %4526 = vmatpush1.msra.mxu0 0.0
    %4527 = vmatprep.subr.mxu0 0.0
    %4528 = vmatpush1.msra.mxu0 0.0
    %4529 = vmatprep.mubr.f32.mxu0 0.0
    %4530 = vmatmul.mubr.f32.gmra.mrb[0].mxu0 %v4463
    %v4531 = vpop.f32.mrb[0].mxu0
    %v4532 = vadd.f32 %v143, %v4531
    %v4533 = vpop.f32.mrb[0].mxu0
    %4534 = vdwg.mxu0
    %v4535 = vxor.u32 %v4532, 2147483648
    %v4536 = vmul.f32 %v4535, 1.442695
    %v4537 = vpow.pop %v4536
    %v4538 = vadd.f32 %v4537, 1.0
    %v4539 = vrcp.pop %v4538
    %v4540 = vmul.f32 1.0, %v4539
    %v4541 = vtanh.pop %v4532
    %v4542 = vmul.f32 %v4540, %v3834
    %4544 = vrot.lane.b32.xlu0 %v4541, 64
    %v4545 = vpop.permute.xlu0 %4544
    %v4547 = vmul.f32 %v4540, %v4545
    %4549 = vrot.lane.b32.xlu0 %v4547, 32
    %v4550 = vpop.permute.xlu0 %4549
    %v4552 = vadd.f32 %v4542, %v4550
    %v4553 = vtanh.pop %v4552
    %4555 = vrot.lane.b32.xlu0 %v4553, 64
    %v4556 = vpop.permute.xlu0 %4555
    %v4558 = vmul.f32 %v4540, %v4556
    %4560 = vrot.lane.b32.xlu0 %v4558, 32
    %v4561 = vpop.permute.xlu0 %4560
    %4563 = vst.msk [vmem:[#allocation2] sm:$0xff] %vm134, %v4561
    %4564 = vrot.lane.b32.xlu0 %v3947, 64
    %v4565 = vpop.permute.xlu0 %4564
    %4567 = vst.msk [vmem:[#allocation2] sm:$0xff] %vm136, %v4565
    %v4568 = vld [vmem:[#allocation2] sm:$0xff]
    %v4570 = vsel %vm145, %v4568, 0
    %4572 = vmatprep.subr.mxu0 0.0
    %4573 = vmatpush1.msra.mxu0 %v57
    %4574 = vmatprep.subr.mxu0 0.0
    %4575 = vmatpush1.msra.mxu0 %v58
    %4576 = vmatprep.subr.mxu0 0.0
    %4577 = vmatpush1.msra.mxu0 %v59
    %4578 = vmatprep.subr.mxu0 0.0
    %4579 = vmatpush1.msra.mxu0 %v60
    %4580 = vmatprep.subr.mxu0 0.0
    %4581 = vmatpush1.msra.mxu0 %v61
    %4582 = vmatprep.subr.mxu0 0.0
    %4583 = vmatpush1.msra.mxu0 %v62
    %4584 = vmatprep.subr.mxu0 0.0
    %4585 = vmatpush1.msra.mxu0 %v63
    %4586 = vmatprep.subr.mxu0 0.0
    %4587 = vmatpush1.msra.mxu0 %v64
    %4588 = vmatprep.subr.mxu0 0.0
    %4589 = vmatpush1.msra.mxu0 0.0
    %4590 = vmatprep.subr.mxu0 0.0
    %4591 = vmatpush1.msra.mxu0 0.0
    %4592 = vmatprep.subr.mxu0 0.0
    %4593 = vmatpush1.msra.mxu0 0.0
    %4594 = vmatprep.subr.mxu0 0.0
    %4595 = vmatpush1.msra.mxu0 0.0
    %4596 = vmatprep.subr.mxu0 0.0
    %4597 = vmatpush1.msra.mxu0 0.0
    %4598 = vmatprep.subr.mxu0 0.0
    %4599 = vmatpush1.msra.mxu0 0.0
    %4600 = vmatprep.subr.mxu0 0.0
    %4601 = vmatpush1.msra.mxu0 0.0
    %4602 = vmatprep.subr.mxu0 0.0
    %4603 = vmatpush1.msra.mxu0 0.0
    %4604 = vmatprep.subr.mxu0 0.0
    %4605 = vmatpush1.msra.mxu0 0.0
    %4606 = vmatprep.subr.mxu0 0.0
    %4607 = vmatpush1.msra.mxu0 0.0
    %4608 = vmatprep.subr.mxu0 0.0
    %4609 = vmatpush1.msra.mxu0 0.0
    %4610 = vmatprep.subr.mxu0 0.0
    %4611 = vmatpush1.msra.mxu0 0.0
    %4612 = vmatprep.subr.mxu0 0.0
    %4613 = vmatpush1.msra.mxu0 0.0
    %4614 = vmatprep.subr.mxu0 0.0
    %4615 = vmatpush1.msra.mxu0 0.0
    %4616 = vmatprep.subr.mxu0 0.0
    %4617 = vmatpush1.msra.mxu0 0.0
    %4618 = vmatprep.subr.mxu0 0.0
    %4619 = vmatpush1.msra.mxu0 0.0
    %4620 = vmatprep.subr.mxu0 0.0
    %4621 = vmatpush1.msra.mxu0 0.0
    %4622 = vmatprep.subr.mxu0 0.0
    %4623 = vmatpush1.msra.mxu0 0.0
    %4624 = vmatprep.subr.mxu0 0.0
    %4625 = vmatpush1.msra.mxu0 0.0
    %4626 = vmatprep.subr.mxu0 0.0
    %4627 = vmatpush1.msra.mxu0 0.0
    %4628 = vmatprep.subr.mxu0 0.0
    %4629 = vmatpush1.msra.mxu0 0.0
    %4630 = vmatprep.subr.mxu0 0.0
    %4631 = vmatpush1.msra.mxu0 0.0
    %4632 = vmatprep.subr.mxu0 0.0
    %4633 = vmatpush1.msra.mxu0 0.0
    %4634 = vmatprep.subr.mxu0 0.0
    %4635 = vmatpush1.msra.mxu0 0.0
    %4636 = vmatprep.mubr.f32.mxu0 0.0
    %4637 = vmatmul.mubr.f32.gmra.mrb[0].mxu0 %v4570
    %v4638 = vpop.f32.mrb[0].mxu0
    %v4639 = vadd.f32 %v254, %v4638
    %v4640 = vpop.f32.mrb[0].mxu0
    %4641 = vdwg.mxu0
    %v4642 = vxor.u32 %v4639, 2147483648
    %v4643 = vmul.f32 %v4642, 1.442695
    %v4644 = vpow.pop %v4643
    %v4645 = vadd.f32 %v4644, 1.0
    %v4646 = vrcp.pop %v4645
    %v4647 = vmul.f32 1.0, %v4646
    %v4648 = vtanh.pop %v4639
    %v4649 = vmul.f32 %v4647, %v3941
    %4651 = vrot.lane.b32.xlu0 %v4648, 64
    %v4652 = vpop.permute.xlu0 %4651
    %v4654 = vmul.f32 %v4647, %v4652
    %4656 = vrot.lane.b32.xlu0 %v4654, 32
    %v4657 = vpop.permute.xlu0 %4656
    %v4659 = vadd.f32 %v4649, %v4657
    %v4660 = vtanh.pop %v4659
    %4662 = vrot.lane.b32.xlu0 %v4660, 64
    %v4663 = vpop.permute.xlu0 %4662
    %v4665 = vmul.f32 %v4647, %v4663
    %4667 = vrot.lane.b32.xlu0 %v4665, 32
    %v4668 = vpop.permute.xlu0 %4667
    %v4669 = vsel %vm134, %v4668, 0
    %4671 = vmatprep.subr.mxu0 0.0
    %4672 = vmatpush1.msra.mxu0 %v66
    %4673 = vmatprep.subr.mxu0 0.0
    %4674 = vmatpush1.msra.mxu0 %v67
    %4675 = vmatprep.subr.mxu0 0.0
    %4676 = vmatpush1.msra.mxu0 %v68
    %4677 = vmatprep.subr.mxu0 0.0
    %4678 = vmatpush1.msra.mxu0 %v69
    %4679 = vmatprep.subr.mxu0 0.0
    %4680 = vmatpush1.msra.mxu0 0.0
    %4681 = vmatprep.subr.mxu0 0.0
    %4682 = vmatpush1.msra.mxu0 0.0
    %4683 = vmatprep.subr.mxu0 0.0
    %4684 = vmatpush1.msra.mxu0 0.0
    %4685 = vmatprep.subr.mxu0 0.0
    %4686 = vmatpush1.msra.mxu0 0.0
    %4687 = vmatprep.subr.mxu0 0.0
    %4688 = vmatpush1.msra.mxu0 0.0
    %4689 = vmatprep.subr.mxu0 0.0
    %4690 = vmatpush1.msra.mxu0 0.0
    %4691 = vmatprep.subr.mxu0 0.0
    %4692 = vmatpush1.msra.mxu0 0.0
    %4693 = vmatprep.subr.mxu0 0.0
    %4694 = vmatpush1.msra.mxu0 0.0
    %4695 = vmatprep.subr.mxu0 0.0
    %4696 = vmatpush1.msra.mxu0 0.0
    %4697 = vmatprep.subr.mxu0 0.0
    %4698 = vmatpush1.msra.mxu0 0.0
    %4699 = vmatprep.subr.mxu0 0.0
    %4700 = vmatpush1.msra.mxu0 0.0
    %4701 = vmatprep.subr.mxu0 0.0
    %4702 = vmatpush1.msra.mxu0 0.0
    %4703 = vmatprep.subr.mxu0 0.0
    %4704 = vmatpush1.msra.mxu0 0.0
    %4705 = vmatprep.subr.mxu0 0.0
    %4706 = vmatpush1.msra.mxu0 0.0
    %4707 = vmatprep.subr.mxu0 0.0
    %4708 = vmatpush1.msra.mxu0 0.0
    %4709 = vmatprep.subr.mxu0 0.0
    %4710 = vmatpush1.msra.mxu0 0.0
    %4711 = vmatprep.subr.mxu0 0.0
    %4712 = vmatpush1.msra.mxu0 0.0
    %4713 = vmatprep.subr.mxu0 0.0
    %4714 = vmatpush1.msra.mxu0 0.0
    %4715 = vmatprep.subr.mxu0 0.0
    %4716 = vmatpush1.msra.mxu0 0.0
    %4717 = vmatprep.subr.mxu0 0.0
    %4718 = vmatpush1.msra.mxu0 0.0
    %4719 = vmatprep.subr.mxu0 0.0
    %4720 = vmatpush1.msra.mxu0 0.0
    %4721 = vmatprep.subr.mxu0 0.0
    %4722 = vmatpush1.msra.mxu0 0.0
    %4723 = vmatprep.subr.mxu0 0.0
    %4724 = vmatpush1.msra.mxu0 0.0
    %4725 = vmatprep.subr.mxu0 0.0
    %4726 = vmatpush1.msra.mxu0 0.0
    %4727 = vmatprep.subr.mxu0 0.0
    %4728 = vmatpush1.msra.mxu0 0.0
    %4729 = vmatprep.subr.mxu0 0.0
    %4730 = vmatpush1.msra.mxu0 0.0
    %4731 = vmatprep.subr.mxu0 0.0
    %4732 = vmatpush1.msra.mxu0 0.0
    %4733 = vmatprep.subr.mxu0 0.0
    %4734 = vmatpush1.msra.mxu0 0.0
    %4735 = vmatprep.mubr.f32.mxu0 0.0
    %4736 = vmatmul.mubr.f32.gmra.mrb[0].mxu0 %v4669
    %v4737 = vpop.f32.mrb[0].mxu0
    %v4738 = vadd.f32 %v123, %v4737
    %v4739 = vpop.f32.mrb[0].mxu0
    %4740 = vdwg.mxu0
    %4741 = vmax.xlane.f32.xlu0 %v4738
    %v4742 = vpop.xlane.xlu0 %4741
    %v4743 = vsub.f32 %v4738, %v4742
    %v4744 = vmul.f32 %v4743, 1.442695
    %v4745 = vpow.pop %v4744
    %v4746 = vmul.f32 %v4745, %v124
    %4747 = vadd.xlane.f32.xlu0 %v4746
    %v4748 = vpop.xlane.xlu0 %4747
    %v4749 = vrcp.pop %v4748
    %v4750 = vmul.f32 1.0, %v4749
    %v4751 = vmul.f32 %v4746, %v4750
    %4752 = vmatprep.subr.mxu0 0.0
    %4753 = vmatpush1.msra.mxu0 %v70
    %4754 = vmatprep.subr.mxu0 0.0
    %4755 = vmatpush1.msra.mxu0 %v71
    %4756 = vmatprep.subr.mxu0 0.0
    %4757 = vmatpush1.msra.mxu0 %v72
    %4758 = vmatprep.subr.mxu0 0.0
    %4759 = vmatpush1.msra.mxu0 %v73
    %4760 = vmatprep.subr.mxu0 0.0
    %4761 = vmatpush1.msra.mxu0 %v74
    %4762 = vmatprep.subr.mxu0 0.0
    %4763 = vmatpush1.msra.mxu0 %v75
    %4764 = vmatprep.subr.mxu0 0.0
    %4765 = vmatpush1.msra.mxu0 %v76
    %4766 = vmatprep.subr.mxu0 0.0
    %4767 = vmatpush1.msra.mxu0 %v77
    %4768 = vmatprep.subr.mxu0 0.0
    %4769 = vmatpush1.msra.mxu0 %v78
    %4770 = vmatprep.subr.mxu0 0.0
    %4771 = vmatpush1.msra.mxu0 %v79
    %4772 = vmatprep.subr.mxu0 0.0
    %4773 = vmatpush1.msra.mxu0 %v80
    %4774 = vmatprep.subr.mxu0 0.0
    %4775 = vmatpush1.msra.mxu0 %v81
    %4776 = vmatprep.subr.mxu0 0.0
    %4777 = vmatpush1.msra.mxu0 %v82
    %4778 = vmatprep.subr.mxu0 0.0
    %4779 = vmatpush1.msra.mxu0 %v83
    %4780 = vmatprep.subr.mxu0 0.0
    %4781 = vmatpush1.msra.mxu0 %v84
    %4782 = vmatprep.subr.mxu0 0.0
    %4783 = vmatpush1.msra.mxu0 %v85
    %4784 = vmatprep.subr.mxu0 0.0
    %4785 = vmatpush1.msra.mxu0 0.0
    %4786 = vmatprep.subr.mxu0 0.0
    %4787 = vmatpush1.msra.mxu0 0.0
    %4788 = vmatprep.subr.mxu0 0.0
    %4789 = vmatpush1.msra.mxu0 0.0
    %4790 = vmatprep.subr.mxu0 0.0
    %4791 = vmatpush1.msra.mxu0 0.0
    %4792 = vmatprep.subr.mxu0 0.0
    %4793 = vmatpush1.msra.mxu0 0.0
    %4794 = vmatprep.subr.mxu0 0.0
    %4795 = vmatpush1.msra.mxu0 0.0
    %4796 = vmatprep.subr.mxu0 0.0
    %4797 = vmatpush1.msra.mxu0 0.0
    %4798 = vmatprep.subr.mxu0 0.0
    %4799 = vmatpush1.msra.mxu0 0.0
    %4800 = vmatprep.subr.mxu0 0.0
    %4801 = vmatpush1.msra.mxu0 0.0
    %4802 = vmatprep.subr.mxu0 0.0
    %4803 = vmatpush1.msra.mxu0 0.0
    %4804 = vmatprep.subr.mxu0 0.0
    %4805 = vmatpush1.msra.mxu0 0.0
    %4806 = vmatprep.subr.mxu0 0.0
    %4807 = vmatpush1.msra.mxu0 0.0
    %4808 = vmatprep.subr.mxu0 0.0
    %4809 = vmatpush1.msra.mxu0 0.0
    %4810 = vmatprep.subr.mxu0 0.0
    %4811 = vmatpush1.msra.mxu0 0.0
    %4812 = vmatprep.subr.mxu0 0.0
    %4813 = vmatpush1.msra.mxu0 0.0
    %4814 = vmatprep.subr.mxu0 0.0
    %4815 = vmatpush1.msra.mxu0 0.0
    %4816 = vmatprep.mubr.f32.mxu0 0.0
    %4817 = vmatmul.mubr.f32.gmra.mrb[0].mxu0 %v4751
    %v4818 = vpop.f32.mrb[0].mxu0
    %v4819 = vadd.f32 0.0, %v4818
    %v4820 = vpop.f32.mrb[0].mxu0
    %4821 = vdwg.mxu0
    %4822 = vmatprep.subr.mxu0 0.0
    %4823 = vmatpush1.msra.mxu0 %v86
    %4824 = vmatprep.subr.mxu0 0.0
    %4825 = vmatpush1.msra.mxu0 %v87
    %4826 = vmatprep.subr.mxu0 0.0
    %4827 = vmatpush1.msra.mxu0 %v88
    %4828 = vmatprep.subr.mxu0 0.0
    %4829 = vmatpush1.msra.mxu0 %v89
    %4830 = vmatprep.subr.mxu0 0.0
    %4831 = vmatpush1.msra.mxu0 0.0
    %4832 = vmatprep.subr.mxu0 0.0
    %4833 = vmatpush1.msra.mxu0 0.0
    %4834 = vmatprep.subr.mxu0 0.0
    %4835 = vmatpush1.msra.mxu0 0.0
    %4836 = vmatprep.subr.mxu0 0.0
    %4837 = vmatpush1.msra.mxu0 0.0
    %4838 = vmatprep.subr.mxu0 0.0
    %4839 = vmatpush1.msra.mxu0 0.0
    %4840 = vmatprep.subr.mxu0 0.0
    %4841 = vmatpush1.msra.mxu0 0.0
    %4842 = vmatprep.subr.mxu0 0.0
    %4843 = vmatpush1.msra.mxu0 0.0
    %4844 = vmatprep.subr.mxu0 0.0
    %4845 = vmatpush1.msra.mxu0 0.0
    %4846 = vmatprep.subr.mxu0 0.0
    %4847 = vmatpush1.msra.mxu0 0.0
    %4848 = vmatprep.subr.mxu0 0.0
    %4849 = vmatpush1.msra.mxu0 0.0
    %4850 = vmatprep.subr.mxu0 0.0
    %4851 = vmatpush1.msra.mxu0 0.0
    %4852 = vmatprep.subr.mxu0 0.0
    %4853 = vmatpush1.msra.mxu0 0.0
    %4854 = vmatprep.subr.mxu0 0.0
    %4855 = vmatpush1.msra.mxu0 0.0
    %4856 = vmatprep.subr.mxu0 0.0
    %4857 = vmatpush1.msra.mxu0 0.0
    %4858 = vmatprep.subr.mxu0 0.0
    %4859 = vmatpush1.msra.mxu0 0.0
    %4860 = vmatprep.subr.mxu0 0.0
    %4861 = vmatpush1.msra.mxu0 0.0
    %4862 = vmatprep.subr.mxu0 0.0
    %4863 = vmatpush1.msra.mxu0 0.0
    %4864 = vmatprep.subr.mxu0 0.0
    %4865 = vmatpush1.msra.mxu0 0.0
    %4866 = vmatprep.subr.mxu0 0.0
    %4867 = vmatpush1.msra.mxu0 0.0
    %4868 = vmatprep.subr.mxu0 0.0
    %4869 = vmatpush1.msra.mxu0 0.0
    %4870 = vmatprep.subr.mxu0 0.0
    %4871 = vmatpush1.msra.mxu0 0.0
    %4872 = vmatprep.subr.mxu0 0.0
    %4873 = vmatpush1.msra.mxu0 0.0
    %4874 = vmatprep.subr.mxu0 0.0
    %4875 = vmatpush1.msra.mxu0 0.0
    %4876 = vmatprep.subr.mxu0 0.0
    %4877 = vmatpush1.msra.mxu0 0.0
    %4878 = vmatprep.subr.mxu0 0.0
    %4879 = vmatpush1.msra.mxu0 0.0
    %4880 = vmatprep.subr.mxu0 0.0
    %4881 = vmatpush1.msra.mxu0 0.0
    %4882 = vmatprep.subr.mxu0 0.0
    %4883 = vmatpush1.msra.mxu0 0.0
    %4884 = vmatprep.subr.mxu0 0.0
    %4885 = vmatpush1.msra.mxu0 0.0
    %4886 = vmatprep.mubr.f32.mxu0 0.0
    %4887 = vmatmul.mubr.f32.gmra.mrb[0].mxu0 %v4669
    %v4888 = vpop.f32.mrb[0].mxu0
    %v4889 = vadd.f32 %v4819, %v4888
    %v4890 = vpop.f32.mrb[0].mxu0
    %4891 = vdwg.mxu0
    %v4892 = vadd.f32 %v4889, %v583
    %4893 = vmatprep.subr.mxu0 0.0
    %4894 = vmatpush1.msra.mxu0 %v91
    %4895 = vmatprep.subr.mxu0 0.0
    %4896 = vmatpush1.msra.mxu0 %v92
    %4897 = vmatprep.subr.mxu0 0.0
    %4898 = vmatpush1.msra.mxu0 %v93
    %4899 = vmatprep.subr.mxu0 0.0
    %4900 = vmatpush1.msra.mxu0 %v94
    %4901 = vmatprep.subr.mxu0 0.0
    %4902 = vmatpush1.msra.mxu0 %v95
    %4903 = vmatprep.subr.mxu0 0.0
    %4904 = vmatpush1.msra.mxu0 %v96
    %4905 = vmatprep.subr.mxu0 0.0
    %4906 = vmatpush1.msra.mxu0 %v97
    %4907 = vmatprep.subr.mxu0 0.0
    %4908 = vmatpush1.msra.mxu0 %v98
    %4909 = vmatprep.subr.mxu0 0.0
    %4910 = vmatpush1.msra.mxu0 %v99
    %4911 = vmatprep.subr.mxu0 0.0
    %4912 = vmatpush1.msra.mxu0 %v100
    %4913 = vmatprep.subr.mxu0 0.0
    %4914 = vmatpush1.msra.mxu0 %v101
    %4915 = vmatprep.subr.mxu0 0.0
    %4916 = vmatpush1.msra.mxu0 %v102
    %4917 = vmatprep.subr.mxu0 0.0
    %4918 = vmatpush1.msra.mxu0 %v103
    %4919 = vmatprep.subr.mxu0 0.0
    %4920 = vmatpush1.msra.mxu0 %v104
    %4921 = vmatprep.subr.mxu0 0.0
    %4922 = vmatpush1.msra.mxu0 %v105
    %4923 = vmatprep.subr.mxu0 0.0
    %4924 = vmatpush1.msra.mxu0 %v106
    %4925 = vmatprep.subr.mxu0 0.0
    %4926 = vmatpush1.msra.mxu0 0.0
    %4927 = vmatprep.subr.mxu0 0.0
    %4928 = vmatpush1.msra.mxu0 0.0
    %4929 = vmatprep.subr.mxu0 0.0
    %4930 = vmatpush1.msra.mxu0 0.0
    %4931 = vmatprep.subr.mxu0 0.0
    %4932 = vmatpush1.msra.mxu0 0.0
    %4933 = vmatprep.subr.mxu0 0.0
    %4934 = vmatpush1.msra.mxu0 0.0
    %4935 = vmatprep.subr.mxu0 0.0
    %4936 = vmatpush1.msra.mxu0 0.0
    %4937 = vmatprep.subr.mxu0 0.0
    %4938 = vmatpush1.msra.mxu0 0.0
    %4939 = vmatprep.subr.mxu0 0.0
    %4940 = vmatpush1.msra.mxu0 0.0
    %4941 = vmatprep.subr.mxu0 0.0
    %4942 = vmatpush1.msra.mxu0 0.0
    %4943 = vmatprep.subr.mxu0 0.0
    %4944 = vmatpush1.msra.mxu0 0.0
    %4945 = vmatprep.subr.mxu0 0.0
    %4946 = vmatpush1.msra.mxu0 0.0
    %4947 = vmatprep.subr.mxu0 0.0
    %4948 = vmatpush1.msra.mxu0 0.0
    %4949 = vmatprep.subr.mxu0 0.0
    %4950 = vmatpush1.msra.mxu0 0.0
    %4951 = vmatprep.subr.mxu0 0.0
    %4952 = vmatpush1.msra.mxu0 0.0
    %4953 = vmatprep.subr.mxu0 0.0
    %4954 = vmatpush1.msra.mxu0 0.0
    %4955 = vmatprep.subr.mxu0 0.0
    %4956 = vmatpush1.msra.mxu0 0.0
    %4957 = vmatprep.mubr.f32.mxu0 0.0
    %4958 = vmatmul.mubr.f32.gmra.mrb[0].mxu0 %v4751
    %v4959 = vpop.f32.mrb[0].mxu0
    %v4960 = vadd.f32 0.0, %v4959
    %v4961 = vpop.f32.mrb[0].mxu0
    %4962 = vdwg.mxu0
    %v4963 = vmul.f32 %v4960, %v4960
    %v4964 = vsel %vm134, %v4963, 0.0
    %4965 = vadd.xlane.f32.xlu0 %v4964
    %v4966 = vpop.xlane.xlu0 %4965
    %v4967 = vrsqrt.pop %v4966
    %v4968 = vmul.f32 %v4966, %v4967
    %vm4969 = vcmp.eq.f32.partialorder %v4966, inf
    %v4970 = vsel %vm4969, %v4966, %v4968
    %vm4971 = vcmp.eq.f32.partialorder %v4966, 0.0
    %v4972 = vand.u32 %v4966, 2147483648
    %v4973 = vsel %vm4971, %v4972, %v4970
    %v4974 = vmul.f32 %v4892, %v4892
    %v4975 = vsel %vm134, %v4974, 0.0
    %4976 = vadd.xlane.f32.xlu0 %v4975
    %v4977 = vpop.xlane.xlu0 %4976
    %v4978 = vrsqrt.pop %v4977
    %v4979 = vmul.f32 %v4977, %v4978
    %vm4980 = vcmp.eq.f32.partialorder %v4977, inf
    %v4981 = vsel %vm4980, %v4977, %v4979
    %vm4982 = vcmp.eq.f32.partialorder %v4977, 0.0
    %v4983 = vand.u32 %v4977, 2147483648
    %v4984 = vsel %vm4982, %v4983, %v4981
    %v4985 = vmul.f32 %v4973, 0.2
    %v4986 = vmin.f32 %v4984, %v4985
    %v4987 = vmax.f32 %v4984, 1e-12
    %v4988 = vrcp.pop %v4987
    %v4989 = vmul.f32 %v4892, %v4988
    %v4990 = vmul.f32 %v4989, %v4986
    %v4991 = vadd.f32 %v4960, %v4990
    %v4993 = vsel %vm134, %v4991, 0
    %4995 = vmatprep.subr.mxu0 0.0
    %4996 = vmatpush1.msra.mxu0 %v125
    %4997 = vmatprep.subr.mxu0 0.0
    %4998 = vmatpush1.msra.mxu0 %v126
    %4999 = vmatprep.subr.mxu0 0.0
    %5000 = vmatpush1.msra.mxu0 %v127
    %5001 = vmatprep.subr.mxu0 0.0
    %5002 = vmatpush1.msra.mxu0 %v128
    %5003 = vmatprep.subr.mxu0 0.0
    %5004 = vmatpush1.msra.mxu0 0.0
    %5005 = vmatprep.subr.mxu0 0.0
    %5006 = vmatpush1.msra.mxu0 0.0
    %5007 = vmatprep.subr.mxu0 0.0
    %5008 = vmatpush1.msra.mxu0 0.0
    %5009 = vmatprep.subr.mxu0 0.0
    %5010 = vmatpush1.msra.mxu0 0.0
    %5011 = vmatprep.subr.mxu0 0.0
    %5012 = vmatpush1.msra.mxu0 0.0
    %5013 = vmatprep.subr.mxu0 0.0
    %5014 = vmatpush1.msra.mxu0 0.0
    %5015 = vmatprep.subr.mxu0 0.0
    %5016 = vmatpush1.msra.mxu0 0.0
    %5017 = vmatprep.subr.mxu0 0.0
    %5018 = vmatpush1.msra.mxu0 0.0
    %5019 = vmatprep.subr.mxu0 0.0
    %5020 = vmatpush1.msra.mxu0 0.0
    %5021 = vmatprep.subr.mxu0 0.0
    %5022 = vmatpush1.msra.mxu0 0.0
    %5023 = vmatprep.subr.mxu0 0.0
    %5024 = vmatpush1.msra.mxu0 0.0
    %5025 = vmatprep.subr.mxu0 0.0
    %5026 = vmatpush1.msra.mxu0 0.0
    %5027 = vmatprep.subr.mxu0 0.0
    %5028 = vmatpush1.msra.mxu0 0.0
    %5029 = vmatprep.subr.mxu0 0.0
    %5030 = vmatpush1.msra.mxu0 0.0
    %5031 = vmatprep.subr.mxu0 0.0
    %5032 = vmatpush1.msra.mxu0 0.0
    %5033 = vmatprep.subr.mxu0 0.0
    %5034 = vmatpush1.msra.mxu0 0.0
    %5035 = vmatprep.subr.mxu0 0.0
    %5036 = vmatpush1.msra.mxu0 0.0
    %5037 = vmatprep.subr.mxu0 0.0
    %5038 = vmatpush1.msra.mxu0 0.0
    %5039 = vmatprep.subr.mxu0 0.0
    %5040 = vmatpush1.msra.mxu0 0.0
    %5041 = vmatprep.subr.mxu0 0.0
    %5042 = vmatpush1.msra.mxu0 0.0
    %5043 = vmatprep.subr.mxu0 0.0
    %5044 = vmatpush1.msra.mxu0 0.0
    %5045 = vmatprep.subr.mxu0 0.0
    %5046 = vmatpush1.msra.mxu0 0.0
    %5047 = vmatprep.subr.mxu0 0.0
    %5048 = vmatpush1.msra.mxu0 0.0
    %5049 = vmatprep.subr.mxu0 0.0
    %5050 = vmatpush1.msra.mxu0 0.0
    %5051 = vmatprep.subr.mxu0 0.0
    %5052 = vmatpush1.msra.mxu0 0.0
    %5053 = vmatprep.subr.mxu0 0.0
    %5054 = vmatpush1.msra.mxu0 0.0
    %5055 = vmatprep.subr.mxu0 0.0
    %5056 = vmatpush1.msra.mxu0 0.0
    %5057 = vmatprep.subr.mxu0 0.0
    %5058 = vmatpush1.msra.mxu0 0.0
    %5059 = vmatprep.mubr.f32.mxu0 0.0
    %5060 = vmatmul.mubr.f32.gmra.mrb[0].mxu0 %v4993
    %v5061 = vpop.f32.mrb[0].mxu0
    %v5062 = vadd.f32 0.0, %v5061
    %v5063 = vpop.f32.mrb[0].mxu0
    %5064 = vdwg.mxu0
    %v5065 = vsel %vm134, %v5062, -inf
    %5066 = vmax.xlane.f32.xlu0 %v5065
    %v5067 = vpop.xlane.xlu0 %5066
    %v5068 = vsub.f32 %v5062, %v5067
    %v5069 = vmul.f32 %v5068, 1.442695
    %v5070 = vpow.pop %v5069
    %v5071 = vsel %vm134, %v5070, 0.0
    %5072 = vadd.xlane.f32.xlu0 %v5071
    %v5073 = vpop.xlane.xlu0 %5072
    %v5074 = vlog2.pop %v5073
    %v5075 = vmul.f32 %v5074, 0.6931472
    %v5076 = vsub.f32 %v5068, %v5075
    %v5077 = vsel %vm134, %v5076, -inf
    %5078 = vmax.xlane.f32.xlu0 %v5077
    %v5079 = vpop.xlane.xlu0 %5078
    %vm5080 = vcmp.eq.f32.partialorder %v5076, %v5079
    %v5081 = vsel %vm5080, %v130, 32
    %v5082 = vsel %vm134, %v5081, 2147483647
    %v5083 = vand.u32 %v5082, 65535
    %v5084 = vshra.s32 %v5082, 16
    %v5085 = vcvt.s32.f32 %v5083
    %v5086 = vcvt.s32.f32 %v5084
    %5087 = vmin.xlane.f32.xlu0 %v5086
    %v5088 = vpop.xlane.xlu0 %5087
    %vm5089 = vcmp.eq.f32.partialorder %v5086, %v5088
    %v5090 = vsel %vm5089, %v5085, inf
    %5091 = vmin.xlane.f32.xlu0 %v5090
    %v5092 = vpop.xlane.xlu0 %5091
    %v5093 = vcvt.f32.s32 %v5092
    %v5094 = vcvt.f32.s32 %v5088
    %v5095 = vshll.u32 %v5094, 16
    %v5096 = vadd.s32 %v5095, %v5093
    %vm5097 = vcmp.eq.s32.totalorder %v130, %v5096
    %v5098 = vsel %vm5097, 1, 0
    %v5099 = vcvt.s32.f32 %v5098
    %s5100 = scalar_lea.vmem [#allocation3], 48
    %5101 = vst.msk [vmem:[%s5100] sm:$0xff] %vm134, %v5076
    %5102 = vmatprep.subr.mxu0 0.0
    %5103 = vmatpush1.msra.mxu0 %v107
    %5104 = vmatprep.subr.mxu0 0.0
    %5105 = vmatpush1.msra.mxu0 %v108
    %5106 = vmatprep.subr.mxu0 0.0
    %5107 = vmatpush1.msra.mxu0 %v109
    %5108 = vmatprep.subr.mxu0 0.0
    %5109 = vmatpush1.msra.mxu0 %v110
    %5110 = vmatprep.subr.mxu0 0.0
    %5111 = vmatpush1.msra.mxu0 %v111
    %5112 = vmatprep.subr.mxu0 0.0
    %5113 = vmatpush1.msra.mxu0 %v112
    %5114 = vmatprep.subr.mxu0 0.0
    %5115 = vmatpush1.msra.mxu0 %v113
    %5116 = vmatprep.subr.mxu0 0.0
    %5117 = vmatpush1.msra.mxu0 %v114
    %5118 = vmatprep.subr.mxu0 0.0
    %5119 = vmatpush1.msra.mxu0 %v115
    %5120 = vmatprep.subr.mxu0 0.0
    %5121 = vmatpush1.msra.mxu0 %v116
    %5122 = vmatprep.subr.mxu0 0.0
    %5123 = vmatpush1.msra.mxu0 %v117
    %5124 = vmatprep.subr.mxu0 0.0
    %5125 = vmatpush1.msra.mxu0 %v118
    %5126 = vmatprep.subr.mxu0 0.0
    %5127 = vmatpush1.msra.mxu0 %v119
    %5128 = vmatprep.subr.mxu0 0.0
    %5129 = vmatpush1.msra.mxu0 %v120
    %5130 = vmatprep.subr.mxu0 0.0
    %5131 = vmatpush1.msra.mxu0 %v121
    %5132 = vmatprep.subr.mxu0 0.0
    %5133 = vmatpush1.msra.mxu0 %v122
    %5134 = vmatprep.subr.mxu0 0.0
    %5135 = vmatpush1.msra.mxu0 0.0
    %5136 = vmatprep.subr.mxu0 0.0
    %5137 = vmatpush1.msra.mxu0 0.0
    %5138 = vmatprep.subr.mxu0 0.0
    %5139 = vmatpush1.msra.mxu0 0.0
    %5140 = vmatprep.subr.mxu0 0.0
    %5141 = vmatpush1.msra.mxu0 0.0
    %5142 = vmatprep.subr.mxu0 0.0
    %5143 = vmatpush1.msra.mxu0 0.0
    %5144 = vmatprep.subr.mxu0 0.0
    %5145 = vmatpush1.msra.mxu0 0.0
    %5146 = vmatprep.subr.mxu0 0.0
    %5147 = vmatpush1.msra.mxu0 0.0
    %5148 = vmatprep.subr.mxu0 0.0
    %5149 = vmatpush1.msra.mxu0 0.0
    %5150 = vmatprep.subr.mxu0 0.0
    %5151 = vmatpush1.msra.mxu0 0.0
    %5152 = vmatprep.subr.mxu0 0.0
    %5153 = vmatpush1.msra.mxu0 0.0
    %5154 = vmatprep.subr.mxu0 0.0
    %5155 = vmatpush1.msra.mxu0 0.0
    %5156 = vmatprep.subr.mxu0 0.0
    %5157 = vmatpush1.msra.mxu0 0.0
    %5158 = vmatprep.subr.mxu0 0.0
    %5159 = vmatpush1.msra.mxu0 0.0
    %5160 = vmatprep.subr.mxu0 0.0
    %5161 = vmatpush1.msra.mxu0 0.0
    %5162 = vmatprep.subr.mxu0 0.0
    %5163 = vmatpush1.msra.mxu0 0.0
    %5164 = vmatprep.subr.mxu0 0.0
    %5165 = vmatpush1.msra.mxu0 0.0
    %5166 = vmatprep.mubr.f32.mxu0 0.0
    %5167 = vmatmul.mubr.f32.gmra.mrb[0].mxu0 %v4751
    %v5168 = vpop.f32.mrb[0].mxu0
    %v5169 = vadd.f32 0.0, %v5168
    %v5170 = vpop.f32.mrb[0].mxu0
    %5171 = vdwg.mxu0
    %s5172 = scalar_lea.vmem [#allocation5], 48
    %5173 = vst.msk [vmem:[%s5172] sm:$0xff] %vm864, %v5169
    %5174 = vst.msk [vmem:[#allocation2] sm:$0xff] %vm134, %v5099
    %5175 = vrot.lane.b32.xlu0 %v4558, 64
    %v5176 = vpop.permute.xlu0 %5175
    %5178 = vst.msk [vmem:[#allocation2] sm:$0xff] %vm136, %v5176
    %v5179 = vld [vmem:[#allocation2] sm:$0xff]
    %v5181 = vsel %vm145, %v5179, 0
    %5183 = vmatprep.subr.mxu0 0.0
    %5184 = vmatpush1.msra.mxu0 %v48
    %5185 = vmatprep.subr.mxu0 0.0
    %5186 = vmatpush1.msra.mxu0 %v49
    %5187 = vmatprep.subr.mxu0 0.0
    %5188 = vmatpush1.msra.mxu0 %v50
    %5189 = vmatprep.subr.mxu0 0.0
    %5190 = vmatpush1.msra.mxu0 %v51
    %5191 = vmatprep.subr.mxu0 0.0
    %5192 = vmatpush1.msra.mxu0 %v52
    %5193 = vmatprep.subr.mxu0 0.0
    %5194 = vmatpush1.msra.mxu0 %v53
    %5195 = vmatprep.subr.mxu0 0.0
    %5196 = vmatpush1.msra.mxu0 %v54
    %5197 = vmatprep.subr.mxu0 0.0
    %5198 = vmatpush1.msra.mxu0 %v55
    %5199 = vmatprep.subr.mxu0 0.0
    %5200 = vmatpush1.msra.mxu0 0.0
    %5201 = vmatprep.subr.mxu0 0.0
    %5202 = vmatpush1.msra.mxu0 0.0
    %5203 = vmatprep.subr.mxu0 0.0
    %5204 = vmatpush1.msra.mxu0 0.0
    %5205 = vmatprep.subr.mxu0 0.0
    %5206 = vmatpush1.msra.mxu0 0.0
    %5207 = vmatprep.subr.mxu0 0.0
    %5208 = vmatpush1.msra.mxu0 0.0
    %5209 = vmatprep.subr.mxu0 0.0
    %5210 = vmatpush1.msra.mxu0 0.0
    %5211 = vmatprep.subr.mxu0 0.0
    %5212 = vmatpush1.msra.mxu0 0.0
    %5213 = vmatprep.subr.mxu0 0.0
    %5214 = vmatpush1.msra.mxu0 0.0
    %5215 = vmatprep.subr.mxu0 0.0
    %5216 = vmatpush1.msra.mxu0 0.0
    %5217 = vmatprep.subr.mxu0 0.0
    %5218 = vmatpush1.msra.mxu0 0.0
    %5219 = vmatprep.subr.mxu0 0.0
    %5220 = vmatpush1.msra.mxu0 0.0
    %5221 = vmatprep.subr.mxu0 0.0
    %5222 = vmatpush1.msra.mxu0 0.0
    %5223 = vmatprep.subr.mxu0 0.0
    %5224 = vmatpush1.msra.mxu0 0.0
    %5225 = vmatprep.subr.mxu0 0.0
    %5226 = vmatpush1.msra.mxu0 0.0
    %5227 = vmatprep.subr.mxu0 0.0
    %5228 = vmatpush1.msra.mxu0 0.0
    %5229 = vmatprep.subr.mxu0 0.0
    %5230 = vmatpush1.msra.mxu0 0.0
    %5231 = vmatprep.subr.mxu0 0.0
    %5232 = vmatpush1.msra.mxu0 0.0
    %5233 = vmatprep.subr.mxu0 0.0
    %5234 = vmatpush1.msra.mxu0 0.0
    %5235 = vmatprep.subr.mxu0 0.0
    %5236 = vmatpush1.msra.mxu0 0.0
    %5237 = vmatprep.subr.mxu0 0.0
    %5238 = vmatpush1.msra.mxu0 0.0
    %5239 = vmatprep.subr.mxu0 0.0
    %5240 = vmatpush1.msra.mxu0 0.0
    %5241 = vmatprep.subr.mxu0 0.0
    %5242 = vmatpush1.msra.mxu0 0.0
    %5243 = vmatprep.subr.mxu0 0.0
    %5244 = vmatpush1.msra.mxu0 0.0
    %5245 = vmatprep.subr.mxu0 0.0
    %5246 = vmatpush1.msra.mxu0 0.0
    %5247 = vmatprep.mubr.f32.mxu0 0.0
    %5248 = vmatmul.mubr.f32.gmra.mrb[0].mxu0 %v5181
    %v5249 = vpop.f32.mrb[0].mxu0
    %v5250 = vadd.f32 %v143, %v5249
    %v5251 = vpop.f32.mrb[0].mxu0
    %5252 = vdwg.mxu0
    %v5253 = vxor.u32 %v5250, 2147483648
    %v5254 = vmul.f32 %v5253, 1.442695
    %v5255 = vpow.pop %v5254
    %v5256 = vadd.f32 %v5255, 1.0
    %v5257 = vrcp.pop %v5256
    %v5258 = vmul.f32 1.0, %v5257
    %v5259 = vtanh.pop %v5250
    %v5260 = vmul.f32 %v5258, %v4552
    %5262 = vrot.lane.b32.xlu0 %v5259, 64
    %v5263 = vpop.permute.xlu0 %5262
    %v5265 = vmul.f32 %v5258, %v5263
    %5267 = vrot.lane.b32.xlu0 %v5265, 32
    %v5268 = vpop.permute.xlu0 %5267
    %v5270 = vadd.f32 %v5260, %v5268
    %v5271 = vtanh.pop %v5270
    %5273 = vrot.lane.b32.xlu0 %v5271, 64
    %v5274 = vpop.permute.xlu0 %5273
    %v5276 = vmul.f32 %v5258, %v5274
    %5278 = vrot.lane.b32.xlu0 %v5276, 32
    %v5279 = vpop.permute.xlu0 %5278
    %5281 = vst.msk [vmem:[#allocation2] sm:$0xff] %vm134, %v5279
    %5282 = vrot.lane.b32.xlu0 %v4665, 64
    %v5283 = vpop.permute.xlu0 %5282
    %5285 = vst.msk [vmem:[#allocation2] sm:$0xff] %vm136, %v5283
    %v5286 = vld [vmem:[#allocation2] sm:$0xff]
    %v5288 = vsel %vm145, %v5286, 0
    %5290 = vmatprep.subr.mxu0 0.0
    %5291 = vmatpush1.msra.mxu0 %v57
    %5292 = vmatprep.subr.mxu0 0.0
    %5293 = vmatpush1.msra.mxu0 %v58
    %5294 = vmatprep.subr.mxu0 0.0
    %5295 = vmatpush1.msra.mxu0 %v59
    %5296 = vmatprep.subr.mxu0 0.0
    %5297 = vmatpush1.msra.mxu0 %v60
    %5298 = vmatprep.subr.mxu0 0.0
    %5299 = vmatpush1.msra.mxu0 %v61
    %5300 = vmatprep.subr.mxu0 0.0
    %5301 = vmatpush1.msra.mxu0 %v62
    %5302 = vmatprep.subr.mxu0 0.0
    %5303 = vmatpush1.msra.mxu0 %v63
    %5304 = vmatprep.subr.mxu0 0.0
    %5305 = vmatpush1.msra.mxu0 %v64
    %5306 = vmatprep.subr.mxu0 0.0
    %5307 = vmatpush1.msra.mxu0 0.0
    %5308 = vmatprep.subr.mxu0 0.0
    %5309 = vmatpush1.msra.mxu0 0.0
    %5310 = vmatprep.subr.mxu0 0.0
    %5311 = vmatpush1.msra.mxu0 0.0
    %5312 = vmatprep.subr.mxu0 0.0
    %5313 = vmatpush1.msra.mxu0 0.0
    %5314 = vmatprep.subr.mxu0 0.0
    %5315 = vmatpush1.msra.mxu0 0.0
    %5316 = vmatprep.subr.mxu0 0.0
    %5317 = vmatpush1.msra.mxu0 0.0
    %5318 = vmatprep.subr.mxu0 0.0
    %5319 = vmatpush1.msra.mxu0 0.0
    %5320 = vmatprep.subr.mxu0 0.0
    %5321 = vmatpush1.msra.mxu0 0.0
    %5322 = vmatprep.subr.mxu0 0.0
    %5323 = vmatpush1.msra.mxu0 0.0
    %5324 = vmatprep.subr.mxu0 0.0
    %5325 = vmatpush1.msra.mxu0 0.0
    %5326 = vmatprep.subr.mxu0 0.0
    %5327 = vmatpush1.msra.mxu0 0.0
    %5328 = vmatprep.subr.mxu0 0.0
    %5329 = vmatpush1.msra.mxu0 0.0
    %5330 = vmatprep.subr.mxu0 0.0
    %5331 = vmatpush1.msra.mxu0 0.0
    %5332 = vmatprep.subr.mxu0 0.0
    %5333 = vmatpush1.msra.mxu0 0.0
    %5334 = vmatprep.subr.mxu0 0.0
    %5335 = vmatpush1.msra.mxu0 0.0
    %5336 = vmatprep.subr.mxu0 0.0
    %5337 = vmatpush1.msra.mxu0 0.0
    %5338 = vmatprep.subr.mxu0 0.0
    %5339 = vmatpush1.msra.mxu0 0.0
    %5340 = vmatprep.subr.mxu0 0.0
    %5341 = vmatpush1.msra.mxu0 0.0
    %5342 = vmatprep.subr.mxu0 0.0
    %5343 = vmatpush1.msra.mxu0 0.0
    %5344 = vmatprep.subr.mxu0 0.0
    %5345 = vmatpush1.msra.mxu0 0.0
    %5346 = vmatprep.subr.mxu0 0.0
    %5347 = vmatpush1.msra.mxu0 0.0
    %5348 = vmatprep.subr.mxu0 0.0
    %5349 = vmatpush1.msra.mxu0 0.0
    %5350 = vmatprep.subr.mxu0 0.0
    %5351 = vmatpush1.msra.mxu0 0.0
    %5352 = vmatprep.subr.mxu0 0.0
    %5353 = vmatpush1.msra.mxu0 0.0
    %5354 = vmatprep.mubr.f32.mxu0 0.0
    %5355 = vmatmul.mubr.f32.gmra.mrb[0].mxu0 %v5288
    %v5356 = vpop.f32.mrb[0].mxu0
    %v5357 = vadd.f32 %v254, %v5356
    %v5358 = vpop.f32.mrb[0].mxu0
    %5359 = vdwg.mxu0
    %v5360 = vxor.u32 %v5357, 2147483648
    %v5361 = vmul.f32 %v5360, 1.442695
    %v5362 = vpow.pop %v5361
    %v5363 = vadd.f32 %v5362, 1.0
    %v5364 = vrcp.pop %v5363
    %v5365 = vmul.f32 1.0, %v5364
    %v5366 = vtanh.pop %v5357
    %v5367 = vmul.f32 %v5365, %v4659
    %5369 = vrot.lane.b32.xlu0 %v5366, 64
    %v5370 = vpop.permute.xlu0 %5369
    %v5372 = vmul.f32 %v5365, %v5370
    %5374 = vrot.lane.b32.xlu0 %v5372, 32
    %v5375 = vpop.permute.xlu0 %5374
    %v5377 = vadd.f32 %v5367, %v5375
    %v5378 = vtanh.pop %v5377
    %5380 = vrot.lane.b32.xlu0 %v5378, 64
    %v5381 = vpop.permute.xlu0 %5380
    %v5383 = vmul.f32 %v5365, %v5381
    %5385 = vrot.lane.b32.xlu0 %v5383, 32
    %v5386 = vpop.permute.xlu0 %5385
    %v5387 = vsel %vm134, %v5386, 0
    %5389 = vmatprep.subr.mxu0 0.0
    %5390 = vmatpush1.msra.mxu0 %v66
    %5391 = vmatprep.subr.mxu0 0.0
    %5392 = vmatpush1.msra.mxu0 %v67
    %5393 = vmatprep.subr.mxu0 0.0
    %5394 = vmatpush1.msra.mxu0 %v68
    %5395 = vmatprep.subr.mxu0 0.0
    %5396 = vmatpush1.msra.mxu0 %v69
    %5397 = vmatprep.subr.mxu0 0.0
    %5398 = vmatpush1.msra.mxu0 0.0
    %5399 = vmatprep.subr.mxu0 0.0
    %5400 = vmatpush1.msra.mxu0 0.0
    %5401 = vmatprep.subr.mxu0 0.0
    %5402 = vmatpush1.msra.mxu0 0.0
    %5403 = vmatprep.subr.mxu0 0.0
    %5404 = vmatpush1.msra.mxu0 0.0
    %5405 = vmatprep.subr.mxu0 0.0
    %5406 = vmatpush1.msra.mxu0 0.0
    %5407 = vmatprep.subr.mxu0 0.0
    %5408 = vmatpush1.msra.mxu0 0.0
    %5409 = vmatprep.subr.mxu0 0.0
    %5410 = vmatpush1.msra.mxu0 0.0
    %5411 = vmatprep.subr.mxu0 0.0
    %5412 = vmatpush1.msra.mxu0 0.0
    %5413 = vmatprep.subr.mxu0 0.0
    %5414 = vmatpush1.msra.mxu0 0.0
    %5415 = vmatprep.subr.mxu0 0.0
    %5416 = vmatpush1.msra.mxu0 0.0
    %5417 = vmatprep.subr.mxu0 0.0
    %5418 = vmatpush1.msra.mxu0 0.0
    %5419 = vmatprep.subr.mxu0 0.0
    %5420 = vmatpush1.msra.mxu0 0.0
    %5421 = vmatprep.subr.mxu0 0.0
    %5422 = vmatpush1.msra.mxu0 0.0
    %5423 = vmatprep.subr.mxu0 0.0
    %5424 = vmatpush1.msra.mxu0 0.0
    %5425 = vmatprep.subr.mxu0 0.0
    %5426 = vmatpush1.msra.mxu0 0.0
    %5427 = vmatprep.subr.mxu0 0.0
    %5428 = vmatpush1.msra.mxu0 0.0
    %5429 = vmatprep.subr.mxu0 0.0
    %5430 = vmatpush1.msra.mxu0 0.0
    %5431 = vmatprep.subr.mxu0 0.0
    %5432 = vmatpush1.msra.mxu0 0.0
    %5433 = vmatprep.subr.mxu0 0.0
    %5434 = vmatpush1.msra.mxu0 0.0
    %5435 = vmatprep.subr.mxu0 0.0
    %5436 = vmatpush1.msra.mxu0 0.0
    %5437 = vmatprep.subr.mxu0 0.0
    %5438 = vmatpush1.msra.mxu0 0.0
    %5439 = vmatprep.subr.mxu0 0.0
    %5440 = vmatpush1.msra.mxu0 0.0
    %5441 = vmatprep.subr.mxu0 0.0
    %5442 = vmatpush1.msra.mxu0 0.0
    %5443 = vmatprep.subr.mxu0 0.0
    %5444 = vmatpush1.msra.mxu0 0.0
    %5445 = vmatprep.subr.mxu0 0.0
    %5446 = vmatpush1.msra.mxu0 0.0
    %5447 = vmatprep.subr.mxu0 0.0
    %5448 = vmatpush1.msra.mxu0 0.0
    %5449 = vmatprep.subr.mxu0 0.0
    %5450 = vmatpush1.msra.mxu0 0.0
    %5451 = vmatprep.subr.mxu0 0.0
    %5452 = vmatpush1.msra.mxu0 0.0
    %5453 = vmatprep.mubr.f32.mxu0 0.0
    %5454 = vmatmul.mubr.f32.gmra.mrb[0].mxu0 %v5387
    %v5455 = vpop.f32.mrb[0].mxu0
    %v5456 = vadd.f32 %v123, %v5455
    %v5457 = vpop.f32.mrb[0].mxu0
    %5458 = vdwg.mxu0
    %5459 = vmax.xlane.f32.xlu0 %v5456
    %v5460 = vpop.xlane.xlu0 %5459
    %v5461 = vsub.f32 %v5456, %v5460
    %v5462 = vmul.f32 %v5461, 1.442695
    %v5463 = vpow.pop %v5462
    %v5464 = vmul.f32 %v5463, %v124
    %5465 = vadd.xlane.f32.xlu0 %v5464
    %v5466 = vpop.xlane.xlu0 %5465
    %v5467 = vrcp.pop %v5466
    %v5468 = vmul.f32 1.0, %v5467
    %v5469 = vmul.f32 %v5464, %v5468
    %5470 = vmatprep.subr.mxu0 0.0
    %5471 = vmatpush1.msra.mxu0 %v70
    %5472 = vmatprep.subr.mxu0 0.0
    %5473 = vmatpush1.msra.mxu0 %v71
    %5474 = vmatprep.subr.mxu0 0.0
    %5475 = vmatpush1.msra.mxu0 %v72
    %5476 = vmatprep.subr.mxu0 0.0
    %5477 = vmatpush1.msra.mxu0 %v73
    %5478 = vmatprep.subr.mxu0 0.0
    %5479 = vmatpush1.msra.mxu0 %v74
    %5480 = vmatprep.subr.mxu0 0.0
    %5481 = vmatpush1.msra.mxu0 %v75
    %5482 = vmatprep.subr.mxu0 0.0
    %5483 = vmatpush1.msra.mxu0 %v76
    %5484 = vmatprep.subr.mxu0 0.0
    %5485 = vmatpush1.msra.mxu0 %v77
    %5486 = vmatprep.subr.mxu0 0.0
    %5487 = vmatpush1.msra.mxu0 %v78
    %5488 = vmatprep.subr.mxu0 0.0
    %5489 = vmatpush1.msra.mxu0 %v79
    %5490 = vmatprep.subr.mxu0 0.0
    %5491 = vmatpush1.msra.mxu0 %v80
    %5492 = vmatprep.subr.mxu0 0.0
    %5493 = vmatpush1.msra.mxu0 %v81
    %5494 = vmatprep.subr.mxu0 0.0
    %5495 = vmatpush1.msra.mxu0 %v82
    %5496 = vmatprep.subr.mxu0 0.0
    %5497 = vmatpush1.msra.mxu0 %v83
    %5498 = vmatprep.subr.mxu0 0.0
    %5499 = vmatpush1.msra.mxu0 %v84
    %5500 = vmatprep.subr.mxu0 0.0
    %5501 = vmatpush1.msra.mxu0 %v85
    %5502 = vmatprep.subr.mxu0 0.0
    %5503 = vmatpush1.msra.mxu0 0.0
    %5504 = vmatprep.subr.mxu0 0.0
    %5505 = vmatpush1.msra.mxu0 0.0
    %5506 = vmatprep.subr.mxu0 0.0
    %5507 = vmatpush1.msra.mxu0 0.0
    %5508 = vmatprep.subr.mxu0 0.0
    %5509 = vmatpush1.msra.mxu0 0.0
    %5510 = vmatprep.subr.mxu0 0.0
    %5511 = vmatpush1.msra.mxu0 0.0
    %5512 = vmatprep.subr.mxu0 0.0
    %5513 = vmatpush1.msra.mxu0 0.0
    %5514 = vmatprep.subr.mxu0 0.0
    %5515 = vmatpush1.msra.mxu0 0.0
    %5516 = vmatprep.subr.mxu0 0.0
    %5517 = vmatpush1.msra.mxu0 0.0
    %5518 = vmatprep.subr.mxu0 0.0
    %5519 = vmatpush1.msra.mxu0 0.0
    %5520 = vmatprep.subr.mxu0 0.0
    %5521 = vmatpush1.msra.mxu0 0.0
    %5522 = vmatprep.subr.mxu0 0.0
    %5523 = vmatpush1.msra.mxu0 0.0
    %5524 = vmatprep.subr.mxu0 0.0
    %5525 = vmatpush1.msra.mxu0 0.0
    %5526 = vmatprep.subr.mxu0 0.0
    %5527 = vmatpush1.msra.mxu0 0.0
    %5528 = vmatprep.subr.mxu0 0.0
    %5529 = vmatpush1.msra.mxu0 0.0
    %5530 = vmatprep.subr.mxu0 0.0
    %5531 = vmatpush1.msra.mxu0 0.0
    %5532 = vmatprep.subr.mxu0 0.0
    %5533 = vmatpush1.msra.mxu0 0.0
    %5534 = vmatprep.mubr.f32.mxu0 0.0
    %5535 = vmatmul.mubr.f32.gmra.mrb[0].mxu0 %v5469
    %v5536 = vpop.f32.mrb[0].mxu0
    %v5537 = vadd.f32 0.0, %v5536
    %v5538 = vpop.f32.mrb[0].mxu0
    %5539 = vdwg.mxu0
    %5540 = vmatprep.subr.mxu0 0.0
    %5541 = vmatpush1.msra.mxu0 %v86
    %5542 = vmatprep.subr.mxu0 0.0
    %5543 = vmatpush1.msra.mxu0 %v87
    %5544 = vmatprep.subr.mxu0 0.0
    %5545 = vmatpush1.msra.mxu0 %v88
    %5546 = vmatprep.subr.mxu0 0.0
    %5547 = vmatpush1.msra.mxu0 %v89
    %5548 = vmatprep.subr.mxu0 0.0
    %5549 = vmatpush1.msra.mxu0 0.0
    %5550 = vmatprep.subr.mxu0 0.0
    %5551 = vmatpush1.msra.mxu0 0.0
    %5552 = vmatprep.subr.mxu0 0.0
    %5553 = vmatpush1.msra.mxu0 0.0
    %5554 = vmatprep.subr.mxu0 0.0
    %5555 = vmatpush1.msra.mxu0 0.0
    %5556 = vmatprep.subr.mxu0 0.0
    %5557 = vmatpush1.msra.mxu0 0.0
    %5558 = vmatprep.subr.mxu0 0.0
    %5559 = vmatpush1.msra.mxu0 0.0
    %5560 = vmatprep.subr.mxu0 0.0
    %5561 = vmatpush1.msra.mxu0 0.0
    %5562 = vmatprep.subr.mxu0 0.0
    %5563 = vmatpush1.msra.mxu0 0.0
    %5564 = vmatprep.subr.mxu0 0.0
    %5565 = vmatpush1.msra.mxu0 0.0
    %5566 = vmatprep.subr.mxu0 0.0
    %5567 = vmatpush1.msra.mxu0 0.0
    %5568 = vmatprep.subr.mxu0 0.0
    %5569 = vmatpush1.msra.mxu0 0.0
    %5570 = vmatprep.subr.mxu0 0.0
    %5571 = vmatpush1.msra.mxu0 0.0
    %5572 = vmatprep.subr.mxu0 0.0
    %5573 = vmatpush1.msra.mxu0 0.0
    %5574 = vmatprep.subr.mxu0 0.0
    %5575 = vmatpush1.msra.mxu0 0.0
    %5576 = vmatprep.subr.mxu0 0.0
    %5577 = vmatpush1.msra.mxu0 0.0
    %5578 = vmatprep.subr.mxu0 0.0
    %5579 = vmatpush1.msra.mxu0 0.0
    %5580 = vmatprep.subr.mxu0 0.0
    %5581 = vmatpush1.msra.mxu0 0.0
    %5582 = vmatprep.subr.mxu0 0.0
    %5583 = vmatpush1.msra.mxu0 0.0
    %5584 = vmatprep.subr.mxu0 0.0
    %5585 = vmatpush1.msra.mxu0 0.0
    %5586 = vmatprep.subr.mxu0 0.0
    %5587 = vmatpush1.msra.mxu0 0.0
    %5588 = vmatprep.subr.mxu0 0.0
    %5589 = vmatpush1.msra.mxu0 0.0
    %5590 = vmatprep.subr.mxu0 0.0
    %5591 = vmatpush1.msra.mxu0 0.0
    %5592 = vmatprep.subr.mxu0 0.0
    %5593 = vmatpush1.msra.mxu0 0.0
    %5594 = vmatprep.subr.mxu0 0.0
    %5595 = vmatpush1.msra.mxu0 0.0
    %5596 = vmatprep.subr.mxu0 0.0
    %5597 = vmatpush1.msra.mxu0 0.0
    %5598 = vmatprep.subr.mxu0 0.0
    %5599 = vmatpush1.msra.mxu0 0.0
    %5600 = vmatprep.subr.mxu0 0.0
    %5601 = vmatpush1.msra.mxu0 0.0
    %5602 = vmatprep.subr.mxu0 0.0
    %5603 = vmatpush1.msra.mxu0 0.0
    %5604 = vmatprep.mubr.f32.mxu0 0.0
    %5605 = vmatmul.mubr.f32.gmra.mrb[0].mxu0 %v5387
    %v5606 = vpop.f32.mrb[0].mxu0
    %v5607 = vadd.f32 %v5537, %v5606
    %v5608 = vpop.f32.mrb[0].mxu0
    %5609 = vdwg.mxu0
    %v5610 = vadd.f32 %v5607, %v583
    %5611 = vmatprep.subr.mxu0 0.0
    %5612 = vmatpush1.msra.mxu0 %v91
    %5613 = vmatprep.subr.mxu0 0.0
    %5614 = vmatpush1.msra.mxu0 %v92
    %5615 = vmatprep.subr.mxu0 0.0
    %5616 = vmatpush1.msra.mxu0 %v93
    %5617 = vmatprep.subr.mxu0 0.0
    %5618 = vmatpush1.msra.mxu0 %v94
    %5619 = vmatprep.subr.mxu0 0.0
    %5620 = vmatpush1.msra.mxu0 %v95
    %5621 = vmatprep.subr.mxu0 0.0
    %5622 = vmatpush1.msra.mxu0 %v96
    %5623 = vmatprep.subr.mxu0 0.0
    %5624 = vmatpush1.msra.mxu0 %v97
    %5625 = vmatprep.subr.mxu0 0.0
    %5626 = vmatpush1.msra.mxu0 %v98
    %5627 = vmatprep.subr.mxu0 0.0
    %5628 = vmatpush1.msra.mxu0 %v99
    %5629 = vmatprep.subr.mxu0 0.0
    %5630 = vmatpush1.msra.mxu0 %v100
    %5631 = vmatprep.subr.mxu0 0.0
    %5632 = vmatpush1.msra.mxu0 %v101
    %5633 = vmatprep.subr.mxu0 0.0
    %5634 = vmatpush1.msra.mxu0 %v102
    %5635 = vmatprep.subr.mxu0 0.0
    %5636 = vmatpush1.msra.mxu0 %v103
    %5637 = vmatprep.subr.mxu0 0.0
    %5638 = vmatpush1.msra.mxu0 %v104
    %5639 = vmatprep.subr.mxu0 0.0
    %5640 = vmatpush1.msra.mxu0 %v105
    %5641 = vmatprep.subr.mxu0 0.0
    %5642 = vmatpush1.msra.mxu0 %v106
    %5643 = vmatprep.subr.mxu0 0.0
    %5644 = vmatpush1.msra.mxu0 0.0
    %5645 = vmatprep.subr.mxu0 0.0
    %5646 = vmatpush1.msra.mxu0 0.0
    %5647 = vmatprep.subr.mxu0 0.0
    %5648 = vmatpush1.msra.mxu0 0.0
    %5649 = vmatprep.subr.mxu0 0.0
    %5650 = vmatpush1.msra.mxu0 0.0
    %5651 = vmatprep.subr.mxu0 0.0
    %5652 = vmatpush1.msra.mxu0 0.0
    %5653 = vmatprep.subr.mxu0 0.0
    %5654 = vmatpush1.msra.mxu0 0.0
    %5655 = vmatprep.subr.mxu0 0.0
    %5656 = vmatpush1.msra.mxu0 0.0
    %5657 = vmatprep.subr.mxu0 0.0
    %5658 = vmatpush1.msra.mxu0 0.0
    %5659 = vmatprep.subr.mxu0 0.0
    %5660 = vmatpush1.msra.mxu0 0.0
    %5661 = vmatprep.subr.mxu0 0.0
    %5662 = vmatpush1.msra.mxu0 0.0
    %5663 = vmatprep.subr.mxu0 0.0
    %5664 = vmatpush1.msra.mxu0 0.0
    %5665 = vmatprep.subr.mxu0 0.0
    %5666 = vmatpush1.msra.mxu0 0.0
    %5667 = vmatprep.subr.mxu0 0.0
    %5668 = vmatpush1.msra.mxu0 0.0
    %5669 = vmatprep.subr.mxu0 0.0
    %5670 = vmatpush1.msra.mxu0 0.0
    %5671 = vmatprep.subr.mxu0 0.0
    %5672 = vmatpush1.msra.mxu0 0.0
    %5673 = vmatprep.subr.mxu0 0.0
    %5674 = vmatpush1.msra.mxu0 0.0
    %5675 = vmatprep.mubr.f32.mxu0 0.0
    %5676 = vmatmul.mubr.f32.gmra.mrb[0].mxu0 %v5469
    %v5677 = vpop.f32.mrb[0].mxu0
    %v5678 = vadd.f32 0.0, %v5677
    %v5679 = vpop.f32.mrb[0].mxu0
    %5680 = vdwg.mxu0
    %v5681 = vmul.f32 %v5678, %v5678
    %v5682 = vsel %vm134, %v5681, 0.0
    %5683 = vadd.xlane.f32.xlu0 %v5682
    %v5684 = vpop.xlane.xlu0 %5683
    %v5685 = vrsqrt.pop %v5684
    %v5686 = vmul.f32 %v5684, %v5685
    %vm5687 = vcmp.eq.f32.partialorder %v5684, inf
    %v5688 = vsel %vm5687, %v5684, %v5686
    %vm5689 = vcmp.eq.f32.partialorder %v5684, 0.0
    %v5690 = vand.u32 %v5684, 2147483648
    %v5691 = vsel %vm5689, %v5690, %v5688
    %v5692 = vmul.f32 %v5610, %v5610
    %v5693 = vsel %vm134, %v5692, 0.0
    %5694 = vadd.xlane.f32.xlu0 %v5693
    %v5695 = vpop.xlane.xlu0 %5694
    %v5696 = vrsqrt.pop %v5695
    %v5697 = vmul.f32 %v5695, %v5696
    %vm5698 = vcmp.eq.f32.partialorder %v5695, inf
    %v5699 = vsel %vm5698, %v5695, %v5697
    %vm5700 = vcmp.eq.f32.partialorder %v5695, 0.0
    %v5701 = vand.u32 %v5695, 2147483648
    %v5702 = vsel %vm5700, %v5701, %v5699
    %v5703 = vmul.f32 %v5691, 0.2
    %v5704 = vmin.f32 %v5702, %v5703
    %v5705 = vmax.f32 %v5702, 1e-12
    %v5706 = vrcp.pop %v5705
    %v5707 = vmul.f32 %v5610, %v5706
    %v5708 = vmul.f32 %v5707, %v5704
    %v5709 = vadd.f32 %v5678, %v5708
    %v5711 = vsel %vm134, %v5709, 0
    %5713 = vmatprep.subr.mxu0 0.0
    %5714 = vmatpush1.msra.mxu0 %v125
    %5715 = vmatprep.subr.mxu0 0.0
    %5716 = vmatpush1.msra.mxu0 %v126
    %5717 = vmatprep.subr.mxu0 0.0
    %5718 = vmatpush1.msra.mxu0 %v127
    %5719 = vmatprep.subr.mxu0 0.0
    %5720 = vmatpush1.msra.mxu0 %v128
    %5721 = vmatprep.subr.mxu0 0.0
    %5722 = vmatpush1.msra.mxu0 0.0
    %5723 = vmatprep.subr.mxu0 0.0
    %5724 = vmatpush1.msra.mxu0 0.0
    %5725 = vmatprep.subr.mxu0 0.0
    %5726 = vmatpush1.msra.mxu0 0.0
    %5727 = vmatprep.subr.mxu0 0.0
    %5728 = vmatpush1.msra.mxu0 0.0
    %5729 = vmatprep.subr.mxu0 0.0
    %5730 = vmatpush1.msra.mxu0 0.0
    %5731 = vmatprep.subr.mxu0 0.0
    %5732 = vmatpush1.msra.mxu0 0.0
    %5733 = vmatprep.subr.mxu0 0.0
    %5734 = vmatpush1.msra.mxu0 0.0
    %5735 = vmatprep.subr.mxu0 0.0
    %5736 = vmatpush1.msra.mxu0 0.0
    %5737 = vmatprep.subr.mxu0 0.0
    %5738 = vmatpush1.msra.mxu0 0.0
    %5739 = vmatprep.subr.mxu0 0.0
    %5740 = vmatpush1.msra.mxu0 0.0
    %5741 = vmatprep.subr.mxu0 0.0
    %5742 = vmatpush1.msra.mxu0 0.0
    %5743 = vmatprep.subr.mxu0 0.0
    %5744 = vmatpush1.msra.mxu0 0.0
    %5745 = vmatprep.subr.mxu0 0.0
    %5746 = vmatpush1.msra.mxu0 0.0
    %5747 = vmatprep.subr.mxu0 0.0
    %5748 = vmatpush1.msra.mxu0 0.0
    %5749 = vmatprep.subr.mxu0 0.0
    %5750 = vmatpush1.msra.mxu0 0.0
    %5751 = vmatprep.subr.mxu0 0.0
    %5752 = vmatpush1.msra.mxu0 0.0
    %5753 = vmatprep.subr.mxu0 0.0
    %5754 = vmatpush1.msra.mxu0 0.0
    %5755 = vmatprep.subr.mxu0 0.0
    %5756 = vmatpush1.msra.mxu0 0.0
    %5757 = vmatprep.subr.mxu0 0.0
    %5758 = vmatpush1.msra.mxu0 0.0
    %5759 = vmatprep.subr.mxu0 0.0
    %5760 = vmatpush1.msra.mxu0 0.0
    %5761 = vmatprep.subr.mxu0 0.0
    %5762 = vmatpush1.msra.mxu0 0.0
    %5763 = vmatprep.subr.mxu0 0.0
    %5764 = vmatpush1.msra.mxu0 0.0
    %5765 = vmatprep.subr.mxu0 0.0
    %5766 = vmatpush1.msra.mxu0 0.0
    %5767 = vmatprep.subr.mxu0 0.0
    %5768 = vmatpush1.msra.mxu0 0.0
    %5769 = vmatprep.subr.mxu0 0.0
    %5770 = vmatpush1.msra.mxu0 0.0
    %5771 = vmatprep.subr.mxu0 0.0
    %5772 = vmatpush1.msra.mxu0 0.0
    %5773 = vmatprep.subr.mxu0 0.0
    %5774 = vmatpush1.msra.mxu0 0.0
    %5775 = vmatprep.subr.mxu0 0.0
    %5776 = vmatpush1.msra.mxu0 0.0
    %5777 = vmatprep.mubr.f32.mxu0 0.0
    %5778 = vmatmul.mubr.f32.gmra.mrb[0].mxu0 %v5711
    %v5779 = vpop.f32.mrb[0].mxu0
    %v5780 = vadd.f32 0.0, %v5779
    %v5781 = vpop.f32.mrb[0].mxu0
    %5782 = vdwg.mxu0
    %v5783 = vsel %vm134, %v5780, -inf
    %5784 = vmax.xlane.f32.xlu0 %v5783
    %v5785 = vpop.xlane.xlu0 %5784
    %v5786 = vsub.f32 %v5780, %v5785
    %v5787 = vmul.f32 %v5786, 1.442695
    %v5788 = vpow.pop %v5787
    %v5789 = vsel %vm134, %v5788, 0.0
    %5790 = vadd.xlane.f32.xlu0 %v5789
    %v5791 = vpop.xlane.xlu0 %5790
    %v5792 = vlog2.pop %v5791
    %v5793 = vmul.f32 %v5792, 0.6931472
    %v5794 = vsub.f32 %v5786, %v5793
    %s5795 = scalar_lea.vmem [#allocation3], 56
    %5796 = vst.msk [vmem:[%s5795] sm:$0xff] %vm134, %v5794
    %5797 = vmatprep.subr.mxu0 0.0
    %5798 = vmatpush1.msra.mxu0 %v107
    %5799 = vmatprep.subr.mxu0 0.0
    %5800 = vmatpush1.msra.mxu0 %v108
    %5801 = vmatprep.subr.mxu0 0.0
    %5802 = vmatpush1.msra.mxu0 %v109
    %5803 = vmatprep.subr.mxu0 0.0
    %5804 = vmatpush1.msra.mxu0 %v110
    %5805 = vmatprep.subr.mxu0 0.0
    %5806 = vmatpush1.msra.mxu0 %v111
    %5807 = vmatprep.subr.mxu0 0.0
    %5808 = vmatpush1.msra.mxu0 %v112
    %5809 = vmatprep.subr.mxu0 0.0
    %5810 = vmatpush1.msra.mxu0 %v113
    %5811 = vmatprep.subr.mxu0 0.0
    %5812 = vmatpush1.msra.mxu0 %v114
    %5813 = vmatprep.subr.mxu0 0.0
    %5814 = vmatpush1.msra.mxu0 %v115
    %5815 = vmatprep.subr.mxu0 0.0
    %5816 = vmatpush1.msra.mxu0 %v116
    %5817 = vmatprep.subr.mxu0 0.0
    %5818 = vmatpush1.msra.mxu0 %v117
    %5819 = vmatprep.subr.mxu0 0.0
    %5820 = vmatpush1.msra.mxu0 %v118
    %5821 = vmatprep.subr.mxu0 0.0
    %5822 = vmatpush1.msra.mxu0 %v119
    %5823 = vmatprep.subr.mxu0 0.0
    %5824 = vmatpush1.msra.mxu0 %v120
    %5825 = vmatprep.subr.mxu0 0.0
    %5826 = vmatpush1.msra.mxu0 %v121
    %5827 = vmatprep.subr.mxu0 0.0
    %5828 = vmatpush1.msra.mxu0 %v122
    %5829 = vmatprep.subr.mxu0 0.0
    %5830 = vmatpush1.msra.mxu0 0.0
    %5831 = vmatprep.subr.mxu0 0.0
    %5832 = vmatpush1.msra.mxu0 0.0
    %5833 = vmatprep.subr.mxu0 0.0
    %5834 = vmatpush1.msra.mxu0 0.0
    %5835 = vmatprep.subr.mxu0 0.0
    %5836 = vmatpush1.msra.mxu0 0.0
    %5837 = vmatprep.subr.mxu0 0.0
    %5838 = vmatpush1.msra.mxu0 0.0
    %5839 = vmatprep.subr.mxu0 0.0
    %5840 = vmatpush1.msra.mxu0 0.0
    %5841 = vmatprep.subr.mxu0 0.0
    %5842 = vmatpush1.msra.mxu0 0.0
    %5843 = vmatprep.subr.mxu0 0.0
    %5844 = vmatpush1.msra.mxu0 0.0
    %5845 = vmatprep.subr.mxu0 0.0
    %5846 = vmatpush1.msra.mxu0 0.0
    %5847 = vmatprep.subr.mxu0 0.0
    %5848 = vmatpush1.msra.mxu0 0.0
    %5849 = vmatprep.subr.mxu0 0.0
    %5850 = vmatpush1.msra.mxu0 0.0
    %5851 = vmatprep.subr.mxu0 0.0
    %5852 = vmatpush1.msra.mxu0 0.0
    %5853 = vmatprep.subr.mxu0 0.0
    %5854 = vmatpush1.msra.mxu0 0.0
    %5855 = vmatprep.subr.mxu0 0.0
    %5856 = vmatpush1.msra.mxu0 0.0
    %5857 = vmatprep.subr.mxu0 0.0
    %5858 = vmatpush1.msra.mxu0 0.0
    %5859 = vmatprep.subr.mxu0 0.0
    %5860 = vmatpush1.msra.mxu0 0.0
    %5861 = vmatprep.mubr.f32.mxu0 0.0
    %5862 = vmatmul.mubr.f32.gmra.mrb[0].mxu0 %v5469
    %v5863 = vpop.f32.mrb[0].mxu0
    %v5864 = vadd.f32 0.0, %v5863
    %v5865 = vpop.f32.mrb[0].mxu0
    %5866 = vdwg.mxu0
    %s5867 = scalar_lea.vmem [#allocation5], 56
    %5868 = vst.msk [vmem:[%s5867] sm:$0xff] %vm864, %v5864
    // Predicated region
    $region54: #{tpu_custom_call.1} parent=1 // pred_check
      _
    $region55: #{tpu_custom_call.1} parent=1 // pred_check_branch
      %5870 = sbr.rel (0) target = $region57
    $region56: #{tpu_custom_call.1} parent=1 // pred_region
      %s5872 = ssub.s32 1024, 1024
      %5873 = vsyncadd [#allocation4], %s5872
      %s5874 = sshll.u32 [#allocation3], 4
      %s5875 = int_to_ptr.vmem [resolvable:$true] %s5874
      %5880 = dma.vmem_to_hbm [thread:$0]  %s5875, 1024, %s13, [#allocation4], 128, 128, 8
    $region57: #{tpu_custom_call.1} parent=1 // pred_fallthru
      _
    // Predicated region
    $region58: #{tpu_custom_call.1} parent=1 // pred_check
      _
    $region59: #{tpu_custom_call.1} parent=1 // pred_check_branch
      %5882 = sbr.rel (0) target = $region61
    $region60: #{tpu_custom_call.1} parent=1 // pred_region
      %s5884 = ssub.s32 1024, 1024
      %5885 = vsyncadd [#allocation6], %s5884
      %s5886 = sshll.u32 [#allocation5], 4
      %s5887 = int_to_ptr.vmem [resolvable:$true] %s5886
      %5892 = dma.vmem_to_hbm [thread:$0]  %s5887, 1024, %s14, [#allocation6], 128, 128, 8
    $region61: #{tpu_custom_call.1} parent=1 // pred_fallthru
      _
    // Predicated region
    $region62: #{tpu_custom_call.1} parent=1 // pred_check
      _
    $region63: #{tpu_custom_call.1} parent=1 // pred_check_branch
      %5894 = sbr.rel (0) target = $region65
    $region64: #{tpu_custom_call.1} parent=1 // pred_region
      %5895 = dma.done [#allocation4], 1024
    $region65: #{tpu_custom_call.1} parent=1 // pred_fallthru
      _
    // Predicated region
    $region66: #{tpu_custom_call.1} parent=1 // pred_check
      _
    $region67: #{tpu_custom_call.1} parent=1 // pred_check_branch
      %5897 = sbr.rel (0) target = $region69
    $region68: #{tpu_custom_call.1} parent=1 // pred_region
      %5898 = dma.done [#allocation6], 1024
    $region69: #{tpu_custom_call.1} parent=1 // pred_fallthru
      _
    %5899 = vsyncpa [#allocation4], 1
    %5900 = vsyncpa [#allocation6], 1

</llo_original>
